<compile_context>
chip_gen: v7x
topology: tpu7x:2x2x1
jax: 0.10.0
libtpu: 0.0.40
codegen_flags: <defaults>
</compile_context>

<pallas_src>
import functools

import numpy as np
import jax
import jax.numpy as jnp
from jax.experimental import pallas as pl
from jax.experimental.pallas import tpu as pltpu


# ---------------------------------------------------------------------------
# Fused kernel: one grid step == one image.  Everything stays in vregs/VMEM;
# the only ref store is the lane-dense output slab.
# ---------------------------------------------------------------------------
def _mff_kernel(x1_ref, x2_ref,
                rh1_ref, rw1_ref, wa1_ref, b1a_ref,
                rh2_ref, rw2_ref, wa2_ref, b1b_ref,
                s_ref, wb_ref, bu_ref, wf_ref, bf_ref,
                o_ref, *, wo, cu):
  f32 = jnp.float32
  half = wo * cu                                   # 256 lanes per up-branch

  def shifted(v, idx):
    # y-shift by (idx - 2) rows with zero fill, as a tiny 0/1 matmul
    # (identity tap skipped); avoids sublane-offset slices / relayouts.
    if idx == 2:
      return v
    return jnp.dot(s_ref[idx], v, preferred_element_type=f32)

  def first_stage(x_ref, rh_ref, rw_ref, wa_ref, b1_ref):
    # (1) bilinear resize (align_corners=True): x-resize + x-halo baked into
    #     rw_ref; y-resize + y-shift per conv tap baked into rh_ref[dy].
    # (2) 5x5 conv1 & conv2 (BN scale folded) as banded matmuls, one per dy.
    x = x_ref[0]                                                  # (h, w*cin)
    xw = jnp.dot(x, rw_ref[...], preferred_element_type=f32)      # (h, (wo+4)*cin)
    y = None
    for dy in range(5):
      rows = jnp.dot(rh_ref[dy], xw, preferred_element_type=f32)  # (ho, (wo+4)*cin)
      t = jnp.dot(rows, wa_ref[dy], preferred_element_type=f32)   # (ho, 2*wo*cu)
      y = t if y is None else y + t
    xc1 = jnp.maximum(y[:, :half] + b1_ref[...], 0.0)   # relu(bn1(conv1(x)))
    return xc1, y[:, half:]                             # bn2(conv2(x)), bias deferred

  xc1_a, br2_a = first_stage(x1_ref, rh1_ref, rw1_ref, wa1_ref, b1a_ref)
  xc1_b, br2_b = first_stage(x2_ref, rh2_ref, rw2_ref, wa2_ref, b1b_ref)

  # up1/up2 stacked along lanes (128-aligned concat at 256); both 3x3 conv1_2
  # convs run as one block-diagonal banded matmul per y-tap.
  xc = jnp.concatenate([xc1_a, xc1_b], axis=1)                    # (ho, 2*wo*cu)
  br2 = jnp.concatenate([br2_a, br2_b], axis=1)
  bran1 = None
  for dy in range(3):
    t = jnp.dot(shifted(xc, dy + 1), wb_ref[dy], preferred_element_type=f32)
    bran1 = t if bran1 is None else bran1 + t
  # relu(bran1 + bran2), with (bias1_2 + bias2) combined host-side.
  u = jnp.maximum(bran1 + br2 + bu_ref[...], 0.0)                 # concat(u1,u2), packed

  # final 5x5 conv + BN + ReLU; the channel concat is folded into wf row-blocks.
  out = None
  for dy in range(5):
    t = jnp.dot(shifted(u, dy), wf_ref[dy], preferred_element_type=f32)
    out = t if out is None else out + t
  o_ref[0] = jnp.maximum(out + bf_ref[...], 0.0)                  # (ho, wo*c_out), lane-dense


# ---------------------------------------------------------------------------
# Host-side helpers: resize matrices, banded conv weights, BN folding.
# ---------------------------------------------------------------------------
def _bilinear_matrix(out_len, in_len):
  """1-D bilinear interpolation matrix, align_corners=True (static, numpy)."""
  m = np.zeros((out_len, in_len), np.float32)
  if in_len == 1 or out_len == 1:
    m[:, 0] = 1.0
    return m
  pos = np.arange(out_len, dtype=np.float64) * (in_len - 1) / (out_len - 1)
  i0 = np.clip(np.floor(pos).astype(np.int64), 0, in_len - 1)
  i1 = np.minimum(i0 + 1, in_len - 1)
  w = (pos - i0).astype(np.float32)
  np.add.at(m, (np.arange(out_len), i0), 1.0 - w)
  np.add.at(m, (np.arange(out_len), i1), w)
  return m


def _band_x(w, in_width, out_width, x_offset):
  """Per-y-tap conv weights as banded (in_width*cin, out_width*cout) matrices.

  w: (k, k, cin, cout) numpy.  Returns (k, in_width*cin, out_width*cout) with
  m[dy, xin*cin+ci, ox*cout+co] = w[dy, xin-ox+x_offset, ci, co] where valid.
  """
  k, _, cin, cout = w.shape
  m = np.zeros((k, in_width * cin, out_width * cout), np.float32)
  for dy in range(k):
    for dx in range(k):
      for ox in range(out_width):
        xin = ox + dx - x_offset
        if 0 <= xin < in_width:
          m[dy, xin * cin:(xin + 1) * cin, ox * cout:(ox + 1) * cout] = w[dy, dx]
  return m
# TODO(synk): banded weights scale as O(wo^2 * c^2 * k); for realistic output
# sizes (e.g. 228x304) tile the output columns / exploit the band's block
# sparsity before scaling this kernel up.


def mff_forward(params, x_block1, x_block2, x_block3, x_block4, size):
  """MFF forward.  NCHW in / NCHW out (PyTorch convention)."""
  del x_block3, x_block4                      # unused by the reference forward
  ho, wo = int(size[0]), int(size[1])
  n = x_block1.shape[0]
  cu = params['up1']['w1'].shape[-1]          # 16
  c_out = params['w'].shape[-1]               # 32
  half = wo * cu

  # TODO(synk): NCHW<->NHWC transposes and (rows, W*C) packing kept as single
  # XLA layout ops at the kernel boundary (<10 KB tensors).
  def prep_input(x_nchw):
    n_, c, h, w = x_nchw.shape
    x = jnp.transpose(x_nchw, (0, 2, 3, 1)).astype(jnp.float32)   # NHWC
    return x.reshape(n_, h, w * c), c, h, w

  x1p, c1, h1, w1 = prep_input(x_block1)
  x2p, c2, h2, w2 = prep_input(x_block2)

  def resize_mats(h_in, w_in, c):
    # x-resize + 2-element x-halo baked into rw;  y-resize + per-tap y-shift
    # (with zero halo rows) baked into rh[dy].
    ah = _bilinear_matrix(ho, h_in)
    ah_pad = np.zeros((ho + 4, h_in), np.float32)
    ah_pad[2:2 + ho] = ah
    rh = np.stack([ah_pad[dy:dy + ho] for dy in range(5)])        # (5, ho, h_in)
    aw = _bilinear_matrix(wo, w_in)
    aw_pad = np.zeros((wo + 4, w_in), np.float32)
    aw_pad[2:2 + wo] = aw
    rw = np.kron(aw_pad.T, np.eye(c, dtype=np.float32))           # (w_in*c, (wo+4)*c)
    return rh, rw

  rh1, rw1 = resize_mats(h1, w1, c1)
  rh2, rw2 = resize_mats(h2, w2, c2)

  def prep_up(p):
    # fold BN scales into the conv weights; build banded matrices.
    (s1, b1), (s2, b2), (s12, b12) = p['bn1'], p['bn2'], p['bn1_2']
    w1 = np.asarray(p['w1']) * np.asarray(s1).reshape(1, 1, 1, -1)
    w2 = np.asarray(p['w2']) * np.asarray(s2).reshape(1, 1, 1, -1)
    w12 = np.asarray(p['w1_2']) * np.asarray(s12).reshape(1, 1, 1, -1)
    # merged conv1|conv2: output columns [conv1 packed | conv2 packed]
    wa = np.concatenate([_band_x(w1, wo + 4, wo, 0),
                         _band_x(w2, wo + 4, wo, 0)], axis=2)     # (5, (wo+4)*cin, 2*half)
    b1_row = np.tile(np.asarray(b1).reshape(-1), wo)[None, :]     # (1, half)
    bsum_row = np.tile((np.asarray(b12) + np.asarray(b2)).reshape(-1), wo)[None, :]
    wb = _band_x(w12, wo, wo, 1)                                  # (3, half, half)
    return wa, b1_row, wb, bsum_row

  wa1, b1a, wb_a, bs_a = prep_up(params['up1'])
  wa2, b1b, wb_b, bs_b = prep_up(params['up2'])

  # block-diagonal 3x3 weights: up1 and up2 conv1_2 batched into one matmul
  wb = np.zeros((3, 2 * half, 2 * half), np.float32)
  wb[:, :half, :half] = wb_a
  wb[:, half:, half:] = wb_b
  bu = np.concatenate([bs_a, bs_b], axis=1)                        # (1, 2*half)

  # final 5x5 conv: channel concat folded into row blocks of the banded weights
  sf, bf = params['bn']
  wfin = np.asarray(params['w']) * np.asarray(sf).reshape(1, 1, 1, -1)
  wf = np.concatenate([_band_x(wfin[:, :, :cu, :], wo, wo, 2),
                       _band_x(wfin[:, :, cu:, :], wo, wo, 2)], axis=1)  # (5, 2*half, wo*c_out)
  bf_row = np.tile(np.asarray(bf).reshape(-1), wo)[None, :]        # (1, wo*c_out)

  # y-shift matrices for offsets -2..2 (exact 0/1 selection)
  s5 = np.stack([np.eye(ho, ho, k=d - 2, dtype=np.float32) for d in range(5)])

  vmem_full = pl.BlockSpec(memory_space=pltpu.MemorySpace.VMEM)
  kern = functools.partial(_mff_kernel, wo=wo, cu=cu)
  out = pl.pallas_call(
      kern,
      out_shape=jax.ShapeDtypeStruct((n, ho, wo * c_out), jnp.float32),
      grid=(n,),
      in_specs=[
          pl.BlockSpec((1, h1, w1 * c1), lambda i: (i, 0, 0)),     # x1, per image
          pl.BlockSpec((1, h2, w2 * c2), lambda i: (i, 0, 0)),     # x2, per image
          vmem_full, vmem_full, vmem_full, vmem_full,              # up1 operands
          vmem_full, vmem_full, vmem_full, vmem_full,              # up2 operands
          vmem_full, vmem_full, vmem_full, vmem_full, vmem_full,   # s5, wb, bu, wf, bf
      ],
      out_specs=pl.BlockSpec((1, ho, wo * c_out), lambda i: (i, 0, 0)),
      compiler_params=pltpu.CompilerParams(
          dimension_semantics=("parallel",),          # both TCs on v7x
          vmem_limit_bytes=48 * 1024 * 1024),
  )(x1p, x2p,
    jnp.asarray(rh1), jnp.asarray(rw1), jnp.asarray(wa1), jnp.asarray(b1a),
    jnp.asarray(rh2), jnp.asarray(rw2), jnp.asarray(wa2), jnp.asarray(b1b),
    jnp.asarray(s5), jnp.asarray(wb), jnp.asarray(bu),
    jnp.asarray(wf), jnp.asarray(bf_row))

  out = out.reshape(n, ho, wo, c_out)
  return jnp.transpose(out, (0, 3, 1, 2))                          # back to NCHW


# ---------------------------------------------------------------------------
# Parameter init (deterministic, synthetic) — inference-mode folded BatchNorm
# ---------------------------------------------------------------------------
def _fold_bn(gamma, beta, mean, var, eps=1e-5):
  scale = gamma / jnp.sqrt(var + eps)
  bias = beta - mean * scale
  return (scale.reshape(1, -1).astype(jnp.float32),
          bias.reshape(1, -1).astype(jnp.float32))


def _init_conv(key, kh, kw, cin, cout):
  # weights stored in (kh, kw, Cin, Cout) layout
  return (jax.random.normal(key, (kh, kw, cin, cout), jnp.float32)
          * (1.0 / jnp.sqrt(kh * kw * cin)))


def _init_bn(key, c):
  k1, k2, k3, k4 = jax.random.split(key, 4)
  gamma = 1.0 + 0.1 * jax.random.normal(k1, (c,), jnp.float32)
  beta = 0.1 * jax.random.normal(k2, (c,), jnp.float32)
  mean = 0.1 * jax.random.normal(k3, (c,), jnp.float32)
  var = 1.0 + 0.1 * jax.random.uniform(k4, (c,), jnp.float32)
  return _fold_bn(gamma, beta, mean, var)


def init_up_projection(key, cin, cout=16):
  k = jax.random.split(key, 6)
  return dict(
      w1=_init_conv(k[0], 5, 5, cin, cout), bn1=_init_bn(k[1], cout),
      w1_2=_init_conv(k[2], 3, 3, cout, cout), bn1_2=_init_bn(k[3], cout),
      w2=_init_conv(k[4], 5, 5, cin, cout), bn2=_init_bn(k[5], cout),
  )


def init_mff(key, block_channel, num_features=32):
  k1, k2, k3, k4 = jax.random.split(key, 4)
  return dict(
      up1=init_up_projection(k1, block_channel[0], 16),
      up2=init_up_projection(k2, block_channel[1], 16),
      w=_init_conv(k3, 5, 5, num_features, num_features),
      bn=_init_bn(k4, num_features),
  )


# ---------------------------------------------------------------------------
# Pure-JAX (XLA) reference for validation
# ---------------------------------------------------------------------------
def _reference_forward(params, x_block1, x_block2, size):
  ho, wo = int(size[0]), int(size[1])

  def resize(x_nchw):
    ah = jnp.asarray(_bilinear_matrix(ho, x_nchw.shape[2]))
    aw = jnp.asarray(_bilinear_matrix(wo, x_nchw.shape[3]))
    t = jnp.einsum('oh,nchw->ncow', ah, x_nchw.astype(jnp.float32))
    return jnp.einsum('pw,ncow->ncop', aw, t)

  def conv_bn(x, w, sb, relu):
    scale, bias = sb
    k = w.shape[0]
    p = (k - 1) // 2
    y = jax.lax.conv_general_dilated(
        x, jnp.transpose(w, (3, 2, 0, 1)), (1, 1), [(p, p), (p, p)],
        dimension_numbers=('NCHW', 'OIHW', 'NCHW'),
        precision=jax.lax.Precision.HIGHEST)
    y = y * scale.reshape(1, -1, 1, 1) + bias.reshape(1, -1, 1, 1)
    return jnp.maximum(y, 0.0) if relu else y

  def up(p, x):
    x = resize(x)
    xc1 = conv_bn(x, p['w1'], p['bn1'], True)
    bran1 = conv_bn(xc1, p['w1_2'], p['bn1_2'], False)
    bran2 = conv_bn(x, p['w2'], p['bn2'], False)
    return jnp.maximum(bran1 + bran2, 0.0)

  x_m1 = up(params['up1'], x_block1)
  x_m2 = up(params['up2'], x_block2)
  x = jnp.concatenate([x_m1, x_m2], axis=1)
  return conv_bn(x, params['w'], params['bn'], True)


if __name__ == "__main__":
  key = jax.random.PRNGKey(0)
  kp, k1, k2, k3, k4 = jax.random.split(key, 5)

  block_channel = [4, 8]
  params = init_mff(kp, block_channel, num_features=32)

  # NCHW inputs, like the PyTorch module
  x_block1 = jax.random.normal(k1, (2, 4, 8, 8), jnp.float32)
  x_block2 = jax.random.normal(k2, (2, 8, 4, 4), jnp.float32)
  x_block3 = jax.random.normal(k3, (2, 16, 4, 4), jnp.float32)   # unused
  x_block4 = jax.random.normal(k4, (2, 32, 2, 2), jnp.float32)   # unused
  size = (16, 16)

  out = mff_forward(params, x_block1, x_block2, x_block3, x_block4, size)
  out = jax.block_until_ready(out)
  assert out.shape == (2, 32, 16, 16), out.shape
  assert bool(jnp.all(jnp.isfinite(out)))

  ref = _reference_forward(params, x_block1, x_block2, size)
  err = float(jnp.max(jnp.abs(out - ref)))
  assert err < 5e-3, f"max abs error vs XLA reference: {err}"
  print("KERNEL_OK")
</pallas_src>

<mosaic_0001>
module attributes {stable_mosaic.version = 11 : i64} {
  func.func @_mff_kernel(%arg0: i32, %arg1: memref<1x8x32xf32, #tpu.memory_space<vmem>>, %arg2: memref<1x4x32xf32, #tpu.memory_space<vmem>>, %arg3: memref<5x16x8xf32, #tpu.memory_space<vmem>>, %arg4: memref<32x80xf32, #tpu.memory_space<vmem>>, %arg5: memref<5x80x512xf32, #tpu.memory_space<vmem>>, %arg6: memref<1x256xf32, #tpu.memory_space<vmem>>, %arg7: memref<5x16x4xf32, #tpu.memory_space<vmem>>, %arg8: memref<32x160xf32, #tpu.memory_space<vmem>>, %arg9: memref<5x160x512xf32, #tpu.memory_space<vmem>>, %arg10: memref<1x256xf32, #tpu.memory_space<vmem>>, %arg11: memref<5x16x16xf32, #tpu.memory_space<vmem>>, %arg12: memref<3x512x512xf32, #tpu.memory_space<vmem>>, %arg13: memref<1x512xf32, #tpu.memory_space<vmem>>, %arg14: memref<5x512x512xf32, #tpu.memory_space<vmem>>, %arg15: memref<1x512xf32, #tpu.memory_space<vmem>>, %arg16: memref<1x16x512xf32, #tpu.memory_space<vmem>>) attributes {dimension_semantics = [#tpu.dimension_semantics<parallel>], iteration_bounds = array<i64: 2>, scalar_prefetch = 0 : i64, scratch_operands = 0 : i64, tpu.core_type = #tpu.core_type<tc>, window_params = [{transform_indices = @transform_0, window_bounds = array<i64: 1, 8, 32>}, {transform_indices = @transform_1, window_bounds = array<i64: 1, 4, 32>}, {pipeline_mode = #tpu.pipeline_mode<synchronous>, transform_indices = @transform_2, window_bounds = array<i64: 5, 16, 8>}, {pipeline_mode = #tpu.pipeline_mode<synchronous>, transform_indices = @transform_3, window_bounds = array<i64: 32, 80>}, {pipeline_mode = #tpu.pipeline_mode<synchronous>, transform_indices = @transform_4, window_bounds = array<i64: 5, 80, 512>}, {pipeline_mode = #tpu.pipeline_mode<synchronous>, transform_indices = @transform_5, window_bounds = array<i64: 1, 256>}, {pipeline_mode = #tpu.pipeline_mode<synchronous>, transform_indices = @transform_6, window_bounds = array<i64: 5, 16, 4>}, {pipeline_mode = #tpu.pipeline_mode<synchronous>, transform_indices = @transform_7, window_bounds = array<i64: 32, 160>}, {pipeline_mode = #tpu.pipeline_mode<synchronous>, transform_indices = @transform_8, window_bounds = array<i64: 5, 160, 512>}, {pipeline_mode = #tpu.pipeline_mode<synchronous>, transform_indices = @transform_9, window_bounds = array<i64: 1, 256>}, {pipeline_mode = #tpu.pipeline_mode<synchronous>, transform_indices = @transform_10, window_bounds = array<i64: 5, 16, 16>}, {pipeline_mode = #tpu.pipeline_mode<synchronous>, transform_indices = @transform_11, window_bounds = array<i64: 3, 512, 512>}, {pipeline_mode = #tpu.pipeline_mode<synchronous>, transform_indices = @transform_12, window_bounds = array<i64: 1, 512>}, {pipeline_mode = #tpu.pipeline_mode<synchronous>, transform_indices = @transform_13, window_bounds = array<i64: 5, 512, 512>}, {pipeline_mode = #tpu.pipeline_mode<synchronous>, transform_indices = @transform_14, window_bounds = array<i64: 1, 512>}, {transform_indices = @transform_15, window_bounds = array<i64: 1, 16, 512>}]} {
    %c0 = arith.constant 0 : index
    %c0_0 = arith.constant 0 : index
    %c0_1 = arith.constant 0 : index
    %0 = vector.load %arg1[%c0, %c0_0, %c0_1] : memref<1x8x32xf32, #tpu.memory_space<vmem>>, vector<1x8x32xf32>
    %1 = vector.shape_cast %0 : vector<1x8x32xf32> to vector<8x32xf32>
    %c0_2 = arith.constant 0 : index
    %c0_3 = arith.constant 0 : index
    %2 = vector.load %arg4[%c0_2, %c0_3] : memref<32x80xf32, #tpu.memory_space<vmem>>, vector<32x80xf32>
    %cst = arith.constant dense<0.000000e+00> : vector<8x80xf32>
    %3 = tpu.matmul %1, %2, %cst {dimension_numbers = #tpu.dot_dimension_numbers<[1], [0], [0], [1], [0, 0, 1, 1], [], []>} : vector<8x32xf32>, vector<32x80xf32>, vector<8x80xf32> -> vector<8x80xf32>
    %c0_4 = arith.constant 0 : index
    %c0_5 = arith.constant 0 : index
    %c0_6 = arith.constant 0 : index
    %4 = vector.load %arg3[%c0_4, %c0_5, %c0_6] : memref<5x16x8xf32, #tpu.memory_space<vmem>>, vector<1x16x8xf32>
    %5 = vector.shape_cast %4 : vector<1x16x8xf32> to vector<16x8xf32>
    %cst_7 = arith.constant dense<0.000000e+00> : vector<16x80xf32>
    %6 = tpu.matmul %5, %3, %cst_7 {dimension_numbers = #tpu.dot_dimension_numbers<[1], [0], [0], [1], [0, 0, 1, 1], [], []>} : vector<16x8xf32>, vector<8x80xf32>, vector<16x80xf32> -> vector<16x80xf32>
    %c0_8 = arith.constant 0 : index
    %c0_9 = arith.constant 0 : index
    %c0_10 = arith.constant 0 : index
    %7 = vector.load %arg5[%c0_8, %c0_9, %c0_10] : memref<5x80x512xf32, #tpu.memory_space<vmem>>, vector<1x80x512xf32>
    %8 = vector.shape_cast %7 : vector<1x80x512xf32> to vector<80x512xf32>
    %cst_11 = arith.constant dense<0.000000e+00> : vector<16x512xf32>
    %9 = tpu.matmul %6, %8, %cst_11 {dimension_numbers = #tpu.dot_dimension_numbers<[1], [0], [0], [1], [0, 0, 1, 1], [], []>} : vector<16x80xf32>, vector<80x512xf32>, vector<16x512xf32> -> vector<16x512xf32>
    %c1 = arith.constant 1 : index
    %c0_12 = arith.constant 0 : index
    %c0_13 = arith.constant 0 : index
    %10 = vector.load %arg3[%c1, %c0_12, %c0_13] : memref<5x16x8xf32, #tpu.memory_space<vmem>>, vector<1x16x8xf32>
    %11 = vector.shape_cast %10 : vector<1x16x8xf32> to vector<16x8xf32>
    %cst_14 = arith.constant dense<0.000000e+00> : vector<16x80xf32>
    %12 = tpu.matmul %11, %3, %cst_14 {dimension_numbers = #tpu.dot_dimension_numbers<[1], [0], [0], [1], [0, 0, 1, 1], [], []>} : vector<16x8xf32>, vector<8x80xf32>, vector<16x80xf32> -> vector<16x80xf32>
    %c1_15 = arith.constant 1 : index
    %c0_16 = arith.constant 0 : index
    %c0_17 = arith.constant 0 : index
    %13 = vector.load %arg5[%c1_15, %c0_16, %c0_17] : memref<5x80x512xf32, #tpu.memory_space<vmem>>, vector<1x80x512xf32>
    %14 = vector.shape_cast %13 : vector<1x80x512xf32> to vector<80x512xf32>
    %cst_18 = arith.constant dense<0.000000e+00> : vector<16x512xf32>
    %15 = tpu.matmul %12, %14, %cst_18 {dimension_numbers = #tpu.dot_dimension_numbers<[1], [0], [0], [1], [0, 0, 1, 1], [], []>} : vector<16x80xf32>, vector<80x512xf32>, vector<16x512xf32> -> vector<16x512xf32>
    %16 = arith.addf %9, %15 : vector<16x512xf32>
    %c2 = arith.constant 2 : index
    %c0_19 = arith.constant 0 : index
    %c0_20 = arith.constant 0 : index
    %17 = vector.load %arg3[%c2, %c0_19, %c0_20] : memref<5x16x8xf32, #tpu.memory_space<vmem>>, vector<1x16x8xf32>
    %18 = vector.shape_cast %17 : vector<1x16x8xf32> to vector<16x8xf32>
    %cst_21 = arith.constant dense<0.000000e+00> : vector<16x80xf32>
    %19 = tpu.matmul %18, %3, %cst_21 {dimension_numbers = #tpu.dot_dimension_numbers<[1], [0], [0], [1], [0, 0, 1, 1], [], []>} : vector<16x8xf32>, vector<8x80xf32>, vector<16x80xf32> -> vector<16x80xf32>
    %c2_22 = arith.constant 2 : index
    %c0_23 = arith.constant 0 : index
    %c0_24 = arith.constant 0 : index
    %20 = vector.load %arg5[%c2_22, %c0_23, %c0_24] : memref<5x80x512xf32, #tpu.memory_space<vmem>>, vector<1x80x512xf32>
    %21 = vector.shape_cast %20 : vector<1x80x512xf32> to vector<80x512xf32>
    %cst_25 = arith.constant dense<0.000000e+00> : vector<16x512xf32>
    %22 = tpu.matmul %19, %21, %cst_25 {dimension_numbers = #tpu.dot_dimension_numbers<[1], [0], [0], [1], [0, 0, 1, 1], [], []>} : vector<16x80xf32>, vector<80x512xf32>, vector<16x512xf32> -> vector<16x512xf32>
    %23 = arith.addf %16, %22 : vector<16x512xf32>
    %c3 = arith.constant 3 : index
    %c0_26 = arith.constant 0 : index
    %c0_27 = arith.constant 0 : index
    %24 = vector.load %arg3[%c3, %c0_26, %c0_27] : memref<5x16x8xf32, #tpu.memory_space<vmem>>, vector<1x16x8xf32>
    %25 = vector.shape_cast %24 : vector<1x16x8xf32> to vector<16x8xf32>
    %cst_28 = arith.constant dense<0.000000e+00> : vector<16x80xf32>
    %26 = tpu.matmul %25, %3, %cst_28 {dimension_numbers = #tpu.dot_dimension_numbers<[1], [0], [0], [1], [0, 0, 1, 1], [], []>} : vector<16x8xf32>, vector<8x80xf32>, vector<16x80xf32> -> vector<16x80xf32>
    %c3_29 = arith.constant 3 : index
    %c0_30 = arith.constant 0 : index
    %c0_31 = arith.constant 0 : index
    %27 = vector.load %arg5[%c3_29, %c0_30, %c0_31] : memref<5x80x512xf32, #tpu.memory_space<vmem>>, vector<1x80x512xf32>
    %28 = vector.shape_cast %27 : vector<1x80x512xf32> to vector<80x512xf32>
    %cst_32 = arith.constant dense<0.000000e+00> : vector<16x512xf32>
    %29 = tpu.matmul %26, %28, %cst_32 {dimension_numbers = #tpu.dot_dimension_numbers<[1], [0], [0], [1], [0, 0, 1, 1], [], []>} : vector<16x80xf32>, vector<80x512xf32>, vector<16x512xf32> -> vector<16x512xf32>
    %30 = arith.addf %23, %29 : vector<16x512xf32>
    %c4 = arith.constant 4 : index
    %c0_33 = arith.constant 0 : index
    %c0_34 = arith.constant 0 : index
    %31 = vector.load %arg3[%c4, %c0_33, %c0_34] : memref<5x16x8xf32, #tpu.memory_space<vmem>>, vector<1x16x8xf32>
    %32 = vector.shape_cast %31 : vector<1x16x8xf32> to vector<16x8xf32>
    %cst_35 = arith.constant dense<0.000000e+00> : vector<16x80xf32>
    %33 = tpu.matmul %32, %3, %cst_35 {dimension_numbers = #tpu.dot_dimension_numbers<[1], [0], [0], [1], [0, 0, 1, 1], [], []>} : vector<16x8xf32>, vector<8x80xf32>, vector<16x80xf32> -> vector<16x80xf32>
    %c4_36 = arith.constant 4 : index
    %c0_37 = arith.constant 0 : index
    %c0_38 = arith.constant 0 : index
    %34 = vector.load %arg5[%c4_36, %c0_37, %c0_38] : memref<5x80x512xf32, #tpu.memory_space<vmem>>, vector<1x80x512xf32>
    %35 = vector.shape_cast %34 : vector<1x80x512xf32> to vector<80x512xf32>
    %cst_39 = arith.constant dense<0.000000e+00> : vector<16x512xf32>
    %36 = tpu.matmul %33, %35, %cst_39 {dimension_numbers = #tpu.dot_dimension_numbers<[1], [0], [0], [1], [0, 0, 1, 1], [], []>} : vector<16x80xf32>, vector<80x512xf32>, vector<16x512xf32> -> vector<16x512xf32>
    %37 = arith.addf %30, %36 : vector<16x512xf32>
    %38 = vector.extract_strided_slice %37 {offsets = [0, 0], sizes = [16, 256], strides = [1, 1]} : vector<16x512xf32> to vector<16x256xf32>
    %c0_40 = arith.constant 0 : index
    %c0_41 = arith.constant 0 : index
    %39 = vector.load %arg6[%c0_40, %c0_41] : memref<1x256xf32, #tpu.memory_space<vmem>>, vector<1x256xf32>
    %40 = vector.broadcast %39 : vector<1x256xf32> to vector<16x256xf32>
    %41 = arith.addf %38, %40 : vector<16x256xf32>
    %cst_42 = arith.constant 0.000000e+00 : f32
    %42 = vector.broadcast %cst_42 : f32 to vector<16x256xf32>
    %43 = arith.maximumf %41, %42 : vector<16x256xf32>
    %44 = vector.extract_strided_slice %37 {offsets = [0, 256], sizes = [16, 256], strides = [1, 1]} : vector<16x512xf32> to vector<16x256xf32>
    %c0_43 = arith.constant 0 : index
    %c0_44 = arith.constant 0 : index
    %c0_45 = arith.constant 0 : index
    %45 = vector.load %arg2[%c0_43, %c0_44, %c0_45] : memref<1x4x32xf32, #tpu.memory_space<vmem>>, vector<1x4x32xf32>
    %46 = vector.shape_cast %45 : vector<1x4x32xf32> to vector<4x32xf32>
    %c0_46 = arith.constant 0 : index
    %c0_47 = arith.constant 0 : index
    %47 = vector.load %arg8[%c0_46, %c0_47] : memref<32x160xf32, #tpu.memory_space<vmem>>, vector<32x160xf32>
    %cst_48 = arith.constant dense<0.000000e+00> : vector<4x160xf32>
    %48 = tpu.matmul %46, %47, %cst_48 {dimension_numbers = #tpu.dot_dimension_numbers<[1], [0], [0], [1], [0, 0, 1, 1], [], []>} : vector<4x32xf32>, vector<32x160xf32>, vector<4x160xf32> -> vector<4x160xf32>
    %c0_49 = arith.constant 0 : index
    %c0_50 = arith.constant 0 : index
    %c0_51 = arith.constant 0 : index
    %49 = vector.load %arg7[%c0_49, %c0_50, %c0_51] : memref<5x16x4xf32, #tpu.memory_space<vmem>>, vector<1x16x4xf32>
    %50 = vector.shape_cast %49 : vector<1x16x4xf32> to vector<16x4xf32>
    %cst_52 = arith.constant dense<0.000000e+00> : vector<16x160xf32>
    %51 = tpu.matmul %50, %48, %cst_52 {dimension_numbers = #tpu.dot_dimension_numbers<[1], [0], [0], [1], [0, 0, 1, 1], [], []>} : vector<16x4xf32>, vector<4x160xf32>, vector<16x160xf32> -> vector<16x160xf32>
    %c0_53 = arith.constant 0 : index
    %c0_54 = arith.constant 0 : index
    %c0_55 = arith.constant 0 : index
    %52 = vector.load %arg9[%c0_53, %c0_54, %c0_55] : memref<5x160x512xf32, #tpu.memory_space<vmem>>, vector<1x160x512xf32>
    %53 = vector.shape_cast %52 : vector<1x160x512xf32> to vector<160x512xf32>
    %cst_56 = arith.constant dense<0.000000e+00> : vector<16x512xf32>
    %54 = tpu.matmul %51, %53, %cst_56 {dimension_numbers = #tpu.dot_dimension_numbers<[1], [0], [0], [1], [0, 0, 1, 1], [], []>} : vector<16x160xf32>, vector<160x512xf32>, vector<16x512xf32> -> vector<16x512xf32>
    %c1_57 = arith.constant 1 : index
    %c0_58 = arith.constant 0 : index
    %c0_59 = arith.constant 0 : index
    %55 = vector.load %arg7[%c1_57, %c0_58, %c0_59] : memref<5x16x4xf32, #tpu.memory_space<vmem>>, vector<1x16x4xf32>
    %56 = vector.shape_cast %55 : vector<1x16x4xf32> to vector<16x4xf32>
    %cst_60 = arith.constant dense<0.000000e+00> : vector<16x160xf32>
    %57 = tpu.matmul %56, %48, %cst_60 {dimension_numbers = #tpu.dot_dimension_numbers<[1], [0], [0], [1], [0, 0, 1, 1], [], []>} : vector<16x4xf32>, vector<4x160xf32>, vector<16x160xf32> -> vector<16x160xf32>
    %c1_61 = arith.constant 1 : index
    %c0_62 = arith.constant 0 : index
    %c0_63 = arith.constant 0 : index
    %58 = vector.load %arg9[%c1_61, %c0_62, %c0_63] : memref<5x160x512xf32, #tpu.memory_space<vmem>>, vector<1x160x512xf32>
    %59 = vector.shape_cast %58 : vector<1x160x512xf32> to vector<160x512xf32>
    %cst_64 = arith.constant dense<0.000000e+00> : vector<16x512xf32>
    %60 = tpu.matmul %57, %59, %cst_64 {dimension_numbers = #tpu.dot_dimension_numbers<[1], [0], [0], [1], [0, 0, 1, 1], [], []>} : vector<16x160xf32>, vector<160x512xf32>, vector<16x512xf32> -> vector<16x512xf32>
    %61 = arith.addf %54, %60 : vector<16x512xf32>
    %c2_65 = arith.constant 2 : index
    %c0_66 = arith.constant 0 : index
    %c0_67 = arith.constant 0 : index
    %62 = vector.load %arg7[%c2_65, %c0_66, %c0_67] : memref<5x16x4xf32, #tpu.memory_space<vmem>>, vector<1x16x4xf32>
    %63 = vector.shape_cast %62 : vector<1x16x4xf32> to vector<16x4xf32>
    %cst_68 = arith.constant dense<0.000000e+00> : vector<16x160xf32>
    %64 = tpu.matmul %63, %48, %cst_68 {dimension_numbers = #tpu.dot_dimension_numbers<[1], [0], [0], [1], [0, 0, 1, 1], [], []>} : vector<16x4xf32>, vector<4x160xf32>, vector<16x160xf32> -> vector<16x160xf32>
    %c2_69 = arith.constant 2 : index
    %c0_70 = arith.constant 0 : index
    %c0_71 = arith.constant 0 : index
    %65 = vector.load %arg9[%c2_69, %c0_70, %c0_71] : memref<5x160x512xf32, #tpu.memory_space<vmem>>, vector<1x160x512xf32>
    %66 = vector.shape_cast %65 : vector<1x160x512xf32> to vector<160x512xf32>
    %cst_72 = arith.constant dense<0.000000e+00> : vector<16x512xf32>
    %67 = tpu.matmul %64, %66, %cst_72 {dimension_numbers = #tpu.dot_dimension_numbers<[1], [0], [0], [1], [0, 0, 1, 1], [], []>} : vector<16x160xf32>, vector<160x512xf32>, vector<16x512xf32> -> vector<16x512xf32>
    %68 = arith.addf %61, %67 : vector<16x512xf32>
    %c3_73 = arith.constant 3 : index
    %c0_74 = arith.constant 0 : index
    %c0_75 = arith.constant 0 : index
    %69 = vector.load %arg7[%c3_73, %c0_74, %c0_75] : memref<5x16x4xf32, #tpu.memory_space<vmem>>, vector<1x16x4xf32>
    %70 = vector.shape_cast %69 : vector<1x16x4xf32> to vector<16x4xf32>
    %cst_76 = arith.constant dense<0.000000e+00> : vector<16x160xf32>
    %71 = tpu.matmul %70, %48, %cst_76 {dimension_numbers = #tpu.dot_dimension_numbers<[1], [0], [0], [1], [0, 0, 1, 1], [], []>} : vector<16x4xf32>, vector<4x160xf32>, vector<16x160xf32> -> vector<16x160xf32>
    %c3_77 = arith.constant 3 : index
    %c0_78 = arith.constant 0 : index
    %c0_79 = arith.constant 0 : index
    %72 = vector.load %arg9[%c3_77, %c0_78, %c0_79] : memref<5x160x512xf32, #tpu.memory_space<vmem>>, vector<1x160x512xf32>
    %73 = vector.shape_cast %72 : vector<1x160x512xf32> to vector<160x512xf32>
    %cst_80 = arith.constant dense<0.000000e+00> : vector<16x512xf32>
    %74 = tpu.matmul %71, %73, %cst_80 {dimension_numbers = #tpu.dot_dimension_numbers<[1], [0], [0], [1], [0, 0, 1, 1], [], []>} : vector<16x160xf32>, vector<160x512xf32>, vector<16x512xf32> -> vector<16x512xf32>
    %75 = arith.addf %68, %74 : vector<16x512xf32>
    %c4_81 = arith.constant 4 : index
    %c0_82 = arith.constant 0 : index
    %c0_83 = arith.constant 0 : index
    %76 = vector.load %arg7[%c4_81, %c0_82, %c0_83] : memref<5x16x4xf32, #tpu.memory_space<vmem>>, vector<1x16x4xf32>
    %77 = vector.shape_cast %76 : vector<1x16x4xf32> to vector<16x4xf32>
    %cst_84 = arith.constant dense<0.000000e+00> : vector<16x160xf32>
    %78 = tpu.matmul %77, %48, %cst_84 {dimension_numbers = #tpu.dot_dimension_numbers<[1], [0], [0], [1], [0, 0, 1, 1], [], []>} : vector<16x4xf32>, vector<4x160xf32>, vector<16x160xf32> -> vector<16x160xf32>
    %c4_85 = arith.constant 4 : index
    %c0_86 = arith.constant 0 : index
    %c0_87 = arith.constant 0 : index
    %79 = vector.load %arg9[%c4_85, %c0_86, %c0_87] : memref<5x160x512xf32, #tpu.memory_space<vmem>>, vector<1x160x512xf32>
    %80 = vector.shape_cast %79 : vector<1x160x512xf32> to vector<160x512xf32>
    %cst_88 = arith.constant dense<0.000000e+00> : vector<16x512xf32>
    %81 = tpu.matmul %78, %80, %cst_88 {dimension_numbers = #tpu.dot_dimension_numbers<[1], [0], [0], [1], [0, 0, 1, 1], [], []>} : vector<16x160xf32>, vector<160x512xf32>, vector<16x512xf32> -> vector<16x512xf32>
    %82 = arith.addf %75, %81 : vector<16x512xf32>
    %83 = vector.extract_strided_slice %82 {offsets = [0, 0], sizes = [16, 256], strides = [1, 1]} : vector<16x512xf32> to vector<16x256xf32>
    %c0_89 = arith.constant 0 : index
    %c0_90 = arith.constant 0 : index
    %84 = vector.load %arg10[%c0_89, %c0_90] : memref<1x256xf32, #tpu.memory_space<vmem>>, vector<1x256xf32>
    %85 = vector.broadcast %84 : vector<1x256xf32> to vector<16x256xf32>
    %86 = arith.addf %83, %85 : vector<16x256xf32>
    %cst_91 = arith.constant 0.000000e+00 : f32
    %87 = vector.broadcast %cst_91 : f32 to vector<16x256xf32>
    %88 = arith.maximumf %86, %87 : vector<16x256xf32>
    %89 = vector.extract_strided_slice %82 {offsets = [0, 256], sizes = [16, 256], strides = [1, 1]} : vector<16x512xf32> to vector<16x256xf32>
    %90 = tpu.concatenate %43, %88 in 1 : vector<16x256xf32>, vector<16x256xf32> -> vector<16x512xf32>
    %91 = tpu.concatenate %44, %89 in 1 : vector<16x256xf32>, vector<16x256xf32> -> vector<16x512xf32>
    %c1_92 = arith.constant 1 : index
    %c0_93 = arith.constant 0 : index
    %c0_94 = arith.constant 0 : index
    %92 = vector.load %arg11[%c1_92, %c0_93, %c0_94] : memref<5x16x16xf32, #tpu.memory_space<vmem>>, vector<1x16x16xf32>
    %93 = vector.shape_cast %92 : vector<1x16x16xf32> to vector<16x16xf32>
    %cst_95 = arith.constant dense<0.000000e+00> : vector<16x512xf32>
    %94 = tpu.matmul %93, %90, %cst_95 {dimension_numbers = #tpu.dot_dimension_numbers<[1], [0], [0], [1], [0, 0, 1, 1], [], []>} : vector<16x16xf32>, vector<16x512xf32>, vector<16x512xf32> -> vector<16x512xf32>
    %c0_96 = arith.constant 0 : index
    %c0_97 = arith.constant 0 : index
    %c0_98 = arith.constant 0 : index
    %95 = vector.load %arg12[%c0_96, %c0_97, %c0_98] : memref<3x512x512xf32, #tpu.memory_space<vmem>>, vector<1x512x512xf32>
    %96 = vector.shape_cast %95 : vector<1x512x512xf32> to vector<512x512xf32>
    %cst_99 = arith.constant dense<0.000000e+00> : vector<16x512xf32>
    %97 = tpu.matmul %94, %96, %cst_99 {dimension_numbers = #tpu.dot_dimension_numbers<[1], [0], [0], [1], [0, 0, 1, 1], [], []>} : vector<16x512xf32>, vector<512x512xf32>, vector<16x512xf32> -> vector<16x512xf32>
    %c1_100 = arith.constant 1 : index
    %c0_101 = arith.constant 0 : index
    %c0_102 = arith.constant 0 : index
    %98 = vector.load %arg12[%c1_100, %c0_101, %c0_102] : memref<3x512x512xf32, #tpu.memory_space<vmem>>, vector<1x512x512xf32>
    %99 = vector.shape_cast %98 : vector<1x512x512xf32> to vector<512x512xf32>
    %cst_103 = arith.constant dense<0.000000e+00> : vector<16x512xf32>
    %100 = tpu.matmul %90, %99, %cst_103 {dimension_numbers = #tpu.dot_dimension_numbers<[1], [0], [0], [1], [0, 0, 1, 1], [], []>} : vector<16x512xf32>, vector<512x512xf32>, vector<16x512xf32> -> vector<16x512xf32>
    %101 = arith.addf %97, %100 : vector<16x512xf32>
    %c3_104 = arith.constant 3 : index
    %c0_105 = arith.constant 0 : index
    %c0_106 = arith.constant 0 : index
    %102 = vector.load %arg11[%c3_104, %c0_105, %c0_106] : memref<5x16x16xf32, #tpu.memory_space<vmem>>, vector<1x16x16xf32>
    %103 = vector.shape_cast %102 : vector<1x16x16xf32> to vector<16x16xf32>
    %cst_107 = arith.constant dense<0.000000e+00> : vector<16x512xf32>
    %104 = tpu.matmul %103, %90, %cst_107 {dimension_numbers = #tpu.dot_dimension_numbers<[1], [0], [0], [1], [0, 0, 1, 1], [], []>} : vector<16x16xf32>, vector<16x512xf32>, vector<16x512xf32> -> vector<16x512xf32>
    %c2_108 = arith.constant 2 : index
    %c0_109 = arith.constant 0 : index
    %c0_110 = arith.constant 0 : index
    %105 = vector.load %arg12[%c2_108, %c0_109, %c0_110] : memref<3x512x512xf32, #tpu.memory_space<vmem>>, vector<1x512x512xf32>
    %106 = vector.shape_cast %105 : vector<1x512x512xf32> to vector<512x512xf32>
    %cst_111 = arith.constant dense<0.000000e+00> : vector<16x512xf32>
    %107 = tpu.matmul %104, %106, %cst_111 {dimension_numbers = #tpu.dot_dimension_numbers<[1], [0], [0], [1], [0, 0, 1, 1], [], []>} : vector<16x512xf32>, vector<512x512xf32>, vector<16x512xf32> -> vector<16x512xf32>
    %108 = arith.addf %101, %107 : vector<16x512xf32>
    %109 = arith.addf %108, %91 : vector<16x512xf32>
    %c0_112 = arith.constant 0 : index
    %c0_113 = arith.constant 0 : index
    %110 = vector.load %arg13[%c0_112, %c0_113] : memref<1x512xf32, #tpu.memory_space<vmem>>, vector<1x512xf32>
    %111 = vector.broadcast %110 : vector<1x512xf32> to vector<16x512xf32>
    %112 = arith.addf %109, %111 : vector<16x512xf32>
    %cst_114 = arith.constant 0.000000e+00 : f32
    %113 = vector.broadcast %cst_114 : f32 to vector<16x512xf32>
    %114 = arith.maximumf %112, %113 : vector<16x512xf32>
    %c0_115 = arith.constant 0 : index
    %c0_116 = arith.constant 0 : index
    %c0_117 = arith.constant 0 : index
    %115 = vector.load %arg11[%c0_115, %c0_116, %c0_117] : memref<5x16x16xf32, #tpu.memory_space<vmem>>, vector<1x16x16xf32>
    %116 = vector.shape_cast %115 : vector<1x16x16xf32> to vector<16x16xf32>
    %cst_118 = arith.constant dense<0.000000e+00> : vector<16x512xf32>
    %117 = tpu.matmul %116, %114, %cst_118 {dimension_numbers = #tpu.dot_dimension_numbers<[1], [0], [0], [1], [0, 0, 1, 1], [], []>} : vector<16x16xf32>, vector<16x512xf32>, vector<16x512xf32> -> vector<16x512xf32>
    %c0_119 = arith.constant 0 : index
    %c0_120 = arith.constant 0 : index
    %c0_121 = arith.constant 0 : index
    %118 = vector.load %arg14[%c0_119, %c0_120, %c0_121] : memref<5x512x512xf32, #tpu.memory_space<vmem>>, vector<1x512x512xf32>
    %119 = vector.shape_cast %118 : vector<1x512x512xf32> to vector<512x512xf32>
    %cst_122 = arith.constant dense<0.000000e+00> : vector<16x512xf32>
    %120 = tpu.matmul %117, %119, %cst_122 {dimension_numbers = #tpu.dot_dimension_numbers<[1], [0], [0], [1], [0, 0, 1, 1], [], []>} : vector<16x512xf32>, vector<512x512xf32>, vector<16x512xf32> -> vector<16x512xf32>
    %c1_123 = arith.constant 1 : index
    %c0_124 = arith.constant 0 : index
    %c0_125 = arith.constant 0 : index
    %121 = vector.load %arg11[%c1_123, %c0_124, %c0_125] : memref<5x16x16xf32, #tpu.memory_space<vmem>>, vector<1x16x16xf32>
    %122 = vector.shape_cast %121 : vector<1x16x16xf32> to vector<16x16xf32>
    %cst_126 = arith.constant dense<0.000000e+00> : vector<16x512xf32>
    %123 = tpu.matmul %122, %114, %cst_126 {dimension_numbers = #tpu.dot_dimension_numbers<[1], [0], [0], [1], [0, 0, 1, 1], [], []>} : vector<16x16xf32>, vector<16x512xf32>, vector<16x512xf32> -> vector<16x512xf32>
    %c1_127 = arith.constant 1 : index
    %c0_128 = arith.constant 0 : index
    %c0_129 = arith.constant 0 : index
    %124 = vector.load %arg14[%c1_127, %c0_128, %c0_129] : memref<5x512x512xf32, #tpu.memory_space<vmem>>, vector<1x512x512xf32>
    %125 = vector.shape_cast %124 : vector<1x512x512xf32> to vector<512x512xf32>
    %cst_130 = arith.constant dense<0.000000e+00> : vector<16x512xf32>
    %126 = tpu.matmul %123, %125, %cst_130 {dimension_numbers = #tpu.dot_dimension_numbers<[1], [0], [0], [1], [0, 0, 1, 1], [], []>} : vector<16x512xf32>, vector<512x512xf32>, vector<16x512xf32> -> vector<16x512xf32>
    %127 = arith.addf %120, %126 : vector<16x512xf32>
    %c2_131 = arith.constant 2 : index
    %c0_132 = arith.constant 0 : index
    %c0_133 = arith.constant 0 : index
    %128 = vector.load %arg14[%c2_131, %c0_132, %c0_133] : memref<5x512x512xf32, #tpu.memory_space<vmem>>, vector<1x512x512xf32>
    %129 = vector.shape_cast %128 : vector<1x512x512xf32> to vector<512x512xf32>
    %cst_134 = arith.constant dense<0.000000e+00> : vector<16x512xf32>
    %130 = tpu.matmul %114, %129, %cst_134 {dimension_numbers = #tpu.dot_dimension_numbers<[1], [0], [0], [1], [0, 0, 1, 1], [], []>} : vector<16x512xf32>, vector<512x512xf32>, vector<16x512xf32> -> vector<16x512xf32>
    %131 = arith.addf %127, %130 : vector<16x512xf32>
    %c3_135 = arith.constant 3 : index
    %c0_136 = arith.constant 0 : index
    %c0_137 = arith.constant 0 : index
    %132 = vector.load %arg11[%c3_135, %c0_136, %c0_137] : memref<5x16x16xf32, #tpu.memory_space<vmem>>, vector<1x16x16xf32>
    %133 = vector.shape_cast %132 : vector<1x16x16xf32> to vector<16x16xf32>
    %cst_138 = arith.constant dense<0.000000e+00> : vector<16x512xf32>
    %134 = tpu.matmul %133, %114, %cst_138 {dimension_numbers = #tpu.dot_dimension_numbers<[1], [0], [0], [1], [0, 0, 1, 1], [], []>} : vector<16x16xf32>, vector<16x512xf32>, vector<16x512xf32> -> vector<16x512xf32>
    %c3_139 = arith.constant 3 : index
    %c0_140 = arith.constant 0 : index
    %c0_141 = arith.constant 0 : index
    %135 = vector.load %arg14[%c3_139, %c0_140, %c0_141] : memref<5x512x512xf32, #tpu.memory_space<vmem>>, vector<1x512x512xf32>
    %136 = vector.shape_cast %135 : vector<1x512x512xf32> to vector<512x512xf32>
    %cst_142 = arith.constant dense<0.000000e+00> : vector<16x512xf32>
    %137 = tpu.matmul %134, %136, %cst_142 {dimension_numbers = #tpu.dot_dimension_numbers<[1], [0], [0], [1], [0, 0, 1, 1], [], []>} : vector<16x512xf32>, vector<512x512xf32>, vector<16x512xf32> -> vector<16x512xf32>
    %138 = arith.addf %131, %137 : vector<16x512xf32>
    %c4_143 = arith.constant 4 : index
    %c0_144 = arith.constant 0 : index
    %c0_145 = arith.constant 0 : index
    %139 = vector.load %arg11[%c4_143, %c0_144, %c0_145] : memref<5x16x16xf32, #tpu.memory_space<vmem>>, vector<1x16x16xf32>
    %140 = vector.shape_cast %139 : vector<1x16x16xf32> to vector<16x16xf32>
    %cst_146 = arith.constant dense<0.000000e+00> : vector<16x512xf32>
    %141 = tpu.matmul %140, %114, %cst_146 {dimension_numbers = #tpu.dot_dimension_numbers<[1], [0], [0], [1], [0, 0, 1, 1], [], []>} : vector<16x16xf32>, vector<16x512xf32>, vector<16x512xf32> -> vector<16x512xf32>
    %c4_147 = arith.constant 4 : index
    %c0_148 = arith.constant 0 : index
    %c0_149 = arith.constant 0 : index
    %142 = vector.load %arg14[%c4_147, %c0_148, %c0_149] : memref<5x512x512xf32, #tpu.memory_space<vmem>>, vector<1x512x512xf32>
    %143 = vector.shape_cast %142 : vector<1x512x512xf32> to vector<512x512xf32>
    %cst_150 = arith.constant dense<0.000000e+00> : vector<16x512xf32>
    %144 = tpu.matmul %141, %143, %cst_150 {dimension_numbers = #tpu.dot_dimension_numbers<[1], [0], [0], [1], [0, 0, 1, 1], [], []>} : vector<16x512xf32>, vector<512x512xf32>, vector<16x512xf32> -> vector<16x512xf32>
    %145 = arith.addf %138, %144 : vector<16x512xf32>
    %c0_151 = arith.constant 0 : index
    %c0_152 = arith.constant 0 : index
    %146 = vector.load %arg15[%c0_151, %c0_152] : memref<1x512xf32, #tpu.memory_space<vmem>>, vector<1x512xf32>
    %147 = vector.broadcast %146 : vector<1x512xf32> to vector<16x512xf32>
    %148 = arith.addf %145, %147 : vector<16x512xf32>
    %cst_153 = arith.constant 0.000000e+00 : f32
    %149 = vector.broadcast %cst_153 : f32 to vector<16x512xf32>
    %150 = arith.maximumf %148, %149 : vector<16x512xf32>
    %c0_154 = arith.constant 0 : index
    %c0_155 = arith.constant 0 : index
    %c0_156 = arith.constant 0 : index
    %151 = vector.load %arg16[%c0_154, %c0_155, %c0_156] : memref<1x16x512xf32, #tpu.memory_space<vmem>>, vector<1x16x512xf32>
    %152 = vector.shape_cast %151 : vector<1x16x512xf32> to vector<16x512xf32>
    %153 = vector.shape_cast %150 : vector<16x512xf32> to vector<1x16x512xf32>
    tpu.vector_store %arg16[%c0_154, %c0_155, %c0_156], %153 {strides = array<i32>} : memref<1x16x512xf32, #tpu.memory_space<vmem>>, vector<1x16x512xf32>,
    return
  }
  func.func @transform_0(%arg0: i32) -> (i32, i32, i32) {
    %c0_i32 = arith.constant 0 : i32
    %c0_i32_0 = arith.constant 0 : i32
    %c0_i32_1 = arith.constant 0 : i32
    return %arg0, %c0_i32, %c0_i32_0 : i32, i32, i32
  }
  func.func @transform_1(%arg0: i32) -> (i32, i32, i32) {
    %c0_i32 = arith.constant 0 : i32
    %c0_i32_0 = arith.constant 0 : i32
    %c0_i32_1 = arith.constant 0 : i32
    return %arg0, %c0_i32, %c0_i32_0 : i32, i32, i32
  }
  func.func @transform_2(%arg0: i32) -> (i32, i32, i32) {
    %c0_i32 = arith.constant 0 : i32
    %c0_i32_0 = arith.constant 0 : i32
    %c0_i32_1 = arith.constant 0 : i32
    %c0_i32_2 = arith.constant 0 : i32
    return %c0_i32, %c0_i32_0, %c0_i32_1 : i32, i32, i32
  }
  func.func @transform_3(%arg0: i32) -> (i32, i32) {
    %c0_i32 = arith.constant 0 : i32
    %c0_i32_0 = arith.constant 0 : i32
    %c0_i32_1 = arith.constant 0 : i32
    return %c0_i32, %c0_i32_0 : i32, i32
  }
  func.func @transform_4(%arg0: i32) -> (i32, i32, i32) {
    %c0_i32 = arith.constant 0 : i32
    %c0_i32_0 = arith.constant 0 : i32
    %c0_i32_1 = arith.constant 0 : i32
    %c0_i32_2 = arith.constant 0 : i32
    return %c0_i32, %c0_i32_0, %c0_i32_1 : i32, i32, i32
  }
  func.func @transform_5(%arg0: i32) -> (i32, i32) {
    %c0_i32 = arith.constant 0 : i32
    %c0_i32_0 = arith.constant 0 : i32
    %c0_i32_1 = arith.constant 0 : i32
    return %c0_i32, %c0_i32_0 : i32, i32
  }
  func.func @transform_6(%arg0: i32) -> (i32, i32, i32) {
    %c0_i32 = arith.constant 0 : i32
    %c0_i32_0 = arith.constant 0 : i32
    %c0_i32_1 = arith.constant 0 : i32
    %c0_i32_2 = arith.constant 0 : i32
    return %c0_i32, %c0_i32_0, %c0_i32_1 : i32, i32, i32
  }
  func.func @transform_7(%arg0: i32) -> (i32, i32) {
    %c0_i32 = arith.constant 0 : i32
    %c0_i32_0 = arith.constant 0 : i32
    %c0_i32_1 = arith.constant 0 : i32
    return %c0_i32, %c0_i32_0 : i32, i32
  }
  func.func @transform_8(%arg0: i32) -> (i32, i32, i32) {
    %c0_i32 = arith.constant 0 : i32
    %c0_i32_0 = arith.constant 0 : i32
    %c0_i32_1 = arith.constant 0 : i32
    %c0_i32_2 = arith.constant 0 : i32
    return %c0_i32, %c0_i32_0, %c0_i32_1 : i32, i32, i32
  }
  func.func @transform_9(%arg0: i32) -> (i32, i32) {
    %c0_i32 = arith.constant 0 : i32
    %c0_i32_0 = arith.constant 0 : i32
    %c0_i32_1 = arith.constant 0 : i32
    return %c0_i32, %c0_i32_0 : i32, i32
  }
  func.func @transform_10(%arg0: i32) -> (i32, i32, i32) {
    %c0_i32 = arith.constant 0 : i32
    %c0_i32_0 = arith.constant 0 : i32
    %c0_i32_1 = arith.constant 0 : i32
    %c0_i32_2 = arith.constant 0 : i32
    return %c0_i32, %c0_i32_0, %c0_i32_1 : i32, i32, i32
  }
  func.func @transform_11(%arg0: i32) -> (i32, i32, i32) {
    %c0_i32 = arith.constant 0 : i32
    %c0_i32_0 = arith.constant 0 : i32
    %c0_i32_1 = arith.constant 0 : i32
    %c0_i32_2 = arith.constant 0 : i32
    return %c0_i32, %c0_i32_0, %c0_i32_1 : i32, i32, i32
  }
  func.func @transform_12(%arg0: i32) -> (i32, i32) {
    %c0_i32 = arith.constant 0 : i32
    %c0_i32_0 = arith.constant 0 : i32
    %c0_i32_1 = arith.constant 0 : i32
    return %c0_i32, %c0_i32_0 : i32, i32
  }
  func.func @transform_13(%arg0: i32) -> (i32, i32, i32) {
    %c0_i32 = arith.constant 0 : i32
    %c0_i32_0 = arith.constant 0 : i32
    %c0_i32_1 = arith.constant 0 : i32
    %c0_i32_2 = arith.constant 0 : i32
    return %c0_i32, %c0_i32_0, %c0_i32_1 : i32, i32, i32
  }
  func.func @transform_14(%arg0: i32) -> (i32, i32) {
    %c0_i32 = arith.constant 0 : i32
    %c0_i32_0 = arith.constant 0 : i32
    %c0_i32_1 = arith.constant 0 : i32
    return %c0_i32, %c0_i32_0 : i32, i32
  }
  func.func @transform_15(%arg0: i32) -> (i32, i32, i32) {
    %c0_i32 = arith.constant 0 : i32
    %c0_i32_0 = arith.constant 0 : i32
    %c0_i32_1 = arith.constant 0 : i32
    return %arg0, %c0_i32, %c0_i32_0 : i32, i32, i32
  }
}

</mosaic_0001>

<llo_original>
// kernel: tpu_custom_call.1
$region0: #{tpu_custom_call.1}
  #allocation0 [shape = 'u32[]', space=smem, size = 0x4, offset = 0x4, fixed_abs, tag = 'smem constant byte address 0x4 - core index']
  #allocation1 [shape = 'u32[144,128]{1,0:T(1,128)}', space=vmem, size = 0x12000, scoped, tag = 'internal scratch']
  %s0 = inlined_call_operand.hbm [shape: f32[2,8,32], index: 0, kind: input, shape index: {}]
  %s1 = inlined_call_operand.hbm [shape: f32[2,4,32], index: 1, kind: input, shape index: {}]
  %s2 = inlined_call_operand.vmem [shape: f32[5,16,8], index: 2, kind: input, shape index: {}]
  %s3 = inlined_call_operand.hbm [shape: f32[32,80], index: 3, kind: input, shape index: {}]
  %s4 = inlined_call_operand.hbm [shape: f32[5,80,512], index: 4, kind: input, shape index: {}]
  %s5 = inlined_call_operand.hbm [shape: f32[1,256], index: 5, kind: input, shape index: {}]
  %s6 = inlined_call_operand.vmem [shape: f32[5,16,4], index: 6, kind: input, shape index: {}]
  %s7 = inlined_call_operand.hbm [shape: f32[32,160], index: 7, kind: input, shape index: {}]
  %s8 = inlined_call_operand.hbm [shape: f32[5,160,512], index: 8, kind: input, shape index: {}]
  %s9 = inlined_call_operand.hbm [shape: f32[1,256], index: 9, kind: input, shape index: {}]
  %s10 = inlined_call_operand.hbm [shape: f32[5,16,16], index: 10, kind: input, shape index: {}]
  %s11 = inlined_call_operand.hbm [shape: f32[3,512,512], index: 11, kind: input, shape index: {}]
  %s12 = inlined_call_operand.hbm [shape: f32[1,512], index: 12, kind: input, shape index: {}]
  %s13 = inlined_call_operand.hbm [shape: f32[5,512,512], index: 13, kind: input, shape index: {}]
  %s14 = inlined_call_operand.hbm [shape: f32[1,512], index: 14, kind: input, shape index: {}]
  %s15 = inlined_call_operand.hbm [shape: f32[2,16,512], index: 15, kind: output, shape index: {}]
  %s16 = sld [smem:[#allocation0]]
  $region145: #{tpu_custom_call.1} parent=0
    _
  %s18 = ssub.s32 1, %s16
  %s19 = scalar_select 0, %s18, %s16
  $region1: #{tpu_custom_call.1} parent=0
    #allocation2 [shape = 'u8[8192]{0}', space=vmem, size = 0x2000, scoped, tag = 'input window, operand 0']
    #allocation3 [shape = 's32[2]{0}', space=sflag, size = 0x8, scoped, tag = 'scoped memory for tpu_custom_call.1']
    #allocation4 [shape = 's32[2]{0}', space=sflag, size = 0x8, scoped, tag = 'scoped memory for tpu_custom_call.1']
    #allocation5 [shape = 'u8[4096]{0}', space=vmem, size = 0x1000, scoped, tag = 'input window, operand 1']
    #allocation6 [shape = 's32[2]{0}', space=sflag, size = 0x8, scoped, tag = 'scoped memory for tpu_custom_call.1']
    #allocation7 [shape = 'u8[16384]{0}', space=vmem, size = 0x4000, scoped, tag = 'input window, operand 3, single buffered']
    #allocation8 [shape = 'u8[819200]{0}', space=vmem, size = 0xc8000, scoped, tag = 'input window, operand 4, single buffered']
    #allocation9 [shape = 's32[1]{0}', space=sflag, size = 0x4, scoped, tag = 'scoped memory for tpu_custom_call.1']
    #allocation10 [shape = 'u8[1024]{0}', space=vmem, size = 0x400, scoped, tag = 'input window, operand 5, single buffered']
    #allocation11 [shape = 'u8[32768]{0}', space=vmem, size = 0x8000, scoped, tag = 'input window, operand 7, single buffered']
    #allocation12 [shape = 's32[1]{0}', space=sflag, size = 0x4, scoped, tag = 'scoped memory for tpu_custom_call.1']
    #allocation13 [shape = 'u8[1638400]{0}', space=vmem, size = 0x190000, scoped, tag = 'input window, operand 8, single buffered']
    #allocation14 [shape = 'u8[1024]{0}', space=vmem, size = 0x400, scoped, tag = 'input window, operand 9, single buffered']
    #allocation15 [shape = 's32[1]{0}', space=sflag, size = 0x4, scoped, tag = 'scoped memory for tpu_custom_call.1']
    #allocation16 [shape = 'u8[40960]{0}', space=vmem, size = 0xa000, scoped, tag = 'input window, operand 10, single buffered']
    #allocation17 [shape = 'u8[3145728]{0}', space=vmem, size = 0x300000, scoped, tag = 'input window, operand 11, single buffered']
    #allocation18 [shape = 's32[1]{0}', space=sflag, size = 0x4, scoped, tag = 'scoped memory for tpu_custom_call.1']
    #allocation19 [shape = 'u8[2048]{0}', space=vmem, size = 0x800, scoped, tag = 'input window, operand 12, single buffered']
    #allocation20 [shape = 'u8[5242880]{0}', space=vmem, size = 0x500000, scoped, tag = 'input window, operand 13, single buffered']
    #allocation21 [shape = 's32[1]{0}', space=sflag, size = 0x4, scoped, tag = 'scoped memory for tpu_custom_call.1']
    #allocation22 [shape = 'u8[2048]{0}', space=vmem, size = 0x800, scoped, tag = 'input window, operand 14, single buffered']
    #allocation23 [shape = 'u8[65536]{0}', space=vmem, size = 0x10000, scoped, tag = 'output window, operand 0']
    %20 = vsyncpa [#allocation3], 0
    %s21 = scalar_lea.sflag [#allocation3], 1
    %22 = vsyncpa %s21, 0
    %23 = vsyncpa [#allocation6], 0
    %s24 = scalar_lea.sflag [#allocation6], 1
    %25 = vsyncpa %s24, 0
    %26 = vsyncpa [#allocation9], 0
    %27 = vsyncpa [#allocation12], 0
    %28 = vsyncpa [#allocation15], 0
    %29 = vsyncpa [#allocation18], 0
    %30 = vsyncpa [#allocation21], 0
    %31 = vsyncpa [#allocation4], 0
    %s32 = scalar_lea.sflag [#allocation4], 1
    %33 = vsyncpa %s32, 0
    loop: start=0, step=1, limit=4
    $region2: #{tpu_custom_call.1} parent=1 // loop_pre_header
      _
    $region3: #{tpu_custom_call.1} parent=1 // loop_header
      %s35 = sphi 0, %s39
      %p36 = scmp.ge.s32.totalorder %s35, 4
      %s45 = sphi 0, %s47
      %s48 = sphi 0, %s45
      %s49 = sphi 0, %s48
      %s65 = sphi 0, %s49
      %s71 = sphi 0, %s73
      %s74 = sphi 0, %s71
      %s75 = sphi 0, %s74
      %s91 = sphi 0, %s75
      %s95 = sphi 0, %s95
      %s97 = sphi 0, %s95
      %s98 = sphi 0, %s97
      %s112 = sphi 0, %s98
      %s116 = sphi 0, %s116
      %s118 = sphi 0, %s116
      %s119 = sphi 0, %s118
      %s133 = sphi 0, %s119
      %s137 = sphi 0, %s137
      %s139 = sphi 0, %s137
      %s140 = sphi 0, %s139
      %s154 = sphi 0, %s140
      %s158 = sphi 0, %s158
      %s160 = sphi 0, %s158
      %s161 = sphi 0, %s160
      %s175 = sphi 0, %s161
      %s179 = sphi 0, %s179
      %s181 = sphi 0, %s179
      %s182 = sphi 0, %s181
      %s196 = sphi 0, %s182
      %s200 = sphi 0, %s200
      %s202 = sphi 0, %s200
      %s203 = sphi 0, %s202
      %s217 = sphi 0, %s203
      %s221 = sphi 0, %s221
      %s223 = sphi 0, %s221
      %s224 = sphi 0, %s223
      %s238 = sphi 0, %s224
      %s242 = sphi 0, %s242
      %s244 = sphi 0, %s242
      %s245 = sphi 0, %s244
      %s259 = sphi 0, %s245
      %s263 = sphi 0, %s263
      %s265 = sphi 0, %s263
      %s266 = sphi 0, %s265
      %s280 = sphi 0, %s266
      %s284 = sphi 0, %s284
      %s286 = sphi 0, %s284
      %s287 = sphi 0, %s286
      %s301 = sphi 0, %s287
      %s305 = sphi 0, %s305
      %s307 = sphi 0, %s305
      %s308 = sphi 0, %s307
      %s322 = sphi 0, %s308
      %s326 = sphi 0, %s326
      %s328 = sphi 0, %s326
      %s329 = sphi 0, %s328
      %s343 = sphi 0, %s329
      %s347 = sphi 0, %s347
      %s349 = sphi 0, %s347
      %s350 = sphi 0, %s349
      %s364 = sphi 0, %s350
      %s370 = sphi 0, %s372
      %s373 = sphi 0, %s370
      %s374 = sphi 0, %s373
      %s390 = sphi 0, %s374
    $region4: #{tpu_custom_call.1} parent=1 // loop_header_branch
      %38 = sbr.rel (%p36) target = $region8
    $region5: #{tpu_custom_call.1} parent=1 // loop_body
      %s40 = ssub.s32 %s35, 1
      %s41 = ssub.s32 %s35, 2
      %s42 = sadd.s32 %s35, 1
      %s43 = ssub.s32 %s35, %s42
      %p44 = scmp.eq.s32.totalorder %s43, 0
      %s46 = sadd.s32 %s45, 1
      %s47 = scalar_select %p44, %s45, %s46
      %p50 = pneg %p44
      %p51 = scmp.eq.s32.totalorder %s35, 1
      %p52 = por %p50, %p51
      %p53 = scmp.ne.s32.totalorder %s45, %s48
      %p54 = scmp.eq.s32.totalorder %s35, 0
      %p55 = por %p53, %p54
      %p56 = scmp.ne.s32.totalorder %s45, %s48
      %p57 = scmp.eq.s32.totalorder %s40, 1
      %p58 = por %p56, %p57
      %p59 = scmp.ne.s32.totalorder %s48, %s49
      %p60 = scmp.eq.s32.totalorder %s40, 0
      %p61 = por %p59, %p60
      %p62 = scmp.ne.s32.totalorder %s48, %s49
      %p63 = scmp.eq.s32.totalorder %s41, 1
      %p64 = por %p62, %p63
      %p66 = scmp.ne.s32.totalorder %s49, %s65
      %p67 = scmp.eq.s32.totalorder %s41, 0
      %p68 = por %p66, %p67
      %s69 = ssub.s32 %s35, %s42
      %p70 = scmp.eq.s32.totalorder %s69, 0
      %s72 = sadd.s32 %s71, 1
      %s73 = scalar_select %p70, %s71, %s72
      %p76 = pneg %p70
      %p77 = scmp.eq.s32.totalorder %s35, 1
      %p78 = por %p76, %p77
      %p79 = scmp.ne.s32.totalorder %s71, %s74
      %p80 = scmp.eq.s32.totalorder %s35, 0
      %p81 = por %p79, %p80
      %p82 = scmp.ne.s32.totalorder %s71, %s74
      %p83 = scmp.eq.s32.totalorder %s40, 1
      %p84 = por %p82, %p83
      %p85 = scmp.ne.s32.totalorder %s74, %s75
      %p86 = scmp.eq.s32.totalorder %s40, 0
      %p87 = por %p85, %p86
      %p88 = scmp.ne.s32.totalorder %s74, %s75
      %p89 = scmp.eq.s32.totalorder %s41, 1
      %p90 = por %p88, %p89
      %p92 = scmp.ne.s32.totalorder %s75, %s91
      %p93 = scmp.eq.s32.totalorder %s41, 0
      %p94 = por %p92, %p93
      %s96 = sadd.s32 %s95, 1
      %p99 = scmp.eq.s32.totalorder %s35, 1
      %p100 = scmp.ne.s32.totalorder %s95, %s97
      %p101 = scmp.eq.s32.totalorder %s35, 0
      %p102 = por %p100, %p101
      %p103 = scmp.ne.s32.totalorder %s95, %s97
      %p104 = scmp.eq.s32.totalorder %s40, 1
      %p105 = por %p103, %p104
      %p106 = scmp.ne.s32.totalorder %s97, %s98
      %p107 = scmp.eq.s32.totalorder %s40, 0
      %p108 = por %p106, %p107
      %p109 = scmp.ne.s32.totalorder %s97, %s98
      %p110 = scmp.eq.s32.totalorder %s41, 1
      %p111 = por %p109, %p110
      %p113 = scmp.ne.s32.totalorder %s98, %s112
      %p114 = scmp.eq.s32.totalorder %s41, 0
      %p115 = por %p113, %p114
      %s117 = sadd.s32 %s116, 1
      %p120 = scmp.eq.s32.totalorder %s35, 1
      %p121 = scmp.ne.s32.totalorder %s116, %s118
      %p122 = scmp.eq.s32.totalorder %s35, 0
      %p123 = por %p121, %p122
      %p124 = scmp.ne.s32.totalorder %s116, %s118
      %p125 = scmp.eq.s32.totalorder %s40, 1
      %p126 = por %p124, %p125
      %p127 = scmp.ne.s32.totalorder %s118, %s119
      %p128 = scmp.eq.s32.totalorder %s40, 0
      %p129 = por %p127, %p128
      %p130 = scmp.ne.s32.totalorder %s118, %s119
      %p131 = scmp.eq.s32.totalorder %s41, 1
      %p132 = por %p130, %p131
      %p134 = scmp.ne.s32.totalorder %s119, %s133
      %p135 = scmp.eq.s32.totalorder %s41, 0
      %p136 = por %p134, %p135
      %s138 = sadd.s32 %s137, 1
      %p141 = scmp.eq.s32.totalorder %s35, 1
      %p142 = scmp.ne.s32.totalorder %s137, %s139
      %p143 = scmp.eq.s32.totalorder %s35, 0
      %p144 = por %p142, %p143
      %p145 = scmp.ne.s32.totalorder %s137, %s139
      %p146 = scmp.eq.s32.totalorder %s40, 1
      %p147 = por %p145, %p146
      %p148 = scmp.ne.s32.totalorder %s139, %s140
      %p149 = scmp.eq.s32.totalorder %s40, 0
      %p150 = por %p148, %p149
      %p151 = scmp.ne.s32.totalorder %s139, %s140
      %p152 = scmp.eq.s32.totalorder %s41, 1
      %p153 = por %p151, %p152
      %p155 = scmp.ne.s32.totalorder %s140, %s154
      %p156 = scmp.eq.s32.totalorder %s41, 0
      %p157 = por %p155, %p156
      %s159 = sadd.s32 %s158, 1
      %p162 = scmp.eq.s32.totalorder %s35, 1
      %p163 = scmp.ne.s32.totalorder %s158, %s160
      %p164 = scmp.eq.s32.totalorder %s35, 0
      %p165 = por %p163, %p164
      %p166 = scmp.ne.s32.totalorder %s158, %s160
      %p167 = scmp.eq.s32.totalorder %s40, 1
      %p168 = por %p166, %p167
      %p169 = scmp.ne.s32.totalorder %s160, %s161
      %p170 = scmp.eq.s32.totalorder %s40, 0
      %p171 = por %p169, %p170
      %p172 = scmp.ne.s32.totalorder %s160, %s161
      %p173 = scmp.eq.s32.totalorder %s41, 1
      %p174 = por %p172, %p173
      %p176 = scmp.ne.s32.totalorder %s161, %s175
      %p177 = scmp.eq.s32.totalorder %s41, 0
      %p178 = por %p176, %p177
      %s180 = sadd.s32 %s179, 1
      %p183 = scmp.eq.s32.totalorder %s35, 1
      %p184 = scmp.ne.s32.totalorder %s179, %s181
      %p185 = scmp.eq.s32.totalorder %s35, 0
      %p186 = por %p184, %p185
      %p187 = scmp.ne.s32.totalorder %s179, %s181
      %p188 = scmp.eq.s32.totalorder %s40, 1
      %p189 = por %p187, %p188
      %p190 = scmp.ne.s32.totalorder %s181, %s182
      %p191 = scmp.eq.s32.totalorder %s40, 0
      %p192 = por %p190, %p191
      %p193 = scmp.ne.s32.totalorder %s181, %s182
      %p194 = scmp.eq.s32.totalorder %s41, 1
      %p195 = por %p193, %p194
      %p197 = scmp.ne.s32.totalorder %s182, %s196
      %p198 = scmp.eq.s32.totalorder %s41, 0
      %p199 = por %p197, %p198
      %s201 = sadd.s32 %s200, 1
      %p204 = scmp.eq.s32.totalorder %s35, 1
      %p205 = scmp.ne.s32.totalorder %s200, %s202
      %p206 = scmp.eq.s32.totalorder %s35, 0
      %p207 = por %p205, %p206
      %p208 = scmp.ne.s32.totalorder %s200, %s202
      %p209 = scmp.eq.s32.totalorder %s40, 1
      %p210 = por %p208, %p209
      %p211 = scmp.ne.s32.totalorder %s202, %s203
      %p212 = scmp.eq.s32.totalorder %s40, 0
      %p213 = por %p211, %p212
      %p214 = scmp.ne.s32.totalorder %s202, %s203
      %p215 = scmp.eq.s32.totalorder %s41, 1
      %p216 = por %p214, %p215
      %p218 = scmp.ne.s32.totalorder %s203, %s217
      %p219 = scmp.eq.s32.totalorder %s41, 0
      %p220 = por %p218, %p219
      %s222 = sadd.s32 %s221, 1
      %p225 = scmp.eq.s32.totalorder %s35, 1
      %p226 = scmp.ne.s32.totalorder %s221, %s223
      %p227 = scmp.eq.s32.totalorder %s35, 0
      %p228 = por %p226, %p227
      %p229 = scmp.ne.s32.totalorder %s221, %s223
      %p230 = scmp.eq.s32.totalorder %s40, 1
      %p231 = por %p229, %p230
      %p232 = scmp.ne.s32.totalorder %s223, %s224
      %p233 = scmp.eq.s32.totalorder %s40, 0
      %p234 = por %p232, %p233
      %p235 = scmp.ne.s32.totalorder %s223, %s224
      %p236 = scmp.eq.s32.totalorder %s41, 1
      %p237 = por %p235, %p236
      %p239 = scmp.ne.s32.totalorder %s224, %s238
      %p240 = scmp.eq.s32.totalorder %s41, 0
      %p241 = por %p239, %p240
      %s243 = sadd.s32 %s242, 1
      %p246 = scmp.eq.s32.totalorder %s35, 1
      %p247 = scmp.ne.s32.totalorder %s242, %s244
      %p248 = scmp.eq.s32.totalorder %s35, 0
      %p249 = por %p247, %p248
      %p250 = scmp.ne.s32.totalorder %s242, %s244
      %p251 = scmp.eq.s32.totalorder %s40, 1
      %p252 = por %p250, %p251
      %p253 = scmp.ne.s32.totalorder %s244, %s245
      %p254 = scmp.eq.s32.totalorder %s40, 0
      %p255 = por %p253, %p254
      %p256 = scmp.ne.s32.totalorder %s244, %s245
      %p257 = scmp.eq.s32.totalorder %s41, 1
      %p258 = por %p256, %p257
      %p260 = scmp.ne.s32.totalorder %s245, %s259
      %p261 = scmp.eq.s32.totalorder %s41, 0
      %p262 = por %p260, %p261
      %s264 = sadd.s32 %s263, 1
      %p267 = scmp.eq.s32.totalorder %s35, 1
      %p268 = scmp.ne.s32.totalorder %s263, %s265
      %p269 = scmp.eq.s32.totalorder %s35, 0
      %p270 = por %p268, %p269
      %p271 = scmp.ne.s32.totalorder %s263, %s265
      %p272 = scmp.eq.s32.totalorder %s40, 1
      %p273 = por %p271, %p272
      %p274 = scmp.ne.s32.totalorder %s265, %s266
      %p275 = scmp.eq.s32.totalorder %s40, 0
      %p276 = por %p274, %p275
      %p277 = scmp.ne.s32.totalorder %s265, %s266
      %p278 = scmp.eq.s32.totalorder %s41, 1
      %p279 = por %p277, %p278
      %p281 = scmp.ne.s32.totalorder %s266, %s280
      %p282 = scmp.eq.s32.totalorder %s41, 0
      %p283 = por %p281, %p282
      %s285 = sadd.s32 %s284, 1
      %p288 = scmp.eq.s32.totalorder %s35, 1
      %p289 = scmp.ne.s32.totalorder %s284, %s286
      %p290 = scmp.eq.s32.totalorder %s35, 0
      %p291 = por %p289, %p290
      %p292 = scmp.ne.s32.totalorder %s284, %s286
      %p293 = scmp.eq.s32.totalorder %s40, 1
      %p294 = por %p292, %p293
      %p295 = scmp.ne.s32.totalorder %s286, %s287
      %p296 = scmp.eq.s32.totalorder %s40, 0
      %p297 = por %p295, %p296
      %p298 = scmp.ne.s32.totalorder %s286, %s287
      %p299 = scmp.eq.s32.totalorder %s41, 1
      %p300 = por %p298, %p299
      %p302 = scmp.ne.s32.totalorder %s287, %s301
      %p303 = scmp.eq.s32.totalorder %s41, 0
      %p304 = por %p302, %p303
      %s306 = sadd.s32 %s305, 1
      %p309 = scmp.eq.s32.totalorder %s35, 1
      %p310 = scmp.ne.s32.totalorder %s305, %s307
      %p311 = scmp.eq.s32.totalorder %s35, 0
      %p312 = por %p310, %p311
      %p313 = scmp.ne.s32.totalorder %s305, %s307
      %p314 = scmp.eq.s32.totalorder %s40, 1
      %p315 = por %p313, %p314
      %p316 = scmp.ne.s32.totalorder %s307, %s308
      %p317 = scmp.eq.s32.totalorder %s40, 0
      %p318 = por %p316, %p317
      %p319 = scmp.ne.s32.totalorder %s307, %s308
      %p320 = scmp.eq.s32.totalorder %s41, 1
      %p321 = por %p319, %p320
      %p323 = scmp.ne.s32.totalorder %s308, %s322
      %p324 = scmp.eq.s32.totalorder %s41, 0
      %p325 = por %p323, %p324
      %s327 = sadd.s32 %s326, 1
      %p330 = scmp.eq.s32.totalorder %s35, 1
      %p331 = scmp.ne.s32.totalorder %s326, %s328
      %p332 = scmp.eq.s32.totalorder %s35, 0
      %p333 = por %p331, %p332
      %p334 = scmp.ne.s32.totalorder %s326, %s328
      %p335 = scmp.eq.s32.totalorder %s40, 1
      %p336 = por %p334, %p335
      %p337 = scmp.ne.s32.totalorder %s328, %s329
      %p338 = scmp.eq.s32.totalorder %s40, 0
      %p339 = por %p337, %p338
      %p340 = scmp.ne.s32.totalorder %s328, %s329
      %p341 = scmp.eq.s32.totalorder %s41, 1
      %p342 = por %p340, %p341
      %p344 = scmp.ne.s32.totalorder %s329, %s343
      %p345 = scmp.eq.s32.totalorder %s41, 0
      %p346 = por %p344, %p345
      %s348 = sadd.s32 %s347, 1
      %p351 = scmp.eq.s32.totalorder %s35, 1
      %p352 = scmp.ne.s32.totalorder %s347, %s349
      %p353 = scmp.eq.s32.totalorder %s35, 0
      %p354 = por %p352, %p353
      %p355 = scmp.ne.s32.totalorder %s347, %s349
      %p356 = scmp.eq.s32.totalorder %s40, 1
      %p357 = por %p355, %p356
      %p358 = scmp.ne.s32.totalorder %s349, %s350
      %p359 = scmp.eq.s32.totalorder %s40, 0
      %p360 = por %p358, %p359
      %p361 = scmp.ne.s32.totalorder %s349, %s350
      %p362 = scmp.eq.s32.totalorder %s41, 1
      %p363 = por %p361, %p362
      %p365 = scmp.ne.s32.totalorder %s350, %s364
      %p366 = scmp.eq.s32.totalorder %s41, 0
      %p367 = por %p365, %p366
      %s368 = ssub.s32 %s35, %s42
      %p369 = scmp.eq.s32.totalorder %s368, 0
      %s371 = sadd.s32 %s370, 1
      %s372 = scalar_select %p369, %s370, %s371
      %p375 = pneg %p369
      %p376 = scmp.eq.s32.totalorder %s35, 1
      %p377 = por %p375, %p376
      %p378 = scmp.ne.s32.totalorder %s370, %s373
      %p379 = scmp.eq.s32.totalorder %s35, 0
      %p380 = por %p378, %p379
      %p381 = scmp.ne.s32.totalorder %s370, %s373
      %p382 = scmp.eq.s32.totalorder %s40, 1
      %p383 = por %p381, %p382
      %p384 = scmp.ne.s32.totalorder %s373, %s374
      %p385 = scmp.eq.s32.totalorder %s40, 0
      %p386 = por %p384, %p385
      %p387 = scmp.ne.s32.totalorder %s373, %s374
      %p388 = scmp.eq.s32.totalorder %s41, 1
      %p389 = por %p387, %p388
      %p391 = scmp.ne.s32.totalorder %s374, %s390
      %p392 = scmp.eq.s32.totalorder %s41, 0
      %p393 = por %p391, %p392
      %p394 = scmp.le.s32.totalorder 1, %s35
      %p395 = scmp.lt.s32.totalorder %s35, 3
      %p396 = pnand %p394, %p395
      %p397 = pneg %p396
      // Predicated region
      $region9: #{tpu_custom_call.1} parent=5 // pred_check
        _
      $region10: #{tpu_custom_call.1} parent=5 // pred_check_branch
        %399 = sbr.rel (%p396) target = $region12
      $region11: #{tpu_custom_call.1} parent=5 // pred_region
        %s400 = ssub.s32 %s35, 1
        // Predicated region
        $region13: #{tpu_custom_call.1} parent=11 // pred_check
          %p401 = pneg %p108
        $region14: #{tpu_custom_call.1} parent=11 // pred_check_branch
          %403 = sbr.rel (%p401) target = $region16
        $region15: #{tpu_custom_call.1} parent=11 // pred_region
          _
        $region16: #{tpu_custom_call.1} parent=11 // pred_fallthru
          _
        // Predicated region
        $region17: #{tpu_custom_call.1} parent=11 // pred_check
          %p404 = pneg %p129
        $region18: #{tpu_custom_call.1} parent=11 // pred_check_branch
          %406 = sbr.rel (%p404) target = $region20
        $region19: #{tpu_custom_call.1} parent=11 // pred_region
          %s408 = ssub.s32 512, 512
          %409 = vsyncadd [#allocation6], %s408
          %s410 = sshll.u32 [#allocation7], 4
          %s411 = int_to_ptr.vmem [resolvable:$true] %s410
          %416 = dma.hbm_to_vmem [thread:$0]  %s3, 512, %s411, [#allocation6], 128, 128, 8
        $region20: #{tpu_custom_call.1} parent=11 // pred_fallthru
          _
        // Predicated region
        $region21: #{tpu_custom_call.1} parent=11 // pred_check
          %p417 = pneg %p150
        $region22: #{tpu_custom_call.1} parent=11 // pred_check_branch
          %419 = sbr.rel (%p417) target = $region24
        $region23: #{tpu_custom_call.1} parent=11 // pred_region
          %s421 = ssub.s32 25600, 25600
          %422 = vsyncadd [#allocation9], %s421
          %s423 = sshll.u32 [#allocation8], 4
          %s424 = int_to_ptr.vmem [resolvable:$true] %s423
          %429 = dma.hbm_to_vmem [thread:$0]  %s4, 25600, %s424, [#allocation9], 512, 512, 32
        $region24: #{tpu_custom_call.1} parent=11 // pred_fallthru
          _
        // Predicated region
        $region25: #{tpu_custom_call.1} parent=11 // pred_check
          %p430 = pneg %p171
        $region26: #{tpu_custom_call.1} parent=11 // pred_check_branch
          %432 = sbr.rel (%p430) target = $region28
        $region27: #{tpu_custom_call.1} parent=11 // pred_region
          %s434 = ssub.s32 32, 32
          %435 = vsyncadd [#allocation9], %s434
          %s437 = sshll.u32 [#allocation10], 4
          %s438 = int_to_ptr.vmem [resolvable:$true] %s437
          %440 = dma.hbm_to_vmem [thread:$0]  %s5, 32, %s438, [#allocation9]
        $region28: #{tpu_custom_call.1} parent=11 // pred_fallthru
          _
        // Predicated region
        $region29: #{tpu_custom_call.1} parent=11 // pred_check
          %p441 = pneg %p192
        $region30: #{tpu_custom_call.1} parent=11 // pred_check_branch
          %443 = sbr.rel (%p441) target = $region32
        $region31: #{tpu_custom_call.1} parent=11 // pred_region
          _
        $region32: #{tpu_custom_call.1} parent=11 // pred_fallthru
          _
        // Predicated region
        $region33: #{tpu_custom_call.1} parent=11 // pred_check
          %p444 = pneg %p213
        $region34: #{tpu_custom_call.1} parent=11 // pred_check_branch
          %446 = sbr.rel (%p444) target = $region36
        $region35: #{tpu_custom_call.1} parent=11 // pred_region
          %s448 = ssub.s32 1024, 1024
          %449 = vsyncadd [#allocation12], %s448
          %s450 = sshll.u32 [#allocation11], 4
          %s451 = int_to_ptr.vmem [resolvable:$true] %s450
          %456 = dma.hbm_to_vmem [thread:$0]  %s7, 1024, %s451, [#allocation12], 256, 256, 16
        $region36: #{tpu_custom_call.1} parent=11 // pred_fallthru
          _
        // Predicated region
        $region37: #{tpu_custom_call.1} parent=11 // pred_check
          %p457 = pneg %p234
        $region38: #{tpu_custom_call.1} parent=11 // pred_check_branch
          %459 = sbr.rel (%p457) target = $region40
        $region39: #{tpu_custom_call.1} parent=11 // pred_region
          %s461 = ssub.s32 51200, 51200
          %462 = vsyncadd [#allocation12], %s461
          %s463 = sshll.u32 [#allocation13], 4
          %s464 = int_to_ptr.vmem [resolvable:$true] %s463
          %469 = dma.hbm_to_vmem [thread:$0]  %s8, 51200, %s464, [#allocation12], 512, 512, 32
        $region40: #{tpu_custom_call.1} parent=11 // pred_fallthru
          _
        // Predicated region
        $region41: #{tpu_custom_call.1} parent=11 // pred_check
          %p470 = pneg %p255
        $region42: #{tpu_custom_call.1} parent=11 // pred_check_branch
          %472 = sbr.rel (%p470) target = $region44
        $region43: #{tpu_custom_call.1} parent=11 // pred_region
          %s474 = ssub.s32 32, 32
          %475 = vsyncadd [#allocation15], %s474
          %s477 = sshll.u32 [#allocation14], 4
          %s478 = int_to_ptr.vmem [resolvable:$true] %s477
          %480 = dma.hbm_to_vmem [thread:$0]  %s9, 32, %s478, [#allocation15]
        $region44: #{tpu_custom_call.1} parent=11 // pred_fallthru
          _
        // Predicated region
        $region45: #{tpu_custom_call.1} parent=11 // pred_check
          %p481 = pneg %p276
        $region46: #{tpu_custom_call.1} parent=11 // pred_check_branch
          %483 = sbr.rel (%p481) target = $region48
        $region47: #{tpu_custom_call.1} parent=11 // pred_region
          %s485 = ssub.s32 1280, 1280
          %486 = vsyncadd [#allocation15], %s485
          %s487 = sshll.u32 [#allocation16], 4
          %s488 = int_to_ptr.vmem [resolvable:$true] %s487
          %493 = dma.hbm_to_vmem [thread:$0]  %s10, 1280, %s488, [#allocation15], 128, 128, 8
        $region48: #{tpu_custom_call.1} parent=11 // pred_fallthru
          _
        // Predicated region
        $region49: #{tpu_custom_call.1} parent=11 // pred_check
          %p494 = pneg %p297
        $region50: #{tpu_custom_call.1} parent=11 // pred_check_branch
          %496 = sbr.rel (%p494) target = $region52
        $region51: #{tpu_custom_call.1} parent=11 // pred_region
          %s498 = ssub.s32 98304, 98304
          %499 = vsyncadd [#allocation18], %s498
          %s500 = sshll.u32 [#allocation17], 4
          %s501 = int_to_ptr.vmem [resolvable:$true] %s500
          %506 = dma.hbm_to_vmem [thread:$0]  %s11, 98304, %s501, [#allocation18], 512, 512, 32
        $region52: #{tpu_custom_call.1} parent=11 // pred_fallthru
          _
        // Predicated region
        $region53: #{tpu_custom_call.1} parent=11 // pred_check
          %p507 = pneg %p318
        $region54: #{tpu_custom_call.1} parent=11 // pred_check_branch
          %509 = sbr.rel (%p507) target = $region56
        $region55: #{tpu_custom_call.1} parent=11 // pred_region
          %s511 = ssub.s32 64, 64
          %512 = vsyncadd [#allocation18], %s511
          %s514 = sshll.u32 [#allocation19], 4
          %s515 = int_to_ptr.vmem [resolvable:$true] %s514
          %517 = dma.hbm_to_vmem [thread:$0]  %s12, 64, %s515, [#allocation18]
        $region56: #{tpu_custom_call.1} parent=11 // pred_fallthru
          _
        // Predicated region
        $region57: #{tpu_custom_call.1} parent=11 // pred_check
          %p518 = pneg %p339
        $region58: #{tpu_custom_call.1} parent=11 // pred_check_branch
          %520 = sbr.rel (%p518) target = $region60
        $region59: #{tpu_custom_call.1} parent=11 // pred_region
          %s522 = ssub.s32 163840, 163840
          %523 = vsyncadd [#allocation21], %s522
          %s524 = sshll.u32 [#allocation20], 4
          %s525 = int_to_ptr.vmem [resolvable:$true] %s524
          %530 = dma.hbm_to_vmem [thread:$0]  %s13, 163840, %s525, [#allocation21], 512, 512, 32
        $region60: #{tpu_custom_call.1} parent=11 // pred_fallthru
          _
        // Predicated region
        $region61: #{tpu_custom_call.1} parent=11 // pred_check
          %p531 = pneg %p360
        $region62: #{tpu_custom_call.1} parent=11 // pred_check_branch
          %533 = sbr.rel (%p531) target = $region64
        $region63: #{tpu_custom_call.1} parent=11 // pred_region
          %s535 = ssub.s32 64, 64
          %536 = vsyncadd [#allocation21], %s535
          %s538 = sshll.u32 [#allocation22], 4
          %s539 = int_to_ptr.vmem [resolvable:$true] %s538
          %541 = dma.hbm_to_vmem [thread:$0]  %s14, 64, %s539, [#allocation21]
        $region64: #{tpu_custom_call.1} parent=11 // pred_fallthru
          _
      $region12: #{tpu_custom_call.1} parent=5 // pred_fallthru
        _
      %p542 = scmp.lt.s32.totalorder %s35, 2
      // Predicated region
      $region65: #{tpu_custom_call.1} parent=5 // pred_check
        %p543 = pneg %p542
      $region66: #{tpu_custom_call.1} parent=5 // pred_check_branch
        %545 = sbr.rel (%p543) target = $region68
      $region67: #{tpu_custom_call.1} parent=5 // pred_region
        // Predicated region
        $region69: #{tpu_custom_call.1} parent=67 // pred_check
          %p546 = pneg %p55
        $region70: #{tpu_custom_call.1} parent=67 // pred_check_branch
          %548 = sbr.rel (%p546) target = $region72
        $region71: #{tpu_custom_call.1} parent=67 // pred_region
          %s549 = sand.u32 %s45, 1
          %s550 = scalar_lea.sflag [#allocation3], %s549
          %s551 = sand.u32 %s45, 1
          %s552 = smul.addr %s551, 8
          %s553 = scalar_lea.vmem [#allocation2], %s552
          %s555 = ssub.s32 128, 128
          %556 = vsyncadd %s550, %s555
          %s557 = smul.addr %s35, 128
          %s558 = scalar_lea.hbm %s0, %s557
          %s560 = sshll.u32 %s553, 4
          %s561 = int_to_ptr.vmem [resolvable:$true] %s560
          %563 = dma.hbm_to_vmem [thread:$0]  %s558, 128, %s561, %s550
        $region72: #{tpu_custom_call.1} parent=67 // pred_fallthru
          _
        // Predicated region
        $region73: #{tpu_custom_call.1} parent=67 // pred_check
          %p564 = pneg %p81
        $region74: #{tpu_custom_call.1} parent=67 // pred_check_branch
          %566 = sbr.rel (%p564) target = $region76
        $region75: #{tpu_custom_call.1} parent=67 // pred_region
          %s567 = sand.u32 %s35, 1
          %s568 = scalar_lea.sflag [#allocation6], %s567
          %s569 = sand.u32 %s71, 1
          %s570 = smul.addr %s569, 4
          %s571 = scalar_lea.vmem [#allocation5], %s570
          %s573 = ssub.s32 64, 64
          %574 = vsyncadd %s568, %s573
          %s575 = smul.addr %s35, 64
          %s576 = scalar_lea.hbm %s1, %s575
          %s578 = sshll.u32 %s571, 4
          %s579 = int_to_ptr.vmem [resolvable:$true] %s578
          %581 = dma.hbm_to_vmem [thread:$0]  %s576, 64, %s579, %s568
        $region76: #{tpu_custom_call.1} parent=67 // pred_fallthru
          _
      $region68: #{tpu_custom_call.1} parent=5 // pred_fallthru
        _
      %p582 = scmp.le.s32.totalorder 1, %s35
      %p583 = scmp.lt.s32.totalorder %s35, 3
      %p584 = pnand %p582, %p583
      %p585 = pneg %p584
      // Predicated region
      $region77: #{tpu_custom_call.1} parent=5 // pred_check
        _
      $region78: #{tpu_custom_call.1} parent=5 // pred_check_branch
        %587 = sbr.rel (%p584) target = $region80
      $region79: #{tpu_custom_call.1} parent=5 // pred_region
        %s588 = ssub.s32 %s35, 1
        %s589 = sand.u32 %s48, 1
        %s590 = scalar_lea.sflag [#allocation3], %s589
        %s591 = sand.u32 %s48, 1
        %s592 = smul.addr %s591, 8
        %s593 = scalar_lea.vmem [#allocation2], %s592
        // Predicated region
        $region81: #{tpu_custom_call.1} parent=79 // pred_check
          %p594 = pneg %p61
        $region82: #{tpu_custom_call.1} parent=79 // pred_check_branch
          %596 = sbr.rel (%p594) target = $region84
        $region83: #{tpu_custom_call.1} parent=79 // pred_region
          %597 = dma.done %s590, 128
        $region84: #{tpu_custom_call.1} parent=79 // pred_fallthru
          _
        %s598 = sand.u32 %s40, 1
        %s599 = scalar_lea.sflag [#allocation6], %s598
        %s600 = sand.u32 %s74, 1
        %s601 = smul.addr %s600, 4
        %s602 = scalar_lea.vmem [#allocation5], %s601
        // Predicated region
        $region85: #{tpu_custom_call.1} parent=79 // pred_check
          %p603 = pneg %p87
        $region86: #{tpu_custom_call.1} parent=79 // pred_check_branch
          %605 = sbr.rel (%p603) target = $region88
        $region87: #{tpu_custom_call.1} parent=79 // pred_region
          %606 = dma.done %s599, 64
        $region88: #{tpu_custom_call.1} parent=79 // pred_fallthru
          _
        // Predicated region
        $region89: #{tpu_custom_call.1} parent=79 // pred_check
          %p607 = pneg %p129
        $region90: #{tpu_custom_call.1} parent=79 // pred_check_branch
          %609 = sbr.rel (%p607) target = $region92
        $region91: #{tpu_custom_call.1} parent=79 // pred_region
          %610 = dma.done [#allocation6], 512
        $region92: #{tpu_custom_call.1} parent=79 // pred_fallthru
          _
        // Predicated region
        $region93: #{tpu_custom_call.1} parent=79 // pred_check
          %p611 = pneg %p150
        $region94: #{tpu_custom_call.1} parent=79 // pred_check_branch
          %613 = sbr.rel (%p611) target = $region96
        $region95: #{tpu_custom_call.1} parent=79 // pred_region
          %614 = dma.done [#allocation9], 25600
        $region96: #{tpu_custom_call.1} parent=79 // pred_fallthru
          _
        // Predicated region
        $region97: #{tpu_custom_call.1} parent=79 // pred_check
          %p615 = pneg %p171
        $region98: #{tpu_custom_call.1} parent=79 // pred_check_branch
          %617 = sbr.rel (%p615) target = $region100
        $region99: #{tpu_custom_call.1} parent=79 // pred_region
          %618 = dma.done [#allocation9], 32
        $region100: #{tpu_custom_call.1} parent=79 // pred_fallthru
          _
        // Predicated region
        $region101: #{tpu_custom_call.1} parent=79 // pred_check
          %p619 = pneg %p213
        $region102: #{tpu_custom_call.1} parent=79 // pred_check_branch
          %621 = sbr.rel (%p619) target = $region104
        $region103: #{tpu_custom_call.1} parent=79 // pred_region
          %622 = dma.done [#allocation12], 1024
        $region104: #{tpu_custom_call.1} parent=79 // pred_fallthru
          _
        // Predicated region
        $region105: #{tpu_custom_call.1} parent=79 // pred_check
          %p623 = pneg %p234
        $region106: #{tpu_custom_call.1} parent=79 // pred_check_branch
          %625 = sbr.rel (%p623) target = $region108
        $region107: #{tpu_custom_call.1} parent=79 // pred_region
          %626 = dma.done [#allocation12], 51200
        $region108: #{tpu_custom_call.1} parent=79 // pred_fallthru
          _
        // Predicated region
        $region109: #{tpu_custom_call.1} parent=79 // pred_check
          %p627 = pneg %p255
        $region110: #{tpu_custom_call.1} parent=79 // pred_check_branch
          %629 = sbr.rel (%p627) target = $region112
        $region111: #{tpu_custom_call.1} parent=79 // pred_region
          %630 = dma.done [#allocation15], 32
        $region112: #{tpu_custom_call.1} parent=79 // pred_fallthru
          _
        // Predicated region
        $region113: #{tpu_custom_call.1} parent=79 // pred_check
          %p631 = pneg %p276
        $region114: #{tpu_custom_call.1} parent=79 // pred_check_branch
          %633 = sbr.rel (%p631) target = $region116
        $region115: #{tpu_custom_call.1} parent=79 // pred_region
          %634 = dma.done [#allocation15], 1280
        $region116: #{tpu_custom_call.1} parent=79 // pred_fallthru
          _
        // Predicated region
        $region117: #{tpu_custom_call.1} parent=79 // pred_check
          %p635 = pneg %p297
        $region118: #{tpu_custom_call.1} parent=79 // pred_check_branch
          %637 = sbr.rel (%p635) target = $region120
        $region119: #{tpu_custom_call.1} parent=79 // pred_region
          %638 = dma.done [#allocation18], 98304
        $region120: #{tpu_custom_call.1} parent=79 // pred_fallthru
          _
        // Predicated region
        $region121: #{tpu_custom_call.1} parent=79 // pred_check
          %p639 = pneg %p318
        $region122: #{tpu_custom_call.1} parent=79 // pred_check_branch
          %641 = sbr.rel (%p639) target = $region124
        $region123: #{tpu_custom_call.1} parent=79 // pred_region
          %642 = dma.done [#allocation18], 64
        $region124: #{tpu_custom_call.1} parent=79 // pred_fallthru
          _
        // Predicated region
        $region125: #{tpu_custom_call.1} parent=79 // pred_check
          %p643 = pneg %p339
        $region126: #{tpu_custom_call.1} parent=79 // pred_check_branch
          %645 = sbr.rel (%p643) target = $region128
        $region127: #{tpu_custom_call.1} parent=79 // pred_region
          %646 = dma.done [#allocation21], 163840
        $region128: #{tpu_custom_call.1} parent=79 // pred_fallthru
          _
        // Predicated region
        $region129: #{tpu_custom_call.1} parent=79 // pred_check
          %p647 = pneg %p360
        $region130: #{tpu_custom_call.1} parent=79 // pred_check_branch
          %649 = sbr.rel (%p647) target = $region132
        $region131: #{tpu_custom_call.1} parent=79 // pred_region
          %650 = dma.done [#allocation21], 64
        $region132: #{tpu_custom_call.1} parent=79 // pred_fallthru
          _
        %s651 = sand.u32 %s48, 1
        %s652 = scalar_lea.sflag [#allocation3], %s651
        %s653 = sand.u32 %s48, 1
        %s654 = smul.addr %s653, 8
        %s655 = scalar_lea.vmem [#allocation2], %s654
        %p656 = pneg %p61
        %p657 = pneg %p58
        %s658 = sand.u32 %s40, 1
        %s659 = scalar_lea.sflag [#allocation6], %s658
        %s660 = sand.u32 %s74, 1
        %s661 = smul.addr %s660, 4
        %s662 = scalar_lea.vmem [#allocation5], %s661
        %p663 = pneg %p87
        %p664 = pneg %p84
        %p665 = pneg %p108
        %p666 = pneg %p105
        %p667 = pneg %p129
        %p668 = pneg %p126
        %p669 = pneg %p150
        %p670 = pneg %p147
        %p671 = pneg %p171
        %p672 = pneg %p168
        %p673 = pneg %p192
        %p674 = pneg %p189
        %p675 = pneg %p213
        %p676 = pneg %p210
        %p677 = pneg %p234
        %p678 = pneg %p231
        %p679 = pneg %p255
        %p680 = pneg %p252
        %p681 = pneg %p276
        %p682 = pneg %p273
        %p683 = pneg %p297
        %p684 = pneg %p294
        %p685 = pneg %p318
        %p686 = pneg %p315
        %p687 = pneg %p339
        %p688 = pneg %p336
        %p689 = pneg %p360
        %p690 = pneg %p357
        %p691 = pneg %p386
        %p692 = pneg %p383
        %s693 = sand.u32 %s373, 1
        %s694 = scalar_lea.sflag [#allocation4], %s693
        %s695 = sand.u32 %s373, 1
        %s696 = smul.addr %s695, 64
        %s697 = scalar_lea.vmem [#allocation23], %s696
        %v698 = vld [vmem:[%s593] sm:$0xff]
        %v699 = vld [vmem:[#allocation7] sm:$0xff]
        %v700 = vld [vmem:[#allocation7 + $0x8] sm:$0xff]
        %v701 = vld [vmem:[#allocation7 + $0x10] sm:$0xff]
        %v702 = vld [vmem:[#allocation7 + $0x18] sm:$0xff]
        %vm703 = vcmask 261120
        %v705 = vsel %vm703, %v698, 0
        %707 = vmatprep.subr.mxu0 0.0
        %708 = vmatpush1.msra.mxu0 %v699
        %709 = vmatprep.subr.mxu0 0.0
        %710 = vmatpush1.msra.mxu0 %v700
        %711 = vmatprep.subr.mxu0 0.0
        %712 = vmatpush1.msra.mxu0 %v701
        %713 = vmatprep.subr.mxu0 0.0
        %714 = vmatpush1.msra.mxu0 %v702
        %715 = vmatprep.subr.mxu0 0.0
        %716 = vmatpush1.msra.mxu0 0.0
        %717 = vmatprep.subr.mxu0 0.0
        %718 = vmatpush1.msra.mxu0 0.0
        %719 = vmatprep.subr.mxu0 0.0
        %720 = vmatpush1.msra.mxu0 0.0
        %721 = vmatprep.subr.mxu0 0.0
        %722 = vmatpush1.msra.mxu0 0.0
        %723 = vmatprep.subr.mxu0 0.0
        %724 = vmatpush1.msra.mxu0 0.0
        %725 = vmatprep.subr.mxu0 0.0
        %726 = vmatpush1.msra.mxu0 0.0
        %727 = vmatprep.subr.mxu0 0.0
        %728 = vmatpush1.msra.mxu0 0.0
        %729 = vmatprep.subr.mxu0 0.0
        %730 = vmatpush1.msra.mxu0 0.0
        %731 = vmatprep.subr.mxu0 0.0
        %732 = vmatpush1.msra.mxu0 0.0
        %733 = vmatprep.subr.mxu0 0.0
        %734 = vmatpush1.msra.mxu0 0.0
        %735 = vmatprep.subr.mxu0 0.0
        %736 = vmatpush1.msra.mxu0 0.0
        %737 = vmatprep.subr.mxu0 0.0
        %738 = vmatpush1.msra.mxu0 0.0
        %739 = vmatprep.subr.mxu0 0.0
        %740 = vmatpush1.msra.mxu0 0.0
        %741 = vmatprep.subr.mxu0 0.0
        %742 = vmatpush1.msra.mxu0 0.0
        %743 = vmatprep.subr.mxu0 0.0
        %744 = vmatpush1.msra.mxu0 0.0
        %745 = vmatprep.subr.mxu0 0.0
        %746 = vmatpush1.msra.mxu0 0.0
        %747 = vmatprep.subr.mxu0 0.0
        %748 = vmatpush1.msra.mxu0 0.0
        %749 = vmatprep.subr.mxu0 0.0
        %750 = vmatpush1.msra.mxu0 0.0
        %751 = vmatprep.subr.mxu0 0.0
        %752 = vmatpush1.msra.mxu0 0.0
        %753 = vmatprep.subr.mxu0 0.0
        %754 = vmatpush1.msra.mxu0 0.0
        %755 = vmatprep.subr.mxu0 0.0
        %756 = vmatpush1.msra.mxu0 0.0
        %757 = vmatprep.subr.mxu0 0.0
        %758 = vmatpush1.msra.mxu0 0.0
        %759 = vmatprep.subr.mxu0 0.0
        %760 = vmatpush1.msra.mxu0 0.0
        %761 = vmatprep.subr.mxu0 0.0
        %762 = vmatpush1.msra.mxu0 0.0
        %763 = vmatprep.subr.mxu0 0.0
        %764 = vmatpush1.msra.mxu0 0.0
        %765 = vmatprep.subr.mxu0 0.0
        %766 = vmatpush1.msra.mxu0 0.0
        %767 = vmatprep.subr.mxu0 0.0
        %768 = vmatpush1.msra.mxu0 0.0
        %769 = vmatprep.subr.mxu0 0.0
        %770 = vmatpush1.msra.mxu0 0.0
        %771 = vmatprep.mubr.f32.mxu0 0.0
        %772 = vmatmul.mubr.f32.gmra.mrb[0].mxu0 %v705
        %v773 = vpop.f32.mrb[0].mxu0
        %v774 = vadd.f32 0.0, %v773
        %v775 = vpop.f32.mrb[0].mxu0
        %776 = vdwg.mxu0
        %v777 = vld [vmem:[%s2] sm:$0xff]
        %v778 = vld [vmem:[%s2 + $0x8] sm:$0xff]
        %vm779 = vcmask 64512
        %v781 = vsel %vm779, %v777, 0
        %v784 = vsel %vm779, %v778, 0
        %786 = vmatprep.subr.mxu0 0.0
        %787 = vmatpush1.msra.mxu0 %v774
        %788 = vmatprep.subr.mxu0 0.0
        %789 = vmatpush1.msra.mxu0 0.0
        %790 = vmatprep.subr.mxu0 0.0
        %791 = vmatpush1.msra.mxu0 0.0
        %792 = vmatprep.subr.mxu0 0.0
        %793 = vmatpush1.msra.mxu0 0.0
        %794 = vmatprep.subr.mxu0 0.0
        %795 = vmatpush1.msra.mxu0 0.0
        %796 = vmatprep.subr.mxu0 0.0
        %797 = vmatpush1.msra.mxu0 0.0
        %798 = vmatprep.subr.mxu0 0.0
        %799 = vmatpush1.msra.mxu0 0.0
        %800 = vmatprep.subr.mxu0 0.0
        %801 = vmatpush1.msra.mxu0 0.0
        %802 = vmatprep.subr.mxu0 0.0
        %803 = vmatpush1.msra.mxu0 0.0
        %804 = vmatprep.subr.mxu0 0.0
        %805 = vmatpush1.msra.mxu0 0.0
        %806 = vmatprep.subr.mxu0 0.0
        %807 = vmatpush1.msra.mxu0 0.0
        %808 = vmatprep.subr.mxu0 0.0
        %809 = vmatpush1.msra.mxu0 0.0
        %810 = vmatprep.subr.mxu0 0.0
        %811 = vmatpush1.msra.mxu0 0.0
        %812 = vmatprep.subr.mxu0 0.0
        %813 = vmatpush1.msra.mxu0 0.0
        %814 = vmatprep.subr.mxu0 0.0
        %815 = vmatpush1.msra.mxu0 0.0
        %816 = vmatprep.subr.mxu0 0.0
        %817 = vmatpush1.msra.mxu0 0.0
        %818 = vmatprep.subr.mxu0 0.0
        %819 = vmatpush1.msra.mxu0 0.0
        %820 = vmatprep.subr.mxu0 0.0
        %821 = vmatpush1.msra.mxu0 0.0
        %822 = vmatprep.subr.mxu0 0.0
        %823 = vmatpush1.msra.mxu0 0.0
        %824 = vmatprep.subr.mxu0 0.0
        %825 = vmatpush1.msra.mxu0 0.0
        %826 = vmatprep.subr.mxu0 0.0
        %827 = vmatpush1.msra.mxu0 0.0
        %828 = vmatprep.subr.mxu0 0.0
        %829 = vmatpush1.msra.mxu0 0.0
        %830 = vmatprep.subr.mxu0 0.0
        %831 = vmatpush1.msra.mxu0 0.0
        %832 = vmatprep.subr.mxu0 0.0
        %833 = vmatpush1.msra.mxu0 0.0
        %834 = vmatprep.subr.mxu0 0.0
        %835 = vmatpush1.msra.mxu0 0.0
        %836 = vmatprep.subr.mxu0 0.0
        %837 = vmatpush1.msra.mxu0 0.0
        %838 = vmatprep.subr.mxu0 0.0
        %839 = vmatpush1.msra.mxu0 0.0
        %840 = vmatprep.subr.mxu0 0.0
        %841 = vmatpush1.msra.mxu0 0.0
        %842 = vmatprep.subr.mxu0 0.0
        %843 = vmatpush1.msra.mxu0 0.0
        %844 = vmatprep.subr.mxu0 0.0
        %845 = vmatpush1.msra.mxu0 0.0
        %846 = vmatprep.subr.mxu0 0.0
        %847 = vmatpush1.msra.mxu0 0.0
        %848 = vmatprep.subr.mxu0 0.0
        %849 = vmatpush1.msra.mxu0 0.0
        %850 = vmatprep.mubr.f32.mxu0 0.0
        %851 = vmatmul.mubr.f32.gmra.mrb[0].mxu0 %v781
        %v852 = vpop.f32.mrb[0].mxu0
        %v853 = vadd.f32 0.0, %v852
        %v854 = vpop.f32.mrb[0].mxu0
        %855 = vmatprep.mubr.f32.mxu0 0.0
        %856 = vmatmul.mubr.f32.gmra.mrb[0].mxu0 %v784
        %v857 = vpop.f32.mrb[0].mxu0
        %v858 = vadd.f32 0.0, %v857
        %v859 = vpop.f32.mrb[0].mxu0
        %860 = vdwg.mxu0
        %v861 = vld [vmem:[#allocation8] sm:$0xff]
        %v862 = vld [vmem:[#allocation8 + $0x8] sm:$0xff]
        %v863 = vld [vmem:[#allocation8 + $0x10] sm:$0xff]
        %v864 = vld [vmem:[#allocation8 + $0x18] sm:$0xff]
        %v865 = vld [vmem:[#allocation8 + $0x20] sm:$0xff]
        %v866 = vld [vmem:[#allocation8 + $0x28] sm:$0xff]
        %v867 = vld [vmem:[#allocation8 + $0x30] sm:$0xff]
        %v868 = vld [vmem:[#allocation8 + $0x38] sm:$0xff]
        %v869 = vld [vmem:[#allocation8 + $0x40] sm:$0xff]
        %v870 = vld [vmem:[#allocation8 + $0x48] sm:$0xff]
        %v871 = vld [vmem:[#allocation8 + $0x50] sm:$0xff]
        %v872 = vld [vmem:[#allocation8 + $0x58] sm:$0xff]
        %v873 = vld [vmem:[#allocation8 + $0x60] sm:$0xff]
        %v874 = vld [vmem:[#allocation8 + $0x68] sm:$0xff]
        %v875 = vld [vmem:[#allocation8 + $0x70] sm:$0xff]
        %v876 = vld [vmem:[#allocation8 + $0x78] sm:$0xff]
        %v877 = vld [vmem:[#allocation8 + $0x80] sm:$0xff]
        %v878 = vld [vmem:[#allocation8 + $0x88] sm:$0xff]
        %v879 = vld [vmem:[#allocation8 + $0x90] sm:$0xff]
        %v880 = vld [vmem:[#allocation8 + $0x98] sm:$0xff]
        %v881 = vld [vmem:[#allocation8 + $0xa0] sm:$0xff]
        %v882 = vld [vmem:[#allocation8 + $0xa8] sm:$0xff]
        %v883 = vld [vmem:[#allocation8 + $0xb0] sm:$0xff]
        %v884 = vld [vmem:[#allocation8 + $0xb8] sm:$0xff]
        %v885 = vld [vmem:[#allocation8 + $0xc0] sm:$0xff]
        %v886 = vld [vmem:[#allocation8 + $0xc8] sm:$0xff]
        %v887 = vld [vmem:[#allocation8 + $0xd0] sm:$0xff]
        %v888 = vld [vmem:[#allocation8 + $0xd8] sm:$0xff]
        %v889 = vld [vmem:[#allocation8 + $0xe0] sm:$0xff]
        %v890 = vld [vmem:[#allocation8 + $0xe8] sm:$0xff]
        %v891 = vld [vmem:[#allocation8 + $0xf0] sm:$0xff]
        %v892 = vld [vmem:[#allocation8 + $0xf8] sm:$0xff]
        %v893 = vld [vmem:[#allocation8 + $0x100] sm:$0xff]
        %v894 = vld [vmem:[#allocation8 + $0x108] sm:$0xff]
        %v895 = vld [vmem:[#allocation8 + $0x110] sm:$0xff]
        %v896 = vld [vmem:[#allocation8 + $0x118] sm:$0xff]
        %v897 = vld [vmem:[#allocation8 + $0x120] sm:$0xff]
        %v898 = vld [vmem:[#allocation8 + $0x128] sm:$0xff]
        %v899 = vld [vmem:[#allocation8 + $0x130] sm:$0xff]
        %v900 = vld [vmem:[#allocation8 + $0x138] sm:$0xff]
        %s901 = scalar_lea.vmem %s2, 16
        %v902 = vld [vmem:[%s901] sm:$0xff]
        %v903 = vld [vmem:[%s901 + $0x8] sm:$0xff]
        %v905 = vsel %vm779, %v902, 0
        %v908 = vsel %vm779, %v903, 0
        %910 = vmatprep.subr.mxu0 0.0
        %911 = vmatpush1.msra.mxu0 %v774
        %912 = vmatprep.subr.mxu0 0.0
        %913 = vmatpush1.msra.mxu0 0.0
        %914 = vmatprep.subr.mxu0 0.0
        %915 = vmatpush1.msra.mxu0 0.0
        %916 = vmatprep.subr.mxu0 0.0
        %917 = vmatpush1.msra.mxu0 0.0
        %918 = vmatprep.subr.mxu0 0.0
        %919 = vmatpush1.msra.mxu0 0.0
        %920 = vmatprep.subr.mxu0 0.0
        %921 = vmatpush1.msra.mxu0 0.0
        %922 = vmatprep.subr.mxu0 0.0
        %923 = vmatpush1.msra.mxu0 0.0
        %924 = vmatprep.subr.mxu0 0.0
        %925 = vmatpush1.msra.mxu0 0.0
        %926 = vmatprep.subr.mxu0 0.0
        %927 = vmatpush1.msra.mxu0 0.0
        %928 = vmatprep.subr.mxu0 0.0
        %929 = vmatpush1.msra.mxu0 0.0
        %930 = vmatprep.subr.mxu0 0.0
        %931 = vmatpush1.msra.mxu0 0.0
        %932 = vmatprep.subr.mxu0 0.0
        %933 = vmatpush1.msra.mxu0 0.0
        %934 = vmatprep.subr.mxu0 0.0
        %935 = vmatpush1.msra.mxu0 0.0
        %936 = vmatprep.subr.mxu0 0.0
        %937 = vmatpush1.msra.mxu0 0.0
        %938 = vmatprep.subr.mxu0 0.0
        %939 = vmatpush1.msra.mxu0 0.0
        %940 = vmatprep.subr.mxu0 0.0
        %941 = vmatpush1.msra.mxu0 0.0
        %942 = vmatprep.subr.mxu0 0.0
        %943 = vmatpush1.msra.mxu0 0.0
        %944 = vmatprep.subr.mxu0 0.0
        %945 = vmatpush1.msra.mxu0 0.0
        %946 = vmatprep.subr.mxu0 0.0
        %947 = vmatpush1.msra.mxu0 0.0
        %948 = vmatprep.subr.mxu0 0.0
        %949 = vmatpush1.msra.mxu0 0.0
        %950 = vmatprep.subr.mxu0 0.0
        %951 = vmatpush1.msra.mxu0 0.0
        %952 = vmatprep.subr.mxu0 0.0
        %953 = vmatpush1.msra.mxu0 0.0
        %954 = vmatprep.subr.mxu0 0.0
        %955 = vmatpush1.msra.mxu0 0.0
        %956 = vmatprep.subr.mxu0 0.0
        %957 = vmatpush1.msra.mxu0 0.0
        %958 = vmatprep.subr.mxu0 0.0
        %959 = vmatpush1.msra.mxu0 0.0
        %960 = vmatprep.subr.mxu0 0.0
        %961 = vmatpush1.msra.mxu0 0.0
        %962 = vmatprep.subr.mxu0 0.0
        %963 = vmatpush1.msra.mxu0 0.0
        %964 = vmatprep.subr.mxu0 0.0
        %965 = vmatpush1.msra.mxu0 0.0
        %966 = vmatprep.subr.mxu0 0.0
        %967 = vmatpush1.msra.mxu0 0.0
        %968 = vmatprep.subr.mxu0 0.0
        %969 = vmatpush1.msra.mxu0 0.0
        %970 = vmatprep.subr.mxu0 0.0
        %971 = vmatpush1.msra.mxu0 0.0
        %972 = vmatprep.subr.mxu0 0.0
        %973 = vmatpush1.msra.mxu0 0.0
        %974 = vmatprep.mubr.f32.mxu0 0.0
        %975 = vmatmul.mubr.f32.gmra.mrb[0].mxu0 %v905
        %v976 = vpop.f32.mrb[0].mxu0
        %v977 = vadd.f32 0.0, %v976
        %v978 = vpop.f32.mrb[0].mxu0
        %979 = vmatprep.mubr.f32.mxu0 0.0
        %980 = vmatmul.mubr.f32.gmra.mrb[0].mxu0 %v908
        %v981 = vpop.f32.mrb[0].mxu0
        %v982 = vadd.f32 0.0, %v981
        %v983 = vpop.f32.mrb[0].mxu0
        %984 = vdwg.mxu0
        %s985 = scalar_lea.vmem [#allocation8], 320
        %v986 = vld [vmem:[%s985] sm:$0xff]
        %v987 = vld [vmem:[%s985 + $0x8] sm:$0xff]
        %v988 = vld [vmem:[%s985 + $0x10] sm:$0xff]
        %v989 = vld [vmem:[%s985 + $0x18] sm:$0xff]
        %v990 = vld [vmem:[%s985 + $0x20] sm:$0xff]
        %v991 = vld [vmem:[%s985 + $0x28] sm:$0xff]
        %v992 = vld [vmem:[%s985 + $0x30] sm:$0xff]
        %v993 = vld [vmem:[%s985 + $0x38] sm:$0xff]
        %v994 = vld [vmem:[%s985 + $0x40] sm:$0xff]
        %v995 = vld [vmem:[%s985 + $0x48] sm:$0xff]
        %v996 = vld [vmem:[%s985 + $0x50] sm:$0xff]
        %v997 = vld [vmem:[%s985 + $0x58] sm:$0xff]
        %v998 = vld [vmem:[%s985 + $0x60] sm:$0xff]
        %v999 = vld [vmem:[%s985 + $0x68] sm:$0xff]
        %v1000 = vld [vmem:[%s985 + $0x70] sm:$0xff]
        %v1001 = vld [vmem:[%s985 + $0x78] sm:$0xff]
        %v1002 = vld [vmem:[%s985 + $0x80] sm:$0xff]
        %v1003 = vld [vmem:[%s985 + $0x88] sm:$0xff]
        %v1004 = vld [vmem:[%s985 + $0x90] sm:$0xff]
        %v1005 = vld [vmem:[%s985 + $0x98] sm:$0xff]
        %v1006 = vld [vmem:[%s985 + $0xa0] sm:$0xff]
        %v1007 = vld [vmem:[%s985 + $0xa8] sm:$0xff]
        %v1008 = vld [vmem:[%s985 + $0xb0] sm:$0xff]
        %v1009 = vld [vmem:[%s985 + $0xb8] sm:$0xff]
        %v1010 = vld [vmem:[%s985 + $0xc0] sm:$0xff]
        %v1011 = vld [vmem:[%s985 + $0xc8] sm:$0xff]
        %v1012 = vld [vmem:[%s985 + $0xd0] sm:$0xff]
        %v1013 = vld [vmem:[%s985 + $0xd8] sm:$0xff]
        %v1014 = vld [vmem:[%s985 + $0xe0] sm:$0xff]
        %v1015 = vld [vmem:[%s985 + $0xe8] sm:$0xff]
        %v1016 = vld [vmem:[%s985 + $0xf0] sm:$0xff]
        %v1017 = vld [vmem:[%s985 + $0xf8] sm:$0xff]
        %v1018 = vld [vmem:[%s985 + $0x100] sm:$0xff]
        %v1019 = vld [vmem:[%s985 + $0x108] sm:$0xff]
        %v1020 = vld [vmem:[%s985 + $0x110] sm:$0xff]
        %v1021 = vld [vmem:[%s985 + $0x118] sm:$0xff]
        %v1022 = vld [vmem:[%s985 + $0x120] sm:$0xff]
        %v1023 = vld [vmem:[%s985 + $0x128] sm:$0xff]
        %v1024 = vld [vmem:[%s985 + $0x130] sm:$0xff]
        %v1025 = vld [vmem:[%s985 + $0x138] sm:$0xff]
        %vm1026 = vcmask 654336
        %v1028 = vsel %vm1026, %v977, 0
        %v1031 = vsel %vm1026, %v982, 0
        %1033 = vmatprep.subr.mxu0 %v987
        %1034 = vmatpush1.msra.mxu0 %v986
        %1035 = vmatprep.subr.mxu0 %v991
        %1036 = vmatpush1.msra.mxu0 %v990
        %1037 = vmatprep.subr.mxu0 %v995
        %1038 = vmatpush1.msra.mxu0 %v994
        %1039 = vmatprep.subr.mxu0 %v999
        %1040 = vmatpush1.msra.mxu0 %v998
        %1041 = vmatprep.subr.mxu0 %v1003
        %1042 = vmatpush1.msra.mxu0 %v1002
        %1043 = vmatprep.subr.mxu0 %v1007
        %1044 = vmatpush1.msra.mxu0 %v1006
        %1045 = vmatprep.subr.mxu0 %v1011
        %1046 = vmatpush1.msra.mxu0 %v1010
        %1047 = vmatprep.subr.mxu0 %v1015
        %1048 = vmatpush1.msra.mxu0 %v1014
        %1049 = vmatprep.subr.mxu0 %v1019
        %1050 = vmatpush1.msra.mxu0 %v1018
        %1051 = vmatprep.subr.mxu0 %v1023
        %1052 = vmatpush1.msra.mxu0 %v1022
        %1053 = vmatprep.subr.mxu0 0.0
        %1054 = vmatpush1.msra.mxu0 0.0
        %1055 = vmatprep.subr.mxu0 0.0
        %1056 = vmatpush1.msra.mxu0 0.0
        %1057 = vmatprep.subr.mxu0 0.0
        %1058 = vmatpush1.msra.mxu0 0.0
        %1059 = vmatprep.subr.mxu0 0.0
        %1060 = vmatpush1.msra.mxu0 0.0
        %1061 = vmatprep.subr.mxu0 0.0
        %1062 = vmatpush1.msra.mxu0 0.0
        %1063 = vmatprep.subr.mxu0 0.0
        %1064 = vmatpush1.msra.mxu0 0.0
        %1065 = vmatprep.subr.mxu0 0.0
        %1066 = vmatpush1.msra.mxu0 0.0
        %1067 = vmatprep.subr.mxu0 0.0
        %1068 = vmatpush1.msra.mxu0 0.0
        %1069 = vmatprep.subr.mxu0 0.0
        %1070 = vmatpush1.msra.mxu0 0.0
        %1071 = vmatprep.subr.mxu0 0.0
        %1072 = vmatpush1.msra.mxu0 0.0
        %1073 = vmatprep.subr.mxu0 0.0
        %1074 = vmatpush1.msra.mxu0 0.0
        %1075 = vmatprep.subr.mxu0 0.0
        %1076 = vmatpush1.msra.mxu0 0.0
        %1077 = vmatprep.subr.mxu0 0.0
        %1078 = vmatpush1.msra.mxu0 0.0
        %1079 = vmatprep.subr.mxu0 0.0
        %1080 = vmatpush1.msra.mxu0 0.0
        %1081 = vmatprep.subr.mxu0 0.0
        %1082 = vmatpush1.msra.mxu0 0.0
        %1083 = vmatprep.subr.mxu0 0.0
        %1084 = vmatpush1.msra.mxu0 0.0
        %1085 = vmatprep.subr.mxu0 0.0
        %1086 = vmatpush1.msra.mxu0 0.0
        %1087 = vmatprep.subr.mxu0 0.0
        %1088 = vmatpush1.msra.mxu0 0.0
        %1089 = vmatprep.subr.mxu0 0.0
        %1090 = vmatpush1.msra.mxu0 0.0
        %1091 = vmatprep.subr.mxu0 0.0
        %1092 = vmatpush1.msra.mxu0 0.0
        %1093 = vmatprep.subr.mxu0 0.0
        %1094 = vmatpush1.msra.mxu0 0.0
        %1095 = vmatprep.subr.mxu0 0.0
        %1096 = vmatpush1.msra.mxu0 0.0
        %1097 = vmatprep.mubr.f32.mxu0 0.0
        %1098 = vmatmul.mubr.f32.gmra.mrb[0].mxu0 %v1028
        %v1099 = vpop.f32.mrb[0].mxu0
        %v1100 = vadd.f32 0.0, %v1099
        %v1101 = vpop.f32.mrb[0].mxu0
        %v1102 = vadd.f32 0.0, %v1101
        %1103 = vmatprep.mubr.f32.mxu0 0.0
        %1104 = vmatmul.mubr.f32.gmra.mrb[0].mxu0 %v1031
        %v1105 = vpop.f32.mrb[0].mxu0
        %v1106 = vadd.f32 0.0, %v1105
        %v1107 = vpop.f32.mrb[0].mxu0
        %v1108 = vadd.f32 0.0, %v1107
        %1109 = vdwg.mxu0
        %1110 = vmatprep.subr.mxu0 %v989
        %1111 = vmatpush1.msra.mxu0 %v988
        %1112 = vmatprep.subr.mxu0 %v993
        %1113 = vmatpush1.msra.mxu0 %v992
        %1114 = vmatprep.subr.mxu0 %v997
        %1115 = vmatpush1.msra.mxu0 %v996
        %1116 = vmatprep.subr.mxu0 %v1001
        %1117 = vmatpush1.msra.mxu0 %v1000
        %1118 = vmatprep.subr.mxu0 %v1005
        %1119 = vmatpush1.msra.mxu0 %v1004
        %1120 = vmatprep.subr.mxu0 %v1009
        %1121 = vmatpush1.msra.mxu0 %v1008
        %1122 = vmatprep.subr.mxu0 %v1013
        %1123 = vmatpush1.msra.mxu0 %v1012
        %1124 = vmatprep.subr.mxu0 %v1017
        %1125 = vmatpush1.msra.mxu0 %v1016
        %1126 = vmatprep.subr.mxu0 %v1021
        %1127 = vmatpush1.msra.mxu0 %v1020
        %1128 = vmatprep.subr.mxu0 %v1025
        %1129 = vmatpush1.msra.mxu0 %v1024
        %1130 = vmatprep.subr.mxu0 0.0
        %1131 = vmatpush1.msra.mxu0 0.0
        %1132 = vmatprep.subr.mxu0 0.0
        %1133 = vmatpush1.msra.mxu0 0.0
        %1134 = vmatprep.subr.mxu0 0.0
        %1135 = vmatpush1.msra.mxu0 0.0
        %1136 = vmatprep.subr.mxu0 0.0
        %1137 = vmatpush1.msra.mxu0 0.0
        %1138 = vmatprep.subr.mxu0 0.0
        %1139 = vmatpush1.msra.mxu0 0.0
        %1140 = vmatprep.subr.mxu0 0.0
        %1141 = vmatpush1.msra.mxu0 0.0
        %1142 = vmatprep.subr.mxu0 0.0
        %1143 = vmatpush1.msra.mxu0 0.0
        %1144 = vmatprep.subr.mxu0 0.0
        %1145 = vmatpush1.msra.mxu0 0.0
        %1146 = vmatprep.subr.mxu0 0.0
        %1147 = vmatpush1.msra.mxu0 0.0
        %1148 = vmatprep.subr.mxu0 0.0
        %1149 = vmatpush1.msra.mxu0 0.0
        %1150 = vmatprep.subr.mxu0 0.0
        %1151 = vmatpush1.msra.mxu0 0.0
        %1152 = vmatprep.subr.mxu0 0.0
        %1153 = vmatpush1.msra.mxu0 0.0
        %1154 = vmatprep.subr.mxu0 0.0
        %1155 = vmatpush1.msra.mxu0 0.0
        %1156 = vmatprep.subr.mxu0 0.0
        %1157 = vmatpush1.msra.mxu0 0.0
        %1158 = vmatprep.subr.mxu0 0.0
        %1159 = vmatpush1.msra.mxu0 0.0
        %1160 = vmatprep.subr.mxu0 0.0
        %1161 = vmatpush1.msra.mxu0 0.0
        %1162 = vmatprep.subr.mxu0 0.0
        %1163 = vmatpush1.msra.mxu0 0.0
        %1164 = vmatprep.subr.mxu0 0.0
        %1165 = vmatpush1.msra.mxu0 0.0
        %1166 = vmatprep.subr.mxu0 0.0
        %1167 = vmatpush1.msra.mxu0 0.0
        %1168 = vmatprep.subr.mxu0 0.0
        %1169 = vmatpush1.msra.mxu0 0.0
        %1170 = vmatprep.subr.mxu0 0.0
        %1171 = vmatpush1.msra.mxu0 0.0
        %1172 = vmatprep.subr.mxu0 0.0
        %1173 = vmatpush1.msra.mxu0 0.0
        %1174 = vmatprep.mubr.f32.mxu0 0.0
        %1175 = vmatmul.mubr.f32.gmra.mrb[0].mxu0 %v1028
        %v1176 = vpop.f32.mrb[0].mxu0
        %v1177 = vadd.f32 0.0, %v1176
        %v1178 = vpop.f32.mrb[0].mxu0
        %v1179 = vadd.f32 0.0, %v1178
        %1180 = vmatprep.mubr.f32.mxu0 0.0
        %1181 = vmatmul.mubr.f32.gmra.mrb[0].mxu0 %v1031
        %v1182 = vpop.f32.mrb[0].mxu0
        %v1183 = vadd.f32 0.0, %v1182
        %v1184 = vpop.f32.mrb[0].mxu0
        %v1185 = vadd.f32 0.0, %v1184
        %1186 = vdwg.mxu0
        %v1188 = vsel %vm1026, %v853, 0
        %v1191 = vsel %vm1026, %v858, 0
        %1193 = vmatprep.subr.mxu0 %v862
        %1194 = vmatpush1.msra.mxu0 %v861
        %1195 = vmatprep.subr.mxu0 %v866
        %1196 = vmatpush1.msra.mxu0 %v865
        %1197 = vmatprep.subr.mxu0 %v870
        %1198 = vmatpush1.msra.mxu0 %v869
        %1199 = vmatprep.subr.mxu0 %v874
        %1200 = vmatpush1.msra.mxu0 %v873
        %1201 = vmatprep.subr.mxu0 %v878
        %1202 = vmatpush1.msra.mxu0 %v877
        %1203 = vmatprep.subr.mxu0 %v882
        %1204 = vmatpush1.msra.mxu0 %v881
        %1205 = vmatprep.subr.mxu0 %v886
        %1206 = vmatpush1.msra.mxu0 %v885
        %1207 = vmatprep.subr.mxu0 %v890
        %1208 = vmatpush1.msra.mxu0 %v889
        %1209 = vmatprep.subr.mxu0 %v894
        %1210 = vmatpush1.msra.mxu0 %v893
        %1211 = vmatprep.subr.mxu0 %v898
        %1212 = vmatpush1.msra.mxu0 %v897
        %1213 = vmatprep.subr.mxu0 0.0
        %1214 = vmatpush1.msra.mxu0 0.0
        %1215 = vmatprep.subr.mxu0 0.0
        %1216 = vmatpush1.msra.mxu0 0.0
        %1217 = vmatprep.subr.mxu0 0.0
        %1218 = vmatpush1.msra.mxu0 0.0
        %1219 = vmatprep.subr.mxu0 0.0
        %1220 = vmatpush1.msra.mxu0 0.0
        %1221 = vmatprep.subr.mxu0 0.0
        %1222 = vmatpush1.msra.mxu0 0.0
        %1223 = vmatprep.subr.mxu0 0.0
        %1224 = vmatpush1.msra.mxu0 0.0
        %1225 = vmatprep.subr.mxu0 0.0
        %1226 = vmatpush1.msra.mxu0 0.0
        %1227 = vmatprep.subr.mxu0 0.0
        %1228 = vmatpush1.msra.mxu0 0.0
        %1229 = vmatprep.subr.mxu0 0.0
        %1230 = vmatpush1.msra.mxu0 0.0
        %1231 = vmatprep.subr.mxu0 0.0
        %1232 = vmatpush1.msra.mxu0 0.0
        %1233 = vmatprep.subr.mxu0 0.0
        %1234 = vmatpush1.msra.mxu0 0.0
        %1235 = vmatprep.subr.mxu0 0.0
        %1236 = vmatpush1.msra.mxu0 0.0
        %1237 = vmatprep.subr.mxu0 0.0
        %1238 = vmatpush1.msra.mxu0 0.0
        %1239 = vmatprep.subr.mxu0 0.0
        %1240 = vmatpush1.msra.mxu0 0.0
        %1241 = vmatprep.subr.mxu0 0.0
        %1242 = vmatpush1.msra.mxu0 0.0
        %1243 = vmatprep.subr.mxu0 0.0
        %1244 = vmatpush1.msra.mxu0 0.0
        %1245 = vmatprep.subr.mxu0 0.0
        %1246 = vmatpush1.msra.mxu0 0.0
        %1247 = vmatprep.subr.mxu0 0.0
        %1248 = vmatpush1.msra.mxu0 0.0
        %1249 = vmatprep.subr.mxu0 0.0
        %1250 = vmatpush1.msra.mxu0 0.0
        %1251 = vmatprep.subr.mxu0 0.0
        %1252 = vmatpush1.msra.mxu0 0.0
        %1253 = vmatprep.subr.mxu0 0.0
        %1254 = vmatpush1.msra.mxu0 0.0
        %1255 = vmatprep.subr.mxu0 0.0
        %1256 = vmatpush1.msra.mxu0 0.0
        %1257 = vmatprep.mubr.f32.mxu0 0.0
        %1258 = vmatmul.mubr.f32.gmra.mrb[0].mxu0 %v1188
        %v1259 = vpop.f32.mrb[0].mxu0
        %v1260 = vadd.f32 %v1100, %v1259
        %v1261 = vpop.f32.mrb[0].mxu0
        %v1262 = vadd.f32 %v1102, %v1261
        %1263 = vmatprep.mubr.f32.mxu0 0.0
        %1264 = vmatmul.mubr.f32.gmra.mrb[0].mxu0 %v1191
        %v1265 = vpop.f32.mrb[0].mxu0
        %v1266 = vadd.f32 %v1106, %v1265
        %v1267 = vpop.f32.mrb[0].mxu0
        %v1268 = vadd.f32 %v1108, %v1267
        %1269 = vdwg.mxu0
        %1270 = vmatprep.subr.mxu0 %v864
        %1271 = vmatpush1.msra.mxu0 %v863
        %1272 = vmatprep.subr.mxu0 %v868
        %1273 = vmatpush1.msra.mxu0 %v867
        %1274 = vmatprep.subr.mxu0 %v872
        %1275 = vmatpush1.msra.mxu0 %v871
        %1276 = vmatprep.subr.mxu0 %v876
        %1277 = vmatpush1.msra.mxu0 %v875
        %1278 = vmatprep.subr.mxu0 %v880
        %1279 = vmatpush1.msra.mxu0 %v879
        %1280 = vmatprep.subr.mxu0 %v884
        %1281 = vmatpush1.msra.mxu0 %v883
        %1282 = vmatprep.subr.mxu0 %v888
        %1283 = vmatpush1.msra.mxu0 %v887
        %1284 = vmatprep.subr.mxu0 %v892
        %1285 = vmatpush1.msra.mxu0 %v891
        %1286 = vmatprep.subr.mxu0 %v896
        %1287 = vmatpush1.msra.mxu0 %v895
        %1288 = vmatprep.subr.mxu0 %v900
        %1289 = vmatpush1.msra.mxu0 %v899
        %1290 = vmatprep.subr.mxu0 0.0
        %1291 = vmatpush1.msra.mxu0 0.0
        %1292 = vmatprep.subr.mxu0 0.0
        %1293 = vmatpush1.msra.mxu0 0.0
        %1294 = vmatprep.subr.mxu0 0.0
        %1295 = vmatpush1.msra.mxu0 0.0
        %1296 = vmatprep.subr.mxu0 0.0
        %1297 = vmatpush1.msra.mxu0 0.0
        %1298 = vmatprep.subr.mxu0 0.0
        %1299 = vmatpush1.msra.mxu0 0.0
        %1300 = vmatprep.subr.mxu0 0.0
        %1301 = vmatpush1.msra.mxu0 0.0
        %1302 = vmatprep.subr.mxu0 0.0
        %1303 = vmatpush1.msra.mxu0 0.0
        %1304 = vmatprep.subr.mxu0 0.0
        %1305 = vmatpush1.msra.mxu0 0.0
        %1306 = vmatprep.subr.mxu0 0.0
        %1307 = vmatpush1.msra.mxu0 0.0
        %1308 = vmatprep.subr.mxu0 0.0
        %1309 = vmatpush1.msra.mxu0 0.0
        %1310 = vmatprep.subr.mxu0 0.0
        %1311 = vmatpush1.msra.mxu0 0.0
        %1312 = vmatprep.subr.mxu0 0.0
        %1313 = vmatpush1.msra.mxu0 0.0
        %1314 = vmatprep.subr.mxu0 0.0
        %1315 = vmatpush1.msra.mxu0 0.0
        %1316 = vmatprep.subr.mxu0 0.0
        %1317 = vmatpush1.msra.mxu0 0.0
        %1318 = vmatprep.subr.mxu0 0.0
        %1319 = vmatpush1.msra.mxu0 0.0
        %1320 = vmatprep.subr.mxu0 0.0
        %1321 = vmatpush1.msra.mxu0 0.0
        %1322 = vmatprep.subr.mxu0 0.0
        %1323 = vmatpush1.msra.mxu0 0.0
        %1324 = vmatprep.subr.mxu0 0.0
        %1325 = vmatpush1.msra.mxu0 0.0
        %1326 = vmatprep.subr.mxu0 0.0
        %1327 = vmatpush1.msra.mxu0 0.0
        %1328 = vmatprep.subr.mxu0 0.0
        %1329 = vmatpush1.msra.mxu0 0.0
        %1330 = vmatprep.subr.mxu0 0.0
        %1331 = vmatpush1.msra.mxu0 0.0
        %1332 = vmatprep.subr.mxu0 0.0
        %1333 = vmatpush1.msra.mxu0 0.0
        %1334 = vmatprep.mubr.f32.mxu0 0.0
        %1335 = vmatmul.mubr.f32.gmra.mrb[0].mxu0 %v1188
        %v1336 = vpop.f32.mrb[0].mxu0
        %v1337 = vadd.f32 %v1177, %v1336
        %v1338 = vpop.f32.mrb[0].mxu0
        %v1339 = vadd.f32 %v1179, %v1338
        %1340 = vmatprep.mubr.f32.mxu0 0.0
        %1341 = vmatmul.mubr.f32.gmra.mrb[0].mxu0 %v1191
        %v1342 = vpop.f32.mrb[0].mxu0
        %v1343 = vadd.f32 %v1183, %v1342
        %v1344 = vpop.f32.mrb[0].mxu0
        %v1345 = vadd.f32 %v1185, %v1344
        %1346 = vdwg.mxu0
        %s1347 = scalar_lea.vmem %s2, 32
        %v1348 = vld [vmem:[%s1347] sm:$0xff]
        %v1349 = vld [vmem:[%s1347 + $0x8] sm:$0xff]
        %v1351 = vsel %vm779, %v1348, 0
        %v1354 = vsel %vm779, %v1349, 0
        %1356 = vmatprep.subr.mxu0 0.0
        %1357 = vmatpush1.msra.mxu0 %v774
        %1358 = vmatprep.subr.mxu0 0.0
        %1359 = vmatpush1.msra.mxu0 0.0
        %1360 = vmatprep.subr.mxu0 0.0
        %1361 = vmatpush1.msra.mxu0 0.0
        %1362 = vmatprep.subr.mxu0 0.0
        %1363 = vmatpush1.msra.mxu0 0.0
        %1364 = vmatprep.subr.mxu0 0.0
        %1365 = vmatpush1.msra.mxu0 0.0
        %1366 = vmatprep.subr.mxu0 0.0
        %1367 = vmatpush1.msra.mxu0 0.0
        %1368 = vmatprep.subr.mxu0 0.0
        %1369 = vmatpush1.msra.mxu0 0.0
        %1370 = vmatprep.subr.mxu0 0.0
        %1371 = vmatpush1.msra.mxu0 0.0
        %1372 = vmatprep.subr.mxu0 0.0
        %1373 = vmatpush1.msra.mxu0 0.0
        %1374 = vmatprep.subr.mxu0 0.0
        %1375 = vmatpush1.msra.mxu0 0.0
        %1376 = vmatprep.subr.mxu0 0.0
        %1377 = vmatpush1.msra.mxu0 0.0
        %1378 = vmatprep.subr.mxu0 0.0
        %1379 = vmatpush1.msra.mxu0 0.0
        %1380 = vmatprep.subr.mxu0 0.0
        %1381 = vmatpush1.msra.mxu0 0.0
        %1382 = vmatprep.subr.mxu0 0.0
        %1383 = vmatpush1.msra.mxu0 0.0
        %1384 = vmatprep.subr.mxu0 0.0
        %1385 = vmatpush1.msra.mxu0 0.0
        %1386 = vmatprep.subr.mxu0 0.0
        %1387 = vmatpush1.msra.mxu0 0.0
        %1388 = vmatprep.subr.mxu0 0.0
        %1389 = vmatpush1.msra.mxu0 0.0
        %1390 = vmatprep.subr.mxu0 0.0
        %1391 = vmatpush1.msra.mxu0 0.0
        %1392 = vmatprep.subr.mxu0 0.0
        %1393 = vmatpush1.msra.mxu0 0.0
        %1394 = vmatprep.subr.mxu0 0.0
        %1395 = vmatpush1.msra.mxu0 0.0
        %1396 = vmatprep.subr.mxu0 0.0
        %1397 = vmatpush1.msra.mxu0 0.0
        %1398 = vmatprep.subr.mxu0 0.0
        %1399 = vmatpush1.msra.mxu0 0.0
        %1400 = vmatprep.subr.mxu0 0.0
        %1401 = vmatpush1.msra.mxu0 0.0
        %1402 = vmatprep.subr.mxu0 0.0
        %1403 = vmatpush1.msra.mxu0 0.0
        %1404 = vmatprep.subr.mxu0 0.0
        %1405 = vmatpush1.msra.mxu0 0.0
        %1406 = vmatprep.subr.mxu0 0.0
        %1407 = vmatpush1.msra.mxu0 0.0
        %1408 = vmatprep.subr.mxu0 0.0
        %1409 = vmatpush1.msra.mxu0 0.0
        %1410 = vmatprep.subr.mxu0 0.0
        %1411 = vmatpush1.msra.mxu0 0.0
        %1412 = vmatprep.subr.mxu0 0.0
        %1413 = vmatpush1.msra.mxu0 0.0
        %1414 = vmatprep.subr.mxu0 0.0
        %1415 = vmatpush1.msra.mxu0 0.0
        %1416 = vmatprep.subr.mxu0 0.0
        %1417 = vmatpush1.msra.mxu0 0.0
        %1418 = vmatprep.subr.mxu0 0.0
        %1419 = vmatpush1.msra.mxu0 0.0
        %1420 = vmatprep.mubr.f32.mxu0 0.0
        %1421 = vmatmul.mubr.f32.gmra.mrb[0].mxu0 %v1351
        %v1422 = vpop.f32.mrb[0].mxu0
        %v1423 = vadd.f32 0.0, %v1422
        %v1424 = vpop.f32.mrb[0].mxu0
        %1425 = vmatprep.mubr.f32.mxu0 0.0
        %1426 = vmatmul.mubr.f32.gmra.mrb[0].mxu0 %v1354
        %v1427 = vpop.f32.mrb[0].mxu0
        %v1428 = vadd.f32 0.0, %v1427
        %v1429 = vpop.f32.mrb[0].mxu0
        %1430 = vdwg.mxu0
        %s1431 = scalar_lea.vmem [#allocation8], 640
        %v1432 = vld [vmem:[%s1431] sm:$0xff]
        %v1433 = vld [vmem:[%s1431 + $0x8] sm:$0xff]
        %v1434 = vld [vmem:[%s1431 + $0x10] sm:$0xff]
        %v1435 = vld [vmem:[%s1431 + $0x18] sm:$0xff]
        %v1436 = vld [vmem:[%s1431 + $0x20] sm:$0xff]
        %v1437 = vld [vmem:[%s1431 + $0x28] sm:$0xff]
        %v1438 = vld [vmem:[%s1431 + $0x30] sm:$0xff]
        %v1439 = vld [vmem:[%s1431 + $0x38] sm:$0xff]
        %v1440 = vld [vmem:[%s1431 + $0x40] sm:$0xff]
        %v1441 = vld [vmem:[%s1431 + $0x48] sm:$0xff]
        %v1442 = vld [vmem:[%s1431 + $0x50] sm:$0xff]
        %v1443 = vld [vmem:[%s1431 + $0x58] sm:$0xff]
        %v1444 = vld [vmem:[%s1431 + $0x60] sm:$0xff]
        %v1445 = vld [vmem:[%s1431 + $0x68] sm:$0xff]
        %v1446 = vld [vmem:[%s1431 + $0x70] sm:$0xff]
        %v1447 = vld [vmem:[%s1431 + $0x78] sm:$0xff]
        %v1448 = vld [vmem:[%s1431 + $0x80] sm:$0xff]
        %v1449 = vld [vmem:[%s1431 + $0x88] sm:$0xff]
        %v1450 = vld [vmem:[%s1431 + $0x90] sm:$0xff]
        %v1451 = vld [vmem:[%s1431 + $0x98] sm:$0xff]
        %v1452 = vld [vmem:[%s1431 + $0xa0] sm:$0xff]
        %v1453 = vld [vmem:[%s1431 + $0xa8] sm:$0xff]
        %v1454 = vld [vmem:[%s1431 + $0xb0] sm:$0xff]
        %v1455 = vld [vmem:[%s1431 + $0xb8] sm:$0xff]
        %v1456 = vld [vmem:[%s1431 + $0xc0] sm:$0xff]
        %v1457 = vld [vmem:[%s1431 + $0xc8] sm:$0xff]
        %v1458 = vld [vmem:[%s1431 + $0xd0] sm:$0xff]
        %v1459 = vld [vmem:[%s1431 + $0xd8] sm:$0xff]
        %v1460 = vld [vmem:[%s1431 + $0xe0] sm:$0xff]
        %v1461 = vld [vmem:[%s1431 + $0xe8] sm:$0xff]
        %v1462 = vld [vmem:[%s1431 + $0xf0] sm:$0xff]
        %v1463 = vld [vmem:[%s1431 + $0xf8] sm:$0xff]
        %v1464 = vld [vmem:[%s1431 + $0x100] sm:$0xff]
        %v1465 = vld [vmem:[%s1431 + $0x108] sm:$0xff]
        %v1466 = vld [vmem:[%s1431 + $0x110] sm:$0xff]
        %v1467 = vld [vmem:[%s1431 + $0x118] sm:$0xff]
        %v1468 = vld [vmem:[%s1431 + $0x120] sm:$0xff]
        %v1469 = vld [vmem:[%s1431 + $0x128] sm:$0xff]
        %v1470 = vld [vmem:[%s1431 + $0x130] sm:$0xff]
        %v1471 = vld [vmem:[%s1431 + $0x138] sm:$0xff]
        %v1473 = vsel %vm1026, %v1423, 0
        %v1476 = vsel %vm1026, %v1428, 0
        %1478 = vmatprep.subr.mxu0 %v1433
        %1479 = vmatpush1.msra.mxu0 %v1432
        %1480 = vmatprep.subr.mxu0 %v1437
        %1481 = vmatpush1.msra.mxu0 %v1436
        %1482 = vmatprep.subr.mxu0 %v1441
        %1483 = vmatpush1.msra.mxu0 %v1440
        %1484 = vmatprep.subr.mxu0 %v1445
        %1485 = vmatpush1.msra.mxu0 %v1444
        %1486 = vmatprep.subr.mxu0 %v1449
        %1487 = vmatpush1.msra.mxu0 %v1448
        %1488 = vmatprep.subr.mxu0 %v1453
        %1489 = vmatpush1.msra.mxu0 %v1452
        %1490 = vmatprep.subr.mxu0 %v1457
        %1491 = vmatpush1.msra.mxu0 %v1456
        %1492 = vmatprep.subr.mxu0 %v1461
        %1493 = vmatpush1.msra.mxu0 %v1460
        %1494 = vmatprep.subr.mxu0 %v1465
        %1495 = vmatpush1.msra.mxu0 %v1464
        %1496 = vmatprep.subr.mxu0 %v1469
        %1497 = vmatpush1.msra.mxu0 %v1468
        %1498 = vmatprep.subr.mxu0 0.0
        %1499 = vmatpush1.msra.mxu0 0.0
        %1500 = vmatprep.subr.mxu0 0.0
        %1501 = vmatpush1.msra.mxu0 0.0
        %1502 = vmatprep.subr.mxu0 0.0
        %1503 = vmatpush1.msra.mxu0 0.0
        %1504 = vmatprep.subr.mxu0 0.0
        %1505 = vmatpush1.msra.mxu0 0.0
        %1506 = vmatprep.subr.mxu0 0.0
        %1507 = vmatpush1.msra.mxu0 0.0
        %1508 = vmatprep.subr.mxu0 0.0
        %1509 = vmatpush1.msra.mxu0 0.0
        %1510 = vmatprep.subr.mxu0 0.0
        %1511 = vmatpush1.msra.mxu0 0.0
        %1512 = vmatprep.subr.mxu0 0.0
        %1513 = vmatpush1.msra.mxu0 0.0
        %1514 = vmatprep.subr.mxu0 0.0
        %1515 = vmatpush1.msra.mxu0 0.0
        %1516 = vmatprep.subr.mxu0 0.0
        %1517 = vmatpush1.msra.mxu0 0.0
        %1518 = vmatprep.subr.mxu0 0.0
        %1519 = vmatpush1.msra.mxu0 0.0
        %1520 = vmatprep.subr.mxu0 0.0
        %1521 = vmatpush1.msra.mxu0 0.0
        %1522 = vmatprep.subr.mxu0 0.0
        %1523 = vmatpush1.msra.mxu0 0.0
        %1524 = vmatprep.subr.mxu0 0.0
        %1525 = vmatpush1.msra.mxu0 0.0
        %1526 = vmatprep.subr.mxu0 0.0
        %1527 = vmatpush1.msra.mxu0 0.0
        %1528 = vmatprep.subr.mxu0 0.0
        %1529 = vmatpush1.msra.mxu0 0.0
        %1530 = vmatprep.subr.mxu0 0.0
        %1531 = vmatpush1.msra.mxu0 0.0
        %1532 = vmatprep.subr.mxu0 0.0
        %1533 = vmatpush1.msra.mxu0 0.0
        %1534 = vmatprep.subr.mxu0 0.0
        %1535 = vmatpush1.msra.mxu0 0.0
        %1536 = vmatprep.subr.mxu0 0.0
        %1537 = vmatpush1.msra.mxu0 0.0
        %1538 = vmatprep.subr.mxu0 0.0
        %1539 = vmatpush1.msra.mxu0 0.0
        %1540 = vmatprep.subr.mxu0 0.0
        %1541 = vmatpush1.msra.mxu0 0.0
        %1542 = vmatprep.mubr.f32.mxu0 0.0
        %1543 = vmatmul.mubr.f32.gmra.mrb[0].mxu0 %v1473
        %v1544 = vpop.f32.mrb[0].mxu0
        %v1545 = vadd.f32 0.0, %v1544
        %v1546 = vpop.f32.mrb[0].mxu0
        %v1547 = vadd.f32 0.0, %v1546
        %1548 = vmatprep.mubr.f32.mxu0 0.0
        %1549 = vmatmul.mubr.f32.gmra.mrb[0].mxu0 %v1476
        %v1550 = vpop.f32.mrb[0].mxu0
        %v1551 = vadd.f32 0.0, %v1550
        %v1552 = vpop.f32.mrb[0].mxu0
        %v1553 = vadd.f32 0.0, %v1552
        %1554 = vdwg.mxu0
        %1555 = vmatprep.subr.mxu0 %v1435
        %1556 = vmatpush1.msra.mxu0 %v1434
        %1557 = vmatprep.subr.mxu0 %v1439
        %1558 = vmatpush1.msra.mxu0 %v1438
        %1559 = vmatprep.subr.mxu0 %v1443
        %1560 = vmatpush1.msra.mxu0 %v1442
        %1561 = vmatprep.subr.mxu0 %v1447
        %1562 = vmatpush1.msra.mxu0 %v1446
        %1563 = vmatprep.subr.mxu0 %v1451
        %1564 = vmatpush1.msra.mxu0 %v1450
        %1565 = vmatprep.subr.mxu0 %v1455
        %1566 = vmatpush1.msra.mxu0 %v1454
        %1567 = vmatprep.subr.mxu0 %v1459
        %1568 = vmatpush1.msra.mxu0 %v1458
        %1569 = vmatprep.subr.mxu0 %v1463
        %1570 = vmatpush1.msra.mxu0 %v1462
        %1571 = vmatprep.subr.mxu0 %v1467
        %1572 = vmatpush1.msra.mxu0 %v1466
        %1573 = vmatprep.subr.mxu0 %v1471
        %1574 = vmatpush1.msra.mxu0 %v1470
        %1575 = vmatprep.subr.mxu0 0.0
        %1576 = vmatpush1.msra.mxu0 0.0
        %1577 = vmatprep.subr.mxu0 0.0
        %1578 = vmatpush1.msra.mxu0 0.0
        %1579 = vmatprep.subr.mxu0 0.0
        %1580 = vmatpush1.msra.mxu0 0.0
        %1581 = vmatprep.subr.mxu0 0.0
        %1582 = vmatpush1.msra.mxu0 0.0
        %1583 = vmatprep.subr.mxu0 0.0
        %1584 = vmatpush1.msra.mxu0 0.0
        %1585 = vmatprep.subr.mxu0 0.0
        %1586 = vmatpush1.msra.mxu0 0.0
        %1587 = vmatprep.subr.mxu0 0.0
        %1588 = vmatpush1.msra.mxu0 0.0
        %1589 = vmatprep.subr.mxu0 0.0
        %1590 = vmatpush1.msra.mxu0 0.0
        %1591 = vmatprep.subr.mxu0 0.0
        %1592 = vmatpush1.msra.mxu0 0.0
        %1593 = vmatprep.subr.mxu0 0.0
        %1594 = vmatpush1.msra.mxu0 0.0
        %1595 = vmatprep.subr.mxu0 0.0
        %1596 = vmatpush1.msra.mxu0 0.0
        %1597 = vmatprep.subr.mxu0 0.0
        %1598 = vmatpush1.msra.mxu0 0.0
        %1599 = vmatprep.subr.mxu0 0.0
        %1600 = vmatpush1.msra.mxu0 0.0
        %1601 = vmatprep.subr.mxu0 0.0
        %1602 = vmatpush1.msra.mxu0 0.0
        %1603 = vmatprep.subr.mxu0 0.0
        %1604 = vmatpush1.msra.mxu0 0.0
        %1605 = vmatprep.subr.mxu0 0.0
        %1606 = vmatpush1.msra.mxu0 0.0
        %1607 = vmatprep.subr.mxu0 0.0
        %1608 = vmatpush1.msra.mxu0 0.0
        %1609 = vmatprep.subr.mxu0 0.0
        %1610 = vmatpush1.msra.mxu0 0.0
        %1611 = vmatprep.subr.mxu0 0.0
        %1612 = vmatpush1.msra.mxu0 0.0
        %1613 = vmatprep.subr.mxu0 0.0
        %1614 = vmatpush1.msra.mxu0 0.0
        %1615 = vmatprep.subr.mxu0 0.0
        %1616 = vmatpush1.msra.mxu0 0.0
        %1617 = vmatprep.subr.mxu0 0.0
        %1618 = vmatpush1.msra.mxu0 0.0
        %1619 = vmatprep.mubr.f32.mxu0 0.0
        %1620 = vmatmul.mubr.f32.gmra.mrb[0].mxu0 %v1473
        %v1621 = vpop.f32.mrb[0].mxu0
        %v1622 = vadd.f32 0.0, %v1621
        %v1623 = vpop.f32.mrb[0].mxu0
        %v1624 = vadd.f32 0.0, %v1623
        %1625 = vmatprep.mubr.f32.mxu0 0.0
        %1626 = vmatmul.mubr.f32.gmra.mrb[0].mxu0 %v1476
        %v1627 = vpop.f32.mrb[0].mxu0
        %v1628 = vadd.f32 0.0, %v1627
        %v1629 = vpop.f32.mrb[0].mxu0
        %v1630 = vadd.f32 0.0, %v1629
        %1631 = vdwg.mxu0
        %v1632 = vadd.f32 %v1260, %v1545
        %v1633 = vadd.f32 %v1262, %v1547
        %v1634 = vadd.f32 %v1337, %v1622
        %v1635 = vadd.f32 %v1339, %v1624
        %v1636 = vadd.f32 %v1266, %v1551
        %v1637 = vadd.f32 %v1268, %v1553
        %v1638 = vadd.f32 %v1343, %v1628
        %v1639 = vadd.f32 %v1345, %v1630
        %s1640 = scalar_lea.vmem %s2, 48
        %v1641 = vld [vmem:[%s1640] sm:$0xff]
        %v1642 = vld [vmem:[%s1640 + $0x8] sm:$0xff]
        %v1644 = vsel %vm779, %v1641, 0
        %v1647 = vsel %vm779, %v1642, 0
        %1649 = vmatprep.subr.mxu0 0.0
        %1650 = vmatpush1.msra.mxu0 %v774
        %1651 = vmatprep.subr.mxu0 0.0
        %1652 = vmatpush1.msra.mxu0 0.0
        %1653 = vmatprep.subr.mxu0 0.0
        %1654 = vmatpush1.msra.mxu0 0.0
        %1655 = vmatprep.subr.mxu0 0.0
        %1656 = vmatpush1.msra.mxu0 0.0
        %1657 = vmatprep.subr.mxu0 0.0
        %1658 = vmatpush1.msra.mxu0 0.0
        %1659 = vmatprep.subr.mxu0 0.0
        %1660 = vmatpush1.msra.mxu0 0.0
        %1661 = vmatprep.subr.mxu0 0.0
        %1662 = vmatpush1.msra.mxu0 0.0
        %1663 = vmatprep.subr.mxu0 0.0
        %1664 = vmatpush1.msra.mxu0 0.0
        %1665 = vmatprep.subr.mxu0 0.0
        %1666 = vmatpush1.msra.mxu0 0.0
        %1667 = vmatprep.subr.mxu0 0.0
        %1668 = vmatpush1.msra.mxu0 0.0
        %1669 = vmatprep.subr.mxu0 0.0
        %1670 = vmatpush1.msra.mxu0 0.0
        %1671 = vmatprep.subr.mxu0 0.0
        %1672 = vmatpush1.msra.mxu0 0.0
        %1673 = vmatprep.subr.mxu0 0.0
        %1674 = vmatpush1.msra.mxu0 0.0
        %1675 = vmatprep.subr.mxu0 0.0
        %1676 = vmatpush1.msra.mxu0 0.0
        %1677 = vmatprep.subr.mxu0 0.0
        %1678 = vmatpush1.msra.mxu0 0.0
        %1679 = vmatprep.subr.mxu0 0.0
        %1680 = vmatpush1.msra.mxu0 0.0
        %1681 = vmatprep.subr.mxu0 0.0
        %1682 = vmatpush1.msra.mxu0 0.0
        %1683 = vmatprep.subr.mxu0 0.0
        %1684 = vmatpush1.msra.mxu0 0.0
        %1685 = vmatprep.subr.mxu0 0.0
        %1686 = vmatpush1.msra.mxu0 0.0
        %1687 = vmatprep.subr.mxu0 0.0
        %1688 = vmatpush1.msra.mxu0 0.0
        %1689 = vmatprep.subr.mxu0 0.0
        %1690 = vmatpush1.msra.mxu0 0.0
        %1691 = vmatprep.subr.mxu0 0.0
        %1692 = vmatpush1.msra.mxu0 0.0
        %1693 = vmatprep.subr.mxu0 0.0
        %1694 = vmatpush1.msra.mxu0 0.0
        %1695 = vmatprep.subr.mxu0 0.0
        %1696 = vmatpush1.msra.mxu0 0.0
        %1697 = vmatprep.subr.mxu0 0.0
        %1698 = vmatpush1.msra.mxu0 0.0
        %1699 = vmatprep.subr.mxu0 0.0
        %1700 = vmatpush1.msra.mxu0 0.0
        %1701 = vmatprep.subr.mxu0 0.0
        %1702 = vmatpush1.msra.mxu0 0.0
        %1703 = vmatprep.subr.mxu0 0.0
        %1704 = vmatpush1.msra.mxu0 0.0
        %1705 = vmatprep.subr.mxu0 0.0
        %1706 = vmatpush1.msra.mxu0 0.0
        %1707 = vmatprep.subr.mxu0 0.0
        %1708 = vmatpush1.msra.mxu0 0.0
        %1709 = vmatprep.subr.mxu0 0.0
        %1710 = vmatpush1.msra.mxu0 0.0
        %1711 = vmatprep.subr.mxu0 0.0
        %1712 = vmatpush1.msra.mxu0 0.0
        %1713 = vmatprep.mubr.f32.mxu0 0.0
        %1714 = vmatmul.mubr.f32.gmra.mrb[0].mxu0 %v1644
        %v1715 = vpop.f32.mrb[0].mxu0
        %v1716 = vadd.f32 0.0, %v1715
        %v1717 = vpop.f32.mrb[0].mxu0
        %1718 = vmatprep.mubr.f32.mxu0 0.0
        %1719 = vmatmul.mubr.f32.gmra.mrb[0].mxu0 %v1647
        %v1720 = vpop.f32.mrb[0].mxu0
        %v1721 = vadd.f32 0.0, %v1720
        %v1722 = vpop.f32.mrb[0].mxu0
        %1723 = vdwg.mxu0
        %s1724 = scalar_lea.vmem [#allocation8], 960
        %v1725 = vld [vmem:[%s1724] sm:$0xff]
        %v1726 = vld [vmem:[%s1724 + $0x8] sm:$0xff]
        %v1727 = vld [vmem:[%s1724 + $0x10] sm:$0xff]
        %v1728 = vld [vmem:[%s1724 + $0x18] sm:$0xff]
        %v1729 = vld [vmem:[%s1724 + $0x20] sm:$0xff]
        %v1730 = vld [vmem:[%s1724 + $0x28] sm:$0xff]
        %v1731 = vld [vmem:[%s1724 + $0x30] sm:$0xff]
        %v1732 = vld [vmem:[%s1724 + $0x38] sm:$0xff]
        %v1733 = vld [vmem:[%s1724 + $0x40] sm:$0xff]
        %v1734 = vld [vmem:[%s1724 + $0x48] sm:$0xff]
        %v1735 = vld [vmem:[%s1724 + $0x50] sm:$0xff]
        %v1736 = vld [vmem:[%s1724 + $0x58] sm:$0xff]
        %v1737 = vld [vmem:[%s1724 + $0x60] sm:$0xff]
        %v1738 = vld [vmem:[%s1724 + $0x68] sm:$0xff]
        %v1739 = vld [vmem:[%s1724 + $0x70] sm:$0xff]
        %v1740 = vld [vmem:[%s1724 + $0x78] sm:$0xff]
        %v1741 = vld [vmem:[%s1724 + $0x80] sm:$0xff]
        %v1742 = vld [vmem:[%s1724 + $0x88] sm:$0xff]
        %v1743 = vld [vmem:[%s1724 + $0x90] sm:$0xff]
        %v1744 = vld [vmem:[%s1724 + $0x98] sm:$0xff]
        %v1745 = vld [vmem:[%s1724 + $0xa0] sm:$0xff]
        %v1746 = vld [vmem:[%s1724 + $0xa8] sm:$0xff]
        %v1747 = vld [vmem:[%s1724 + $0xb0] sm:$0xff]
        %v1748 = vld [vmem:[%s1724 + $0xb8] sm:$0xff]
        %v1749 = vld [vmem:[%s1724 + $0xc0] sm:$0xff]
        %v1750 = vld [vmem:[%s1724 + $0xc8] sm:$0xff]
        %v1751 = vld [vmem:[%s1724 + $0xd0] sm:$0xff]
        %v1752 = vld [vmem:[%s1724 + $0xd8] sm:$0xff]
        %v1753 = vld [vmem:[%s1724 + $0xe0] sm:$0xff]
        %v1754 = vld [vmem:[%s1724 + $0xe8] sm:$0xff]
        %v1755 = vld [vmem:[%s1724 + $0xf0] sm:$0xff]
        %v1756 = vld [vmem:[%s1724 + $0xf8] sm:$0xff]
        %v1757 = vld [vmem:[%s1724 + $0x100] sm:$0xff]
        %v1758 = vld [vmem:[%s1724 + $0x108] sm:$0xff]
        %v1759 = vld [vmem:[%s1724 + $0x110] sm:$0xff]
        %v1760 = vld [vmem:[%s1724 + $0x118] sm:$0xff]
        %v1761 = vld [vmem:[%s1724 + $0x120] sm:$0xff]
        %v1762 = vld [vmem:[%s1724 + $0x128] sm:$0xff]
        %v1763 = vld [vmem:[%s1724 + $0x130] sm:$0xff]
        %v1764 = vld [vmem:[%s1724 + $0x138] sm:$0xff]
        %v1766 = vsel %vm1026, %v1716, 0
        %v1769 = vsel %vm1026, %v1721, 0
        %1771 = vmatprep.subr.mxu0 %v1726
        %1772 = vmatpush1.msra.mxu0 %v1725
        %1773 = vmatprep.subr.mxu0 %v1730
        %1774 = vmatpush1.msra.mxu0 %v1729
        %1775 = vmatprep.subr.mxu0 %v1734
        %1776 = vmatpush1.msra.mxu0 %v1733
        %1777 = vmatprep.subr.mxu0 %v1738
        %1778 = vmatpush1.msra.mxu0 %v1737
        %1779 = vmatprep.subr.mxu0 %v1742
        %1780 = vmatpush1.msra.mxu0 %v1741
        %1781 = vmatprep.subr.mxu0 %v1746
        %1782 = vmatpush1.msra.mxu0 %v1745
        %1783 = vmatprep.subr.mxu0 %v1750
        %1784 = vmatpush1.msra.mxu0 %v1749
        %1785 = vmatprep.subr.mxu0 %v1754
        %1786 = vmatpush1.msra.mxu0 %v1753
        %1787 = vmatprep.subr.mxu0 %v1758
        %1788 = vmatpush1.msra.mxu0 %v1757
        %1789 = vmatprep.subr.mxu0 %v1762
        %1790 = vmatpush1.msra.mxu0 %v1761
        %1791 = vmatprep.subr.mxu0 0.0
        %1792 = vmatpush1.msra.mxu0 0.0
        %1793 = vmatprep.subr.mxu0 0.0
        %1794 = vmatpush1.msra.mxu0 0.0
        %1795 = vmatprep.subr.mxu0 0.0
        %1796 = vmatpush1.msra.mxu0 0.0
        %1797 = vmatprep.subr.mxu0 0.0
        %1798 = vmatpush1.msra.mxu0 0.0
        %1799 = vmatprep.subr.mxu0 0.0
        %1800 = vmatpush1.msra.mxu0 0.0
        %1801 = vmatprep.subr.mxu0 0.0
        %1802 = vmatpush1.msra.mxu0 0.0
        %1803 = vmatprep.subr.mxu0 0.0
        %1804 = vmatpush1.msra.mxu0 0.0
        %1805 = vmatprep.subr.mxu0 0.0
        %1806 = vmatpush1.msra.mxu0 0.0
        %1807 = vmatprep.subr.mxu0 0.0
        %1808 = vmatpush1.msra.mxu0 0.0
        %1809 = vmatprep.subr.mxu0 0.0
        %1810 = vmatpush1.msra.mxu0 0.0
        %1811 = vmatprep.subr.mxu0 0.0
        %1812 = vmatpush1.msra.mxu0 0.0
        %1813 = vmatprep.subr.mxu0 0.0
        %1814 = vmatpush1.msra.mxu0 0.0
        %1815 = vmatprep.subr.mxu0 0.0
        %1816 = vmatpush1.msra.mxu0 0.0
        %1817 = vmatprep.subr.mxu0 0.0
        %1818 = vmatpush1.msra.mxu0 0.0
        %1819 = vmatprep.subr.mxu0 0.0
        %1820 = vmatpush1.msra.mxu0 0.0
        %1821 = vmatprep.subr.mxu0 0.0
        %1822 = vmatpush1.msra.mxu0 0.0
        %1823 = vmatprep.subr.mxu0 0.0
        %1824 = vmatpush1.msra.mxu0 0.0
        %1825 = vmatprep.subr.mxu0 0.0
        %1826 = vmatpush1.msra.mxu0 0.0
        %1827 = vmatprep.subr.mxu0 0.0
        %1828 = vmatpush1.msra.mxu0 0.0
        %1829 = vmatprep.subr.mxu0 0.0
        %1830 = vmatpush1.msra.mxu0 0.0
        %1831 = vmatprep.subr.mxu0 0.0
        %1832 = vmatpush1.msra.mxu0 0.0
        %1833 = vmatprep.subr.mxu0 0.0
        %1834 = vmatpush1.msra.mxu0 0.0
        %1835 = vmatprep.mubr.f32.mxu0 0.0
        %1836 = vmatmul.mubr.f32.gmra.mrb[0].mxu0 %v1766
        %v1837 = vpop.f32.mrb[0].mxu0
        %v1838 = vadd.f32 0.0, %v1837
        %v1839 = vpop.f32.mrb[0].mxu0
        %v1840 = vadd.f32 0.0, %v1839
        %1841 = vmatprep.mubr.f32.mxu0 0.0
        %1842 = vmatmul.mubr.f32.gmra.mrb[0].mxu0 %v1769
        %v1843 = vpop.f32.mrb[0].mxu0
        %v1844 = vadd.f32 0.0, %v1843
        %v1845 = vpop.f32.mrb[0].mxu0
        %v1846 = vadd.f32 0.0, %v1845
        %1847 = vdwg.mxu0
        %1848 = vmatprep.subr.mxu0 %v1728
        %1849 = vmatpush1.msra.mxu0 %v1727
        %1850 = vmatprep.subr.mxu0 %v1732
        %1851 = vmatpush1.msra.mxu0 %v1731
        %1852 = vmatprep.subr.mxu0 %v1736
        %1853 = vmatpush1.msra.mxu0 %v1735
        %1854 = vmatprep.subr.mxu0 %v1740
        %1855 = vmatpush1.msra.mxu0 %v1739
        %1856 = vmatprep.subr.mxu0 %v1744
        %1857 = vmatpush1.msra.mxu0 %v1743
        %1858 = vmatprep.subr.mxu0 %v1748
        %1859 = vmatpush1.msra.mxu0 %v1747
        %1860 = vmatprep.subr.mxu0 %v1752
        %1861 = vmatpush1.msra.mxu0 %v1751
        %1862 = vmatprep.subr.mxu0 %v1756
        %1863 = vmatpush1.msra.mxu0 %v1755
        %1864 = vmatprep.subr.mxu0 %v1760
        %1865 = vmatpush1.msra.mxu0 %v1759
        %1866 = vmatprep.subr.mxu0 %v1764
        %1867 = vmatpush1.msra.mxu0 %v1763
        %1868 = vmatprep.subr.mxu0 0.0
        %1869 = vmatpush1.msra.mxu0 0.0
        %1870 = vmatprep.subr.mxu0 0.0
        %1871 = vmatpush1.msra.mxu0 0.0
        %1872 = vmatprep.subr.mxu0 0.0
        %1873 = vmatpush1.msra.mxu0 0.0
        %1874 = vmatprep.subr.mxu0 0.0
        %1875 = vmatpush1.msra.mxu0 0.0
        %1876 = vmatprep.subr.mxu0 0.0
        %1877 = vmatpush1.msra.mxu0 0.0
        %1878 = vmatprep.subr.mxu0 0.0
        %1879 = vmatpush1.msra.mxu0 0.0
        %1880 = vmatprep.subr.mxu0 0.0
        %1881 = vmatpush1.msra.mxu0 0.0
        %1882 = vmatprep.subr.mxu0 0.0
        %1883 = vmatpush1.msra.mxu0 0.0
        %1884 = vmatprep.subr.mxu0 0.0
        %1885 = vmatpush1.msra.mxu0 0.0
        %1886 = vmatprep.subr.mxu0 0.0
        %1887 = vmatpush1.msra.mxu0 0.0
        %1888 = vmatprep.subr.mxu0 0.0
        %1889 = vmatpush1.msra.mxu0 0.0
        %1890 = vmatprep.subr.mxu0 0.0
        %1891 = vmatpush1.msra.mxu0 0.0
        %1892 = vmatprep.subr.mxu0 0.0
        %1893 = vmatpush1.msra.mxu0 0.0
        %1894 = vmatprep.subr.mxu0 0.0
        %1895 = vmatpush1.msra.mxu0 0.0
        %1896 = vmatprep.subr.mxu0 0.0
        %1897 = vmatpush1.msra.mxu0 0.0
        %1898 = vmatprep.subr.mxu0 0.0
        %1899 = vmatpush1.msra.mxu0 0.0
        %1900 = vmatprep.subr.mxu0 0.0
        %1901 = vmatpush1.msra.mxu0 0.0
        %1902 = vmatprep.subr.mxu0 0.0
        %1903 = vmatpush1.msra.mxu0 0.0
        %1904 = vmatprep.subr.mxu0 0.0
        %1905 = vmatpush1.msra.mxu0 0.0
        %1906 = vmatprep.subr.mxu0 0.0
        %1907 = vmatpush1.msra.mxu0 0.0
        %1908 = vmatprep.subr.mxu0 0.0
        %1909 = vmatpush1.msra.mxu0 0.0
        %1910 = vmatprep.subr.mxu0 0.0
        %1911 = vmatpush1.msra.mxu0 0.0
        %1912 = vmatprep.mubr.f32.mxu0 0.0
        %1913 = vmatmul.mubr.f32.gmra.mrb[0].mxu0 %v1766
        %v1914 = vpop.f32.mrb[0].mxu0
        %v1915 = vadd.f32 0.0, %v1914
        %v1916 = vpop.f32.mrb[0].mxu0
        %v1917 = vadd.f32 0.0, %v1916
        %1918 = vmatprep.mubr.f32.mxu0 0.0
        %1919 = vmatmul.mubr.f32.gmra.mrb[0].mxu0 %v1769
        %v1920 = vpop.f32.mrb[0].mxu0
        %v1921 = vadd.f32 0.0, %v1920
        %v1922 = vpop.f32.mrb[0].mxu0
        %v1923 = vadd.f32 0.0, %v1922
        %1924 = vdwg.mxu0
        %v1925 = vadd.f32 %v1632, %v1838
        %v1926 = vadd.f32 %v1633, %v1840
        %v1927 = vadd.f32 %v1634, %v1915
        %v1928 = vadd.f32 %v1635, %v1917
        %v1929 = vadd.f32 %v1636, %v1844
        %v1930 = vadd.f32 %v1637, %v1846
        %v1931 = vadd.f32 %v1638, %v1921
        %v1932 = vadd.f32 %v1639, %v1923
        %s1933 = scalar_lea.vmem %s2, 64
        %v1934 = vld [vmem:[%s1933] sm:$0xff]
        %v1935 = vld [vmem:[%s1933 + $0x8] sm:$0xff]
        %v1937 = vsel %vm779, %v1934, 0
        %v1940 = vsel %vm779, %v1935, 0
        %1942 = vmatprep.subr.mxu0 0.0
        %1943 = vmatpush1.msra.mxu0 %v774
        %1944 = vmatprep.subr.mxu0 0.0
        %1945 = vmatpush1.msra.mxu0 0.0
        %1946 = vmatprep.subr.mxu0 0.0
        %1947 = vmatpush1.msra.mxu0 0.0
        %1948 = vmatprep.subr.mxu0 0.0
        %1949 = vmatpush1.msra.mxu0 0.0
        %1950 = vmatprep.subr.mxu0 0.0
        %1951 = vmatpush1.msra.mxu0 0.0
        %1952 = vmatprep.subr.mxu0 0.0
        %1953 = vmatpush1.msra.mxu0 0.0
        %1954 = vmatprep.subr.mxu0 0.0
        %1955 = vmatpush1.msra.mxu0 0.0
        %1956 = vmatprep.subr.mxu0 0.0
        %1957 = vmatpush1.msra.mxu0 0.0
        %1958 = vmatprep.subr.mxu0 0.0
        %1959 = vmatpush1.msra.mxu0 0.0
        %1960 = vmatprep.subr.mxu0 0.0
        %1961 = vmatpush1.msra.mxu0 0.0
        %1962 = vmatprep.subr.mxu0 0.0
        %1963 = vmatpush1.msra.mxu0 0.0
        %1964 = vmatprep.subr.mxu0 0.0
        %1965 = vmatpush1.msra.mxu0 0.0
        %1966 = vmatprep.subr.mxu0 0.0
        %1967 = vmatpush1.msra.mxu0 0.0
        %1968 = vmatprep.subr.mxu0 0.0
        %1969 = vmatpush1.msra.mxu0 0.0
        %1970 = vmatprep.subr.mxu0 0.0
        %1971 = vmatpush1.msra.mxu0 0.0
        %1972 = vmatprep.subr.mxu0 0.0
        %1973 = vmatpush1.msra.mxu0 0.0
        %1974 = vmatprep.subr.mxu0 0.0
        %1975 = vmatpush1.msra.mxu0 0.0
        %1976 = vmatprep.subr.mxu0 0.0
        %1977 = vmatpush1.msra.mxu0 0.0
        %1978 = vmatprep.subr.mxu0 0.0
        %1979 = vmatpush1.msra.mxu0 0.0
        %1980 = vmatprep.subr.mxu0 0.0
        %1981 = vmatpush1.msra.mxu0 0.0
        %1982 = vmatprep.subr.mxu0 0.0
        %1983 = vmatpush1.msra.mxu0 0.0
        %1984 = vmatprep.subr.mxu0 0.0
        %1985 = vmatpush1.msra.mxu0 0.0
        %1986 = vmatprep.subr.mxu0 0.0
        %1987 = vmatpush1.msra.mxu0 0.0
        %1988 = vmatprep.subr.mxu0 0.0
        %1989 = vmatpush1.msra.mxu0 0.0
        %1990 = vmatprep.subr.mxu0 0.0
        %1991 = vmatpush1.msra.mxu0 0.0
        %1992 = vmatprep.subr.mxu0 0.0
        %1993 = vmatpush1.msra.mxu0 0.0
        %1994 = vmatprep.subr.mxu0 0.0
        %1995 = vmatpush1.msra.mxu0 0.0
        %1996 = vmatprep.subr.mxu0 0.0
        %1997 = vmatpush1.msra.mxu0 0.0
        %1998 = vmatprep.subr.mxu0 0.0
        %1999 = vmatpush1.msra.mxu0 0.0
        %2000 = vmatprep.subr.mxu0 0.0
        %2001 = vmatpush1.msra.mxu0 0.0
        %2002 = vmatprep.subr.mxu0 0.0
        %2003 = vmatpush1.msra.mxu0 0.0
        %2004 = vmatprep.subr.mxu0 0.0
        %2005 = vmatpush1.msra.mxu0 0.0
        %2006 = vmatprep.mubr.f32.mxu0 0.0
        %2007 = vmatmul.mubr.f32.gmra.mrb[0].mxu0 %v1937
        %v2008 = vpop.f32.mrb[0].mxu0
        %v2009 = vadd.f32 0.0, %v2008
        %v2010 = vpop.f32.mrb[0].mxu0
        %2011 = vmatprep.mubr.f32.mxu0 0.0
        %2012 = vmatmul.mubr.f32.gmra.mrb[0].mxu0 %v1940
        %v2013 = vpop.f32.mrb[0].mxu0
        %v2014 = vadd.f32 0.0, %v2013
        %v2015 = vpop.f32.mrb[0].mxu0
        %2016 = vdwg.mxu0
        %s2017 = scalar_lea.vmem [#allocation8], 1280
        %v2018 = vld [vmem:[%s2017] sm:$0xff]
        %v2019 = vld [vmem:[%s2017 + $0x8] sm:$0xff]
        %v2020 = vld [vmem:[%s2017 + $0x10] sm:$0xff]
        %v2021 = vld [vmem:[%s2017 + $0x18] sm:$0xff]
        %v2022 = vld [vmem:[%s2017 + $0x20] sm:$0xff]
        %v2023 = vld [vmem:[%s2017 + $0x28] sm:$0xff]
        %v2024 = vld [vmem:[%s2017 + $0x30] sm:$0xff]
        %v2025 = vld [vmem:[%s2017 + $0x38] sm:$0xff]
        %v2026 = vld [vmem:[%s2017 + $0x40] sm:$0xff]
        %v2027 = vld [vmem:[%s2017 + $0x48] sm:$0xff]
        %v2028 = vld [vmem:[%s2017 + $0x50] sm:$0xff]
        %v2029 = vld [vmem:[%s2017 + $0x58] sm:$0xff]
        %v2030 = vld [vmem:[%s2017 + $0x60] sm:$0xff]
        %v2031 = vld [vmem:[%s2017 + $0x68] sm:$0xff]
        %v2032 = vld [vmem:[%s2017 + $0x70] sm:$0xff]
        %v2033 = vld [vmem:[%s2017 + $0x78] sm:$0xff]
        %v2034 = vld [vmem:[%s2017 + $0x80] sm:$0xff]
        %v2035 = vld [vmem:[%s2017 + $0x88] sm:$0xff]
        %v2036 = vld [vmem:[%s2017 + $0x90] sm:$0xff]
        %v2037 = vld [vmem:[%s2017 + $0x98] sm:$0xff]
        %v2038 = vld [vmem:[%s2017 + $0xa0] sm:$0xff]
        %v2039 = vld [vmem:[%s2017 + $0xa8] sm:$0xff]
        %v2040 = vld [vmem:[%s2017 + $0xb0] sm:$0xff]
        %v2041 = vld [vmem:[%s2017 + $0xb8] sm:$0xff]
        %v2042 = vld [vmem:[%s2017 + $0xc0] sm:$0xff]
        %v2043 = vld [vmem:[%s2017 + $0xc8] sm:$0xff]
        %v2044 = vld [vmem:[%s2017 + $0xd0] sm:$0xff]
        %v2045 = vld [vmem:[%s2017 + $0xd8] sm:$0xff]
        %v2046 = vld [vmem:[%s2017 + $0xe0] sm:$0xff]
        %v2047 = vld [vmem:[%s2017 + $0xe8] sm:$0xff]
        %v2048 = vld [vmem:[%s2017 + $0xf0] sm:$0xff]
        %v2049 = vld [vmem:[%s2017 + $0xf8] sm:$0xff]
        %v2050 = vld [vmem:[%s2017 + $0x100] sm:$0xff]
        %v2051 = vld [vmem:[%s2017 + $0x108] sm:$0xff]
        %v2052 = vld [vmem:[%s2017 + $0x110] sm:$0xff]
        %v2053 = vld [vmem:[%s2017 + $0x118] sm:$0xff]
        %v2054 = vld [vmem:[%s2017 + $0x120] sm:$0xff]
        %v2055 = vld [vmem:[%s2017 + $0x128] sm:$0xff]
        %v2056 = vld [vmem:[%s2017 + $0x130] sm:$0xff]
        %v2057 = vld [vmem:[%s2017 + $0x138] sm:$0xff]
        %v2059 = vsel %vm1026, %v2009, 0
        %v2062 = vsel %vm1026, %v2014, 0
        %2064 = vmatprep.subr.mxu0 %v2019
        %2065 = vmatpush1.msra.mxu0 %v2018
        %2066 = vmatprep.subr.mxu0 %v2023
        %2067 = vmatpush1.msra.mxu0 %v2022
        %2068 = vmatprep.subr.mxu0 %v2027
        %2069 = vmatpush1.msra.mxu0 %v2026
        %2070 = vmatprep.subr.mxu0 %v2031
        %2071 = vmatpush1.msra.mxu0 %v2030
        %2072 = vmatprep.subr.mxu0 %v2035
        %2073 = vmatpush1.msra.mxu0 %v2034
        %2074 = vmatprep.subr.mxu0 %v2039
        %2075 = vmatpush1.msra.mxu0 %v2038
        %2076 = vmatprep.subr.mxu0 %v2043
        %2077 = vmatpush1.msra.mxu0 %v2042
        %2078 = vmatprep.subr.mxu0 %v2047
        %2079 = vmatpush1.msra.mxu0 %v2046
        %2080 = vmatprep.subr.mxu0 %v2051
        %2081 = vmatpush1.msra.mxu0 %v2050
        %2082 = vmatprep.subr.mxu0 %v2055
        %2083 = vmatpush1.msra.mxu0 %v2054
        %2084 = vmatprep.subr.mxu0 0.0
        %2085 = vmatpush1.msra.mxu0 0.0
        %2086 = vmatprep.subr.mxu0 0.0
        %2087 = vmatpush1.msra.mxu0 0.0
        %2088 = vmatprep.subr.mxu0 0.0
        %2089 = vmatpush1.msra.mxu0 0.0
        %2090 = vmatprep.subr.mxu0 0.0
        %2091 = vmatpush1.msra.mxu0 0.0
        %2092 = vmatprep.subr.mxu0 0.0
        %2093 = vmatpush1.msra.mxu0 0.0
        %2094 = vmatprep.subr.mxu0 0.0
        %2095 = vmatpush1.msra.mxu0 0.0
        %2096 = vmatprep.subr.mxu0 0.0
        %2097 = vmatpush1.msra.mxu0 0.0
        %2098 = vmatprep.subr.mxu0 0.0
        %2099 = vmatpush1.msra.mxu0 0.0
        %2100 = vmatprep.subr.mxu0 0.0
        %2101 = vmatpush1.msra.mxu0 0.0
        %2102 = vmatprep.subr.mxu0 0.0
        %2103 = vmatpush1.msra.mxu0 0.0
        %2104 = vmatprep.subr.mxu0 0.0
        %2105 = vmatpush1.msra.mxu0 0.0
        %2106 = vmatprep.subr.mxu0 0.0
        %2107 = vmatpush1.msra.mxu0 0.0
        %2108 = vmatprep.subr.mxu0 0.0
        %2109 = vmatpush1.msra.mxu0 0.0
        %2110 = vmatprep.subr.mxu0 0.0
        %2111 = vmatpush1.msra.mxu0 0.0
        %2112 = vmatprep.subr.mxu0 0.0
        %2113 = vmatpush1.msra.mxu0 0.0
        %2114 = vmatprep.subr.mxu0 0.0
        %2115 = vmatpush1.msra.mxu0 0.0
        %2116 = vmatprep.subr.mxu0 0.0
        %2117 = vmatpush1.msra.mxu0 0.0
        %2118 = vmatprep.subr.mxu0 0.0
        %2119 = vmatpush1.msra.mxu0 0.0
        %2120 = vmatprep.subr.mxu0 0.0
        %2121 = vmatpush1.msra.mxu0 0.0
        %2122 = vmatprep.subr.mxu0 0.0
        %2123 = vmatpush1.msra.mxu0 0.0
        %2124 = vmatprep.subr.mxu0 0.0
        %2125 = vmatpush1.msra.mxu0 0.0
        %2126 = vmatprep.subr.mxu0 0.0
        %2127 = vmatpush1.msra.mxu0 0.0
        %2128 = vmatprep.mubr.f32.mxu0 0.0
        %2129 = vmatmul.mubr.f32.gmra.mrb[0].mxu0 %v2059
        %v2130 = vpop.f32.mrb[0].mxu0
        %v2131 = vadd.f32 0.0, %v2130
        %v2132 = vpop.f32.mrb[0].mxu0
        %v2133 = vadd.f32 0.0, %v2132
        %2134 = vmatprep.mubr.f32.mxu0 0.0
        %2135 = vmatmul.mubr.f32.gmra.mrb[0].mxu0 %v2062
        %v2136 = vpop.f32.mrb[0].mxu0
        %v2137 = vadd.f32 0.0, %v2136
        %v2138 = vpop.f32.mrb[0].mxu0
        %v2139 = vadd.f32 0.0, %v2138
        %2140 = vdwg.mxu0
        %2141 = vmatprep.subr.mxu0 %v2021
        %2142 = vmatpush1.msra.mxu0 %v2020
        %2143 = vmatprep.subr.mxu0 %v2025
        %2144 = vmatpush1.msra.mxu0 %v2024
        %2145 = vmatprep.subr.mxu0 %v2029
        %2146 = vmatpush1.msra.mxu0 %v2028
        %2147 = vmatprep.subr.mxu0 %v2033
        %2148 = vmatpush1.msra.mxu0 %v2032
        %2149 = vmatprep.subr.mxu0 %v2037
        %2150 = vmatpush1.msra.mxu0 %v2036
        %2151 = vmatprep.subr.mxu0 %v2041
        %2152 = vmatpush1.msra.mxu0 %v2040
        %2153 = vmatprep.subr.mxu0 %v2045
        %2154 = vmatpush1.msra.mxu0 %v2044
        %2155 = vmatprep.subr.mxu0 %v2049
        %2156 = vmatpush1.msra.mxu0 %v2048
        %2157 = vmatprep.subr.mxu0 %v2053
        %2158 = vmatpush1.msra.mxu0 %v2052
        %2159 = vmatprep.subr.mxu0 %v2057
        %2160 = vmatpush1.msra.mxu0 %v2056
        %2161 = vmatprep.subr.mxu0 0.0
        %2162 = vmatpush1.msra.mxu0 0.0
        %2163 = vmatprep.subr.mxu0 0.0
        %2164 = vmatpush1.msra.mxu0 0.0
        %2165 = vmatprep.subr.mxu0 0.0
        %2166 = vmatpush1.msra.mxu0 0.0
        %2167 = vmatprep.subr.mxu0 0.0
        %2168 = vmatpush1.msra.mxu0 0.0
        %2169 = vmatprep.subr.mxu0 0.0
        %2170 = vmatpush1.msra.mxu0 0.0
        %2171 = vmatprep.subr.mxu0 0.0
        %2172 = vmatpush1.msra.mxu0 0.0
        %2173 = vmatprep.subr.mxu0 0.0
        %2174 = vmatpush1.msra.mxu0 0.0
        %2175 = vmatprep.subr.mxu0 0.0
        %2176 = vmatpush1.msra.mxu0 0.0
        %2177 = vmatprep.subr.mxu0 0.0
        %2178 = vmatpush1.msra.mxu0 0.0
        %2179 = vmatprep.subr.mxu0 0.0
        %2180 = vmatpush1.msra.mxu0 0.0
        %2181 = vmatprep.subr.mxu0 0.0
        %2182 = vmatpush1.msra.mxu0 0.0
        %2183 = vmatprep.subr.mxu0 0.0
        %2184 = vmatpush1.msra.mxu0 0.0
        %2185 = vmatprep.subr.mxu0 0.0
        %2186 = vmatpush1.msra.mxu0 0.0
        %2187 = vmatprep.subr.mxu0 0.0
        %2188 = vmatpush1.msra.mxu0 0.0
        %2189 = vmatprep.subr.mxu0 0.0
        %2190 = vmatpush1.msra.mxu0 0.0
        %2191 = vmatprep.subr.mxu0 0.0
        %2192 = vmatpush1.msra.mxu0 0.0
        %2193 = vmatprep.subr.mxu0 0.0
        %2194 = vmatpush1.msra.mxu0 0.0
        %2195 = vmatprep.subr.mxu0 0.0
        %2196 = vmatpush1.msra.mxu0 0.0
        %2197 = vmatprep.subr.mxu0 0.0
        %2198 = vmatpush1.msra.mxu0 0.0
        %2199 = vmatprep.subr.mxu0 0.0
        %2200 = vmatpush1.msra.mxu0 0.0
        %2201 = vmatprep.subr.mxu0 0.0
        %2202 = vmatpush1.msra.mxu0 0.0
        %2203 = vmatprep.subr.mxu0 0.0
        %2204 = vmatpush1.msra.mxu0 0.0
        %2205 = vmatprep.mubr.f32.mxu0 0.0
        %2206 = vmatmul.mubr.f32.gmra.mrb[0].mxu0 %v2059
        %v2207 = vpop.f32.mrb[0].mxu0
        %v2208 = vadd.f32 0.0, %v2207
        %v2209 = vpop.f32.mrb[0].mxu0
        %v2210 = vadd.f32 0.0, %v2209
        %2211 = vmatprep.mubr.f32.mxu0 0.0
        %2212 = vmatmul.mubr.f32.gmra.mrb[0].mxu0 %v2062
        %v2213 = vpop.f32.mrb[0].mxu0
        %v2214 = vadd.f32 0.0, %v2213
        %v2215 = vpop.f32.mrb[0].mxu0
        %v2216 = vadd.f32 0.0, %v2215
        %2217 = vdwg.mxu0
        %v2218 = vadd.f32 %v1925, %v2131
        %v2219 = vadd.f32 %v1926, %v2133
        %v2220 = vadd.f32 %v1927, %v2208
        %v2221 = vadd.f32 %v1928, %v2210
        %v2222 = vadd.f32 %v1929, %v2137
        %v2223 = vadd.f32 %v1930, %v2139
        %v2224 = vadd.f32 %v1931, %v2214
        %v2225 = vadd.f32 %v1932, %v2216
        %v2226 = vld [vmem:[#allocation10] sm:$0x3]
        %v2228 = vlaneseq
        %v2229 = vshrl.u32 %v2228, 7
        %v2230 = vsub.s32 0, %v2229
        %v2231 = vrot.slane %v2226, %v2230
        %v2232 = vlaneseq
        %v2233 = vshrl.u32 %v2232, 7
        %v2234 = vsub.s32 1, %v2233
        %v2235 = vrot.slane %v2226, %v2234
        %v2238 = vadd.f32 %v2218, %v2231
        %v2239 = vadd.f32 %v2219, %v2235
        %v2240 = vadd.f32 %v2222, %v2231
        %v2241 = vadd.f32 %v2223, %v2235
        %v2242 = vmax.f32 %v2238, 0.0
        %v2243 = vmax.f32 %v2239, 0.0
        %v2244 = vmax.f32 %v2240, 0.0
        %v2245 = vmax.f32 %v2241, 0.0
        %v2246 = vld [vmem:[%s602] sm:$0xf]
        %v2247 = vld [vmem:[#allocation11] sm:$0xff]
        %v2248 = vld [vmem:[#allocation11 + $0x8] sm:$0xff]
        %v2249 = vld [vmem:[#allocation11 + $0x10] sm:$0xff]
        %v2250 = vld [vmem:[#allocation11 + $0x18] sm:$0xff]
        %v2251 = vld [vmem:[#allocation11 + $0x20] sm:$0xff]
        %v2252 = vld [vmem:[#allocation11 + $0x28] sm:$0xff]
        %v2253 = vld [vmem:[#allocation11 + $0x30] sm:$0xff]
        %v2254 = vld [vmem:[#allocation11 + $0x38] sm:$0xff]
        %v2256 = vsel %vm703, %v2246, 0
        %2258 = vmatprep.subr.mxu0 %v2248
        %2259 = vmatpush1.msra.mxu0 %v2247
        %2260 = vmatprep.subr.mxu0 %v2250
        %2261 = vmatpush1.msra.mxu0 %v2249
        %2262 = vmatprep.subr.mxu0 %v2252
        %2263 = vmatpush1.msra.mxu0 %v2251
        %2264 = vmatprep.subr.mxu0 %v2254
        %2265 = vmatpush1.msra.mxu0 %v2253
        %2266 = vmatprep.subr.mxu0 0.0
        %2267 = vmatpush1.msra.mxu0 0.0
        %2268 = vmatprep.subr.mxu0 0.0
        %2269 = vmatpush1.msra.mxu0 0.0
        %2270 = vmatprep.subr.mxu0 0.0
        %2271 = vmatpush1.msra.mxu0 0.0
        %2272 = vmatprep.subr.mxu0 0.0
        %2273 = vmatpush1.msra.mxu0 0.0
        %2274 = vmatprep.subr.mxu0 0.0
        %2275 = vmatpush1.msra.mxu0 0.0
        %2276 = vmatprep.subr.mxu0 0.0
        %2277 = vmatpush1.msra.mxu0 0.0
        %2278 = vmatprep.subr.mxu0 0.0
        %2279 = vmatpush1.msra.mxu0 0.0
        %2280 = vmatprep.subr.mxu0 0.0
        %2281 = vmatpush1.msra.mxu0 0.0
        %2282 = vmatprep.subr.mxu0 0.0
        %2283 = vmatpush1.msra.mxu0 0.0
        %2284 = vmatprep.subr.mxu0 0.0
        %2285 = vmatpush1.msra.mxu0 0.0
        %2286 = vmatprep.subr.mxu0 0.0
        %2287 = vmatpush1.msra.mxu0 0.0
        %2288 = vmatprep.subr.mxu0 0.0
        %2289 = vmatpush1.msra.mxu0 0.0
        %2290 = vmatprep.subr.mxu0 0.0
        %2291 = vmatpush1.msra.mxu0 0.0
        %2292 = vmatprep.subr.mxu0 0.0
        %2293 = vmatpush1.msra.mxu0 0.0
        %2294 = vmatprep.subr.mxu0 0.0
        %2295 = vmatpush1.msra.mxu0 0.0
        %2296 = vmatprep.subr.mxu0 0.0
        %2297 = vmatpush1.msra.mxu0 0.0
        %2298 = vmatprep.subr.mxu0 0.0
        %2299 = vmatpush1.msra.mxu0 0.0
        %2300 = vmatprep.subr.mxu0 0.0
        %2301 = vmatpush1.msra.mxu0 0.0
        %2302 = vmatprep.subr.mxu0 0.0
        %2303 = vmatpush1.msra.mxu0 0.0
        %2304 = vmatprep.subr.mxu0 0.0
        %2305 = vmatpush1.msra.mxu0 0.0
        %2306 = vmatprep.subr.mxu0 0.0
        %2307 = vmatpush1.msra.mxu0 0.0
        %2308 = vmatprep.subr.mxu0 0.0
        %2309 = vmatpush1.msra.mxu0 0.0
        %2310 = vmatprep.subr.mxu0 0.0
        %2311 = vmatpush1.msra.mxu0 0.0
        %2312 = vmatprep.subr.mxu0 0.0
        %2313 = vmatpush1.msra.mxu0 0.0
        %2314 = vmatprep.subr.mxu0 0.0
        %2315 = vmatpush1.msra.mxu0 0.0
        %2316 = vmatprep.subr.mxu0 0.0
        %2317 = vmatpush1.msra.mxu0 0.0
        %2318 = vmatprep.subr.mxu0 0.0
        %2319 = vmatpush1.msra.mxu0 0.0
        %2320 = vmatprep.subr.mxu0 0.0
        %2321 = vmatpush1.msra.mxu0 0.0
        %2322 = vmatprep.mubr.f32.mxu0 0.0
        %2323 = vmatmul.mubr.f32.gmra.mrb[0].mxu0 %v2256
        %v2324 = vpop.f32.mrb[0].mxu0
        %v2325 = vadd.f32 0.0, %v2324
        %v2326 = vpop.f32.mrb[0].mxu0
        %v2327 = vadd.f32 0.0, %v2326
        %2328 = vdwg.mxu0
        %v2329 = vld [vmem:[%s6] sm:$0xff]
        %v2330 = vld [vmem:[%s6 + $0x8] sm:$0xff]
        %vm2331 = vcmask 31744
        %v2333 = vsel %vm2331, %v2329, 0
        %v2336 = vsel %vm2331, %v2330, 0
        %vm2338 = vcmask 1043456
        %v2340 = vsel %vm2338, %v2325, 0
        %v2343 = vsel %vm2338, %v2327, 0
        %2345 = vmatprep.subr.mxu0 %v2343
        %2346 = vmatpush1.msra.mxu0 %v2340
        %2347 = vmatprep.subr.mxu0 0.0
        %2348 = vmatpush1.msra.mxu0 0.0
        %2349 = vmatprep.subr.mxu0 0.0
        %2350 = vmatpush1.msra.mxu0 0.0
        %2351 = vmatprep.subr.mxu0 0.0
        %2352 = vmatpush1.msra.mxu0 0.0
        %2353 = vmatprep.subr.mxu0 0.0
        %2354 = vmatpush1.msra.mxu0 0.0
        %2355 = vmatprep.subr.mxu0 0.0
        %2356 = vmatpush1.msra.mxu0 0.0
        %2357 = vmatprep.subr.mxu0 0.0
        %2358 = vmatpush1.msra.mxu0 0.0
        %2359 = vmatprep.subr.mxu0 0.0
        %2360 = vmatpush1.msra.mxu0 0.0
        %2361 = vmatprep.subr.mxu0 0.0
        %2362 = vmatpush1.msra.mxu0 0.0
        %2363 = vmatprep.subr.mxu0 0.0
        %2364 = vmatpush1.msra.mxu0 0.0
        %2365 = vmatprep.subr.mxu0 0.0
        %2366 = vmatpush1.msra.mxu0 0.0
        %2367 = vmatprep.subr.mxu0 0.0
        %2368 = vmatpush1.msra.mxu0 0.0
        %2369 = vmatprep.subr.mxu0 0.0
        %2370 = vmatpush1.msra.mxu0 0.0
        %2371 = vmatprep.subr.mxu0 0.0
        %2372 = vmatpush1.msra.mxu0 0.0
        %2373 = vmatprep.subr.mxu0 0.0
        %2374 = vmatpush1.msra.mxu0 0.0
        %2375 = vmatprep.subr.mxu0 0.0
        %2376 = vmatpush1.msra.mxu0 0.0
        %2377 = vmatprep.subr.mxu0 0.0
        %2378 = vmatpush1.msra.mxu0 0.0
        %2379 = vmatprep.subr.mxu0 0.0
        %2380 = vmatpush1.msra.mxu0 0.0
        %2381 = vmatprep.subr.mxu0 0.0
        %2382 = vmatpush1.msra.mxu0 0.0
        %2383 = vmatprep.subr.mxu0 0.0
        %2384 = vmatpush1.msra.mxu0 0.0
        %2385 = vmatprep.subr.mxu0 0.0
        %2386 = vmatpush1.msra.mxu0 0.0
        %2387 = vmatprep.subr.mxu0 0.0
        %2388 = vmatpush1.msra.mxu0 0.0
        %2389 = vmatprep.subr.mxu0 0.0
        %2390 = vmatpush1.msra.mxu0 0.0
        %2391 = vmatprep.subr.mxu0 0.0
        %2392 = vmatpush1.msra.mxu0 0.0
        %2393 = vmatprep.subr.mxu0 0.0
        %2394 = vmatpush1.msra.mxu0 0.0
        %2395 = vmatprep.subr.mxu0 0.0
        %2396 = vmatpush1.msra.mxu0 0.0
        %2397 = vmatprep.subr.mxu0 0.0
        %2398 = vmatpush1.msra.mxu0 0.0
        %2399 = vmatprep.subr.mxu0 0.0
        %2400 = vmatpush1.msra.mxu0 0.0
        %2401 = vmatprep.subr.mxu0 0.0
        %2402 = vmatpush1.msra.mxu0 0.0
        %2403 = vmatprep.subr.mxu0 0.0
        %2404 = vmatpush1.msra.mxu0 0.0
        %2405 = vmatprep.subr.mxu0 0.0
        %2406 = vmatpush1.msra.mxu0 0.0
        %2407 = vmatprep.subr.mxu0 0.0
        %2408 = vmatpush1.msra.mxu0 0.0
        %2409 = vmatprep.mubr.f32.mxu0 0.0
        %2410 = vmatmul.mubr.f32.gmra.mrb[0].mxu0 %v2333
        %v2411 = vpop.f32.mrb[0].mxu0
        %v2412 = vadd.f32 0.0, %v2411
        %v2413 = vpop.f32.mrb[0].mxu0
        %v2414 = vadd.f32 0.0, %v2413
        %2415 = vmatprep.mubr.f32.mxu0 0.0
        %2416 = vmatmul.mubr.f32.gmra.mrb[0].mxu0 %v2336
        %v2417 = vpop.f32.mrb[0].mxu0
        %v2418 = vadd.f32 0.0, %v2417
        %v2419 = vpop.f32.mrb[0].mxu0
        %v2420 = vadd.f32 0.0, %v2419
        %2421 = vdwg.mxu0
        %v2422 = vld [vmem:[#allocation13] sm:$0xff]
        %v2423 = vld [vmem:[#allocation13 + $0x8] sm:$0xff]
        %v2424 = vld [vmem:[#allocation13 + $0x10] sm:$0xff]
        %v2425 = vld [vmem:[#allocation13 + $0x18] sm:$0xff]
        %v2426 = vld [vmem:[#allocation13 + $0x20] sm:$0xff]
        %v2427 = vld [vmem:[#allocation13 + $0x28] sm:$0xff]
        %v2428 = vld [vmem:[#allocation13 + $0x30] sm:$0xff]
        %v2429 = vld [vmem:[#allocation13 + $0x38] sm:$0xff]
        %v2430 = vld [vmem:[#allocation13 + $0x40] sm:$0xff]
        %v2431 = vld [vmem:[#allocation13 + $0x48] sm:$0xff]
        %v2432 = vld [vmem:[#allocation13 + $0x50] sm:$0xff]
        %v2433 = vld [vmem:[#allocation13 + $0x58] sm:$0xff]
        %v2434 = vld [vmem:[#allocation13 + $0x60] sm:$0xff]
        %v2435 = vld [vmem:[#allocation13 + $0x68] sm:$0xff]
        %v2436 = vld [vmem:[#allocation13 + $0x70] sm:$0xff]
        %v2437 = vld [vmem:[#allocation13 + $0x78] sm:$0xff]
        %v2438 = vld [vmem:[#allocation13 + $0x80] sm:$0xff]
        %v2439 = vld [vmem:[#allocation13 + $0x88] sm:$0xff]
        %v2440 = vld [vmem:[#allocation13 + $0x90] sm:$0xff]
        %v2441 = vld [vmem:[#allocation13 + $0x98] sm:$0xff]
        %v2442 = vld [vmem:[#allocation13 + $0xa0] sm:$0xff]
        %v2443 = vld [vmem:[#allocation13 + $0xa8] sm:$0xff]
        %v2444 = vld [vmem:[#allocation13 + $0xb0] sm:$0xff]
        %v2445 = vld [vmem:[#allocation13 + $0xb8] sm:$0xff]
        %v2446 = vld [vmem:[#allocation13 + $0xc0] sm:$0xff]
        %v2447 = vld [vmem:[#allocation13 + $0xc8] sm:$0xff]
        %v2448 = vld [vmem:[#allocation13 + $0xd0] sm:$0xff]
        %v2449 = vld [vmem:[#allocation13 + $0xd8] sm:$0xff]
        %v2450 = vld [vmem:[#allocation13 + $0xe0] sm:$0xff]
        %v2451 = vld [vmem:[#allocation13 + $0xe8] sm:$0xff]
        %v2452 = vld [vmem:[#allocation13 + $0xf0] sm:$0xff]
        %v2453 = vld [vmem:[#allocation13 + $0xf8] sm:$0xff]
        %v2454 = vld [vmem:[#allocation13 + $0x100] sm:$0xff]
        %v2455 = vld [vmem:[#allocation13 + $0x108] sm:$0xff]
        %v2456 = vld [vmem:[#allocation13 + $0x110] sm:$0xff]
        %v2457 = vld [vmem:[#allocation13 + $0x118] sm:$0xff]
        %v2458 = vld [vmem:[#allocation13 + $0x120] sm:$0xff]
        %v2459 = vld [vmem:[#allocation13 + $0x128] sm:$0xff]
        %v2460 = vld [vmem:[#allocation13 + $0x130] sm:$0xff]
        %v2461 = vld [vmem:[#allocation13 + $0x138] sm:$0xff]
        %v2462 = vld [vmem:[#allocation13 + $0x140] sm:$0xff]
        %v2463 = vld [vmem:[#allocation13 + $0x148] sm:$0xff]
        %v2464 = vld [vmem:[#allocation13 + $0x150] sm:$0xff]
        %v2465 = vld [vmem:[#allocation13 + $0x158] sm:$0xff]
        %v2466 = vld [vmem:[#allocation13 + $0x160] sm:$0xff]
        %v2467 = vld [vmem:[#allocation13 + $0x168] sm:$0xff]
        %v2468 = vld [vmem:[#allocation13 + $0x170] sm:$0xff]
        %v2469 = vld [vmem:[#allocation13 + $0x178] sm:$0xff]
        %v2470 = vld [vmem:[#allocation13 + $0x180] sm:$0xff]
        %v2471 = vld [vmem:[#allocation13 + $0x188] sm:$0xff]
        %v2472 = vld [vmem:[#allocation13 + $0x190] sm:$0xff]
        %v2473 = vld [vmem:[#allocation13 + $0x198] sm:$0xff]
        %v2474 = vld [vmem:[#allocation13 + $0x1a0] sm:$0xff]
        %v2475 = vld [vmem:[#allocation13 + $0x1a8] sm:$0xff]
        %v2476 = vld [vmem:[#allocation13 + $0x1b0] sm:$0xff]
        %v2477 = vld [vmem:[#allocation13 + $0x1b8] sm:$0xff]
        %v2478 = vld [vmem:[#allocation13 + $0x1c0] sm:$0xff]
        %v2479 = vld [vmem:[#allocation13 + $0x1c8] sm:$0xff]
        %v2480 = vld [vmem:[#allocation13 + $0x1d0] sm:$0xff]
        %v2481 = vld [vmem:[#allocation13 + $0x1d8] sm:$0xff]
        %v2482 = vld [vmem:[#allocation13 + $0x1e0] sm:$0xff]
        %v2483 = vld [vmem:[#allocation13 + $0x1e8] sm:$0xff]
        %v2484 = vld [vmem:[#allocation13 + $0x1f0] sm:$0xff]
        %v2485 = vld [vmem:[#allocation13 + $0x1f8] sm:$0xff]
        %v2486 = vld [vmem:[#allocation13 + $0x200] sm:$0xff]
        %v2487 = vld [vmem:[#allocation13 + $0x208] sm:$0xff]
        %v2488 = vld [vmem:[#allocation13 + $0x210] sm:$0xff]
        %v2489 = vld [vmem:[#allocation13 + $0x218] sm:$0xff]
        %v2490 = vld [vmem:[#allocation13 + $0x220] sm:$0xff]
        %v2491 = vld [vmem:[#allocation13 + $0x228] sm:$0xff]
        %v2492 = vld [vmem:[#allocation13 + $0x230] sm:$0xff]
        %v2493 = vld [vmem:[#allocation13 + $0x238] sm:$0xff]
        %v2494 = vld [vmem:[#allocation13 + $0x240] sm:$0xff]
        %v2495 = vld [vmem:[#allocation13 + $0x248] sm:$0xff]
        %v2496 = vld [vmem:[#allocation13 + $0x250] sm:$0xff]
        %v2497 = vld [vmem:[#allocation13 + $0x258] sm:$0xff]
        %v2498 = vld [vmem:[#allocation13 + $0x260] sm:$0xff]
        %v2499 = vld [vmem:[#allocation13 + $0x268] sm:$0xff]
        %v2500 = vld [vmem:[#allocation13 + $0x270] sm:$0xff]
        %v2501 = vld [vmem:[#allocation13 + $0x278] sm:$0xff]
        %s2502 = scalar_lea.vmem %s6, 16
        %v2503 = vld [vmem:[%s2502] sm:$0xff]
        %v2504 = vld [vmem:[%s2502 + $0x8] sm:$0xff]
        %v2506 = vsel %vm2331, %v2503, 0
        %v2509 = vsel %vm2331, %v2504, 0
        %2511 = vmatprep.subr.mxu0 %v2343
        %2512 = vmatpush1.msra.mxu0 %v2340
        %2513 = vmatprep.subr.mxu0 0.0
        %2514 = vmatpush1.msra.mxu0 0.0
        %2515 = vmatprep.subr.mxu0 0.0
        %2516 = vmatpush1.msra.mxu0 0.0
        %2517 = vmatprep.subr.mxu0 0.0
        %2518 = vmatpush1.msra.mxu0 0.0
        %2519 = vmatprep.subr.mxu0 0.0
        %2520 = vmatpush1.msra.mxu0 0.0
        %2521 = vmatprep.subr.mxu0 0.0
        %2522 = vmatpush1.msra.mxu0 0.0
        %2523 = vmatprep.subr.mxu0 0.0
        %2524 = vmatpush1.msra.mxu0 0.0
        %2525 = vmatprep.subr.mxu0 0.0
        %2526 = vmatpush1.msra.mxu0 0.0
        %2527 = vmatprep.subr.mxu0 0.0
        %2528 = vmatpush1.msra.mxu0 0.0
        %2529 = vmatprep.subr.mxu0 0.0
        %2530 = vmatpush1.msra.mxu0 0.0
        %2531 = vmatprep.subr.mxu0 0.0
        %2532 = vmatpush1.msra.mxu0 0.0
        %2533 = vmatprep.subr.mxu0 0.0
        %2534 = vmatpush1.msra.mxu0 0.0
        %2535 = vmatprep.subr.mxu0 0.0
        %2536 = vmatpush1.msra.mxu0 0.0
        %2537 = vmatprep.subr.mxu0 0.0
        %2538 = vmatpush1.msra.mxu0 0.0
        %2539 = vmatprep.subr.mxu0 0.0
        %2540 = vmatpush1.msra.mxu0 0.0
        %2541 = vmatprep.subr.mxu0 0.0
        %2542 = vmatpush1.msra.mxu0 0.0
        %2543 = vmatprep.subr.mxu0 0.0
        %2544 = vmatpush1.msra.mxu0 0.0
        %2545 = vmatprep.subr.mxu0 0.0
        %2546 = vmatpush1.msra.mxu0 0.0
        %2547 = vmatprep.subr.mxu0 0.0
        %2548 = vmatpush1.msra.mxu0 0.0
        %2549 = vmatprep.subr.mxu0 0.0
        %2550 = vmatpush1.msra.mxu0 0.0
        %2551 = vmatprep.subr.mxu0 0.0
        %2552 = vmatpush1.msra.mxu0 0.0
        %2553 = vmatprep.subr.mxu0 0.0
        %2554 = vmatpush1.msra.mxu0 0.0
        %2555 = vmatprep.subr.mxu0 0.0
        %2556 = vmatpush1.msra.mxu0 0.0
        %2557 = vmatprep.subr.mxu0 0.0
        %2558 = vmatpush1.msra.mxu0 0.0
        %2559 = vmatprep.subr.mxu0 0.0
        %2560 = vmatpush1.msra.mxu0 0.0
        %2561 = vmatprep.subr.mxu0 0.0
        %2562 = vmatpush1.msra.mxu0 0.0
        %2563 = vmatprep.subr.mxu0 0.0
        %2564 = vmatpush1.msra.mxu0 0.0
        %2565 = vmatprep.subr.mxu0 0.0
        %2566 = vmatpush1.msra.mxu0 0.0
        %2567 = vmatprep.subr.mxu0 0.0
        %2568 = vmatpush1.msra.mxu0 0.0
        %2569 = vmatprep.subr.mxu0 0.0
        %2570 = vmatpush1.msra.mxu0 0.0
        %2571 = vmatprep.subr.mxu0 0.0
        %2572 = vmatpush1.msra.mxu0 0.0
        %2573 = vmatprep.subr.mxu0 0.0
        %2574 = vmatpush1.msra.mxu0 0.0
        %2575 = vmatprep.mubr.f32.mxu0 0.0
        %2576 = vmatmul.mubr.f32.gmra.mrb[0].mxu0 %v2506
        %v2577 = vpop.f32.mrb[0].mxu0
        %v2578 = vadd.f32 0.0, %v2577
        %v2579 = vpop.f32.mrb[0].mxu0
        %v2580 = vadd.f32 0.0, %v2579
        %2581 = vmatprep.mubr.f32.mxu0 0.0
        %2582 = vmatmul.mubr.f32.gmra.mrb[0].mxu0 %v2509
        %v2583 = vpop.f32.mrb[0].mxu0
        %v2584 = vadd.f32 0.0, %v2583
        %v2585 = vpop.f32.mrb[0].mxu0
        %v2586 = vadd.f32 0.0, %v2585
        %2587 = vdwg.mxu0
        %s2588 = scalar_lea.vmem [#allocation13], 640
        %v2589 = vld [vmem:[%s2588] sm:$0xff]
        %v2590 = vld [vmem:[%s2588 + $0x8] sm:$0xff]
        %v2591 = vld [vmem:[%s2588 + $0x10] sm:$0xff]
        %v2592 = vld [vmem:[%s2588 + $0x18] sm:$0xff]
        %v2593 = vld [vmem:[%s2588 + $0x20] sm:$0xff]
        %v2594 = vld [vmem:[%s2588 + $0x28] sm:$0xff]
        %v2595 = vld [vmem:[%s2588 + $0x30] sm:$0xff]
        %v2596 = vld [vmem:[%s2588 + $0x38] sm:$0xff]
        %v2597 = vld [vmem:[%s2588 + $0x40] sm:$0xff]
        %v2598 = vld [vmem:[%s2588 + $0x48] sm:$0xff]
        %v2599 = vld [vmem:[%s2588 + $0x50] sm:$0xff]
        %v2600 = vld [vmem:[%s2588 + $0x58] sm:$0xff]
        %v2601 = vld [vmem:[%s2588 + $0x60] sm:$0xff]
        %v2602 = vld [vmem:[%s2588 + $0x68] sm:$0xff]
        %v2603 = vld [vmem:[%s2588 + $0x70] sm:$0xff]
        %v2604 = vld [vmem:[%s2588 + $0x78] sm:$0xff]
        %v2605 = vld [vmem:[%s2588 + $0x80] sm:$0xff]
        %v2606 = vld [vmem:[%s2588 + $0x88] sm:$0xff]
        %v2607 = vld [vmem:[%s2588 + $0x90] sm:$0xff]
        %v2608 = vld [vmem:[%s2588 + $0x98] sm:$0xff]
        %v2609 = vld [vmem:[%s2588 + $0xa0] sm:$0xff]
        %v2610 = vld [vmem:[%s2588 + $0xa8] sm:$0xff]
        %v2611 = vld [vmem:[%s2588 + $0xb0] sm:$0xff]
        %v2612 = vld [vmem:[%s2588 + $0xb8] sm:$0xff]
        %v2613 = vld [vmem:[%s2588 + $0xc0] sm:$0xff]
        %v2614 = vld [vmem:[%s2588 + $0xc8] sm:$0xff]
        %v2615 = vld [vmem:[%s2588 + $0xd0] sm:$0xff]
        %v2616 = vld [vmem:[%s2588 + $0xd8] sm:$0xff]
        %v2617 = vld [vmem:[%s2588 + $0xe0] sm:$0xff]
        %v2618 = vld [vmem:[%s2588 + $0xe8] sm:$0xff]
        %v2619 = vld [vmem:[%s2588 + $0xf0] sm:$0xff]
        %v2620 = vld [vmem:[%s2588 + $0xf8] sm:$0xff]
        %v2621 = vld [vmem:[%s2588 + $0x100] sm:$0xff]
        %v2622 = vld [vmem:[%s2588 + $0x108] sm:$0xff]
        %v2623 = vld [vmem:[%s2588 + $0x110] sm:$0xff]
        %v2624 = vld [vmem:[%s2588 + $0x118] sm:$0xff]
        %v2625 = vld [vmem:[%s2588 + $0x120] sm:$0xff]
        %v2626 = vld [vmem:[%s2588 + $0x128] sm:$0xff]
        %v2627 = vld [vmem:[%s2588 + $0x130] sm:$0xff]
        %v2628 = vld [vmem:[%s2588 + $0x138] sm:$0xff]
        %v2629 = vld [vmem:[%s2588 + $0x140] sm:$0xff]
        %v2630 = vld [vmem:[%s2588 + $0x148] sm:$0xff]
        %v2631 = vld [vmem:[%s2588 + $0x150] sm:$0xff]
        %v2632 = vld [vmem:[%s2588 + $0x158] sm:$0xff]
        %v2633 = vld [vmem:[%s2588 + $0x160] sm:$0xff]
        %v2634 = vld [vmem:[%s2588 + $0x168] sm:$0xff]
        %v2635 = vld [vmem:[%s2588 + $0x170] sm:$0xff]
        %v2636 = vld [vmem:[%s2588 + $0x178] sm:$0xff]
        %v2637 = vld [vmem:[%s2588 + $0x180] sm:$0xff]
        %v2638 = vld [vmem:[%s2588 + $0x188] sm:$0xff]
        %v2639 = vld [vmem:[%s2588 + $0x190] sm:$0xff]
        %v2640 = vld [vmem:[%s2588 + $0x198] sm:$0xff]
        %v2641 = vld [vmem:[%s2588 + $0x1a0] sm:$0xff]
        %v2642 = vld [vmem:[%s2588 + $0x1a8] sm:$0xff]
        %v2643 = vld [vmem:[%s2588 + $0x1b0] sm:$0xff]
        %v2644 = vld [vmem:[%s2588 + $0x1b8] sm:$0xff]
        %v2645 = vld [vmem:[%s2588 + $0x1c0] sm:$0xff]
        %v2646 = vld [vmem:[%s2588 + $0x1c8] sm:$0xff]
        %v2647 = vld [vmem:[%s2588 + $0x1d0] sm:$0xff]
        %v2648 = vld [vmem:[%s2588 + $0x1d8] sm:$0xff]
        %v2649 = vld [vmem:[%s2588 + $0x1e0] sm:$0xff]
        %v2650 = vld [vmem:[%s2588 + $0x1e8] sm:$0xff]
        %v2651 = vld [vmem:[%s2588 + $0x1f0] sm:$0xff]
        %v2652 = vld [vmem:[%s2588 + $0x1f8] sm:$0xff]
        %v2653 = vld [vmem:[%s2588 + $0x200] sm:$0xff]
        %v2654 = vld [vmem:[%s2588 + $0x208] sm:$0xff]
        %v2655 = vld [vmem:[%s2588 + $0x210] sm:$0xff]
        %v2656 = vld [vmem:[%s2588 + $0x218] sm:$0xff]
        %v2657 = vld [vmem:[%s2588 + $0x220] sm:$0xff]
        %v2658 = vld [vmem:[%s2588 + $0x228] sm:$0xff]
        %v2659 = vld [vmem:[%s2588 + $0x230] sm:$0xff]
        %v2660 = vld [vmem:[%s2588 + $0x238] sm:$0xff]
        %v2661 = vld [vmem:[%s2588 + $0x240] sm:$0xff]
        %v2662 = vld [vmem:[%s2588 + $0x248] sm:$0xff]
        %v2663 = vld [vmem:[%s2588 + $0x250] sm:$0xff]
        %v2664 = vld [vmem:[%s2588 + $0x258] sm:$0xff]
        %v2665 = vld [vmem:[%s2588 + $0x260] sm:$0xff]
        %v2666 = vld [vmem:[%s2588 + $0x268] sm:$0xff]
        %v2667 = vld [vmem:[%s2588 + $0x270] sm:$0xff]
        %v2668 = vld [vmem:[%s2588 + $0x278] sm:$0xff]
        %v2670 = vsel %vm703, %v2580, 0
        %v2673 = vsel %vm703, %v2586, 0
        %2675 = vmatprep.subr.mxu0 %v2590
        %2676 = vmatpush1.msra.mxu0 %v2589
        %2677 = vmatprep.subr.mxu0 %v2594
        %2678 = vmatpush1.msra.mxu0 %v2593
        %2679 = vmatprep.subr.mxu0 %v2598
        %2680 = vmatpush1.msra.mxu0 %v2597
        %2681 = vmatprep.subr.mxu0 %v2602
        %2682 = vmatpush1.msra.mxu0 %v2601
        %2683 = vmatprep.subr.mxu0 %v2606
        %2684 = vmatpush1.msra.mxu0 %v2605
        %2685 = vmatprep.subr.mxu0 %v2610
        %2686 = vmatpush1.msra.mxu0 %v2609
        %2687 = vmatprep.subr.mxu0 %v2614
        %2688 = vmatpush1.msra.mxu0 %v2613
        %2689 = vmatprep.subr.mxu0 %v2618
        %2690 = vmatpush1.msra.mxu0 %v2617
        %2691 = vmatprep.subr.mxu0 %v2622
        %2692 = vmatpush1.msra.mxu0 %v2621
        %2693 = vmatprep.subr.mxu0 %v2626
        %2694 = vmatpush1.msra.mxu0 %v2625
        %2695 = vmatprep.subr.mxu0 %v2630
        %2696 = vmatpush1.msra.mxu0 %v2629
        %2697 = vmatprep.subr.mxu0 %v2634
        %2698 = vmatpush1.msra.mxu0 %v2633
        %2699 = vmatprep.subr.mxu0 %v2638
        %2700 = vmatpush1.msra.mxu0 %v2637
        %2701 = vmatprep.subr.mxu0 %v2642
        %2702 = vmatpush1.msra.mxu0 %v2641
        %2703 = vmatprep.subr.mxu0 %v2646
        %2704 = vmatpush1.msra.mxu0 %v2645
        %2705 = vmatprep.subr.mxu0 %v2650
        %2706 = vmatpush1.msra.mxu0 %v2649
        %2707 = vmatprep.subr.mxu0 %v2654
        %2708 = vmatpush1.msra.mxu0 %v2653
        %2709 = vmatprep.subr.mxu0 %v2658
        %2710 = vmatpush1.msra.mxu0 %v2657
        %2711 = vmatprep.subr.mxu0 %v2662
        %2712 = vmatpush1.msra.mxu0 %v2661
        %2713 = vmatprep.subr.mxu0 %v2666
        %2714 = vmatpush1.msra.mxu0 %v2665
        %2715 = vmatprep.subr.mxu0 0.0
        %2716 = vmatpush1.msra.mxu0 0.0
        %2717 = vmatprep.subr.mxu0 0.0
        %2718 = vmatpush1.msra.mxu0 0.0
        %2719 = vmatprep.subr.mxu0 0.0
        %2720 = vmatpush1.msra.mxu0 0.0
        %2721 = vmatprep.subr.mxu0 0.0
        %2722 = vmatpush1.msra.mxu0 0.0
        %2723 = vmatprep.subr.mxu0 0.0
        %2724 = vmatpush1.msra.mxu0 0.0
        %2725 = vmatprep.subr.mxu0 0.0
        %2726 = vmatpush1.msra.mxu0 0.0
        %2727 = vmatprep.subr.mxu0 0.0
        %2728 = vmatpush1.msra.mxu0 0.0
        %2729 = vmatprep.subr.mxu0 0.0
        %2730 = vmatpush1.msra.mxu0 0.0
        %2731 = vmatprep.subr.mxu0 0.0
        %2732 = vmatpush1.msra.mxu0 0.0
        %2733 = vmatprep.subr.mxu0 0.0
        %2734 = vmatpush1.msra.mxu0 0.0
        %2735 = vmatprep.subr.mxu0 0.0
        %2736 = vmatpush1.msra.mxu0 0.0
        %2737 = vmatprep.subr.mxu0 0.0
        %2738 = vmatpush1.msra.mxu0 0.0
        %2739 = vmatprep.mubr.f32.mxu0 %v2670
        %2740 = vmatmul.mubr.f32.gmra.mrb[0].mxu0 %v2578
        %v2741 = vpop.f32.mrb[0].mxu0
        %v2742 = vadd.f32 0.0, %v2741
        %v2743 = vpop.f32.mrb[0].mxu0
        %v2744 = vadd.f32 0.0, %v2743
        %2745 = vmatprep.mubr.f32.mxu0 %v2673
        %2746 = vmatmul.mubr.f32.gmra.mrb[0].mxu0 %v2584
        %v2747 = vpop.f32.mrb[0].mxu0
        %v2748 = vadd.f32 0.0, %v2747
        %v2749 = vpop.f32.mrb[0].mxu0
        %v2750 = vadd.f32 0.0, %v2749
        %2751 = vdwg.mxu0
        %2752 = vmatprep.subr.mxu0 %v2592
        %2753 = vmatpush1.msra.mxu0 %v2591
        %2754 = vmatprep.subr.mxu0 %v2596
        %2755 = vmatpush1.msra.mxu0 %v2595
        %2756 = vmatprep.subr.mxu0 %v2600
        %2757 = vmatpush1.msra.mxu0 %v2599
        %2758 = vmatprep.subr.mxu0 %v2604
        %2759 = vmatpush1.msra.mxu0 %v2603
        %2760 = vmatprep.subr.mxu0 %v2608
        %2761 = vmatpush1.msra.mxu0 %v2607
        %2762 = vmatprep.subr.mxu0 %v2612
        %2763 = vmatpush1.msra.mxu0 %v2611
        %2764 = vmatprep.subr.mxu0 %v2616
        %2765 = vmatpush1.msra.mxu0 %v2615
        %2766 = vmatprep.subr.mxu0 %v2620
        %2767 = vmatpush1.msra.mxu0 %v2619
        %2768 = vmatprep.subr.mxu0 %v2624
        %2769 = vmatpush1.msra.mxu0 %v2623
        %2770 = vmatprep.subr.mxu0 %v2628
        %2771 = vmatpush1.msra.mxu0 %v2627
        %2772 = vmatprep.subr.mxu0 %v2632
        %2773 = vmatpush1.msra.mxu0 %v2631
        %2774 = vmatprep.subr.mxu0 %v2636
        %2775 = vmatpush1.msra.mxu0 %v2635
        %2776 = vmatprep.subr.mxu0 %v2640
        %2777 = vmatpush1.msra.mxu0 %v2639
        %2778 = vmatprep.subr.mxu0 %v2644
        %2779 = vmatpush1.msra.mxu0 %v2643
        %2780 = vmatprep.subr.mxu0 %v2648
        %2781 = vmatpush1.msra.mxu0 %v2647
        %2782 = vmatprep.subr.mxu0 %v2652
        %2783 = vmatpush1.msra.mxu0 %v2651
        %2784 = vmatprep.subr.mxu0 %v2656
        %2785 = vmatpush1.msra.mxu0 %v2655
        %2786 = vmatprep.subr.mxu0 %v2660
        %2787 = vmatpush1.msra.mxu0 %v2659
        %2788 = vmatprep.subr.mxu0 %v2664
        %2789 = vmatpush1.msra.mxu0 %v2663
        %2790 = vmatprep.subr.mxu0 %v2668
        %2791 = vmatpush1.msra.mxu0 %v2667
        %2792 = vmatprep.subr.mxu0 0.0
        %2793 = vmatpush1.msra.mxu0 0.0
        %2794 = vmatprep.subr.mxu0 0.0
        %2795 = vmatpush1.msra.mxu0 0.0
        %2796 = vmatprep.subr.mxu0 0.0
        %2797 = vmatpush1.msra.mxu0 0.0
        %2798 = vmatprep.subr.mxu0 0.0
        %2799 = vmatpush1.msra.mxu0 0.0
        %2800 = vmatprep.subr.mxu0 0.0
        %2801 = vmatpush1.msra.mxu0 0.0
        %2802 = vmatprep.subr.mxu0 0.0
        %2803 = vmatpush1.msra.mxu0 0.0
        %2804 = vmatprep.subr.mxu0 0.0
        %2805 = vmatpush1.msra.mxu0 0.0
        %2806 = vmatprep.subr.mxu0 0.0
        %2807 = vmatpush1.msra.mxu0 0.0
        %2808 = vmatprep.subr.mxu0 0.0
        %2809 = vmatpush1.msra.mxu0 0.0
        %2810 = vmatprep.subr.mxu0 0.0
        %2811 = vmatpush1.msra.mxu0 0.0
        %2812 = vmatprep.subr.mxu0 0.0
        %2813 = vmatpush1.msra.mxu0 0.0
        %2814 = vmatprep.subr.mxu0 0.0
        %2815 = vmatpush1.msra.mxu0 0.0
        %2816 = vmatprep.mubr.f32.mxu0 %v2670
        %2817 = vmatmul.mubr.f32.gmra.mrb[0].mxu0 %v2578
        %v2818 = vpop.f32.mrb[0].mxu0
        %v2819 = vadd.f32 0.0, %v2818
        %v2820 = vpop.f32.mrb[0].mxu0
        %v2821 = vadd.f32 0.0, %v2820
        %2822 = vmatprep.mubr.f32.mxu0 %v2673
        %2823 = vmatmul.mubr.f32.gmra.mrb[0].mxu0 %v2584
        %v2824 = vpop.f32.mrb[0].mxu0
        %v2825 = vadd.f32 0.0, %v2824
        %v2826 = vpop.f32.mrb[0].mxu0
        %v2827 = vadd.f32 0.0, %v2826
        %2828 = vdwg.mxu0
        %v2830 = vsel %vm703, %v2414, 0
        %v2833 = vsel %vm703, %v2420, 0
        %2835 = vmatprep.subr.mxu0 %v2423
        %2836 = vmatpush1.msra.mxu0 %v2422
        %2837 = vmatprep.subr.mxu0 %v2427
        %2838 = vmatpush1.msra.mxu0 %v2426
        %2839 = vmatprep.subr.mxu0 %v2431
        %2840 = vmatpush1.msra.mxu0 %v2430
        %2841 = vmatprep.subr.mxu0 %v2435
        %2842 = vmatpush1.msra.mxu0 %v2434
        %2843 = vmatprep.subr.mxu0 %v2439
        %2844 = vmatpush1.msra.mxu0 %v2438
        %2845 = vmatprep.subr.mxu0 %v2443
        %2846 = vmatpush1.msra.mxu0 %v2442
        %2847 = vmatprep.subr.mxu0 %v2447
        %2848 = vmatpush1.msra.mxu0 %v2446
        %2849 = vmatprep.subr.mxu0 %v2451
        %2850 = vmatpush1.msra.mxu0 %v2450
        %2851 = vmatprep.subr.mxu0 %v2455
        %2852 = vmatpush1.msra.mxu0 %v2454
        %2853 = vmatprep.subr.mxu0 %v2459
        %2854 = vmatpush1.msra.mxu0 %v2458
        %2855 = vmatprep.subr.mxu0 %v2463
        %2856 = vmatpush1.msra.mxu0 %v2462
        %2857 = vmatprep.subr.mxu0 %v2467
        %2858 = vmatpush1.msra.mxu0 %v2466
        %2859 = vmatprep.subr.mxu0 %v2471
        %2860 = vmatpush1.msra.mxu0 %v2470
        %2861 = vmatprep.subr.mxu0 %v2475
        %2862 = vmatpush1.msra.mxu0 %v2474
        %2863 = vmatprep.subr.mxu0 %v2479
        %2864 = vmatpush1.msra.mxu0 %v2478
        %2865 = vmatprep.subr.mxu0 %v2483
        %2866 = vmatpush1.msra.mxu0 %v2482
        %2867 = vmatprep.subr.mxu0 %v2487
        %2868 = vmatpush1.msra.mxu0 %v2486
        %2869 = vmatprep.subr.mxu0 %v2491
        %2870 = vmatpush1.msra.mxu0 %v2490
        %2871 = vmatprep.subr.mxu0 %v2495
        %2872 = vmatpush1.msra.mxu0 %v2494
        %2873 = vmatprep.subr.mxu0 %v2499
        %2874 = vmatpush1.msra.mxu0 %v2498
        %2875 = vmatprep.subr.mxu0 0.0
        %2876 = vmatpush1.msra.mxu0 0.0
        %2877 = vmatprep.subr.mxu0 0.0
        %2878 = vmatpush1.msra.mxu0 0.0
        %2879 = vmatprep.subr.mxu0 0.0
        %2880 = vmatpush1.msra.mxu0 0.0
        %2881 = vmatprep.subr.mxu0 0.0
        %2882 = vmatpush1.msra.mxu0 0.0
        %2883 = vmatprep.subr.mxu0 0.0
        %2884 = vmatpush1.msra.mxu0 0.0
        %2885 = vmatprep.subr.mxu0 0.0
        %2886 = vmatpush1.msra.mxu0 0.0
        %2887 = vmatprep.subr.mxu0 0.0
        %2888 = vmatpush1.msra.mxu0 0.0
        %2889 = vmatprep.subr.mxu0 0.0
        %2890 = vmatpush1.msra.mxu0 0.0
        %2891 = vmatprep.subr.mxu0 0.0
        %2892 = vmatpush1.msra.mxu0 0.0
        %2893 = vmatprep.subr.mxu0 0.0
        %2894 = vmatpush1.msra.mxu0 0.0
        %2895 = vmatprep.subr.mxu0 0.0
        %2896 = vmatpush1.msra.mxu0 0.0
        %2897 = vmatprep.subr.mxu0 0.0
        %2898 = vmatpush1.msra.mxu0 0.0
        %2899 = vmatprep.mubr.f32.mxu0 %v2830
        %2900 = vmatmul.mubr.f32.gmra.mrb[0].mxu0 %v2412
        %v2901 = vpop.f32.mrb[0].mxu0
        %v2902 = vadd.f32 %v2742, %v2901
        %v2903 = vpop.f32.mrb[0].mxu0
        %v2904 = vadd.f32 %v2744, %v2903
        %2905 = vmatprep.mubr.f32.mxu0 %v2833
        %2906 = vmatmul.mubr.f32.gmra.mrb[0].mxu0 %v2418
        %v2907 = vpop.f32.mrb[0].mxu0
        %v2908 = vadd.f32 %v2748, %v2907
        %v2909 = vpop.f32.mrb[0].mxu0
        %v2910 = vadd.f32 %v2750, %v2909
        %2911 = vdwg.mxu0
        %2912 = vmatprep.subr.mxu0 %v2425
        %2913 = vmatpush1.msra.mxu0 %v2424
        %2914 = vmatprep.subr.mxu0 %v2429
        %2915 = vmatpush1.msra.mxu0 %v2428
        %2916 = vmatprep.subr.mxu0 %v2433
        %2917 = vmatpush1.msra.mxu0 %v2432
        %2918 = vmatprep.subr.mxu0 %v2437
        %2919 = vmatpush1.msra.mxu0 %v2436
        %2920 = vmatprep.subr.mxu0 %v2441
        %2921 = vmatpush1.msra.mxu0 %v2440
        %2922 = vmatprep.subr.mxu0 %v2445
        %2923 = vmatpush1.msra.mxu0 %v2444
        %2924 = vmatprep.subr.mxu0 %v2449
        %2925 = vmatpush1.msra.mxu0 %v2448
        %2926 = vmatprep.subr.mxu0 %v2453
        %2927 = vmatpush1.msra.mxu0 %v2452
        %2928 = vmatprep.subr.mxu0 %v2457
        %2929 = vmatpush1.msra.mxu0 %v2456
        %2930 = vmatprep.subr.mxu0 %v2461
        %2931 = vmatpush1.msra.mxu0 %v2460
        %2932 = vmatprep.subr.mxu0 %v2465
        %2933 = vmatpush1.msra.mxu0 %v2464
        %2934 = vmatprep.subr.mxu0 %v2469
        %2935 = vmatpush1.msra.mxu0 %v2468
        %2936 = vmatprep.subr.mxu0 %v2473
        %2937 = vmatpush1.msra.mxu0 %v2472
        %2938 = vmatprep.subr.mxu0 %v2477
        %2939 = vmatpush1.msra.mxu0 %v2476
        %2940 = vmatprep.subr.mxu0 %v2481
        %2941 = vmatpush1.msra.mxu0 %v2480
        %2942 = vmatprep.subr.mxu0 %v2485
        %2943 = vmatpush1.msra.mxu0 %v2484
        %2944 = vmatprep.subr.mxu0 %v2489
        %2945 = vmatpush1.msra.mxu0 %v2488
        %2946 = vmatprep.subr.mxu0 %v2493
        %2947 = vmatpush1.msra.mxu0 %v2492
        %2948 = vmatprep.subr.mxu0 %v2497
        %2949 = vmatpush1.msra.mxu0 %v2496
        %2950 = vmatprep.subr.mxu0 %v2501
        %2951 = vmatpush1.msra.mxu0 %v2500
        %2952 = vmatprep.subr.mxu0 0.0
        %2953 = vmatpush1.msra.mxu0 0.0
        %2954 = vmatprep.subr.mxu0 0.0
        %2955 = vmatpush1.msra.mxu0 0.0
        %2956 = vmatprep.subr.mxu0 0.0
        %2957 = vmatpush1.msra.mxu0 0.0
        %2958 = vmatprep.subr.mxu0 0.0
        %2959 = vmatpush1.msra.mxu0 0.0
        %2960 = vmatprep.subr.mxu0 0.0
        %2961 = vmatpush1.msra.mxu0 0.0
        %2962 = vmatprep.subr.mxu0 0.0
        %2963 = vmatpush1.msra.mxu0 0.0
        %2964 = vmatprep.subr.mxu0 0.0
        %2965 = vmatpush1.msra.mxu0 0.0
        %2966 = vmatprep.subr.mxu0 0.0
        %2967 = vmatpush1.msra.mxu0 0.0
        %2968 = vmatprep.subr.mxu0 0.0
        %2969 = vmatpush1.msra.mxu0 0.0
        %2970 = vmatprep.subr.mxu0 0.0
        %2971 = vmatpush1.msra.mxu0 0.0
        %2972 = vmatprep.subr.mxu0 0.0
        %2973 = vmatpush1.msra.mxu0 0.0
        %2974 = vmatprep.subr.mxu0 0.0
        %2975 = vmatpush1.msra.mxu0 0.0
        %2976 = vmatprep.mubr.f32.mxu0 %v2830
        %2977 = vmatmul.mubr.f32.gmra.mrb[0].mxu0 %v2412
        %v2978 = vpop.f32.mrb[0].mxu0
        %v2979 = vadd.f32 %v2819, %v2978
        %v2980 = vpop.f32.mrb[0].mxu0
        %v2981 = vadd.f32 %v2821, %v2980
        %2982 = vmatprep.mubr.f32.mxu0 %v2833
        %2983 = vmatmul.mubr.f32.gmra.mrb[0].mxu0 %v2418
        %v2984 = vpop.f32.mrb[0].mxu0
        %v2985 = vadd.f32 %v2825, %v2984
        %v2986 = vpop.f32.mrb[0].mxu0
        %v2987 = vadd.f32 %v2827, %v2986
        %2988 = vdwg.mxu0
        %s2989 = scalar_lea.vmem %s6, 32
        %v2990 = vld [vmem:[%s2989] sm:$0xff]
        %v2991 = vld [vmem:[%s2989 + $0x8] sm:$0xff]
        %v2993 = vsel %vm2331, %v2990, 0
        %v2996 = vsel %vm2331, %v2991, 0
        %2998 = vmatprep.subr.mxu0 %v2343
        %2999 = vmatpush1.msra.mxu0 %v2340
        %3000 = vmatprep.subr.mxu0 0.0
        %3001 = vmatpush1.msra.mxu0 0.0
        %3002 = vmatprep.subr.mxu0 0.0
        %3003 = vmatpush1.msra.mxu0 0.0
        %3004 = vmatprep.subr.mxu0 0.0
        %3005 = vmatpush1.msra.mxu0 0.0
        %3006 = vmatprep.subr.mxu0 0.0
        %3007 = vmatpush1.msra.mxu0 0.0
        %3008 = vmatprep.subr.mxu0 0.0
        %3009 = vmatpush1.msra.mxu0 0.0
        %3010 = vmatprep.subr.mxu0 0.0
        %3011 = vmatpush1.msra.mxu0 0.0
        %3012 = vmatprep.subr.mxu0 0.0
        %3013 = vmatpush1.msra.mxu0 0.0
        %3014 = vmatprep.subr.mxu0 0.0
        %3015 = vmatpush1.msra.mxu0 0.0
        %3016 = vmatprep.subr.mxu0 0.0
        %3017 = vmatpush1.msra.mxu0 0.0
        %3018 = vmatprep.subr.mxu0 0.0
        %3019 = vmatpush1.msra.mxu0 0.0
        %3020 = vmatprep.subr.mxu0 0.0
        %3021 = vmatpush1.msra.mxu0 0.0
        %3022 = vmatprep.subr.mxu0 0.0
        %3023 = vmatpush1.msra.mxu0 0.0
        %3024 = vmatprep.subr.mxu0 0.0
        %3025 = vmatpush1.msra.mxu0 0.0
        %3026 = vmatprep.subr.mxu0 0.0
        %3027 = vmatpush1.msra.mxu0 0.0
        %3028 = vmatprep.subr.mxu0 0.0
        %3029 = vmatpush1.msra.mxu0 0.0
        %3030 = vmatprep.subr.mxu0 0.0
        %3031 = vmatpush1.msra.mxu0 0.0
        %3032 = vmatprep.subr.mxu0 0.0
        %3033 = vmatpush1.msra.mxu0 0.0
        %3034 = vmatprep.subr.mxu0 0.0
        %3035 = vmatpush1.msra.mxu0 0.0
        %3036 = vmatprep.subr.mxu0 0.0
        %3037 = vmatpush1.msra.mxu0 0.0
        %3038 = vmatprep.subr.mxu0 0.0
        %3039 = vmatpush1.msra.mxu0 0.0
        %3040 = vmatprep.subr.mxu0 0.0
        %3041 = vmatpush1.msra.mxu0 0.0
        %3042 = vmatprep.subr.mxu0 0.0
        %3043 = vmatpush1.msra.mxu0 0.0
        %3044 = vmatprep.subr.mxu0 0.0
        %3045 = vmatpush1.msra.mxu0 0.0
        %3046 = vmatprep.subr.mxu0 0.0
        %3047 = vmatpush1.msra.mxu0 0.0
        %3048 = vmatprep.subr.mxu0 0.0
        %3049 = vmatpush1.msra.mxu0 0.0
        %3050 = vmatprep.subr.mxu0 0.0
        %3051 = vmatpush1.msra.mxu0 0.0
        %3052 = vmatprep.subr.mxu0 0.0
        %3053 = vmatpush1.msra.mxu0 0.0
        %3054 = vmatprep.subr.mxu0 0.0
        %3055 = vmatpush1.msra.mxu0 0.0
        %3056 = vmatprep.subr.mxu0 0.0
        %3057 = vmatpush1.msra.mxu0 0.0
        %3058 = vmatprep.subr.mxu0 0.0
        %3059 = vmatpush1.msra.mxu0 0.0
        %3060 = vmatprep.subr.mxu0 0.0
        %3061 = vmatpush1.msra.mxu0 0.0
        %3062 = vmatprep.mubr.f32.mxu0 0.0
        %3063 = vmatmul.mubr.f32.gmra.mrb[0].mxu0 %v2993
        %v3064 = vpop.f32.mrb[0].mxu0
        %v3065 = vadd.f32 0.0, %v3064
        %v3066 = vpop.f32.mrb[0].mxu0
        %v3067 = vadd.f32 0.0, %v3066
        %3068 = vmatprep.mubr.f32.mxu0 0.0
        %3069 = vmatmul.mubr.f32.gmra.mrb[0].mxu0 %v2996
        %v3070 = vpop.f32.mrb[0].mxu0
        %v3071 = vadd.f32 0.0, %v3070
        %v3072 = vpop.f32.mrb[0].mxu0
        %v3073 = vadd.f32 0.0, %v3072
        %3074 = vdwg.mxu0
        %s3075 = scalar_lea.vmem [#allocation13], 1280
        %v3076 = vld [vmem:[%s3075] sm:$0xff]
        %v3077 = vld [vmem:[%s3075 + $0x8] sm:$0xff]
        %v3078 = vld [vmem:[%s3075 + $0x10] sm:$0xff]
        %v3079 = vld [vmem:[%s3075 + $0x18] sm:$0xff]
        %v3080 = vld [vmem:[%s3075 + $0x20] sm:$0xff]
        %v3081 = vld [vmem:[%s3075 + $0x28] sm:$0xff]
        %v3082 = vld [vmem:[%s3075 + $0x30] sm:$0xff]
        %v3083 = vld [vmem:[%s3075 + $0x38] sm:$0xff]
        %v3084 = vld [vmem:[%s3075 + $0x40] sm:$0xff]
        %v3085 = vld [vmem:[%s3075 + $0x48] sm:$0xff]
        %v3086 = vld [vmem:[%s3075 + $0x50] sm:$0xff]
        %v3087 = vld [vmem:[%s3075 + $0x58] sm:$0xff]
        %v3088 = vld [vmem:[%s3075 + $0x60] sm:$0xff]
        %v3089 = vld [vmem:[%s3075 + $0x68] sm:$0xff]
        %v3090 = vld [vmem:[%s3075 + $0x70] sm:$0xff]
        %v3091 = vld [vmem:[%s3075 + $0x78] sm:$0xff]
        %v3092 = vld [vmem:[%s3075 + $0x80] sm:$0xff]
        %v3093 = vld [vmem:[%s3075 + $0x88] sm:$0xff]
        %v3094 = vld [vmem:[%s3075 + $0x90] sm:$0xff]
        %v3095 = vld [vmem:[%s3075 + $0x98] sm:$0xff]
        %v3096 = vld [vmem:[%s3075 + $0xa0] sm:$0xff]
        %v3097 = vld [vmem:[%s3075 + $0xa8] sm:$0xff]
        %v3098 = vld [vmem:[%s3075 + $0xb0] sm:$0xff]
        %v3099 = vld [vmem:[%s3075 + $0xb8] sm:$0xff]
        %v3100 = vld [vmem:[%s3075 + $0xc0] sm:$0xff]
        %v3101 = vld [vmem:[%s3075 + $0xc8] sm:$0xff]
        %v3102 = vld [vmem:[%s3075 + $0xd0] sm:$0xff]
        %v3103 = vld [vmem:[%s3075 + $0xd8] sm:$0xff]
        %v3104 = vld [vmem:[%s3075 + $0xe0] sm:$0xff]
        %v3105 = vld [vmem:[%s3075 + $0xe8] sm:$0xff]
        %v3106 = vld [vmem:[%s3075 + $0xf0] sm:$0xff]
        %v3107 = vld [vmem:[%s3075 + $0xf8] sm:$0xff]
        %v3108 = vld [vmem:[%s3075 + $0x100] sm:$0xff]
        %v3109 = vld [vmem:[%s3075 + $0x108] sm:$0xff]
        %v3110 = vld [vmem:[%s3075 + $0x110] sm:$0xff]
        %v3111 = vld [vmem:[%s3075 + $0x118] sm:$0xff]
        %v3112 = vld [vmem:[%s3075 + $0x120] sm:$0xff]
        %v3113 = vld [vmem:[%s3075 + $0x128] sm:$0xff]
        %v3114 = vld [vmem:[%s3075 + $0x130] sm:$0xff]
        %v3115 = vld [vmem:[%s3075 + $0x138] sm:$0xff]
        %v3116 = vld [vmem:[%s3075 + $0x140] sm:$0xff]
        %v3117 = vld [vmem:[%s3075 + $0x148] sm:$0xff]
        %v3118 = vld [vmem:[%s3075 + $0x150] sm:$0xff]
        %v3119 = vld [vmem:[%s3075 + $0x158] sm:$0xff]
        %v3120 = vld [vmem:[%s3075 + $0x160] sm:$0xff]
        %v3121 = vld [vmem:[%s3075 + $0x168] sm:$0xff]
        %v3122 = vld [vmem:[%s3075 + $0x170] sm:$0xff]
        %v3123 = vld [vmem:[%s3075 + $0x178] sm:$0xff]
        %v3124 = vld [vmem:[%s3075 + $0x180] sm:$0xff]
        %v3125 = vld [vmem:[%s3075 + $0x188] sm:$0xff]
        %v3126 = vld [vmem:[%s3075 + $0x190] sm:$0xff]
        %v3127 = vld [vmem:[%s3075 + $0x198] sm:$0xff]
        %v3128 = vld [vmem:[%s3075 + $0x1a0] sm:$0xff]
        %v3129 = vld [vmem:[%s3075 + $0x1a8] sm:$0xff]
        %v3130 = vld [vmem:[%s3075 + $0x1b0] sm:$0xff]
        %v3131 = vld [vmem:[%s3075 + $0x1b8] sm:$0xff]
        %v3132 = vld [vmem:[%s3075 + $0x1c0] sm:$0xff]
        %v3133 = vld [vmem:[%s3075 + $0x1c8] sm:$0xff]
        %v3134 = vld [vmem:[%s3075 + $0x1d0] sm:$0xff]
        %v3135 = vld [vmem:[%s3075 + $0x1d8] sm:$0xff]
        %v3136 = vld [vmem:[%s3075 + $0x1e0] sm:$0xff]
        %v3137 = vld [vmem:[%s3075 + $0x1e8] sm:$0xff]
        %v3138 = vld [vmem:[%s3075 + $0x1f0] sm:$0xff]
        %v3139 = vld [vmem:[%s3075 + $0x1f8] sm:$0xff]
        %v3140 = vld [vmem:[%s3075 + $0x200] sm:$0xff]
        %v3141 = vld [vmem:[%s3075 + $0x208] sm:$0xff]
        %v3142 = vld [vmem:[%s3075 + $0x210] sm:$0xff]
        %v3143 = vld [vmem:[%s3075 + $0x218] sm:$0xff]
        %v3144 = vld [vmem:[%s3075 + $0x220] sm:$0xff]
        %v3145 = vld [vmem:[%s3075 + $0x228] sm:$0xff]
        %v3146 = vld [vmem:[%s3075 + $0x230] sm:$0xff]
        %v3147 = vld [vmem:[%s3075 + $0x238] sm:$0xff]
        %v3148 = vld [vmem:[%s3075 + $0x240] sm:$0xff]
        %v3149 = vld [vmem:[%s3075 + $0x248] sm:$0xff]
        %v3150 = vld [vmem:[%s3075 + $0x250] sm:$0xff]
        %v3151 = vld [vmem:[%s3075 + $0x258] sm:$0xff]
        %v3152 = vld [vmem:[%s3075 + $0x260] sm:$0xff]
        %v3153 = vld [vmem:[%s3075 + $0x268] sm:$0xff]
        %v3154 = vld [vmem:[%s3075 + $0x270] sm:$0xff]
        %v3155 = vld [vmem:[%s3075 + $0x278] sm:$0xff]
        %v3157 = vsel %vm703, %v3067, 0
        %v3160 = vsel %vm703, %v3073, 0
        %3162 = vmatprep.subr.mxu0 %v3077
        %3163 = vmatpush1.msra.mxu0 %v3076
        %3164 = vmatprep.subr.mxu0 %v3081
        %3165 = vmatpush1.msra.mxu0 %v3080
        %3166 = vmatprep.subr.mxu0 %v3085
        %3167 = vmatpush1.msra.mxu0 %v3084
        %3168 = vmatprep.subr.mxu0 %v3089
        %3169 = vmatpush1.msra.mxu0 %v3088
        %3170 = vmatprep.subr.mxu0 %v3093
        %3171 = vmatpush1.msra.mxu0 %v3092
        %3172 = vmatprep.subr.mxu0 %v3097
        %3173 = vmatpush1.msra.mxu0 %v3096
        %3174 = vmatprep.subr.mxu0 %v3101
        %3175 = vmatpush1.msra.mxu0 %v3100
        %3176 = vmatprep.subr.mxu0 %v3105
        %3177 = vmatpush1.msra.mxu0 %v3104
        %3178 = vmatprep.subr.mxu0 %v3109
        %3179 = vmatpush1.msra.mxu0 %v3108
        %3180 = vmatprep.subr.mxu0 %v3113
        %3181 = vmatpush1.msra.mxu0 %v3112
        %3182 = vmatprep.subr.mxu0 %v3117
        %3183 = vmatpush1.msra.mxu0 %v3116
        %3184 = vmatprep.subr.mxu0 %v3121
        %3185 = vmatpush1.msra.mxu0 %v3120
        %3186 = vmatprep.subr.mxu0 %v3125
        %3187 = vmatpush1.msra.mxu0 %v3124
        %3188 = vmatprep.subr.mxu0 %v3129
        %3189 = vmatpush1.msra.mxu0 %v3128
        %3190 = vmatprep.subr.mxu0 %v3133
        %3191 = vmatpush1.msra.mxu0 %v3132
        %3192 = vmatprep.subr.mxu0 %v3137
        %3193 = vmatpush1.msra.mxu0 %v3136
        %3194 = vmatprep.subr.mxu0 %v3141
        %3195 = vmatpush1.msra.mxu0 %v3140
        %3196 = vmatprep.subr.mxu0 %v3145
        %3197 = vmatpush1.msra.mxu0 %v3144
        %3198 = vmatprep.subr.mxu0 %v3149
        %3199 = vmatpush1.msra.mxu0 %v3148
        %3200 = vmatprep.subr.mxu0 %v3153
        %3201 = vmatpush1.msra.mxu0 %v3152
        %3202 = vmatprep.subr.mxu0 0.0
        %3203 = vmatpush1.msra.mxu0 0.0
        %3204 = vmatprep.subr.mxu0 0.0
        %3205 = vmatpush1.msra.mxu0 0.0
        %3206 = vmatprep.subr.mxu0 0.0
        %3207 = vmatpush1.msra.mxu0 0.0
        %3208 = vmatprep.subr.mxu0 0.0
        %3209 = vmatpush1.msra.mxu0 0.0
        %3210 = vmatprep.subr.mxu0 0.0
        %3211 = vmatpush1.msra.mxu0 0.0
        %3212 = vmatprep.subr.mxu0 0.0
        %3213 = vmatpush1.msra.mxu0 0.0
        %3214 = vmatprep.subr.mxu0 0.0
        %3215 = vmatpush1.msra.mxu0 0.0
        %3216 = vmatprep.subr.mxu0 0.0
        %3217 = vmatpush1.msra.mxu0 0.0
        %3218 = vmatprep.subr.mxu0 0.0
        %3219 = vmatpush1.msra.mxu0 0.0
        %3220 = vmatprep.subr.mxu0 0.0
        %3221 = vmatpush1.msra.mxu0 0.0
        %3222 = vmatprep.subr.mxu0 0.0
        %3223 = vmatpush1.msra.mxu0 0.0
        %3224 = vmatprep.subr.mxu0 0.0
        %3225 = vmatpush1.msra.mxu0 0.0
        %3226 = vmatprep.mubr.f32.mxu0 %v3157
        %3227 = vmatmul.mubr.f32.gmra.mrb[0].mxu0 %v3065
        %v3228 = vpop.f32.mrb[0].mxu0
        %v3229 = vadd.f32 0.0, %v3228
        %v3230 = vpop.f32.mrb[0].mxu0
        %v3231 = vadd.f32 0.0, %v3230
        %3232 = vmatprep.mubr.f32.mxu0 %v3160
        %3233 = vmatmul.mubr.f32.gmra.mrb[0].mxu0 %v3071
        %v3234 = vpop.f32.mrb[0].mxu0
        %v3235 = vadd.f32 0.0, %v3234
        %v3236 = vpop.f32.mrb[0].mxu0
        %v3237 = vadd.f32 0.0, %v3236
        %3238 = vdwg.mxu0
        %3239 = vmatprep.subr.mxu0 %v3079
        %3240 = vmatpush1.msra.mxu0 %v3078
        %3241 = vmatprep.subr.mxu0 %v3083
        %3242 = vmatpush1.msra.mxu0 %v3082
        %3243 = vmatprep.subr.mxu0 %v3087
        %3244 = vmatpush1.msra.mxu0 %v3086
        %3245 = vmatprep.subr.mxu0 %v3091
        %3246 = vmatpush1.msra.mxu0 %v3090
        %3247 = vmatprep.subr.mxu0 %v3095
        %3248 = vmatpush1.msra.mxu0 %v3094
        %3249 = vmatprep.subr.mxu0 %v3099
        %3250 = vmatpush1.msra.mxu0 %v3098
        %3251 = vmatprep.subr.mxu0 %v3103
        %3252 = vmatpush1.msra.mxu0 %v3102
        %3253 = vmatprep.subr.mxu0 %v3107
        %3254 = vmatpush1.msra.mxu0 %v3106
        %3255 = vmatprep.subr.mxu0 %v3111
        %3256 = vmatpush1.msra.mxu0 %v3110
        %3257 = vmatprep.subr.mxu0 %v3115
        %3258 = vmatpush1.msra.mxu0 %v3114
        %3259 = vmatprep.subr.mxu0 %v3119
        %3260 = vmatpush1.msra.mxu0 %v3118
        %3261 = vmatprep.subr.mxu0 %v3123
        %3262 = vmatpush1.msra.mxu0 %v3122
        %3263 = vmatprep.subr.mxu0 %v3127
        %3264 = vmatpush1.msra.mxu0 %v3126
        %3265 = vmatprep.subr.mxu0 %v3131
        %3266 = vmatpush1.msra.mxu0 %v3130
        %3267 = vmatprep.subr.mxu0 %v3135
        %3268 = vmatpush1.msra.mxu0 %v3134
        %3269 = vmatprep.subr.mxu0 %v3139
        %3270 = vmatpush1.msra.mxu0 %v3138
        %3271 = vmatprep.subr.mxu0 %v3143
        %3272 = vmatpush1.msra.mxu0 %v3142
        %3273 = vmatprep.subr.mxu0 %v3147
        %3274 = vmatpush1.msra.mxu0 %v3146
        %3275 = vmatprep.subr.mxu0 %v3151
        %3276 = vmatpush1.msra.mxu0 %v3150
        %3277 = vmatprep.subr.mxu0 %v3155
        %3278 = vmatpush1.msra.mxu0 %v3154
        %3279 = vmatprep.subr.mxu0 0.0
        %3280 = vmatpush1.msra.mxu0 0.0
        %3281 = vmatprep.subr.mxu0 0.0
        %3282 = vmatpush1.msra.mxu0 0.0
        %3283 = vmatprep.subr.mxu0 0.0
        %3284 = vmatpush1.msra.mxu0 0.0
        %3285 = vmatprep.subr.mxu0 0.0
        %3286 = vmatpush1.msra.mxu0 0.0
        %3287 = vmatprep.subr.mxu0 0.0
        %3288 = vmatpush1.msra.mxu0 0.0
        %3289 = vmatprep.subr.mxu0 0.0
        %3290 = vmatpush1.msra.mxu0 0.0
        %3291 = vmatprep.subr.mxu0 0.0
        %3292 = vmatpush1.msra.mxu0 0.0
        %3293 = vmatprep.subr.mxu0 0.0
        %3294 = vmatpush1.msra.mxu0 0.0
        %3295 = vmatprep.subr.mxu0 0.0
        %3296 = vmatpush1.msra.mxu0 0.0
        %3297 = vmatprep.subr.mxu0 0.0
        %3298 = vmatpush1.msra.mxu0 0.0
        %3299 = vmatprep.subr.mxu0 0.0
        %3300 = vmatpush1.msra.mxu0 0.0
        %3301 = vmatprep.subr.mxu0 0.0
        %3302 = vmatpush1.msra.mxu0 0.0
        %3303 = vmatprep.mubr.f32.mxu0 %v3157
        %3304 = vmatmul.mubr.f32.gmra.mrb[0].mxu0 %v3065
        %v3305 = vpop.f32.mrb[0].mxu0
        %v3306 = vadd.f32 0.0, %v3305
        %v3307 = vpop.f32.mrb[0].mxu0
        %v3308 = vadd.f32 0.0, %v3307
        %3309 = vmatprep.mubr.f32.mxu0 %v3160
        %3310 = vmatmul.mubr.f32.gmra.mrb[0].mxu0 %v3071
        %v3311 = vpop.f32.mrb[0].mxu0
        %v3312 = vadd.f32 0.0, %v3311
        %v3313 = vpop.f32.mrb[0].mxu0
        %v3314 = vadd.f32 0.0, %v3313
        %3315 = vdwg.mxu0
        %v3316 = vadd.f32 %v2902, %v3229
        %v3317 = vadd.f32 %v2904, %v3231
        %v3318 = vadd.f32 %v2979, %v3306
        %v3319 = vadd.f32 %v2981, %v3308
        %v3320 = vadd.f32 %v2908, %v3235
        %v3321 = vadd.f32 %v2910, %v3237
        %v3322 = vadd.f32 %v2985, %v3312
        %v3323 = vadd.f32 %v2987, %v3314
        %s3324 = scalar_lea.vmem %s6, 48
        %v3325 = vld [vmem:[%s3324] sm:$0xff]
        %v3326 = vld [vmem:[%s3324 + $0x8] sm:$0xff]
        %v3328 = vsel %vm2331, %v3325, 0
        %v3331 = vsel %vm2331, %v3326, 0
        %3333 = vmatprep.subr.mxu0 %v2343
        %3334 = vmatpush1.msra.mxu0 %v2340
        %3335 = vmatprep.subr.mxu0 0.0
        %3336 = vmatpush1.msra.mxu0 0.0
        %3337 = vmatprep.subr.mxu0 0.0
        %3338 = vmatpush1.msra.mxu0 0.0
        %3339 = vmatprep.subr.mxu0 0.0
        %3340 = vmatpush1.msra.mxu0 0.0
        %3341 = vmatprep.subr.mxu0 0.0
        %3342 = vmatpush1.msra.mxu0 0.0
        %3343 = vmatprep.subr.mxu0 0.0
        %3344 = vmatpush1.msra.mxu0 0.0
        %3345 = vmatprep.subr.mxu0 0.0
        %3346 = vmatpush1.msra.mxu0 0.0
        %3347 = vmatprep.subr.mxu0 0.0
        %3348 = vmatpush1.msra.mxu0 0.0
        %3349 = vmatprep.subr.mxu0 0.0
        %3350 = vmatpush1.msra.mxu0 0.0
        %3351 = vmatprep.subr.mxu0 0.0
        %3352 = vmatpush1.msra.mxu0 0.0
        %3353 = vmatprep.subr.mxu0 0.0
        %3354 = vmatpush1.msra.mxu0 0.0
        %3355 = vmatprep.subr.mxu0 0.0
        %3356 = vmatpush1.msra.mxu0 0.0
        %3357 = vmatprep.subr.mxu0 0.0
        %3358 = vmatpush1.msra.mxu0 0.0
        %3359 = vmatprep.subr.mxu0 0.0
        %3360 = vmatpush1.msra.mxu0 0.0
        %3361 = vmatprep.subr.mxu0 0.0
        %3362 = vmatpush1.msra.mxu0 0.0
        %3363 = vmatprep.subr.mxu0 0.0
        %3364 = vmatpush1.msra.mxu0 0.0
        %3365 = vmatprep.subr.mxu0 0.0
        %3366 = vmatpush1.msra.mxu0 0.0
        %3367 = vmatprep.subr.mxu0 0.0
        %3368 = vmatpush1.msra.mxu0 0.0
        %3369 = vmatprep.subr.mxu0 0.0
        %3370 = vmatpush1.msra.mxu0 0.0
        %3371 = vmatprep.subr.mxu0 0.0
        %3372 = vmatpush1.msra.mxu0 0.0
        %3373 = vmatprep.subr.mxu0 0.0
        %3374 = vmatpush1.msra.mxu0 0.0
        %3375 = vmatprep.subr.mxu0 0.0
        %3376 = vmatpush1.msra.mxu0 0.0
        %3377 = vmatprep.subr.mxu0 0.0
        %3378 = vmatpush1.msra.mxu0 0.0
        %3379 = vmatprep.subr.mxu0 0.0
        %3380 = vmatpush1.msra.mxu0 0.0
        %3381 = vmatprep.subr.mxu0 0.0
        %3382 = vmatpush1.msra.mxu0 0.0
        %3383 = vmatprep.subr.mxu0 0.0
        %3384 = vmatpush1.msra.mxu0 0.0
        %3385 = vmatprep.subr.mxu0 0.0
        %3386 = vmatpush1.msra.mxu0 0.0
        %3387 = vmatprep.subr.mxu0 0.0
        %3388 = vmatpush1.msra.mxu0 0.0
        %3389 = vmatprep.subr.mxu0 0.0
        %3390 = vmatpush1.msra.mxu0 0.0
        %3391 = vmatprep.subr.mxu0 0.0
        %3392 = vmatpush1.msra.mxu0 0.0
        %3393 = vmatprep.subr.mxu0 0.0
        %3394 = vmatpush1.msra.mxu0 0.0
        %3395 = vmatprep.subr.mxu0 0.0
        %3396 = vmatpush1.msra.mxu0 0.0
        %3397 = vmatprep.mubr.f32.mxu0 0.0
        %3398 = vmatmul.mubr.f32.gmra.mrb[0].mxu0 %v3328
        %v3399 = vpop.f32.mrb[0].mxu0
        %v3400 = vadd.f32 0.0, %v3399
        %v3401 = vpop.f32.mrb[0].mxu0
        %v3402 = vadd.f32 0.0, %v3401
        %3403 = vmatprep.mubr.f32.mxu0 0.0
        %3404 = vmatmul.mubr.f32.gmra.mrb[0].mxu0 %v3331
        %v3405 = vpop.f32.mrb[0].mxu0
        %v3406 = vadd.f32 0.0, %v3405
        %v3407 = vpop.f32.mrb[0].mxu0
        %v3408 = vadd.f32 0.0, %v3407
        %3409 = vdwg.mxu0
        %s3410 = scalar_lea.vmem [#allocation13], 1920
        %v3411 = vld [vmem:[%s3410] sm:$0xff]
        %v3412 = vld [vmem:[%s3410 + $0x8] sm:$0xff]
        %v3413 = vld [vmem:[%s3410 + $0x10] sm:$0xff]
        %v3414 = vld [vmem:[%s3410 + $0x18] sm:$0xff]
        %v3415 = vld [vmem:[%s3410 + $0x20] sm:$0xff]
        %v3416 = vld [vmem:[%s3410 + $0x28] sm:$0xff]
        %v3417 = vld [vmem:[%s3410 + $0x30] sm:$0xff]
        %v3418 = vld [vmem:[%s3410 + $0x38] sm:$0xff]
        %v3419 = vld [vmem:[%s3410 + $0x40] sm:$0xff]
        %v3420 = vld [vmem:[%s3410 + $0x48] sm:$0xff]
        %v3421 = vld [vmem:[%s3410 + $0x50] sm:$0xff]
        %v3422 = vld [vmem:[%s3410 + $0x58] sm:$0xff]
        %v3423 = vld [vmem:[%s3410 + $0x60] sm:$0xff]
        %v3424 = vld [vmem:[%s3410 + $0x68] sm:$0xff]
        %v3425 = vld [vmem:[%s3410 + $0x70] sm:$0xff]
        %v3426 = vld [vmem:[%s3410 + $0x78] sm:$0xff]
        %v3427 = vld [vmem:[%s3410 + $0x80] sm:$0xff]
        %v3428 = vld [vmem:[%s3410 + $0x88] sm:$0xff]
        %v3429 = vld [vmem:[%s3410 + $0x90] sm:$0xff]
        %v3430 = vld [vmem:[%s3410 + $0x98] sm:$0xff]
        %v3431 = vld [vmem:[%s3410 + $0xa0] sm:$0xff]
        %v3432 = vld [vmem:[%s3410 + $0xa8] sm:$0xff]
        %v3433 = vld [vmem:[%s3410 + $0xb0] sm:$0xff]
        %v3434 = vld [vmem:[%s3410 + $0xb8] sm:$0xff]
        %v3435 = vld [vmem:[%s3410 + $0xc0] sm:$0xff]
        %v3436 = vld [vmem:[%s3410 + $0xc8] sm:$0xff]
        %v3437 = vld [vmem:[%s3410 + $0xd0] sm:$0xff]
        %v3438 = vld [vmem:[%s3410 + $0xd8] sm:$0xff]
        %v3439 = vld [vmem:[%s3410 + $0xe0] sm:$0xff]
        %v3440 = vld [vmem:[%s3410 + $0xe8] sm:$0xff]
        %v3441 = vld [vmem:[%s3410 + $0xf0] sm:$0xff]
        %v3442 = vld [vmem:[%s3410 + $0xf8] sm:$0xff]
        %v3443 = vld [vmem:[%s3410 + $0x100] sm:$0xff]
        %v3444 = vld [vmem:[%s3410 + $0x108] sm:$0xff]
        %v3445 = vld [vmem:[%s3410 + $0x110] sm:$0xff]
        %v3446 = vld [vmem:[%s3410 + $0x118] sm:$0xff]
        %v3447 = vld [vmem:[%s3410 + $0x120] sm:$0xff]
        %v3448 = vld [vmem:[%s3410 + $0x128] sm:$0xff]
        %v3449 = vld [vmem:[%s3410 + $0x130] sm:$0xff]
        %v3450 = vld [vmem:[%s3410 + $0x138] sm:$0xff]
        %v3451 = vld [vmem:[%s3410 + $0x140] sm:$0xff]
        %v3452 = vld [vmem:[%s3410 + $0x148] sm:$0xff]
        %v3453 = vld [vmem:[%s3410 + $0x150] sm:$0xff]
        %v3454 = vld [vmem:[%s3410 + $0x158] sm:$0xff]
        %v3455 = vld [vmem:[%s3410 + $0x160] sm:$0xff]
        %v3456 = vld [vmem:[%s3410 + $0x168] sm:$0xff]
        %v3457 = vld [vmem:[%s3410 + $0x170] sm:$0xff]
        %v3458 = vld [vmem:[%s3410 + $0x178] sm:$0xff]
        %v3459 = vld [vmem:[%s3410 + $0x180] sm:$0xff]
        %v3460 = vld [vmem:[%s3410 + $0x188] sm:$0xff]
        %v3461 = vld [vmem:[%s3410 + $0x190] sm:$0xff]
        %v3462 = vld [vmem:[%s3410 + $0x198] sm:$0xff]
        %v3463 = vld [vmem:[%s3410 + $0x1a0] sm:$0xff]
        %v3464 = vld [vmem:[%s3410 + $0x1a8] sm:$0xff]
        %v3465 = vld [vmem:[%s3410 + $0x1b0] sm:$0xff]
        %v3466 = vld [vmem:[%s3410 + $0x1b8] sm:$0xff]
        %v3467 = vld [vmem:[%s3410 + $0x1c0] sm:$0xff]
        %v3468 = vld [vmem:[%s3410 + $0x1c8] sm:$0xff]
        %v3469 = vld [vmem:[%s3410 + $0x1d0] sm:$0xff]
        %v3470 = vld [vmem:[%s3410 + $0x1d8] sm:$0xff]
        %v3471 = vld [vmem:[%s3410 + $0x1e0] sm:$0xff]
        %v3472 = vld [vmem:[%s3410 + $0x1e8] sm:$0xff]
        %v3473 = vld [vmem:[%s3410 + $0x1f0] sm:$0xff]
        %v3474 = vld [vmem:[%s3410 + $0x1f8] sm:$0xff]
        %v3475 = vld [vmem:[%s3410 + $0x200] sm:$0xff]
        %v3476 = vld [vmem:[%s3410 + $0x208] sm:$0xff]
        %v3477 = vld [vmem:[%s3410 + $0x210] sm:$0xff]
        %v3478 = vld [vmem:[%s3410 + $0x218] sm:$0xff]
        %v3479 = vld [vmem:[%s3410 + $0x220] sm:$0xff]
        %v3480 = vld [vmem:[%s3410 + $0x228] sm:$0xff]
        %v3481 = vld [vmem:[%s3410 + $0x230] sm:$0xff]
        %v3482 = vld [vmem:[%s3410 + $0x238] sm:$0xff]
        %v3483 = vld [vmem:[%s3410 + $0x240] sm:$0xff]
        %v3484 = vld [vmem:[%s3410 + $0x248] sm:$0xff]
        %v3485 = vld [vmem:[%s3410 + $0x250] sm:$0xff]
        %v3486 = vld [vmem:[%s3410 + $0x258] sm:$0xff]
        %v3487 = vld [vmem:[%s3410 + $0x260] sm:$0xff]
        %v3488 = vld [vmem:[%s3410 + $0x268] sm:$0xff]
        %v3489 = vld [vmem:[%s3410 + $0x270] sm:$0xff]
        %v3490 = vld [vmem:[%s3410 + $0x278] sm:$0xff]
        %v3492 = vsel %vm703, %v3402, 0
        %v3495 = vsel %vm703, %v3408, 0
        %3497 = vmatprep.subr.mxu0 %v3412
        %3498 = vmatpush1.msra.mxu0 %v3411
        %3499 = vmatprep.subr.mxu0 %v3416
        %3500 = vmatpush1.msra.mxu0 %v3415
        %3501 = vmatprep.subr.mxu0 %v3420
        %3502 = vmatpush1.msra.mxu0 %v3419
        %3503 = vmatprep.subr.mxu0 %v3424
        %3504 = vmatpush1.msra.mxu0 %v3423
        %3505 = vmatprep.subr.mxu0 %v3428
        %3506 = vmatpush1.msra.mxu0 %v3427
        %3507 = vmatprep.subr.mxu0 %v3432
        %3508 = vmatpush1.msra.mxu0 %v3431
        %3509 = vmatprep.subr.mxu0 %v3436
        %3510 = vmatpush1.msra.mxu0 %v3435
        %3511 = vmatprep.subr.mxu0 %v3440
        %3512 = vmatpush1.msra.mxu0 %v3439
        %3513 = vmatprep.subr.mxu0 %v3444
        %3514 = vmatpush1.msra.mxu0 %v3443
        %3515 = vmatprep.subr.mxu0 %v3448
        %3516 = vmatpush1.msra.mxu0 %v3447
        %3517 = vmatprep.subr.mxu0 %v3452
        %3518 = vmatpush1.msra.mxu0 %v3451
        %3519 = vmatprep.subr.mxu0 %v3456
        %3520 = vmatpush1.msra.mxu0 %v3455
        %3521 = vmatprep.subr.mxu0 %v3460
        %3522 = vmatpush1.msra.mxu0 %v3459
        %3523 = vmatprep.subr.mxu0 %v3464
        %3524 = vmatpush1.msra.mxu0 %v3463
        %3525 = vmatprep.subr.mxu0 %v3468
        %3526 = vmatpush1.msra.mxu0 %v3467
        %3527 = vmatprep.subr.mxu0 %v3472
        %3528 = vmatpush1.msra.mxu0 %v3471
        %3529 = vmatprep.subr.mxu0 %v3476
        %3530 = vmatpush1.msra.mxu0 %v3475
        %3531 = vmatprep.subr.mxu0 %v3480
        %3532 = vmatpush1.msra.mxu0 %v3479
        %3533 = vmatprep.subr.mxu0 %v3484
        %3534 = vmatpush1.msra.mxu0 %v3483
        %3535 = vmatprep.subr.mxu0 %v3488
        %3536 = vmatpush1.msra.mxu0 %v3487
        %3537 = vmatprep.subr.mxu0 0.0
        %3538 = vmatpush1.msra.mxu0 0.0
        %3539 = vmatprep.subr.mxu0 0.0
        %3540 = vmatpush1.msra.mxu0 0.0
        %3541 = vmatprep.subr.mxu0 0.0
        %3542 = vmatpush1.msra.mxu0 0.0
        %3543 = vmatprep.subr.mxu0 0.0
        %3544 = vmatpush1.msra.mxu0 0.0
        %3545 = vmatprep.subr.mxu0 0.0
        %3546 = vmatpush1.msra.mxu0 0.0
        %3547 = vmatprep.subr.mxu0 0.0
        %3548 = vmatpush1.msra.mxu0 0.0
        %3549 = vmatprep.subr.mxu0 0.0
        %3550 = vmatpush1.msra.mxu0 0.0
        %3551 = vmatprep.subr.mxu0 0.0
        %3552 = vmatpush1.msra.mxu0 0.0
        %3553 = vmatprep.subr.mxu0 0.0
        %3554 = vmatpush1.msra.mxu0 0.0
        %3555 = vmatprep.subr.mxu0 0.0
        %3556 = vmatpush1.msra.mxu0 0.0
        %3557 = vmatprep.subr.mxu0 0.0
        %3558 = vmatpush1.msra.mxu0 0.0
        %3559 = vmatprep.subr.mxu0 0.0
        %3560 = vmatpush1.msra.mxu0 0.0
        %3561 = vmatprep.mubr.f32.mxu0 %v3492
        %3562 = vmatmul.mubr.f32.gmra.mrb[0].mxu0 %v3400
        %v3563 = vpop.f32.mrb[0].mxu0
        %v3564 = vadd.f32 0.0, %v3563
        %v3565 = vpop.f32.mrb[0].mxu0
        %v3566 = vadd.f32 0.0, %v3565
        %3567 = vmatprep.mubr.f32.mxu0 %v3495
        %3568 = vmatmul.mubr.f32.gmra.mrb[0].mxu0 %v3406
        %v3569 = vpop.f32.mrb[0].mxu0
        %v3570 = vadd.f32 0.0, %v3569
        %v3571 = vpop.f32.mrb[0].mxu0
        %v3572 = vadd.f32 0.0, %v3571
        %3573 = vdwg.mxu0
        %3574 = vmatprep.subr.mxu0 %v3414
        %3575 = vmatpush1.msra.mxu0 %v3413
        %3576 = vmatprep.subr.mxu0 %v3418
        %3577 = vmatpush1.msra.mxu0 %v3417
        %3578 = vmatprep.subr.mxu0 %v3422
        %3579 = vmatpush1.msra.mxu0 %v3421
        %3580 = vmatprep.subr.mxu0 %v3426
        %3581 = vmatpush1.msra.mxu0 %v3425
        %3582 = vmatprep.subr.mxu0 %v3430
        %3583 = vmatpush1.msra.mxu0 %v3429
        %3584 = vmatprep.subr.mxu0 %v3434
        %3585 = vmatpush1.msra.mxu0 %v3433
        %3586 = vmatprep.subr.mxu0 %v3438
        %3587 = vmatpush1.msra.mxu0 %v3437
        %3588 = vmatprep.subr.mxu0 %v3442
        %3589 = vmatpush1.msra.mxu0 %v3441
        %3590 = vmatprep.subr.mxu0 %v3446
        %3591 = vmatpush1.msra.mxu0 %v3445
        %3592 = vmatprep.subr.mxu0 %v3450
        %3593 = vmatpush1.msra.mxu0 %v3449
        %3594 = vmatprep.subr.mxu0 %v3454
        %3595 = vmatpush1.msra.mxu0 %v3453
        %3596 = vmatprep.subr.mxu0 %v3458
        %3597 = vmatpush1.msra.mxu0 %v3457
        %3598 = vmatprep.subr.mxu0 %v3462
        %3599 = vmatpush1.msra.mxu0 %v3461
        %3600 = vmatprep.subr.mxu0 %v3466
        %3601 = vmatpush1.msra.mxu0 %v3465
        %3602 = vmatprep.subr.mxu0 %v3470
        %3603 = vmatpush1.msra.mxu0 %v3469
        %3604 = vmatprep.subr.mxu0 %v3474
        %3605 = vmatpush1.msra.mxu0 %v3473
        %3606 = vmatprep.subr.mxu0 %v3478
        %3607 = vmatpush1.msra.mxu0 %v3477
        %3608 = vmatprep.subr.mxu0 %v3482
        %3609 = vmatpush1.msra.mxu0 %v3481
        %3610 = vmatprep.subr.mxu0 %v3486
        %3611 = vmatpush1.msra.mxu0 %v3485
        %3612 = vmatprep.subr.mxu0 %v3490
        %3613 = vmatpush1.msra.mxu0 %v3489
        %3614 = vmatprep.subr.mxu0 0.0
        %3615 = vmatpush1.msra.mxu0 0.0
        %3616 = vmatprep.subr.mxu0 0.0
        %3617 = vmatpush1.msra.mxu0 0.0
        %3618 = vmatprep.subr.mxu0 0.0
        %3619 = vmatpush1.msra.mxu0 0.0
        %3620 = vmatprep.subr.mxu0 0.0
        %3621 = vmatpush1.msra.mxu0 0.0
        %3622 = vmatprep.subr.mxu0 0.0
        %3623 = vmatpush1.msra.mxu0 0.0
        %3624 = vmatprep.subr.mxu0 0.0
        %3625 = vmatpush1.msra.mxu0 0.0
        %3626 = vmatprep.subr.mxu0 0.0
        %3627 = vmatpush1.msra.mxu0 0.0
        %3628 = vmatprep.subr.mxu0 0.0
        %3629 = vmatpush1.msra.mxu0 0.0
        %3630 = vmatprep.subr.mxu0 0.0
        %3631 = vmatpush1.msra.mxu0 0.0
        %3632 = vmatprep.subr.mxu0 0.0
        %3633 = vmatpush1.msra.mxu0 0.0
        %3634 = vmatprep.subr.mxu0 0.0
        %3635 = vmatpush1.msra.mxu0 0.0
        %3636 = vmatprep.subr.mxu0 0.0
        %3637 = vmatpush1.msra.mxu0 0.0
        %3638 = vmatprep.mubr.f32.mxu0 %v3492
        %3639 = vmatmul.mubr.f32.gmra.mrb[0].mxu0 %v3400
        %v3640 = vpop.f32.mrb[0].mxu0
        %v3641 = vadd.f32 0.0, %v3640
        %v3642 = vpop.f32.mrb[0].mxu0
        %v3643 = vadd.f32 0.0, %v3642
        %3644 = vmatprep.mubr.f32.mxu0 %v3495
        %3645 = vmatmul.mubr.f32.gmra.mrb[0].mxu0 %v3406
        %v3646 = vpop.f32.mrb[0].mxu0
        %v3647 = vadd.f32 0.0, %v3646
        %v3648 = vpop.f32.mrb[0].mxu0
        %v3649 = vadd.f32 0.0, %v3648
        %3650 = vdwg.mxu0
        %v3651 = vadd.f32 %v3316, %v3564
        %v3652 = vadd.f32 %v3317, %v3566
        %v3653 = vadd.f32 %v3318, %v3641
        %v3654 = vadd.f32 %v3319, %v3643
        %v3655 = vadd.f32 %v3320, %v3570
        %v3656 = vadd.f32 %v3321, %v3572
        %v3657 = vadd.f32 %v3322, %v3647
        %v3658 = vadd.f32 %v3323, %v3649
        %s3659 = scalar_lea.vmem %s6, 64
        %v3660 = vld [vmem:[%s3659] sm:$0xff]
        %v3661 = vld [vmem:[%s3659 + $0x8] sm:$0xff]
        %v3663 = vsel %vm2331, %v3660, 0
        %v3666 = vsel %vm2331, %v3661, 0
        %3668 = vmatprep.subr.mxu0 %v2343
        %3669 = vmatpush1.msra.mxu0 %v2340
        %3670 = vmatprep.subr.mxu0 0.0
        %3671 = vmatpush1.msra.mxu0 0.0
        %3672 = vmatprep.subr.mxu0 0.0
        %3673 = vmatpush1.msra.mxu0 0.0
        %3674 = vmatprep.subr.mxu0 0.0
        %3675 = vmatpush1.msra.mxu0 0.0
        %3676 = vmatprep.subr.mxu0 0.0
        %3677 = vmatpush1.msra.mxu0 0.0
        %3678 = vmatprep.subr.mxu0 0.0
        %3679 = vmatpush1.msra.mxu0 0.0
        %3680 = vmatprep.subr.mxu0 0.0
        %3681 = vmatpush1.msra.mxu0 0.0
        %3682 = vmatprep.subr.mxu0 0.0
        %3683 = vmatpush1.msra.mxu0 0.0
        %3684 = vmatprep.subr.mxu0 0.0
        %3685 = vmatpush1.msra.mxu0 0.0
        %3686 = vmatprep.subr.mxu0 0.0
        %3687 = vmatpush1.msra.mxu0 0.0
        %3688 = vmatprep.subr.mxu0 0.0
        %3689 = vmatpush1.msra.mxu0 0.0
        %3690 = vmatprep.subr.mxu0 0.0
        %3691 = vmatpush1.msra.mxu0 0.0
        %3692 = vmatprep.subr.mxu0 0.0
        %3693 = vmatpush1.msra.mxu0 0.0
        %3694 = vmatprep.subr.mxu0 0.0
        %3695 = vmatpush1.msra.mxu0 0.0
        %3696 = vmatprep.subr.mxu0 0.0
        %3697 = vmatpush1.msra.mxu0 0.0
        %3698 = vmatprep.subr.mxu0 0.0
        %3699 = vmatpush1.msra.mxu0 0.0
        %3700 = vmatprep.subr.mxu0 0.0
        %3701 = vmatpush1.msra.mxu0 0.0
        %3702 = vmatprep.subr.mxu0 0.0
        %3703 = vmatpush1.msra.mxu0 0.0
        %3704 = vmatprep.subr.mxu0 0.0
        %3705 = vmatpush1.msra.mxu0 0.0
        %3706 = vmatprep.subr.mxu0 0.0
        %3707 = vmatpush1.msra.mxu0 0.0
        %3708 = vmatprep.subr.mxu0 0.0
        %3709 = vmatpush1.msra.mxu0 0.0
        %3710 = vmatprep.subr.mxu0 0.0
        %3711 = vmatpush1.msra.mxu0 0.0
        %3712 = vmatprep.subr.mxu0 0.0
        %3713 = vmatpush1.msra.mxu0 0.0
        %3714 = vmatprep.subr.mxu0 0.0
        %3715 = vmatpush1.msra.mxu0 0.0
        %3716 = vmatprep.subr.mxu0 0.0
        %3717 = vmatpush1.msra.mxu0 0.0
        %3718 = vmatprep.subr.mxu0 0.0
        %3719 = vmatpush1.msra.mxu0 0.0
        %3720 = vmatprep.subr.mxu0 0.0
        %3721 = vmatpush1.msra.mxu0 0.0
        %3722 = vmatprep.subr.mxu0 0.0
        %3723 = vmatpush1.msra.mxu0 0.0
        %3724 = vmatprep.subr.mxu0 0.0
        %3725 = vmatpush1.msra.mxu0 0.0
        %3726 = vmatprep.subr.mxu0 0.0
        %3727 = vmatpush1.msra.mxu0 0.0
        %3728 = vmatprep.subr.mxu0 0.0
        %3729 = vmatpush1.msra.mxu0 0.0
        %3730 = vmatprep.subr.mxu0 0.0
        %3731 = vmatpush1.msra.mxu0 0.0
        %3732 = vmatprep.mubr.f32.mxu0 0.0
        %3733 = vmatmul.mubr.f32.gmra.mrb[0].mxu0 %v3663
        %v3734 = vpop.f32.mrb[0].mxu0
        %v3735 = vadd.f32 0.0, %v3734
        %v3736 = vpop.f32.mrb[0].mxu0
        %v3737 = vadd.f32 0.0, %v3736
        %3738 = vmatprep.mubr.f32.mxu0 0.0
        %3739 = vmatmul.mubr.f32.gmra.mrb[0].mxu0 %v3666
        %v3740 = vpop.f32.mrb[0].mxu0
        %v3741 = vadd.f32 0.0, %v3740
        %v3742 = vpop.f32.mrb[0].mxu0
        %v3743 = vadd.f32 0.0, %v3742
        %3744 = vdwg.mxu0
        %s3745 = scalar_lea.vmem [#allocation13], 2560
        %v3746 = vld [vmem:[%s3745] sm:$0xff]
        %v3747 = vld [vmem:[%s3745 + $0x8] sm:$0xff]
        %v3748 = vld [vmem:[%s3745 + $0x10] sm:$0xff]
        %v3749 = vld [vmem:[%s3745 + $0x18] sm:$0xff]
        %v3750 = vld [vmem:[%s3745 + $0x20] sm:$0xff]
        %v3751 = vld [vmem:[%s3745 + $0x28] sm:$0xff]
        %v3752 = vld [vmem:[%s3745 + $0x30] sm:$0xff]
        %v3753 = vld [vmem:[%s3745 + $0x38] sm:$0xff]
        %v3754 = vld [vmem:[%s3745 + $0x40] sm:$0xff]
        %v3755 = vld [vmem:[%s3745 + $0x48] sm:$0xff]
        %v3756 = vld [vmem:[%s3745 + $0x50] sm:$0xff]
        %v3757 = vld [vmem:[%s3745 + $0x58] sm:$0xff]
        %v3758 = vld [vmem:[%s3745 + $0x60] sm:$0xff]
        %v3759 = vld [vmem:[%s3745 + $0x68] sm:$0xff]
        %v3760 = vld [vmem:[%s3745 + $0x70] sm:$0xff]
        %v3761 = vld [vmem:[%s3745 + $0x78] sm:$0xff]
        %v3762 = vld [vmem:[%s3745 + $0x80] sm:$0xff]
        %v3763 = vld [vmem:[%s3745 + $0x88] sm:$0xff]
        %v3764 = vld [vmem:[%s3745 + $0x90] sm:$0xff]
        %v3765 = vld [vmem:[%s3745 + $0x98] sm:$0xff]
        %v3766 = vld [vmem:[%s3745 + $0xa0] sm:$0xff]
        %v3767 = vld [vmem:[%s3745 + $0xa8] sm:$0xff]
        %v3768 = vld [vmem:[%s3745 + $0xb0] sm:$0xff]
        %v3769 = vld [vmem:[%s3745 + $0xb8] sm:$0xff]
        %v3770 = vld [vmem:[%s3745 + $0xc0] sm:$0xff]
        %v3771 = vld [vmem:[%s3745 + $0xc8] sm:$0xff]
        %v3772 = vld [vmem:[%s3745 + $0xd0] sm:$0xff]
        %v3773 = vld [vmem:[%s3745 + $0xd8] sm:$0xff]
        %v3774 = vld [vmem:[%s3745 + $0xe0] sm:$0xff]
        %v3775 = vld [vmem:[%s3745 + $0xe8] sm:$0xff]
        %v3776 = vld [vmem:[%s3745 + $0xf0] sm:$0xff]
        %v3777 = vld [vmem:[%s3745 + $0xf8] sm:$0xff]
        %v3778 = vld [vmem:[%s3745 + $0x100] sm:$0xff]
        %v3779 = vld [vmem:[%s3745 + $0x108] sm:$0xff]
        %v3780 = vld [vmem:[%s3745 + $0x110] sm:$0xff]
        %v3781 = vld [vmem:[%s3745 + $0x118] sm:$0xff]
        %v3782 = vld [vmem:[%s3745 + $0x120] sm:$0xff]
        %v3783 = vld [vmem:[%s3745 + $0x128] sm:$0xff]
        %v3784 = vld [vmem:[%s3745 + $0x130] sm:$0xff]
        %v3785 = vld [vmem:[%s3745 + $0x138] sm:$0xff]
        %v3786 = vld [vmem:[%s3745 + $0x140] sm:$0xff]
        %v3787 = vld [vmem:[%s3745 + $0x148] sm:$0xff]
        %v3788 = vld [vmem:[%s3745 + $0x150] sm:$0xff]
        %v3789 = vld [vmem:[%s3745 + $0x158] sm:$0xff]
        %v3790 = vld [vmem:[%s3745 + $0x160] sm:$0xff]
        %v3791 = vld [vmem:[%s3745 + $0x168] sm:$0xff]
        %v3792 = vld [vmem:[%s3745 + $0x170] sm:$0xff]
        %v3793 = vld [vmem:[%s3745 + $0x178] sm:$0xff]
        %v3794 = vld [vmem:[%s3745 + $0x180] sm:$0xff]
        %v3795 = vld [vmem:[%s3745 + $0x188] sm:$0xff]
        %v3796 = vld [vmem:[%s3745 + $0x190] sm:$0xff]
        %v3797 = vld [vmem:[%s3745 + $0x198] sm:$0xff]
        %v3798 = vld [vmem:[%s3745 + $0x1a0] sm:$0xff]
        %v3799 = vld [vmem:[%s3745 + $0x1a8] sm:$0xff]
        %v3800 = vld [vmem:[%s3745 + $0x1b0] sm:$0xff]
        %v3801 = vld [vmem:[%s3745 + $0x1b8] sm:$0xff]
        %v3802 = vld [vmem:[%s3745 + $0x1c0] sm:$0xff]
        %v3803 = vld [vmem:[%s3745 + $0x1c8] sm:$0xff]
        %v3804 = vld [vmem:[%s3745 + $0x1d0] sm:$0xff]
        %v3805 = vld [vmem:[%s3745 + $0x1d8] sm:$0xff]
        %v3806 = vld [vmem:[%s3745 + $0x1e0] sm:$0xff]
        %v3807 = vld [vmem:[%s3745 + $0x1e8] sm:$0xff]
        %v3808 = vld [vmem:[%s3745 + $0x1f0] sm:$0xff]
        %v3809 = vld [vmem:[%s3745 + $0x1f8] sm:$0xff]
        %v3810 = vld [vmem:[%s3745 + $0x200] sm:$0xff]
        %v3811 = vld [vmem:[%s3745 + $0x208] sm:$0xff]
        %v3812 = vld [vmem:[%s3745 + $0x210] sm:$0xff]
        %v3813 = vld [vmem:[%s3745 + $0x218] sm:$0xff]
        %v3814 = vld [vmem:[%s3745 + $0x220] sm:$0xff]
        %v3815 = vld [vmem:[%s3745 + $0x228] sm:$0xff]
        %v3816 = vld [vmem:[%s3745 + $0x230] sm:$0xff]
        %v3817 = vld [vmem:[%s3745 + $0x238] sm:$0xff]
        %v3818 = vld [vmem:[%s3745 + $0x240] sm:$0xff]
        %v3819 = vld [vmem:[%s3745 + $0x248] sm:$0xff]
        %v3820 = vld [vmem:[%s3745 + $0x250] sm:$0xff]
        %v3821 = vld [vmem:[%s3745 + $0x258] sm:$0xff]
        %v3822 = vld [vmem:[%s3745 + $0x260] sm:$0xff]
        %v3823 = vld [vmem:[%s3745 + $0x268] sm:$0xff]
        %v3824 = vld [vmem:[%s3745 + $0x270] sm:$0xff]
        %v3825 = vld [vmem:[%s3745 + $0x278] sm:$0xff]
        %v3827 = vsel %vm703, %v3737, 0
        %v3830 = vsel %vm703, %v3743, 0
        %3832 = vmatprep.subr.mxu0 %v3747
        %3833 = vmatpush1.msra.mxu0 %v3746
        %3834 = vmatprep.subr.mxu0 %v3751
        %3835 = vmatpush1.msra.mxu0 %v3750
        %3836 = vmatprep.subr.mxu0 %v3755
        %3837 = vmatpush1.msra.mxu0 %v3754
        %3838 = vmatprep.subr.mxu0 %v3759
        %3839 = vmatpush1.msra.mxu0 %v3758
        %3840 = vmatprep.subr.mxu0 %v3763
        %3841 = vmatpush1.msra.mxu0 %v3762
        %3842 = vmatprep.subr.mxu0 %v3767
        %3843 = vmatpush1.msra.mxu0 %v3766
        %3844 = vmatprep.subr.mxu0 %v3771
        %3845 = vmatpush1.msra.mxu0 %v3770
        %3846 = vmatprep.subr.mxu0 %v3775
        %3847 = vmatpush1.msra.mxu0 %v3774
        %3848 = vmatprep.subr.mxu0 %v3779
        %3849 = vmatpush1.msra.mxu0 %v3778
        %3850 = vmatprep.subr.mxu0 %v3783
        %3851 = vmatpush1.msra.mxu0 %v3782
        %3852 = vmatprep.subr.mxu0 %v3787
        %3853 = vmatpush1.msra.mxu0 %v3786
        %3854 = vmatprep.subr.mxu0 %v3791
        %3855 = vmatpush1.msra.mxu0 %v3790
        %3856 = vmatprep.subr.mxu0 %v3795
        %3857 = vmatpush1.msra.mxu0 %v3794
        %3858 = vmatprep.subr.mxu0 %v3799
        %3859 = vmatpush1.msra.mxu0 %v3798
        %3860 = vmatprep.subr.mxu0 %v3803
        %3861 = vmatpush1.msra.mxu0 %v3802
        %3862 = vmatprep.subr.mxu0 %v3807
        %3863 = vmatpush1.msra.mxu0 %v3806
        %3864 = vmatprep.subr.mxu0 %v3811
        %3865 = vmatpush1.msra.mxu0 %v3810
        %3866 = vmatprep.subr.mxu0 %v3815
        %3867 = vmatpush1.msra.mxu0 %v3814
        %3868 = vmatprep.subr.mxu0 %v3819
        %3869 = vmatpush1.msra.mxu0 %v3818
        %3870 = vmatprep.subr.mxu0 %v3823
        %3871 = vmatpush1.msra.mxu0 %v3822
        %3872 = vmatprep.subr.mxu0 0.0
        %3873 = vmatpush1.msra.mxu0 0.0
        %3874 = vmatprep.subr.mxu0 0.0
        %3875 = vmatpush1.msra.mxu0 0.0
        %3876 = vmatprep.subr.mxu0 0.0
        %3877 = vmatpush1.msra.mxu0 0.0
        %3878 = vmatprep.subr.mxu0 0.0
        %3879 = vmatpush1.msra.mxu0 0.0
        %3880 = vmatprep.subr.mxu0 0.0
        %3881 = vmatpush1.msra.mxu0 0.0
        %3882 = vmatprep.subr.mxu0 0.0
        %3883 = vmatpush1.msra.mxu0 0.0
        %3884 = vmatprep.subr.mxu0 0.0
        %3885 = vmatpush1.msra.mxu0 0.0
        %3886 = vmatprep.subr.mxu0 0.0
        %3887 = vmatpush1.msra.mxu0 0.0
        %3888 = vmatprep.subr.mxu0 0.0
        %3889 = vmatpush1.msra.mxu0 0.0
        %3890 = vmatprep.subr.mxu0 0.0
        %3891 = vmatpush1.msra.mxu0 0.0
        %3892 = vmatprep.subr.mxu0 0.0
        %3893 = vmatpush1.msra.mxu0 0.0
        %3894 = vmatprep.subr.mxu0 0.0
        %3895 = vmatpush1.msra.mxu0 0.0
        %3896 = vmatprep.mubr.f32.mxu0 %v3827
        %3897 = vmatmul.mubr.f32.gmra.mrb[0].mxu0 %v3735
        %v3898 = vpop.f32.mrb[0].mxu0
        %v3899 = vadd.f32 0.0, %v3898
        %v3900 = vpop.f32.mrb[0].mxu0
        %v3901 = vadd.f32 0.0, %v3900
        %3902 = vmatprep.mubr.f32.mxu0 %v3830
        %3903 = vmatmul.mubr.f32.gmra.mrb[0].mxu0 %v3741
        %v3904 = vpop.f32.mrb[0].mxu0
        %v3905 = vadd.f32 0.0, %v3904
        %v3906 = vpop.f32.mrb[0].mxu0
        %v3907 = vadd.f32 0.0, %v3906
        %3908 = vdwg.mxu0
        %3909 = vmatprep.subr.mxu0 %v3749
        %3910 = vmatpush1.msra.mxu0 %v3748
        %3911 = vmatprep.subr.mxu0 %v3753
        %3912 = vmatpush1.msra.mxu0 %v3752
        %3913 = vmatprep.subr.mxu0 %v3757
        %3914 = vmatpush1.msra.mxu0 %v3756
        %3915 = vmatprep.subr.mxu0 %v3761
        %3916 = vmatpush1.msra.mxu0 %v3760
        %3917 = vmatprep.subr.mxu0 %v3765
        %3918 = vmatpush1.msra.mxu0 %v3764
        %3919 = vmatprep.subr.mxu0 %v3769
        %3920 = vmatpush1.msra.mxu0 %v3768
        %3921 = vmatprep.subr.mxu0 %v3773
        %3922 = vmatpush1.msra.mxu0 %v3772
        %3923 = vmatprep.subr.mxu0 %v3777
        %3924 = vmatpush1.msra.mxu0 %v3776
        %3925 = vmatprep.subr.mxu0 %v3781
        %3926 = vmatpush1.msra.mxu0 %v3780
        %3927 = vmatprep.subr.mxu0 %v3785
        %3928 = vmatpush1.msra.mxu0 %v3784
        %3929 = vmatprep.subr.mxu0 %v3789
        %3930 = vmatpush1.msra.mxu0 %v3788
        %3931 = vmatprep.subr.mxu0 %v3793
        %3932 = vmatpush1.msra.mxu0 %v3792
        %3933 = vmatprep.subr.mxu0 %v3797
        %3934 = vmatpush1.msra.mxu0 %v3796
        %3935 = vmatprep.subr.mxu0 %v3801
        %3936 = vmatpush1.msra.mxu0 %v3800
        %3937 = vmatprep.subr.mxu0 %v3805
        %3938 = vmatpush1.msra.mxu0 %v3804
        %3939 = vmatprep.subr.mxu0 %v3809
        %3940 = vmatpush1.msra.mxu0 %v3808
        %3941 = vmatprep.subr.mxu0 %v3813
        %3942 = vmatpush1.msra.mxu0 %v3812
        %3943 = vmatprep.subr.mxu0 %v3817
        %3944 = vmatpush1.msra.mxu0 %v3816
        %3945 = vmatprep.subr.mxu0 %v3821
        %3946 = vmatpush1.msra.mxu0 %v3820
        %3947 = vmatprep.subr.mxu0 %v3825
        %3948 = vmatpush1.msra.mxu0 %v3824
        %3949 = vmatprep.subr.mxu0 0.0
        %3950 = vmatpush1.msra.mxu0 0.0
        %3951 = vmatprep.subr.mxu0 0.0
        %3952 = vmatpush1.msra.mxu0 0.0
        %3953 = vmatprep.subr.mxu0 0.0
        %3954 = vmatpush1.msra.mxu0 0.0
        %3955 = vmatprep.subr.mxu0 0.0
        %3956 = vmatpush1.msra.mxu0 0.0
        %3957 = vmatprep.subr.mxu0 0.0
        %3958 = vmatpush1.msra.mxu0 0.0
        %3959 = vmatprep.subr.mxu0 0.0
        %3960 = vmatpush1.msra.mxu0 0.0
        %3961 = vmatprep.subr.mxu0 0.0
        %3962 = vmatpush1.msra.mxu0 0.0
        %3963 = vmatprep.subr.mxu0 0.0
        %3964 = vmatpush1.msra.mxu0 0.0
        %3965 = vmatprep.subr.mxu0 0.0
        %3966 = vmatpush1.msra.mxu0 0.0
        %3967 = vmatprep.subr.mxu0 0.0
        %3968 = vmatpush1.msra.mxu0 0.0
        %3969 = vmatprep.subr.mxu0 0.0
        %3970 = vmatpush1.msra.mxu0 0.0
        %3971 = vmatprep.subr.mxu0 0.0
        %3972 = vmatpush1.msra.mxu0 0.0
        %3973 = vmatprep.mubr.f32.mxu0 %v3827
        %3974 = vmatmul.mubr.f32.gmra.mrb[0].mxu0 %v3735
        %v3975 = vpop.f32.mrb[0].mxu0
        %v3976 = vadd.f32 0.0, %v3975
        %v3977 = vpop.f32.mrb[0].mxu0
        %v3978 = vadd.f32 0.0, %v3977
        %3979 = vmatprep.mubr.f32.mxu0 %v3830
        %3980 = vmatmul.mubr.f32.gmra.mrb[0].mxu0 %v3741
        %v3981 = vpop.f32.mrb[0].mxu0
        %v3982 = vadd.f32 0.0, %v3981
        %v3983 = vpop.f32.mrb[0].mxu0
        %v3984 = vadd.f32 0.0, %v3983
        %3985 = vdwg.mxu0
        %v3986 = vadd.f32 %v3651, %v3899
        %v3987 = vadd.f32 %v3652, %v3901
        %v3988 = vadd.f32 %v3653, %v3976
        %v3989 = vadd.f32 %v3654, %v3978
        %v3990 = vadd.f32 %v3655, %v3905
        %v3991 = vadd.f32 %v3656, %v3907
        %v3992 = vadd.f32 %v3657, %v3982
        %v3993 = vadd.f32 %v3658, %v3984
        %v3994 = vld [vmem:[#allocation14] sm:$0x3]
        %v3996 = vlaneseq
        %v3997 = vshrl.u32 %v3996, 7
        %v3998 = vsub.s32 0, %v3997
        %v3999 = vrot.slane %v3994, %v3998
        %v4000 = vlaneseq
        %v4001 = vshrl.u32 %v4000, 7
        %v4002 = vsub.s32 1, %v4001
        %v4003 = vrot.slane %v3994, %v4002
        %v4006 = vadd.f32 %v3986, %v3999
        %v4007 = vadd.f32 %v3987, %v4003
        %v4008 = vadd.f32 %v3990, %v3999
        %v4009 = vadd.f32 %v3991, %v4003
        %v4010 = vmax.f32 %v4006, 0.0
        %v4011 = vmax.f32 %v4007, 0.0
        %v4012 = vmax.f32 %v4008, 0.0
        %v4013 = vmax.f32 %v4009, 0.0
        %s4014 = scalar_lea.vmem [#allocation16], 16
        %v4015 = vld [vmem:[%s4014] sm:$0xff]
        %v4016 = vld [vmem:[%s4014 + $0x8] sm:$0xff]
        %vm4017 = vcmask 130048
        %v4019 = vsel %vm4017, %v4015, 0
        %v4022 = vsel %vm4017, %v4016, 0
        %4024 = vmatprep.subr.mxu0 %v2243
        %4025 = vmatpush1.msra.mxu0 %v2242
        %4026 = vmatprep.subr.mxu0 %v2245
        %4027 = vmatpush1.msra.mxu0 %v2244
        %4028 = vmatprep.subr.mxu0 0.0
        %4029 = vmatpush1.msra.mxu0 0.0
        %4030 = vmatprep.subr.mxu0 0.0
        %4031 = vmatpush1.msra.mxu0 0.0
        %4032 = vmatprep.subr.mxu0 0.0
        %4033 = vmatpush1.msra.mxu0 0.0
        %4034 = vmatprep.subr.mxu0 0.0
        %4035 = vmatpush1.msra.mxu0 0.0
        %4036 = vmatprep.subr.mxu0 0.0
        %4037 = vmatpush1.msra.mxu0 0.0
        %4038 = vmatprep.subr.mxu0 0.0
        %4039 = vmatpush1.msra.mxu0 0.0
        %4040 = vmatprep.subr.mxu0 0.0
        %4041 = vmatpush1.msra.mxu0 0.0
        %4042 = vmatprep.subr.mxu0 0.0
        %4043 = vmatpush1.msra.mxu0 0.0
        %4044 = vmatprep.subr.mxu0 0.0
        %4045 = vmatpush1.msra.mxu0 0.0
        %4046 = vmatprep.subr.mxu0 0.0
        %4047 = vmatpush1.msra.mxu0 0.0
        %4048 = vmatprep.subr.mxu0 0.0
        %4049 = vmatpush1.msra.mxu0 0.0
        %4050 = vmatprep.subr.mxu0 0.0
        %4051 = vmatpush1.msra.mxu0 0.0
        %4052 = vmatprep.subr.mxu0 0.0
        %4053 = vmatpush1.msra.mxu0 0.0
        %4054 = vmatprep.subr.mxu0 0.0
        %4055 = vmatpush1.msra.mxu0 0.0
        %4056 = vmatprep.subr.mxu0 0.0
        %4057 = vmatpush1.msra.mxu0 0.0
        %4058 = vmatprep.subr.mxu0 0.0
        %4059 = vmatpush1.msra.mxu0 0.0
        %4060 = vmatprep.subr.mxu0 0.0
        %4061 = vmatpush1.msra.mxu0 0.0
        %4062 = vmatprep.subr.mxu0 0.0
        %4063 = vmatpush1.msra.mxu0 0.0
        %4064 = vmatprep.subr.mxu0 0.0
        %4065 = vmatpush1.msra.mxu0 0.0
        %4066 = vmatprep.subr.mxu0 0.0
        %4067 = vmatpush1.msra.mxu0 0.0
        %4068 = vmatprep.subr.mxu0 0.0
        %4069 = vmatpush1.msra.mxu0 0.0
        %4070 = vmatprep.subr.mxu0 0.0
        %4071 = vmatpush1.msra.mxu0 0.0
        %4072 = vmatprep.subr.mxu0 0.0
        %4073 = vmatpush1.msra.mxu0 0.0
        %4074 = vmatprep.subr.mxu0 0.0
        %4075 = vmatpush1.msra.mxu0 0.0
        %4076 = vmatprep.subr.mxu0 0.0
        %4077 = vmatpush1.msra.mxu0 0.0
        %4078 = vmatprep.subr.mxu0 0.0
        %4079 = vmatpush1.msra.mxu0 0.0
        %4080 = vmatprep.subr.mxu0 0.0
        %4081 = vmatpush1.msra.mxu0 0.0
        %4082 = vmatprep.subr.mxu0 0.0
        %4083 = vmatpush1.msra.mxu0 0.0
        %4084 = vmatprep.subr.mxu0 0.0
        %4085 = vmatpush1.msra.mxu0 0.0
        %4086 = vmatprep.subr.mxu0 0.0
        %4087 = vmatpush1.msra.mxu0 0.0
        %4088 = vmatprep.mubr.f32.mxu0 0.0
        %4089 = vmatmul.mubr.f32.gmra.mrb[0].mxu0 %v4019
        %v4090 = vpop.f32.mrb[0].mxu0
        %v4091 = vadd.f32 0.0, %v4090
        %v4092 = vpop.f32.mrb[0].mxu0
        %v4093 = vadd.f32 0.0, %v4092
        %4094 = vmatprep.mubr.f32.mxu0 0.0
        %4095 = vmatmul.mubr.f32.gmra.mrb[0].mxu0 %v4022
        %v4096 = vpop.f32.mrb[0].mxu0
        %v4097 = vadd.f32 0.0, %v4096
        %v4098 = vpop.f32.mrb[0].mxu0
        %v4099 = vadd.f32 0.0, %v4098
        %4100 = vdwg.mxu0
        %4101 = vmatprep.subr.mxu0 %v4011
        %4102 = vmatpush1.msra.mxu0 %v4010
        %4103 = vmatprep.subr.mxu0 %v4013
        %4104 = vmatpush1.msra.mxu0 %v4012
        %4105 = vmatprep.subr.mxu0 0.0
        %4106 = vmatpush1.msra.mxu0 0.0
        %4107 = vmatprep.subr.mxu0 0.0
        %4108 = vmatpush1.msra.mxu0 0.0
        %4109 = vmatprep.subr.mxu0 0.0
        %4110 = vmatpush1.msra.mxu0 0.0
        %4111 = vmatprep.subr.mxu0 0.0
        %4112 = vmatpush1.msra.mxu0 0.0
        %4113 = vmatprep.subr.mxu0 0.0
        %4114 = vmatpush1.msra.mxu0 0.0
        %4115 = vmatprep.subr.mxu0 0.0
        %4116 = vmatpush1.msra.mxu0 0.0
        %4117 = vmatprep.subr.mxu0 0.0
        %4118 = vmatpush1.msra.mxu0 0.0
        %4119 = vmatprep.subr.mxu0 0.0
        %4120 = vmatpush1.msra.mxu0 0.0
        %4121 = vmatprep.subr.mxu0 0.0
        %4122 = vmatpush1.msra.mxu0 0.0
        %4123 = vmatprep.subr.mxu0 0.0
        %4124 = vmatpush1.msra.mxu0 0.0
        %4125 = vmatprep.subr.mxu0 0.0
        %4126 = vmatpush1.msra.mxu0 0.0
        %4127 = vmatprep.subr.mxu0 0.0
        %4128 = vmatpush1.msra.mxu0 0.0
        %4129 = vmatprep.subr.mxu0 0.0
        %4130 = vmatpush1.msra.mxu0 0.0
        %4131 = vmatprep.subr.mxu0 0.0
        %4132 = vmatpush1.msra.mxu0 0.0
        %4133 = vmatprep.subr.mxu0 0.0
        %4134 = vmatpush1.msra.mxu0 0.0
        %4135 = vmatprep.subr.mxu0 0.0
        %4136 = vmatpush1.msra.mxu0 0.0
        %4137 = vmatprep.subr.mxu0 0.0
        %4138 = vmatpush1.msra.mxu0 0.0
        %4139 = vmatprep.subr.mxu0 0.0
        %4140 = vmatpush1.msra.mxu0 0.0
        %4141 = vmatprep.subr.mxu0 0.0
        %4142 = vmatpush1.msra.mxu0 0.0
        %4143 = vmatprep.subr.mxu0 0.0
        %4144 = vmatpush1.msra.mxu0 0.0
        %4145 = vmatprep.subr.mxu0 0.0
        %4146 = vmatpush1.msra.mxu0 0.0
        %4147 = vmatprep.subr.mxu0 0.0
        %4148 = vmatpush1.msra.mxu0 0.0
        %4149 = vmatprep.subr.mxu0 0.0
        %4150 = vmatpush1.msra.mxu0 0.0
        %4151 = vmatprep.subr.mxu0 0.0
        %4152 = vmatpush1.msra.mxu0 0.0
        %4153 = vmatprep.subr.mxu0 0.0
        %4154 = vmatpush1.msra.mxu0 0.0
        %4155 = vmatprep.subr.mxu0 0.0
        %4156 = vmatpush1.msra.mxu0 0.0
        %4157 = vmatprep.subr.mxu0 0.0
        %4158 = vmatpush1.msra.mxu0 0.0
        %4159 = vmatprep.subr.mxu0 0.0
        %4160 = vmatpush1.msra.mxu0 0.0
        %4161 = vmatprep.subr.mxu0 0.0
        %4162 = vmatpush1.msra.mxu0 0.0
        %4163 = vmatprep.subr.mxu0 0.0
        %4164 = vmatpush1.msra.mxu0 0.0
        %4165 = vmatprep.mubr.f32.mxu0 0.0
        %4166 = vmatmul.mubr.f32.gmra.mrb[0].mxu0 %v4019
        %v4167 = vpop.f32.mrb[0].mxu0
        %v4168 = vadd.f32 0.0, %v4167
        %v4169 = vpop.f32.mrb[0].mxu0
        %v4170 = vadd.f32 0.0, %v4169
        %4171 = vmatprep.mubr.f32.mxu0 0.0
        %4172 = vmatmul.mubr.f32.gmra.mrb[0].mxu0 %v4022
        %v4173 = vpop.f32.mrb[0].mxu0
        %v4174 = vadd.f32 0.0, %v4173
        %v4175 = vpop.f32.mrb[0].mxu0
        %v4176 = vadd.f32 0.0, %v4175
        %4177 = vdwg.mxu0
        %v4178 = vld [vmem:[#allocation17] sm:$0xff]
        %v4179 = vld [vmem:[#allocation17 + $0x8] sm:$0xff]
        %v4180 = vld [vmem:[#allocation17 + $0x10] sm:$0xff]
        %v4181 = vld [vmem:[#allocation17 + $0x18] sm:$0xff]
        %v4182 = vld [vmem:[#allocation17 + $0x20] sm:$0xff]
        %v4183 = vld [vmem:[#allocation17 + $0x28] sm:$0xff]
        %v4184 = vld [vmem:[#allocation17 + $0x30] sm:$0xff]
        %v4185 = vld [vmem:[#allocation17 + $0x38] sm:$0xff]
        %v4186 = vld [vmem:[#allocation17 + $0x40] sm:$0xff]
        %v4187 = vld [vmem:[#allocation17 + $0x48] sm:$0xff]
        %v4188 = vld [vmem:[#allocation17 + $0x50] sm:$0xff]
        %v4189 = vld [vmem:[#allocation17 + $0x58] sm:$0xff]
        %v4190 = vld [vmem:[#allocation17 + $0x60] sm:$0xff]
        %v4191 = vld [vmem:[#allocation17 + $0x68] sm:$0xff]
        %v4192 = vld [vmem:[#allocation17 + $0x70] sm:$0xff]
        %v4193 = vld [vmem:[#allocation17 + $0x78] sm:$0xff]
        %v4194 = vld [vmem:[#allocation17 + $0x80] sm:$0xff]
        %v4195 = vld [vmem:[#allocation17 + $0x88] sm:$0xff]
        %v4196 = vld [vmem:[#allocation17 + $0x90] sm:$0xff]
        %v4197 = vld [vmem:[#allocation17 + $0x98] sm:$0xff]
        %v4198 = vld [vmem:[#allocation17 + $0xa0] sm:$0xff]
        %v4199 = vld [vmem:[#allocation17 + $0xa8] sm:$0xff]
        %v4200 = vld [vmem:[#allocation17 + $0xb0] sm:$0xff]
        %v4201 = vld [vmem:[#allocation17 + $0xb8] sm:$0xff]
        %v4202 = vld [vmem:[#allocation17 + $0xc0] sm:$0xff]
        %v4203 = vld [vmem:[#allocation17 + $0xc8] sm:$0xff]
        %v4204 = vld [vmem:[#allocation17 + $0xd0] sm:$0xff]
        %v4205 = vld [vmem:[#allocation17 + $0xd8] sm:$0xff]
        %v4206 = vld [vmem:[#allocation17 + $0xe0] sm:$0xff]
        %v4207 = vld [vmem:[#allocation17 + $0xe8] sm:$0xff]
        %v4208 = vld [vmem:[#allocation17 + $0xf0] sm:$0xff]
        %v4209 = vld [vmem:[#allocation17 + $0xf8] sm:$0xff]
        %v4210 = vld [vmem:[#allocation17 + $0x100] sm:$0xff]
        %v4211 = vld [vmem:[#allocation17 + $0x108] sm:$0xff]
        %v4212 = vld [vmem:[#allocation17 + $0x110] sm:$0xff]
        %v4213 = vld [vmem:[#allocation17 + $0x118] sm:$0xff]
        %v4214 = vld [vmem:[#allocation17 + $0x120] sm:$0xff]
        %v4215 = vld [vmem:[#allocation17 + $0x128] sm:$0xff]
        %v4216 = vld [vmem:[#allocation17 + $0x130] sm:$0xff]
        %v4217 = vld [vmem:[#allocation17 + $0x138] sm:$0xff]
        %v4218 = vld [vmem:[#allocation17 + $0x140] sm:$0xff]
        %v4219 = vld [vmem:[#allocation17 + $0x148] sm:$0xff]
        %v4220 = vld [vmem:[#allocation17 + $0x150] sm:$0xff]
        %v4221 = vld [vmem:[#allocation17 + $0x158] sm:$0xff]
        %v4222 = vld [vmem:[#allocation17 + $0x160] sm:$0xff]
        %v4223 = vld [vmem:[#allocation17 + $0x168] sm:$0xff]
        %v4224 = vld [vmem:[#allocation17 + $0x170] sm:$0xff]
        %v4225 = vld [vmem:[#allocation17 + $0x178] sm:$0xff]
        %v4226 = vld [vmem:[#allocation17 + $0x180] sm:$0xff]
        %v4227 = vld [vmem:[#allocation17 + $0x188] sm:$0xff]
        %v4228 = vld [vmem:[#allocation17 + $0x190] sm:$0xff]
        %v4229 = vld [vmem:[#allocation17 + $0x198] sm:$0xff]
        %v4230 = vld [vmem:[#allocation17 + $0x1a0] sm:$0xff]
        %v4231 = vld [vmem:[#allocation17 + $0x1a8] sm:$0xff]
        %v4232 = vld [vmem:[#allocation17 + $0x1b0] sm:$0xff]
        %v4233 = vld [vmem:[#allocation17 + $0x1b8] sm:$0xff]
        %v4234 = vld [vmem:[#allocation17 + $0x1c0] sm:$0xff]
        %v4235 = vld [vmem:[#allocation17 + $0x1c8] sm:$0xff]
        %v4236 = vld [vmem:[#allocation17 + $0x1d0] sm:$0xff]
        %v4237 = vld [vmem:[#allocation17 + $0x1d8] sm:$0xff]
        %v4238 = vld [vmem:[#allocation17 + $0x1e0] sm:$0xff]
        %v4239 = vld [vmem:[#allocation17 + $0x1e8] sm:$0xff]
        %v4240 = vld [vmem:[#allocation17 + $0x1f0] sm:$0xff]
        %v4241 = vld [vmem:[#allocation17 + $0x1f8] sm:$0xff]
        %v4242 = vld [vmem:[#allocation17 + $0x200] sm:$0xff]
        %v4243 = vld [vmem:[#allocation17 + $0x208] sm:$0xff]
        %v4244 = vld [vmem:[#allocation17 + $0x210] sm:$0xff]
        %v4245 = vld [vmem:[#allocation17 + $0x218] sm:$0xff]
        %v4246 = vld [vmem:[#allocation17 + $0x220] sm:$0xff]
        %v4247 = vld [vmem:[#allocation17 + $0x228] sm:$0xff]
        %v4248 = vld [vmem:[#allocation17 + $0x230] sm:$0xff]
        %v4249 = vld [vmem:[#allocation17 + $0x238] sm:$0xff]
        %v4250 = vld [vmem:[#allocation17 + $0x240] sm:$0xff]
        %v4251 = vld [vmem:[#allocation17 + $0x248] sm:$0xff]
        %v4252 = vld [vmem:[#allocation17 + $0x250] sm:$0xff]
        %v4253 = vld [vmem:[#allocation17 + $0x258] sm:$0xff]
        %v4254 = vld [vmem:[#allocation17 + $0x260] sm:$0xff]
        %v4255 = vld [vmem:[#allocation17 + $0x268] sm:$0xff]
        %v4256 = vld [vmem:[#allocation17 + $0x270] sm:$0xff]
        %v4257 = vld [vmem:[#allocation17 + $0x278] sm:$0xff]
        %v4258 = vld [vmem:[#allocation17 + $0x280] sm:$0xff]
        %v4259 = vld [vmem:[#allocation17 + $0x288] sm:$0xff]
        %v4260 = vld [vmem:[#allocation17 + $0x290] sm:$0xff]
        %v4261 = vld [vmem:[#allocation17 + $0x298] sm:$0xff]
        %v4262 = vld [vmem:[#allocation17 + $0x2a0] sm:$0xff]
        %v4263 = vld [vmem:[#allocation17 + $0x2a8] sm:$0xff]
        %v4264 = vld [vmem:[#allocation17 + $0x2b0] sm:$0xff]
        %v4265 = vld [vmem:[#allocation17 + $0x2b8] sm:$0xff]
        %v4266 = vld [vmem:[#allocation17 + $0x2c0] sm:$0xff]
        %v4267 = vld [vmem:[#allocation17 + $0x2c8] sm:$0xff]
        %v4268 = vld [vmem:[#allocation17 + $0x2d0] sm:$0xff]
        %v4269 = vld [vmem:[#allocation17 + $0x2d8] sm:$0xff]
        %v4270 = vld [vmem:[#allocation17 + $0x2e0] sm:$0xff]
        %v4271 = vld [vmem:[#allocation17 + $0x2e8] sm:$0xff]
        %v4272 = vld [vmem:[#allocation17 + $0x2f0] sm:$0xff]
        %v4273 = vld [vmem:[#allocation17 + $0x2f8] sm:$0xff]
        %v4274 = vld [vmem:[#allocation17 + $0x300] sm:$0xff]
        %v4275 = vld [vmem:[#allocation17 + $0x308] sm:$0xff]
        %v4276 = vld [vmem:[#allocation17 + $0x310] sm:$0xff]
        %v4277 = vld [vmem:[#allocation17 + $0x318] sm:$0xff]
        %v4278 = vld [vmem:[#allocation17 + $0x320] sm:$0xff]
        %v4279 = vld [vmem:[#allocation17 + $0x328] sm:$0xff]
        %v4280 = vld [vmem:[#allocation17 + $0x330] sm:$0xff]
        %v4281 = vld [vmem:[#allocation17 + $0x338] sm:$0xff]
        %v4282 = vld [vmem:[#allocation17 + $0x340] sm:$0xff]
        %v4283 = vld [vmem:[#allocation17 + $0x348] sm:$0xff]
        %v4284 = vld [vmem:[#allocation17 + $0x350] sm:$0xff]
        %v4285 = vld [vmem:[#allocation17 + $0x358] sm:$0xff]
        %v4286 = vld [vmem:[#allocation17 + $0x360] sm:$0xff]
        %v4287 = vld [vmem:[#allocation17 + $0x368] sm:$0xff]
        %v4288 = vld [vmem:[#allocation17 + $0x370] sm:$0xff]
        %v4289 = vld [vmem:[#allocation17 + $0x378] sm:$0xff]
        %v4290 = vld [vmem:[#allocation17 + $0x380] sm:$0xff]
        %v4291 = vld [vmem:[#allocation17 + $0x388] sm:$0xff]
        %v4292 = vld [vmem:[#allocation17 + $0x390] sm:$0xff]
        %v4293 = vld [vmem:[#allocation17 + $0x398] sm:$0xff]
        %v4294 = vld [vmem:[#allocation17 + $0x3a0] sm:$0xff]
        %v4295 = vld [vmem:[#allocation17 + $0x3a8] sm:$0xff]
        %v4296 = vld [vmem:[#allocation17 + $0x3b0] sm:$0xff]
        %v4297 = vld [vmem:[#allocation17 + $0x3b8] sm:$0xff]
        %v4298 = vld [vmem:[#allocation17 + $0x3c0] sm:$0xff]
        %v4299 = vld [vmem:[#allocation17 + $0x3c8] sm:$0xff]
        %v4300 = vld [vmem:[#allocation17 + $0x3d0] sm:$0xff]
        %v4301 = vld [vmem:[#allocation17 + $0x3d8] sm:$0xff]
        %v4302 = vld [vmem:[#allocation17 + $0x3e0] sm:$0xff]
        %v4303 = vld [vmem:[#allocation17 + $0x3e8] sm:$0xff]
        %v4304 = vld [vmem:[#allocation17 + $0x3f0] sm:$0xff]
        %v4305 = vld [vmem:[#allocation17 + $0x3f8] sm:$0xff]
        %v4306 = vld [vmem:[#allocation17 + $0x400] sm:$0xff]
        %v4307 = vld [vmem:[#allocation17 + $0x408] sm:$0xff]
        %v4308 = vld [vmem:[#allocation17 + $0x410] sm:$0xff]
        %v4309 = vld [vmem:[#allocation17 + $0x418] sm:$0xff]
        %v4310 = vld [vmem:[#allocation17 + $0x420] sm:$0xff]
        %v4311 = vld [vmem:[#allocation17 + $0x428] sm:$0xff]
        %v4312 = vld [vmem:[#allocation17 + $0x430] sm:$0xff]
        %v4313 = vld [vmem:[#allocation17 + $0x438] sm:$0xff]
        %v4314 = vld [vmem:[#allocation17 + $0x440] sm:$0xff]
        %v4315 = vld [vmem:[#allocation17 + $0x448] sm:$0xff]
        %v4316 = vld [vmem:[#allocation17 + $0x450] sm:$0xff]
        %v4317 = vld [vmem:[#allocation17 + $0x458] sm:$0xff]
        %v4318 = vld [vmem:[#allocation17 + $0x460] sm:$0xff]
        %v4319 = vld [vmem:[#allocation17 + $0x468] sm:$0xff]
        %v4320 = vld [vmem:[#allocation17 + $0x470] sm:$0xff]
        %v4321 = vld [vmem:[#allocation17 + $0x478] sm:$0xff]
        %v4322 = vld [vmem:[#allocation17 + $0x480] sm:$0xff]
        %v4323 = vld [vmem:[#allocation17 + $0x488] sm:$0xff]
        %v4324 = vld [vmem:[#allocation17 + $0x490] sm:$0xff]
        %v4325 = vld [vmem:[#allocation17 + $0x498] sm:$0xff]
        %v4326 = vld [vmem:[#allocation17 + $0x4a0] sm:$0xff]
        %v4327 = vld [vmem:[#allocation17 + $0x4a8] sm:$0xff]
        %v4328 = vld [vmem:[#allocation17 + $0x4b0] sm:$0xff]
        %v4329 = vld [vmem:[#allocation17 + $0x4b8] sm:$0xff]
        %v4330 = vld [vmem:[#allocation17 + $0x4c0] sm:$0xff]
        %v4331 = vld [vmem:[#allocation17 + $0x4c8] sm:$0xff]
        %v4332 = vld [vmem:[#allocation17 + $0x4d0] sm:$0xff]
        %v4333 = vld [vmem:[#allocation17 + $0x4d8] sm:$0xff]
        %v4334 = vld [vmem:[#allocation17 + $0x4e0] sm:$0xff]
        %v4335 = vld [vmem:[#allocation17 + $0x4e8] sm:$0xff]
        %v4336 = vld [vmem:[#allocation17 + $0x4f0] sm:$0xff]
        %v4337 = vld [vmem:[#allocation17 + $0x4f8] sm:$0xff]
        %v4338 = vld [vmem:[#allocation17 + $0x500] sm:$0xff]
        %v4339 = vld [vmem:[#allocation17 + $0x508] sm:$0xff]
        %v4340 = vld [vmem:[#allocation17 + $0x510] sm:$0xff]
        %v4341 = vld [vmem:[#allocation17 + $0x518] sm:$0xff]
        %v4342 = vld [vmem:[#allocation17 + $0x520] sm:$0xff]
        %v4343 = vld [vmem:[#allocation17 + $0x528] sm:$0xff]
        %v4344 = vld [vmem:[#allocation17 + $0x530] sm:$0xff]
        %v4345 = vld [vmem:[#allocation17 + $0x538] sm:$0xff]
        %v4346 = vld [vmem:[#allocation17 + $0x540] sm:$0xff]
        %v4347 = vld [vmem:[#allocation17 + $0x548] sm:$0xff]
        %v4348 = vld [vmem:[#allocation17 + $0x550] sm:$0xff]
        %v4349 = vld [vmem:[#allocation17 + $0x558] sm:$0xff]
        %v4350 = vld [vmem:[#allocation17 + $0x560] sm:$0xff]
        %v4351 = vld [vmem:[#allocation17 + $0x568] sm:$0xff]
        %v4352 = vld [vmem:[#allocation17 + $0x570] sm:$0xff]
        %v4353 = vld [vmem:[#allocation17 + $0x578] sm:$0xff]
        %v4354 = vld [vmem:[#allocation17 + $0x580] sm:$0xff]
        %v4355 = vld [vmem:[#allocation17 + $0x588] sm:$0xff]
        %v4356 = vld [vmem:[#allocation17 + $0x590] sm:$0xff]
        %v4357 = vld [vmem:[#allocation17 + $0x598] sm:$0xff]
        %v4358 = vld [vmem:[#allocation17 + $0x5a0] sm:$0xff]
        %v4359 = vld [vmem:[#allocation17 + $0x5a8] sm:$0xff]
        %v4360 = vld [vmem:[#allocation17 + $0x5b0] sm:$0xff]
        %v4361 = vld [vmem:[#allocation17 + $0x5b8] sm:$0xff]
        %v4362 = vld [vmem:[#allocation17 + $0x5c0] sm:$0xff]
        %v4363 = vld [vmem:[#allocation17 + $0x5c8] sm:$0xff]
        %v4364 = vld [vmem:[#allocation17 + $0x5d0] sm:$0xff]
        %v4365 = vld [vmem:[#allocation17 + $0x5d8] sm:$0xff]
        %v4366 = vld [vmem:[#allocation17 + $0x5e0] sm:$0xff]
        %v4367 = vld [vmem:[#allocation17 + $0x5e8] sm:$0xff]
        %v4368 = vld [vmem:[#allocation17 + $0x5f0] sm:$0xff]
        %v4369 = vld [vmem:[#allocation17 + $0x5f8] sm:$0xff]
        %v4370 = vld [vmem:[#allocation17 + $0x600] sm:$0xff]
        %v4371 = vld [vmem:[#allocation17 + $0x608] sm:$0xff]
        %v4372 = vld [vmem:[#allocation17 + $0x610] sm:$0xff]
        %v4373 = vld [vmem:[#allocation17 + $0x618] sm:$0xff]
        %v4374 = vld [vmem:[#allocation17 + $0x620] sm:$0xff]
        %v4375 = vld [vmem:[#allocation17 + $0x628] sm:$0xff]
        %v4376 = vld [vmem:[#allocation17 + $0x630] sm:$0xff]
        %v4377 = vld [vmem:[#allocation17 + $0x638] sm:$0xff]
        %v4378 = vld [vmem:[#allocation17 + $0x640] sm:$0xff]
        %v4379 = vld [vmem:[#allocation17 + $0x648] sm:$0xff]
        %v4380 = vld [vmem:[#allocation17 + $0x650] sm:$0xff]
        %v4381 = vld [vmem:[#allocation17 + $0x658] sm:$0xff]
        %v4382 = vld [vmem:[#allocation17 + $0x660] sm:$0xff]
        %v4383 = vld [vmem:[#allocation17 + $0x668] sm:$0xff]
        %v4384 = vld [vmem:[#allocation17 + $0x670] sm:$0xff]
        %v4385 = vld [vmem:[#allocation17 + $0x678] sm:$0xff]
        %v4386 = vld [vmem:[#allocation17 + $0x680] sm:$0xff]
        %v4387 = vld [vmem:[#allocation17 + $0x688] sm:$0xff]
        %v4388 = vld [vmem:[#allocation17 + $0x690] sm:$0xff]
        %v4389 = vld [vmem:[#allocation17 + $0x698] sm:$0xff]
        %v4390 = vld [vmem:[#allocation17 + $0x6a0] sm:$0xff]
        %v4391 = vld [vmem:[#allocation17 + $0x6a8] sm:$0xff]
        %v4392 = vld [vmem:[#allocation17 + $0x6b0] sm:$0xff]
        %v4393 = vld [vmem:[#allocation17 + $0x6b8] sm:$0xff]
        %v4394 = vld [vmem:[#allocation17 + $0x6c0] sm:$0xff]
        %v4395 = vld [vmem:[#allocation17 + $0x6c8] sm:$0xff]
        %v4396 = vld [vmem:[#allocation17 + $0x6d0] sm:$0xff]
        %v4397 = vld [vmem:[#allocation17 + $0x6d8] sm:$0xff]
        %v4398 = vld [vmem:[#allocation17 + $0x6e0] sm:$0xff]
        %v4399 = vld [vmem:[#allocation17 + $0x6e8] sm:$0xff]
        %v4400 = vld [vmem:[#allocation17 + $0x6f0] sm:$0xff]
        %v4401 = vld [vmem:[#allocation17 + $0x6f8] sm:$0xff]
        %v4402 = vld [vmem:[#allocation17 + $0x700] sm:$0xff]
        %v4403 = vld [vmem:[#allocation17 + $0x708] sm:$0xff]
        %v4404 = vld [vmem:[#allocation17 + $0x710] sm:$0xff]
        %v4405 = vld [vmem:[#allocation17 + $0x718] sm:$0xff]
        %v4406 = vld [vmem:[#allocation17 + $0x720] sm:$0xff]
        %v4407 = vld [vmem:[#allocation17 + $0x728] sm:$0xff]
        %v4408 = vld [vmem:[#allocation17 + $0x730] sm:$0xff]
        %v4409 = vld [vmem:[#allocation17 + $0x738] sm:$0xff]
        %v4410 = vld [vmem:[#allocation17 + $0x740] sm:$0xff]
        %v4411 = vld [vmem:[#allocation17 + $0x748] sm:$0xff]
        %v4412 = vld [vmem:[#allocation17 + $0x750] sm:$0xff]
        %v4413 = vld [vmem:[#allocation17 + $0x758] sm:$0xff]
        %v4414 = vld [vmem:[#allocation17 + $0x760] sm:$0xff]
        %v4415 = vld [vmem:[#allocation17 + $0x768] sm:$0xff]
        %v4416 = vld [vmem:[#allocation17 + $0x770] sm:$0xff]
        %v4417 = vld [vmem:[#allocation17 + $0x778] sm:$0xff]
        %v4418 = vld [vmem:[#allocation17 + $0x780] sm:$0xff]
        %v4419 = vld [vmem:[#allocation17 + $0x788] sm:$0xff]
        %v4420 = vld [vmem:[#allocation17 + $0x790] sm:$0xff]
        %v4421 = vld [vmem:[#allocation17 + $0x798] sm:$0xff]
        %v4422 = vld [vmem:[#allocation17 + $0x7a0] sm:$0xff]
        %v4423 = vld [vmem:[#allocation17 + $0x7a8] sm:$0xff]
        %v4424 = vld [vmem:[#allocation17 + $0x7b0] sm:$0xff]
        %v4425 = vld [vmem:[#allocation17 + $0x7b8] sm:$0xff]
        %v4426 = vld [vmem:[#allocation17 + $0x7c0] sm:$0xff]
        %v4427 = vld [vmem:[#allocation17 + $0x7c8] sm:$0xff]
        %v4428 = vld [vmem:[#allocation17 + $0x7d0] sm:$0xff]
        %v4429 = vld [vmem:[#allocation17 + $0x7d8] sm:$0xff]
        %v4430 = vld [vmem:[#allocation17 + $0x7e0] sm:$0xff]
        %v4431 = vld [vmem:[#allocation17 + $0x7e8] sm:$0xff]
        %v4432 = vld [vmem:[#allocation17 + $0x7f0] sm:$0xff]
        %v4433 = vld [vmem:[#allocation17 + $0x7f8] sm:$0xff]
        %s4434 = scalar_lea.vmem [#allocation17], 2048
        %v4435 = vld [vmem:[%s4434] sm:$0xff]
        %v4436 = vld [vmem:[%s4434 + $0x8] sm:$0xff]
        %v4437 = vld [vmem:[%s4434 + $0x10] sm:$0xff]
        %v4438 = vld [vmem:[%s4434 + $0x18] sm:$0xff]
        %v4439 = vld [vmem:[%s4434 + $0x20] sm:$0xff]
        %v4440 = vld [vmem:[%s4434 + $0x28] sm:$0xff]
        %v4441 = vld [vmem:[%s4434 + $0x30] sm:$0xff]
        %v4442 = vld [vmem:[%s4434 + $0x38] sm:$0xff]
        %v4443 = vld [vmem:[%s4434 + $0x40] sm:$0xff]
        %v4444 = vld [vmem:[%s4434 + $0x48] sm:$0xff]
        %v4445 = vld [vmem:[%s4434 + $0x50] sm:$0xff]
        %v4446 = vld [vmem:[%s4434 + $0x58] sm:$0xff]
        %v4447 = vld [vmem:[%s4434 + $0x60] sm:$0xff]
        %v4448 = vld [vmem:[%s4434 + $0x68] sm:$0xff]
        %v4449 = vld [vmem:[%s4434 + $0x70] sm:$0xff]
        %v4450 = vld [vmem:[%s4434 + $0x78] sm:$0xff]
        %v4451 = vld [vmem:[%s4434 + $0x80] sm:$0xff]
        %v4452 = vld [vmem:[%s4434 + $0x88] sm:$0xff]
        %v4453 = vld [vmem:[%s4434 + $0x90] sm:$0xff]
        %v4454 = vld [vmem:[%s4434 + $0x98] sm:$0xff]
        %v4455 = vld [vmem:[%s4434 + $0xa0] sm:$0xff]
        %v4456 = vld [vmem:[%s4434 + $0xa8] sm:$0xff]
        %v4457 = vld [vmem:[%s4434 + $0xb0] sm:$0xff]
        %v4458 = vld [vmem:[%s4434 + $0xb8] sm:$0xff]
        %v4459 = vld [vmem:[%s4434 + $0xc0] sm:$0xff]
        %v4460 = vld [vmem:[%s4434 + $0xc8] sm:$0xff]
        %v4461 = vld [vmem:[%s4434 + $0xd0] sm:$0xff]
        %v4462 = vld [vmem:[%s4434 + $0xd8] sm:$0xff]
        %v4463 = vld [vmem:[%s4434 + $0xe0] sm:$0xff]
        %v4464 = vld [vmem:[%s4434 + $0xe8] sm:$0xff]
        %v4465 = vld [vmem:[%s4434 + $0xf0] sm:$0xff]
        %v4466 = vld [vmem:[%s4434 + $0xf8] sm:$0xff]
        %v4467 = vld [vmem:[%s4434 + $0x100] sm:$0xff]
        %v4468 = vld [vmem:[%s4434 + $0x108] sm:$0xff]
        %v4469 = vld [vmem:[%s4434 + $0x110] sm:$0xff]
        %v4470 = vld [vmem:[%s4434 + $0x118] sm:$0xff]
        %v4471 = vld [vmem:[%s4434 + $0x120] sm:$0xff]
        %v4472 = vld [vmem:[%s4434 + $0x128] sm:$0xff]
        %v4473 = vld [vmem:[%s4434 + $0x130] sm:$0xff]
        %v4474 = vld [vmem:[%s4434 + $0x138] sm:$0xff]
        %v4475 = vld [vmem:[%s4434 + $0x140] sm:$0xff]
        %v4476 = vld [vmem:[%s4434 + $0x148] sm:$0xff]
        %v4477 = vld [vmem:[%s4434 + $0x150] sm:$0xff]
        %v4478 = vld [vmem:[%s4434 + $0x158] sm:$0xff]
        %v4479 = vld [vmem:[%s4434 + $0x160] sm:$0xff]
        %v4480 = vld [vmem:[%s4434 + $0x168] sm:$0xff]
        %v4481 = vld [vmem:[%s4434 + $0x170] sm:$0xff]
        %v4482 = vld [vmem:[%s4434 + $0x178] sm:$0xff]
        %v4483 = vld [vmem:[%s4434 + $0x180] sm:$0xff]
        %v4484 = vld [vmem:[%s4434 + $0x188] sm:$0xff]
        %v4485 = vld [vmem:[%s4434 + $0x190] sm:$0xff]
        %v4486 = vld [vmem:[%s4434 + $0x198] sm:$0xff]
        %v4487 = vld [vmem:[%s4434 + $0x1a0] sm:$0xff]
        %v4488 = vld [vmem:[%s4434 + $0x1a8] sm:$0xff]
        %v4489 = vld [vmem:[%s4434 + $0x1b0] sm:$0xff]
        %v4490 = vld [vmem:[%s4434 + $0x1b8] sm:$0xff]
        %v4491 = vld [vmem:[%s4434 + $0x1c0] sm:$0xff]
        %v4492 = vld [vmem:[%s4434 + $0x1c8] sm:$0xff]
        %v4493 = vld [vmem:[%s4434 + $0x1d0] sm:$0xff]
        %v4494 = vld [vmem:[%s4434 + $0x1d8] sm:$0xff]
        %v4495 = vld [vmem:[%s4434 + $0x1e0] sm:$0xff]
        %v4496 = vld [vmem:[%s4434 + $0x1e8] sm:$0xff]
        %v4497 = vld [vmem:[%s4434 + $0x1f0] sm:$0xff]
        %v4498 = vld [vmem:[%s4434 + $0x1f8] sm:$0xff]
        %v4499 = vld [vmem:[%s4434 + $0x200] sm:$0xff]
        %v4500 = vld [vmem:[%s4434 + $0x208] sm:$0xff]
        %v4501 = vld [vmem:[%s4434 + $0x210] sm:$0xff]
        %v4502 = vld [vmem:[%s4434 + $0x218] sm:$0xff]
        %v4503 = vld [vmem:[%s4434 + $0x220] sm:$0xff]
        %v4504 = vld [vmem:[%s4434 + $0x228] sm:$0xff]
        %v4505 = vld [vmem:[%s4434 + $0x230] sm:$0xff]
        %v4506 = vld [vmem:[%s4434 + $0x238] sm:$0xff]
        %v4507 = vld [vmem:[%s4434 + $0x240] sm:$0xff]
        %v4508 = vld [vmem:[%s4434 + $0x248] sm:$0xff]
        %v4509 = vld [vmem:[%s4434 + $0x250] sm:$0xff]
        %v4510 = vld [vmem:[%s4434 + $0x258] sm:$0xff]
        %v4511 = vld [vmem:[%s4434 + $0x260] sm:$0xff]
        %v4512 = vld [vmem:[%s4434 + $0x268] sm:$0xff]
        %v4513 = vld [vmem:[%s4434 + $0x270] sm:$0xff]
        %v4514 = vld [vmem:[%s4434 + $0x278] sm:$0xff]
        %v4515 = vld [vmem:[%s4434 + $0x280] sm:$0xff]
        %v4516 = vld [vmem:[%s4434 + $0x288] sm:$0xff]
        %v4517 = vld [vmem:[%s4434 + $0x290] sm:$0xff]
        %v4518 = vld [vmem:[%s4434 + $0x298] sm:$0xff]
        %v4519 = vld [vmem:[%s4434 + $0x2a0] sm:$0xff]
        %v4520 = vld [vmem:[%s4434 + $0x2a8] sm:$0xff]
        %v4521 = vld [vmem:[%s4434 + $0x2b0] sm:$0xff]
        %v4522 = vld [vmem:[%s4434 + $0x2b8] sm:$0xff]
        %v4523 = vld [vmem:[%s4434 + $0x2c0] sm:$0xff]
        %v4524 = vld [vmem:[%s4434 + $0x2c8] sm:$0xff]
        %v4525 = vld [vmem:[%s4434 + $0x2d0] sm:$0xff]
        %v4526 = vld [vmem:[%s4434 + $0x2d8] sm:$0xff]
        %v4527 = vld [vmem:[%s4434 + $0x2e0] sm:$0xff]
        %v4528 = vld [vmem:[%s4434 + $0x2e8] sm:$0xff]
        %v4529 = vld [vmem:[%s4434 + $0x2f0] sm:$0xff]
        %v4530 = vld [vmem:[%s4434 + $0x2f8] sm:$0xff]
        %v4531 = vld [vmem:[%s4434 + $0x300] sm:$0xff]
        %v4532 = vld [vmem:[%s4434 + $0x308] sm:$0xff]
        %v4533 = vld [vmem:[%s4434 + $0x310] sm:$0xff]
        %v4534 = vld [vmem:[%s4434 + $0x318] sm:$0xff]
        %v4535 = vld [vmem:[%s4434 + $0x320] sm:$0xff]
        %v4536 = vld [vmem:[%s4434 + $0x328] sm:$0xff]
        %v4537 = vld [vmem:[%s4434 + $0x330] sm:$0xff]
        %v4538 = vld [vmem:[%s4434 + $0x338] sm:$0xff]
        %v4539 = vld [vmem:[%s4434 + $0x340] sm:$0xff]
        %v4540 = vld [vmem:[%s4434 + $0x348] sm:$0xff]
        %v4541 = vld [vmem:[%s4434 + $0x350] sm:$0xff]
        %v4542 = vld [vmem:[%s4434 + $0x358] sm:$0xff]
        %v4543 = vld [vmem:[%s4434 + $0x360] sm:$0xff]
        %v4544 = vld [vmem:[%s4434 + $0x368] sm:$0xff]
        %v4545 = vld [vmem:[%s4434 + $0x370] sm:$0xff]
        %v4546 = vld [vmem:[%s4434 + $0x378] sm:$0xff]
        %v4547 = vld [vmem:[%s4434 + $0x380] sm:$0xff]
        %v4548 = vld [vmem:[%s4434 + $0x388] sm:$0xff]
        %v4549 = vld [vmem:[%s4434 + $0x390] sm:$0xff]
        %v4550 = vld [vmem:[%s4434 + $0x398] sm:$0xff]
        %v4551 = vld [vmem:[%s4434 + $0x3a0] sm:$0xff]
        %v4552 = vld [vmem:[%s4434 + $0x3a8] sm:$0xff]
        %v4553 = vld [vmem:[%s4434 + $0x3b0] sm:$0xff]
        %v4554 = vld [vmem:[%s4434 + $0x3b8] sm:$0xff]
        %v4555 = vld [vmem:[%s4434 + $0x3c0] sm:$0xff]
        %v4556 = vld [vmem:[%s4434 + $0x3c8] sm:$0xff]
        %v4557 = vld [vmem:[%s4434 + $0x3d0] sm:$0xff]
        %v4558 = vld [vmem:[%s4434 + $0x3d8] sm:$0xff]
        %v4559 = vld [vmem:[%s4434 + $0x3e0] sm:$0xff]
        %v4560 = vld [vmem:[%s4434 + $0x3e8] sm:$0xff]
        %v4561 = vld [vmem:[%s4434 + $0x3f0] sm:$0xff]
        %v4562 = vld [vmem:[%s4434 + $0x3f8] sm:$0xff]
        %v4563 = vld [vmem:[%s4434 + $0x400] sm:$0xff]
        %v4564 = vld [vmem:[%s4434 + $0x408] sm:$0xff]
        %v4565 = vld [vmem:[%s4434 + $0x410] sm:$0xff]
        %v4566 = vld [vmem:[%s4434 + $0x418] sm:$0xff]
        %v4567 = vld [vmem:[%s4434 + $0x420] sm:$0xff]
        %v4568 = vld [vmem:[%s4434 + $0x428] sm:$0xff]
        %v4569 = vld [vmem:[%s4434 + $0x430] sm:$0xff]
        %v4570 = vld [vmem:[%s4434 + $0x438] sm:$0xff]
        %v4571 = vld [vmem:[%s4434 + $0x440] sm:$0xff]
        %v4572 = vld [vmem:[%s4434 + $0x448] sm:$0xff]
        %v4573 = vld [vmem:[%s4434 + $0x450] sm:$0xff]
        %v4574 = vld [vmem:[%s4434 + $0x458] sm:$0xff]
        %v4575 = vld [vmem:[%s4434 + $0x460] sm:$0xff]
        %v4576 = vld [vmem:[%s4434 + $0x468] sm:$0xff]
        %v4577 = vld [vmem:[%s4434 + $0x470] sm:$0xff]
        %v4578 = vld [vmem:[%s4434 + $0x478] sm:$0xff]
        %v4579 = vld [vmem:[%s4434 + $0x480] sm:$0xff]
        %v4580 = vld [vmem:[%s4434 + $0x488] sm:$0xff]
        %v4581 = vld [vmem:[%s4434 + $0x490] sm:$0xff]
        %v4582 = vld [vmem:[%s4434 + $0x498] sm:$0xff]
        %v4583 = vld [vmem:[%s4434 + $0x4a0] sm:$0xff]
        %v4584 = vld [vmem:[%s4434 + $0x4a8] sm:$0xff]
        %v4585 = vld [vmem:[%s4434 + $0x4b0] sm:$0xff]
        %v4586 = vld [vmem:[%s4434 + $0x4b8] sm:$0xff]
        %v4587 = vld [vmem:[%s4434 + $0x4c0] sm:$0xff]
        %v4588 = vld [vmem:[%s4434 + $0x4c8] sm:$0xff]
        %v4589 = vld [vmem:[%s4434 + $0x4d0] sm:$0xff]
        %v4590 = vld [vmem:[%s4434 + $0x4d8] sm:$0xff]
        %v4591 = vld [vmem:[%s4434 + $0x4e0] sm:$0xff]
        %v4592 = vld [vmem:[%s4434 + $0x4e8] sm:$0xff]
        %v4593 = vld [vmem:[%s4434 + $0x4f0] sm:$0xff]
        %v4594 = vld [vmem:[%s4434 + $0x4f8] sm:$0xff]
        %v4595 = vld [vmem:[%s4434 + $0x500] sm:$0xff]
        %v4596 = vld [vmem:[%s4434 + $0x508] sm:$0xff]
        %v4597 = vld [vmem:[%s4434 + $0x510] sm:$0xff]
        %v4598 = vld [vmem:[%s4434 + $0x518] sm:$0xff]
        %v4599 = vld [vmem:[%s4434 + $0x520] sm:$0xff]
        %v4600 = vld [vmem:[%s4434 + $0x528] sm:$0xff]
        %v4601 = vld [vmem:[%s4434 + $0x530] sm:$0xff]
        %v4602 = vld [vmem:[%s4434 + $0x538] sm:$0xff]
        %v4603 = vld [vmem:[%s4434 + $0x540] sm:$0xff]
        %v4604 = vld [vmem:[%s4434 + $0x548] sm:$0xff]
        %v4605 = vld [vmem:[%s4434 + $0x550] sm:$0xff]
        %v4606 = vld [vmem:[%s4434 + $0x558] sm:$0xff]
        %v4607 = vld [vmem:[%s4434 + $0x560] sm:$0xff]
        %v4608 = vld [vmem:[%s4434 + $0x568] sm:$0xff]
        %v4609 = vld [vmem:[%s4434 + $0x570] sm:$0xff]
        %v4610 = vld [vmem:[%s4434 + $0x578] sm:$0xff]
        %v4611 = vld [vmem:[%s4434 + $0x580] sm:$0xff]
        %v4612 = vld [vmem:[%s4434 + $0x588] sm:$0xff]
        %v4613 = vld [vmem:[%s4434 + $0x590] sm:$0xff]
        %v4614 = vld [vmem:[%s4434 + $0x598] sm:$0xff]
        %v4615 = vld [vmem:[%s4434 + $0x5a0] sm:$0xff]
        %v4616 = vld [vmem:[%s4434 + $0x5a8] sm:$0xff]
        %v4617 = vld [vmem:[%s4434 + $0x5b0] sm:$0xff]
        %v4618 = vld [vmem:[%s4434 + $0x5b8] sm:$0xff]
        %v4619 = vld [vmem:[%s4434 + $0x5c0] sm:$0xff]
        %v4620 = vld [vmem:[%s4434 + $0x5c8] sm:$0xff]
        %v4621 = vld [vmem:[%s4434 + $0x5d0] sm:$0xff]
        %v4622 = vld [vmem:[%s4434 + $0x5d8] sm:$0xff]
        %v4623 = vld [vmem:[%s4434 + $0x5e0] sm:$0xff]
        %v4624 = vld [vmem:[%s4434 + $0x5e8] sm:$0xff]
        %v4625 = vld [vmem:[%s4434 + $0x5f0] sm:$0xff]
        %v4626 = vld [vmem:[%s4434 + $0x5f8] sm:$0xff]
        %v4627 = vld [vmem:[%s4434 + $0x600] sm:$0xff]
        %v4628 = vld [vmem:[%s4434 + $0x608] sm:$0xff]
        %v4629 = vld [vmem:[%s4434 + $0x610] sm:$0xff]
        %v4630 = vld [vmem:[%s4434 + $0x618] sm:$0xff]
        %v4631 = vld [vmem:[%s4434 + $0x620] sm:$0xff]
        %v4632 = vld [vmem:[%s4434 + $0x628] sm:$0xff]
        %v4633 = vld [vmem:[%s4434 + $0x630] sm:$0xff]
        %v4634 = vld [vmem:[%s4434 + $0x638] sm:$0xff]
        %v4635 = vld [vmem:[%s4434 + $0x640] sm:$0xff]
        %v4636 = vld [vmem:[%s4434 + $0x648] sm:$0xff]
        %v4637 = vld [vmem:[%s4434 + $0x650] sm:$0xff]
        %v4638 = vld [vmem:[%s4434 + $0x658] sm:$0xff]
        %v4639 = vld [vmem:[%s4434 + $0x660] sm:$0xff]
        %v4640 = vld [vmem:[%s4434 + $0x668] sm:$0xff]
        %v4641 = vld [vmem:[%s4434 + $0x670] sm:$0xff]
        %v4642 = vld [vmem:[%s4434 + $0x678] sm:$0xff]
        %v4643 = vld [vmem:[%s4434 + $0x680] sm:$0xff]
        %v4644 = vld [vmem:[%s4434 + $0x688] sm:$0xff]
        %v4645 = vld [vmem:[%s4434 + $0x690] sm:$0xff]
        %v4646 = vld [vmem:[%s4434 + $0x698] sm:$0xff]
        %v4647 = vld [vmem:[%s4434 + $0x6a0] sm:$0xff]
        %v4648 = vld [vmem:[%s4434 + $0x6a8] sm:$0xff]
        %v4649 = vld [vmem:[%s4434 + $0x6b0] sm:$0xff]
        %v4650 = vld [vmem:[%s4434 + $0x6b8] sm:$0xff]
        %v4651 = vld [vmem:[%s4434 + $0x6c0] sm:$0xff]
        %v4652 = vld [vmem:[%s4434 + $0x6c8] sm:$0xff]
        %v4653 = vld [vmem:[%s4434 + $0x6d0] sm:$0xff]
        %v4654 = vld [vmem:[%s4434 + $0x6d8] sm:$0xff]
        %v4655 = vld [vmem:[%s4434 + $0x6e0] sm:$0xff]
        %v4656 = vld [vmem:[%s4434 + $0x6e8] sm:$0xff]
        %v4657 = vld [vmem:[%s4434 + $0x6f0] sm:$0xff]
        %v4658 = vld [vmem:[%s4434 + $0x6f8] sm:$0xff]
        %v4659 = vld [vmem:[%s4434 + $0x700] sm:$0xff]
        %v4660 = vld [vmem:[%s4434 + $0x708] sm:$0xff]
        %v4661 = vld [vmem:[%s4434 + $0x710] sm:$0xff]
        %v4662 = vld [vmem:[%s4434 + $0x718] sm:$0xff]
        %v4663 = vld [vmem:[%s4434 + $0x720] sm:$0xff]
        %v4664 = vld [vmem:[%s4434 + $0x728] sm:$0xff]
        %v4665 = vld [vmem:[%s4434 + $0x730] sm:$0xff]
        %v4666 = vld [vmem:[%s4434 + $0x738] sm:$0xff]
        %v4667 = vld [vmem:[%s4434 + $0x740] sm:$0xff]
        %v4668 = vld [vmem:[%s4434 + $0x748] sm:$0xff]
        %v4669 = vld [vmem:[%s4434 + $0x750] sm:$0xff]
        %v4670 = vld [vmem:[%s4434 + $0x758] sm:$0xff]
        %v4671 = vld [vmem:[%s4434 + $0x760] sm:$0xff]
        %v4672 = vld [vmem:[%s4434 + $0x768] sm:$0xff]
        %v4673 = vld [vmem:[%s4434 + $0x770] sm:$0xff]
        %v4674 = vld [vmem:[%s4434 + $0x778] sm:$0xff]
        %v4675 = vld [vmem:[%s4434 + $0x780] sm:$0xff]
        %v4676 = vld [vmem:[%s4434 + $0x788] sm:$0xff]
        %v4677 = vld [vmem:[%s4434 + $0x790] sm:$0xff]
        %v4678 = vld [vmem:[%s4434 + $0x798] sm:$0xff]
        %v4679 = vld [vmem:[%s4434 + $0x7a0] sm:$0xff]
        %v4680 = vld [vmem:[%s4434 + $0x7a8] sm:$0xff]
        %v4681 = vld [vmem:[%s4434 + $0x7b0] sm:$0xff]
        %v4682 = vld [vmem:[%s4434 + $0x7b8] sm:$0xff]
        %v4683 = vld [vmem:[%s4434 + $0x7c0] sm:$0xff]
        %v4684 = vld [vmem:[%s4434 + $0x7c8] sm:$0xff]
        %v4685 = vld [vmem:[%s4434 + $0x7d0] sm:$0xff]
        %v4686 = vld [vmem:[%s4434 + $0x7d8] sm:$0xff]
        %v4687 = vld [vmem:[%s4434 + $0x7e0] sm:$0xff]
        %v4688 = vld [vmem:[%s4434 + $0x7e8] sm:$0xff]
        %v4689 = vld [vmem:[%s4434 + $0x7f0] sm:$0xff]
        %v4690 = vld [vmem:[%s4434 + $0x7f8] sm:$0xff]
        %4691 = vmatprep.subr.mxu0 %v4436
        %4692 = vmatpush1.msra.mxu0 %v4435
        %4693 = vmatprep.subr.mxu0 %v4440
        %4694 = vmatpush1.msra.mxu0 %v4439
        %4695 = vmatprep.subr.mxu0 %v4444
        %4696 = vmatpush1.msra.mxu0 %v4443
        %4697 = vmatprep.subr.mxu0 %v4448
        %4698 = vmatpush1.msra.mxu0 %v4447
        %4699 = vmatprep.subr.mxu0 %v4452
        %4700 = vmatpush1.msra.mxu0 %v4451
        %4701 = vmatprep.subr.mxu0 %v4456
        %4702 = vmatpush1.msra.mxu0 %v4455
        %4703 = vmatprep.subr.mxu0 %v4460
        %4704 = vmatpush1.msra.mxu0 %v4459
        %4705 = vmatprep.subr.mxu0 %v4464
        %4706 = vmatpush1.msra.mxu0 %v4463
        %4707 = vmatprep.subr.mxu0 %v4468
        %4708 = vmatpush1.msra.mxu0 %v4467
        %4709 = vmatprep.subr.mxu0 %v4472
        %4710 = vmatpush1.msra.mxu0 %v4471
        %4711 = vmatprep.subr.mxu0 %v4476
        %4712 = vmatpush1.msra.mxu0 %v4475
        %4713 = vmatprep.subr.mxu0 %v4480
        %4714 = vmatpush1.msra.mxu0 %v4479
        %4715 = vmatprep.subr.mxu0 %v4484
        %4716 = vmatpush1.msra.mxu0 %v4483
        %4717 = vmatprep.subr.mxu0 %v4488
        %4718 = vmatpush1.msra.mxu0 %v4487
        %4719 = vmatprep.subr.mxu0 %v4492
        %4720 = vmatpush1.msra.mxu0 %v4491
        %4721 = vmatprep.subr.mxu0 %v4496
        %4722 = vmatpush1.msra.mxu0 %v4495
        %4723 = vmatprep.subr.mxu0 %v4500
        %4724 = vmatpush1.msra.mxu0 %v4499
        %4725 = vmatprep.subr.mxu0 %v4504
        %4726 = vmatpush1.msra.mxu0 %v4503
        %4727 = vmatprep.subr.mxu0 %v4508
        %4728 = vmatpush1.msra.mxu0 %v4507
        %4729 = vmatprep.subr.mxu0 %v4512
        %4730 = vmatpush1.msra.mxu0 %v4511
        %4731 = vmatprep.subr.mxu0 %v4516
        %4732 = vmatpush1.msra.mxu0 %v4515
        %4733 = vmatprep.subr.mxu0 %v4520
        %4734 = vmatpush1.msra.mxu0 %v4519
        %4735 = vmatprep.subr.mxu0 %v4524
        %4736 = vmatpush1.msra.mxu0 %v4523
        %4737 = vmatprep.subr.mxu0 %v4528
        %4738 = vmatpush1.msra.mxu0 %v4527
        %4739 = vmatprep.subr.mxu0 %v4532
        %4740 = vmatpush1.msra.mxu0 %v4531
        %4741 = vmatprep.subr.mxu0 %v4536
        %4742 = vmatpush1.msra.mxu0 %v4535
        %4743 = vmatprep.subr.mxu0 %v4540
        %4744 = vmatpush1.msra.mxu0 %v4539
        %4745 = vmatprep.subr.mxu0 %v4544
        %4746 = vmatpush1.msra.mxu0 %v4543
        %4747 = vmatprep.subr.mxu0 %v4548
        %4748 = vmatpush1.msra.mxu0 %v4547
        %4749 = vmatprep.subr.mxu0 %v4552
        %4750 = vmatpush1.msra.mxu0 %v4551
        %4751 = vmatprep.subr.mxu0 %v4556
        %4752 = vmatpush1.msra.mxu0 %v4555
        %4753 = vmatprep.subr.mxu0 %v4560
        %4754 = vmatpush1.msra.mxu0 %v4559
        %4755 = vmatprep.mubr.f32.mxu0 %v2243
        %4756 = vmatmul.mubr.f32.gmra.mrb[0].mxu0 %v2242
        %v4757 = vpop.f32.mrb[0].mxu0
        %v4758 = vadd.f32 0.0, %v4757
        %v4759 = vpop.f32.mrb[0].mxu0
        %v4760 = vadd.f32 0.0, %v4759
        %4761 = vmatprep.mubr.f32.mxu0 %v2245
        %4762 = vmatmul.mubr.f32.gmra.mrb[0].mxu0 %v2244
        %v4763 = vpop.f32.mrb[0].mxu0
        %v4764 = vadd.f32 0.0, %v4763
        %v4765 = vpop.f32.mrb[0].mxu0
        %v4766 = vadd.f32 0.0, %v4765
        %4767 = vdwg.mxu0
        %4768 = vmatprep.subr.mxu0 %v4564
        %4769 = vmatpush1.msra.mxu0 %v4563
        %4770 = vmatprep.subr.mxu0 %v4568
        %4771 = vmatpush1.msra.mxu0 %v4567
        %4772 = vmatprep.subr.mxu0 %v4572
        %4773 = vmatpush1.msra.mxu0 %v4571
        %4774 = vmatprep.subr.mxu0 %v4576
        %4775 = vmatpush1.msra.mxu0 %v4575
        %4776 = vmatprep.subr.mxu0 %v4580
        %4777 = vmatpush1.msra.mxu0 %v4579
        %4778 = vmatprep.subr.mxu0 %v4584
        %4779 = vmatpush1.msra.mxu0 %v4583
        %4780 = vmatprep.subr.mxu0 %v4588
        %4781 = vmatpush1.msra.mxu0 %v4587
        %4782 = vmatprep.subr.mxu0 %v4592
        %4783 = vmatpush1.msra.mxu0 %v4591
        %4784 = vmatprep.subr.mxu0 %v4596
        %4785 = vmatpush1.msra.mxu0 %v4595
        %4786 = vmatprep.subr.mxu0 %v4600
        %4787 = vmatpush1.msra.mxu0 %v4599
        %4788 = vmatprep.subr.mxu0 %v4604
        %4789 = vmatpush1.msra.mxu0 %v4603
        %4790 = vmatprep.subr.mxu0 %v4608
        %4791 = vmatpush1.msra.mxu0 %v4607
        %4792 = vmatprep.subr.mxu0 %v4612
        %4793 = vmatpush1.msra.mxu0 %v4611
        %4794 = vmatprep.subr.mxu0 %v4616
        %4795 = vmatpush1.msra.mxu0 %v4615
        %4796 = vmatprep.subr.mxu0 %v4620
        %4797 = vmatpush1.msra.mxu0 %v4619
        %4798 = vmatprep.subr.mxu0 %v4624
        %4799 = vmatpush1.msra.mxu0 %v4623
        %4800 = vmatprep.subr.mxu0 %v4628
        %4801 = vmatpush1.msra.mxu0 %v4627
        %4802 = vmatprep.subr.mxu0 %v4632
        %4803 = vmatpush1.msra.mxu0 %v4631
        %4804 = vmatprep.subr.mxu0 %v4636
        %4805 = vmatpush1.msra.mxu0 %v4635
        %4806 = vmatprep.subr.mxu0 %v4640
        %4807 = vmatpush1.msra.mxu0 %v4639
        %4808 = vmatprep.subr.mxu0 %v4644
        %4809 = vmatpush1.msra.mxu0 %v4643
        %4810 = vmatprep.subr.mxu0 %v4648
        %4811 = vmatpush1.msra.mxu0 %v4647
        %4812 = vmatprep.subr.mxu0 %v4652
        %4813 = vmatpush1.msra.mxu0 %v4651
        %4814 = vmatprep.subr.mxu0 %v4656
        %4815 = vmatpush1.msra.mxu0 %v4655
        %4816 = vmatprep.subr.mxu0 %v4660
        %4817 = vmatpush1.msra.mxu0 %v4659
        %4818 = vmatprep.subr.mxu0 %v4664
        %4819 = vmatpush1.msra.mxu0 %v4663
        %4820 = vmatprep.subr.mxu0 %v4668
        %4821 = vmatpush1.msra.mxu0 %v4667
        %4822 = vmatprep.subr.mxu0 %v4672
        %4823 = vmatpush1.msra.mxu0 %v4671
        %4824 = vmatprep.subr.mxu0 %v4676
        %4825 = vmatpush1.msra.mxu0 %v4675
        %4826 = vmatprep.subr.mxu0 %v4680
        %4827 = vmatpush1.msra.mxu0 %v4679
        %4828 = vmatprep.subr.mxu0 %v4684
        %4829 = vmatpush1.msra.mxu0 %v4683
        %4830 = vmatprep.subr.mxu0 %v4688
        %4831 = vmatpush1.msra.mxu0 %v4687
        %4832 = vmatprep.mubr.f32.mxu0 %v4011
        %4833 = vmatmul.mubr.f32.gmra.mrb[0].mxu0 %v4010
        %v4834 = vpop.f32.mrb[0].mxu0
        %v4835 = vadd.f32 %v4758, %v4834
        %v4836 = vpop.f32.mrb[0].mxu0
        %v4837 = vadd.f32 %v4760, %v4836
        %4838 = vmatprep.mubr.f32.mxu0 %v4013
        %4839 = vmatmul.mubr.f32.gmra.mrb[0].mxu0 %v4012
        %v4840 = vpop.f32.mrb[0].mxu0
        %v4841 = vadd.f32 %v4764, %v4840
        %v4842 = vpop.f32.mrb[0].mxu0
        %v4843 = vadd.f32 %v4766, %v4842
        %4844 = vdwg.mxu0
        %4845 = vmatprep.subr.mxu0 %v4438
        %4846 = vmatpush1.msra.mxu0 %v4437
        %4847 = vmatprep.subr.mxu0 %v4442
        %4848 = vmatpush1.msra.mxu0 %v4441
        %4849 = vmatprep.subr.mxu0 %v4446
        %4850 = vmatpush1.msra.mxu0 %v4445
        %4851 = vmatprep.subr.mxu0 %v4450
        %4852 = vmatpush1.msra.mxu0 %v4449
        %4853 = vmatprep.subr.mxu0 %v4454
        %4854 = vmatpush1.msra.mxu0 %v4453
        %4855 = vmatprep.subr.mxu0 %v4458
        %4856 = vmatpush1.msra.mxu0 %v4457
        %4857 = vmatprep.subr.mxu0 %v4462
        %4858 = vmatpush1.msra.mxu0 %v4461
        %4859 = vmatprep.subr.mxu0 %v4466
        %4860 = vmatpush1.msra.mxu0 %v4465
        %4861 = vmatprep.subr.mxu0 %v4470
        %4862 = vmatpush1.msra.mxu0 %v4469
        %4863 = vmatprep.subr.mxu0 %v4474
        %4864 = vmatpush1.msra.mxu0 %v4473
        %4865 = vmatprep.subr.mxu0 %v4478
        %4866 = vmatpush1.msra.mxu0 %v4477
        %4867 = vmatprep.subr.mxu0 %v4482
        %4868 = vmatpush1.msra.mxu0 %v4481
        %4869 = vmatprep.subr.mxu0 %v4486
        %4870 = vmatpush1.msra.mxu0 %v4485
        %4871 = vmatprep.subr.mxu0 %v4490
        %4872 = vmatpush1.msra.mxu0 %v4489
        %4873 = vmatprep.subr.mxu0 %v4494
        %4874 = vmatpush1.msra.mxu0 %v4493
        %4875 = vmatprep.subr.mxu0 %v4498
        %4876 = vmatpush1.msra.mxu0 %v4497
        %4877 = vmatprep.subr.mxu0 %v4502
        %4878 = vmatpush1.msra.mxu0 %v4501
        %4879 = vmatprep.subr.mxu0 %v4506
        %4880 = vmatpush1.msra.mxu0 %v4505
        %4881 = vmatprep.subr.mxu0 %v4510
        %4882 = vmatpush1.msra.mxu0 %v4509
        %4883 = vmatprep.subr.mxu0 %v4514
        %4884 = vmatpush1.msra.mxu0 %v4513
        %4885 = vmatprep.subr.mxu0 %v4518
        %4886 = vmatpush1.msra.mxu0 %v4517
        %4887 = vmatprep.subr.mxu0 %v4522
        %4888 = vmatpush1.msra.mxu0 %v4521
        %4889 = vmatprep.subr.mxu0 %v4526
        %4890 = vmatpush1.msra.mxu0 %v4525
        %4891 = vmatprep.subr.mxu0 %v4530
        %4892 = vmatpush1.msra.mxu0 %v4529
        %4893 = vmatprep.subr.mxu0 %v4534
        %4894 = vmatpush1.msra.mxu0 %v4533
        %4895 = vmatprep.subr.mxu0 %v4538
        %4896 = vmatpush1.msra.mxu0 %v4537
        %4897 = vmatprep.subr.mxu0 %v4542
        %4898 = vmatpush1.msra.mxu0 %v4541
        %4899 = vmatprep.subr.mxu0 %v4546
        %4900 = vmatpush1.msra.mxu0 %v4545
        %4901 = vmatprep.subr.mxu0 %v4550
        %4902 = vmatpush1.msra.mxu0 %v4549
        %4903 = vmatprep.subr.mxu0 %v4554
        %4904 = vmatpush1.msra.mxu0 %v4553
        %4905 = vmatprep.subr.mxu0 %v4558
        %4906 = vmatpush1.msra.mxu0 %v4557
        %4907 = vmatprep.subr.mxu0 %v4562
        %4908 = vmatpush1.msra.mxu0 %v4561
        %4909 = vmatprep.mubr.f32.mxu0 %v2243
        %4910 = vmatmul.mubr.f32.gmra.mrb[0].mxu0 %v2242
        %v4911 = vpop.f32.mrb[0].mxu0
        %v4912 = vadd.f32 0.0, %v4911
        %v4913 = vpop.f32.mrb[0].mxu0
        %v4914 = vadd.f32 0.0, %v4913
        %4915 = vmatprep.mubr.f32.mxu0 %v2245
        %4916 = vmatmul.mubr.f32.gmra.mrb[0].mxu0 %v2244
        %v4917 = vpop.f32.mrb[0].mxu0
        %v4918 = vadd.f32 0.0, %v4917
        %v4919 = vpop.f32.mrb[0].mxu0
        %v4920 = vadd.f32 0.0, %v4919
        %4921 = vdwg.mxu0
        %4922 = vmatprep.subr.mxu0 %v4566
        %4923 = vmatpush1.msra.mxu0 %v4565
        %4924 = vmatprep.subr.mxu0 %v4570
        %4925 = vmatpush1.msra.mxu0 %v4569
        %4926 = vmatprep.subr.mxu0 %v4574
        %4927 = vmatpush1.msra.mxu0 %v4573
        %4928 = vmatprep.subr.mxu0 %v4578
        %4929 = vmatpush1.msra.mxu0 %v4577
        %4930 = vmatprep.subr.mxu0 %v4582
        %4931 = vmatpush1.msra.mxu0 %v4581
        %4932 = vmatprep.subr.mxu0 %v4586
        %4933 = vmatpush1.msra.mxu0 %v4585
        %4934 = vmatprep.subr.mxu0 %v4590
        %4935 = vmatpush1.msra.mxu0 %v4589
        %4936 = vmatprep.subr.mxu0 %v4594
        %4937 = vmatpush1.msra.mxu0 %v4593
        %4938 = vmatprep.subr.mxu0 %v4598
        %4939 = vmatpush1.msra.mxu0 %v4597
        %4940 = vmatprep.subr.mxu0 %v4602
        %4941 = vmatpush1.msra.mxu0 %v4601
        %4942 = vmatprep.subr.mxu0 %v4606
        %4943 = vmatpush1.msra.mxu0 %v4605
        %4944 = vmatprep.subr.mxu0 %v4610
        %4945 = vmatpush1.msra.mxu0 %v4609
        %4946 = vmatprep.subr.mxu0 %v4614
        %4947 = vmatpush1.msra.mxu0 %v4613
        %4948 = vmatprep.subr.mxu0 %v4618
        %4949 = vmatpush1.msra.mxu0 %v4617
        %4950 = vmatprep.subr.mxu0 %v4622
        %4951 = vmatpush1.msra.mxu0 %v4621
        %4952 = vmatprep.subr.mxu0 %v4626
        %4953 = vmatpush1.msra.mxu0 %v4625
        %4954 = vmatprep.subr.mxu0 %v4630
        %4955 = vmatpush1.msra.mxu0 %v4629
        %4956 = vmatprep.subr.mxu0 %v4634
        %4957 = vmatpush1.msra.mxu0 %v4633
        %4958 = vmatprep.subr.mxu0 %v4638
        %4959 = vmatpush1.msra.mxu0 %v4637
        %4960 = vmatprep.subr.mxu0 %v4642
        %4961 = vmatpush1.msra.mxu0 %v4641
        %4962 = vmatprep.subr.mxu0 %v4646
        %4963 = vmatpush1.msra.mxu0 %v4645
        %4964 = vmatprep.subr.mxu0 %v4650
        %4965 = vmatpush1.msra.mxu0 %v4649
        %4966 = vmatprep.subr.mxu0 %v4654
        %4967 = vmatpush1.msra.mxu0 %v4653
        %4968 = vmatprep.subr.mxu0 %v4658
        %4969 = vmatpush1.msra.mxu0 %v4657
        %4970 = vmatprep.subr.mxu0 %v4662
        %4971 = vmatpush1.msra.mxu0 %v4661
        %4972 = vmatprep.subr.mxu0 %v4666
        %4973 = vmatpush1.msra.mxu0 %v4665
        %4974 = vmatprep.subr.mxu0 %v4670
        %4975 = vmatpush1.msra.mxu0 %v4669
        %4976 = vmatprep.subr.mxu0 %v4674
        %4977 = vmatpush1.msra.mxu0 %v4673
        %4978 = vmatprep.subr.mxu0 %v4678
        %4979 = vmatpush1.msra.mxu0 %v4677
        %4980 = vmatprep.subr.mxu0 %v4682
        %4981 = vmatpush1.msra.mxu0 %v4681
        %4982 = vmatprep.subr.mxu0 %v4686
        %4983 = vmatpush1.msra.mxu0 %v4685
        %4984 = vmatprep.subr.mxu0 %v4690
        %4985 = vmatpush1.msra.mxu0 %v4689
        %4986 = vmatprep.mubr.f32.mxu0 %v4011
        %4987 = vmatmul.mubr.f32.gmra.mrb[0].mxu0 %v4010
        %v4988 = vpop.f32.mrb[0].mxu0
        %v4989 = vadd.f32 %v4912, %v4988
        %v4990 = vpop.f32.mrb[0].mxu0
        %v4991 = vadd.f32 %v4914, %v4990
        %4992 = vmatprep.mubr.f32.mxu0 %v4013
        %4993 = vmatmul.mubr.f32.gmra.mrb[0].mxu0 %v4012
        %v4994 = vpop.f32.mrb[0].mxu0
        %v4995 = vadd.f32 %v4918, %v4994
        %v4996 = vpop.f32.mrb[0].mxu0
        %v4997 = vadd.f32 %v4920, %v4996
        %4998 = vdwg.mxu0
        %4999 = vmatprep.subr.mxu0 %v4179
        %5000 = vmatpush1.msra.mxu0 %v4178
        %5001 = vmatprep.subr.mxu0 %v4183
        %5002 = vmatpush1.msra.mxu0 %v4182
        %5003 = vmatprep.subr.mxu0 %v4187
        %5004 = vmatpush1.msra.mxu0 %v4186
        %5005 = vmatprep.subr.mxu0 %v4191
        %5006 = vmatpush1.msra.mxu0 %v4190
        %5007 = vmatprep.subr.mxu0 %v4195
        %5008 = vmatpush1.msra.mxu0 %v4194
        %5009 = vmatprep.subr.mxu0 %v4199
        %5010 = vmatpush1.msra.mxu0 %v4198
        %5011 = vmatprep.subr.mxu0 %v4203
        %5012 = vmatpush1.msra.mxu0 %v4202
        %5013 = vmatprep.subr.mxu0 %v4207
        %5014 = vmatpush1.msra.mxu0 %v4206
        %5015 = vmatprep.subr.mxu0 %v4211
        %5016 = vmatpush1.msra.mxu0 %v4210
        %5017 = vmatprep.subr.mxu0 %v4215
        %5018 = vmatpush1.msra.mxu0 %v4214
        %5019 = vmatprep.subr.mxu0 %v4219
        %5020 = vmatpush1.msra.mxu0 %v4218
        %5021 = vmatprep.subr.mxu0 %v4223
        %5022 = vmatpush1.msra.mxu0 %v4222
        %5023 = vmatprep.subr.mxu0 %v4227
        %5024 = vmatpush1.msra.mxu0 %v4226
        %5025 = vmatprep.subr.mxu0 %v4231
        %5026 = vmatpush1.msra.mxu0 %v4230
        %5027 = vmatprep.subr.mxu0 %v4235
        %5028 = vmatpush1.msra.mxu0 %v4234
        %5029 = vmatprep.subr.mxu0 %v4239
        %5030 = vmatpush1.msra.mxu0 %v4238
        %5031 = vmatprep.subr.mxu0 %v4243
        %5032 = vmatpush1.msra.mxu0 %v4242
        %5033 = vmatprep.subr.mxu0 %v4247
        %5034 = vmatpush1.msra.mxu0 %v4246
        %5035 = vmatprep.subr.mxu0 %v4251
        %5036 = vmatpush1.msra.mxu0 %v4250
        %5037 = vmatprep.subr.mxu0 %v4255
        %5038 = vmatpush1.msra.mxu0 %v4254
        %5039 = vmatprep.subr.mxu0 %v4259
        %5040 = vmatpush1.msra.mxu0 %v4258
        %5041 = vmatprep.subr.mxu0 %v4263
        %5042 = vmatpush1.msra.mxu0 %v4262
        %5043 = vmatprep.subr.mxu0 %v4267
        %5044 = vmatpush1.msra.mxu0 %v4266
        %5045 = vmatprep.subr.mxu0 %v4271
        %5046 = vmatpush1.msra.mxu0 %v4270
        %5047 = vmatprep.subr.mxu0 %v4275
        %5048 = vmatpush1.msra.mxu0 %v4274
        %5049 = vmatprep.subr.mxu0 %v4279
        %5050 = vmatpush1.msra.mxu0 %v4278
        %5051 = vmatprep.subr.mxu0 %v4283
        %5052 = vmatpush1.msra.mxu0 %v4282
        %5053 = vmatprep.subr.mxu0 %v4287
        %5054 = vmatpush1.msra.mxu0 %v4286
        %5055 = vmatprep.subr.mxu0 %v4291
        %5056 = vmatpush1.msra.mxu0 %v4290
        %5057 = vmatprep.subr.mxu0 %v4295
        %5058 = vmatpush1.msra.mxu0 %v4294
        %5059 = vmatprep.subr.mxu0 %v4299
        %5060 = vmatpush1.msra.mxu0 %v4298
        %5061 = vmatprep.subr.mxu0 %v4303
        %5062 = vmatpush1.msra.mxu0 %v4302
        %5063 = vmatprep.mubr.f32.mxu0 %v4093
        %5064 = vmatmul.mubr.f32.gmra.mrb[0].mxu0 %v4091
        %v5065 = vpop.f32.mrb[0].mxu0
        %v5066 = vadd.f32 %v4835, %v5065
        %v5067 = vpop.f32.mrb[0].mxu0
        %v5068 = vadd.f32 %v4837, %v5067
        %5069 = vmatprep.mubr.f32.mxu0 %v4099
        %5070 = vmatmul.mubr.f32.gmra.mrb[0].mxu0 %v4097
        %v5071 = vpop.f32.mrb[0].mxu0
        %v5072 = vadd.f32 %v4841, %v5071
        %v5073 = vpop.f32.mrb[0].mxu0
        %v5074 = vadd.f32 %v4843, %v5073
        %5075 = vdwg.mxu0
        %5076 = vmatprep.subr.mxu0 %v4307
        %5077 = vmatpush1.msra.mxu0 %v4306
        %5078 = vmatprep.subr.mxu0 %v4311
        %5079 = vmatpush1.msra.mxu0 %v4310
        %5080 = vmatprep.subr.mxu0 %v4315
        %5081 = vmatpush1.msra.mxu0 %v4314
        %5082 = vmatprep.subr.mxu0 %v4319
        %5083 = vmatpush1.msra.mxu0 %v4318
        %5084 = vmatprep.subr.mxu0 %v4323
        %5085 = vmatpush1.msra.mxu0 %v4322
        %5086 = vmatprep.subr.mxu0 %v4327
        %5087 = vmatpush1.msra.mxu0 %v4326
        %5088 = vmatprep.subr.mxu0 %v4331
        %5089 = vmatpush1.msra.mxu0 %v4330
        %5090 = vmatprep.subr.mxu0 %v4335
        %5091 = vmatpush1.msra.mxu0 %v4334
        %5092 = vmatprep.subr.mxu0 %v4339
        %5093 = vmatpush1.msra.mxu0 %v4338
        %5094 = vmatprep.subr.mxu0 %v4343
        %5095 = vmatpush1.msra.mxu0 %v4342
        %5096 = vmatprep.subr.mxu0 %v4347
        %5097 = vmatpush1.msra.mxu0 %v4346
        %5098 = vmatprep.subr.mxu0 %v4351
        %5099 = vmatpush1.msra.mxu0 %v4350
        %5100 = vmatprep.subr.mxu0 %v4355
        %5101 = vmatpush1.msra.mxu0 %v4354
        %5102 = vmatprep.subr.mxu0 %v4359
        %5103 = vmatpush1.msra.mxu0 %v4358
        %5104 = vmatprep.subr.mxu0 %v4363
        %5105 = vmatpush1.msra.mxu0 %v4362
        %5106 = vmatprep.subr.mxu0 %v4367
        %5107 = vmatpush1.msra.mxu0 %v4366
        %5108 = vmatprep.subr.mxu0 %v4371
        %5109 = vmatpush1.msra.mxu0 %v4370
        %5110 = vmatprep.subr.mxu0 %v4375
        %5111 = vmatpush1.msra.mxu0 %v4374
        %5112 = vmatprep.subr.mxu0 %v4379
        %5113 = vmatpush1.msra.mxu0 %v4378
        %5114 = vmatprep.subr.mxu0 %v4383
        %5115 = vmatpush1.msra.mxu0 %v4382
        %5116 = vmatprep.subr.mxu0 %v4387
        %5117 = vmatpush1.msra.mxu0 %v4386
        %5118 = vmatprep.subr.mxu0 %v4391
        %5119 = vmatpush1.msra.mxu0 %v4390
        %5120 = vmatprep.subr.mxu0 %v4395
        %5121 = vmatpush1.msra.mxu0 %v4394
        %5122 = vmatprep.subr.mxu0 %v4399
        %5123 = vmatpush1.msra.mxu0 %v4398
        %5124 = vmatprep.subr.mxu0 %v4403
        %5125 = vmatpush1.msra.mxu0 %v4402
        %5126 = vmatprep.subr.mxu0 %v4407
        %5127 = vmatpush1.msra.mxu0 %v4406
        %5128 = vmatprep.subr.mxu0 %v4411
        %5129 = vmatpush1.msra.mxu0 %v4410
        %5130 = vmatprep.subr.mxu0 %v4415
        %5131 = vmatpush1.msra.mxu0 %v4414
        %5132 = vmatprep.subr.mxu0 %v4419
        %5133 = vmatpush1.msra.mxu0 %v4418
        %5134 = vmatprep.subr.mxu0 %v4423
        %5135 = vmatpush1.msra.mxu0 %v4422
        %5136 = vmatprep.subr.mxu0 %v4427
        %5137 = vmatpush1.msra.mxu0 %v4426
        %5138 = vmatprep.subr.mxu0 %v4431
        %5139 = vmatpush1.msra.mxu0 %v4430
        %5140 = vmatprep.mubr.f32.mxu0 %v4170
        %5141 = vmatmul.mubr.f32.gmra.mrb[0].mxu0 %v4168
        %v5142 = vpop.f32.mrb[0].mxu0
        %v5143 = vadd.f32 %v5066, %v5142
        %v5144 = vpop.f32.mrb[0].mxu0
        %v5145 = vadd.f32 %v5068, %v5144
        %5146 = vmatprep.mubr.f32.mxu0 %v4176
        %5147 = vmatmul.mubr.f32.gmra.mrb[0].mxu0 %v4174
        %v5148 = vpop.f32.mrb[0].mxu0
        %v5149 = vadd.f32 %v5072, %v5148
        %v5150 = vpop.f32.mrb[0].mxu0
        %v5151 = vadd.f32 %v5074, %v5150
        %5152 = vdwg.mxu0
        %5153 = vmatprep.subr.mxu0 %v4181
        %5154 = vmatpush1.msra.mxu0 %v4180
        %5155 = vmatprep.subr.mxu0 %v4185
        %5156 = vmatpush1.msra.mxu0 %v4184
        %5157 = vmatprep.subr.mxu0 %v4189
        %5158 = vmatpush1.msra.mxu0 %v4188
        %5159 = vmatprep.subr.mxu0 %v4193
        %5160 = vmatpush1.msra.mxu0 %v4192
        %5161 = vmatprep.subr.mxu0 %v4197
        %5162 = vmatpush1.msra.mxu0 %v4196
        %5163 = vmatprep.subr.mxu0 %v4201
        %5164 = vmatpush1.msra.mxu0 %v4200
        %5165 = vmatprep.subr.mxu0 %v4205
        %5166 = vmatpush1.msra.mxu0 %v4204
        %5167 = vmatprep.subr.mxu0 %v4209
        %5168 = vmatpush1.msra.mxu0 %v4208
        %5169 = vmatprep.subr.mxu0 %v4213
        %5170 = vmatpush1.msra.mxu0 %v4212
        %5171 = vmatprep.subr.mxu0 %v4217
        %5172 = vmatpush1.msra.mxu0 %v4216
        %5173 = vmatprep.subr.mxu0 %v4221
        %5174 = vmatpush1.msra.mxu0 %v4220
        %5175 = vmatprep.subr.mxu0 %v4225
        %5176 = vmatpush1.msra.mxu0 %v4224
        %5177 = vmatprep.subr.mxu0 %v4229
        %5178 = vmatpush1.msra.mxu0 %v4228
        %5179 = vmatprep.subr.mxu0 %v4233
        %5180 = vmatpush1.msra.mxu0 %v4232
        %5181 = vmatprep.subr.mxu0 %v4237
        %5182 = vmatpush1.msra.mxu0 %v4236
        %5183 = vmatprep.subr.mxu0 %v4241
        %5184 = vmatpush1.msra.mxu0 %v4240
        %5185 = vmatprep.subr.mxu0 %v4245
        %5186 = vmatpush1.msra.mxu0 %v4244
        %5187 = vmatprep.subr.mxu0 %v4249
        %5188 = vmatpush1.msra.mxu0 %v4248
        %5189 = vmatprep.subr.mxu0 %v4253
        %5190 = vmatpush1.msra.mxu0 %v4252
        %5191 = vmatprep.subr.mxu0 %v4257
        %5192 = vmatpush1.msra.mxu0 %v4256
        %5193 = vmatprep.subr.mxu0 %v4261
        %5194 = vmatpush1.msra.mxu0 %v4260
        %5195 = vmatprep.subr.mxu0 %v4265
        %5196 = vmatpush1.msra.mxu0 %v4264
        %5197 = vmatprep.subr.mxu0 %v4269
        %5198 = vmatpush1.msra.mxu0 %v4268
        %5199 = vmatprep.subr.mxu0 %v4273
        %5200 = vmatpush1.msra.mxu0 %v4272
        %5201 = vmatprep.subr.mxu0 %v4277
        %5202 = vmatpush1.msra.mxu0 %v4276
        %5203 = vmatprep.subr.mxu0 %v4281
        %5204 = vmatpush1.msra.mxu0 %v4280
        %5205 = vmatprep.subr.mxu0 %v4285
        %5206 = vmatpush1.msra.mxu0 %v4284
        %5207 = vmatprep.subr.mxu0 %v4289
        %5208 = vmatpush1.msra.mxu0 %v4288
        %5209 = vmatprep.subr.mxu0 %v4293
        %5210 = vmatpush1.msra.mxu0 %v4292
        %5211 = vmatprep.subr.mxu0 %v4297
        %5212 = vmatpush1.msra.mxu0 %v4296
        %5213 = vmatprep.subr.mxu0 %v4301
        %5214 = vmatpush1.msra.mxu0 %v4300
        %5215 = vmatprep.subr.mxu0 %v4305
        %5216 = vmatpush1.msra.mxu0 %v4304
        %5217 = vmatprep.mubr.f32.mxu0 %v4093
        %5218 = vmatmul.mubr.f32.gmra.mrb[0].mxu0 %v4091
        %v5219 = vpop.f32.mrb[0].mxu0
        %v5220 = vadd.f32 %v4989, %v5219
        %v5221 = vpop.f32.mrb[0].mxu0
        %v5222 = vadd.f32 %v4991, %v5221
        %5223 = vmatprep.mubr.f32.mxu0 %v4099
        %5224 = vmatmul.mubr.f32.gmra.mrb[0].mxu0 %v4097
        %v5225 = vpop.f32.mrb[0].mxu0
        %v5226 = vadd.f32 %v4995, %v5225
        %v5227 = vpop.f32.mrb[0].mxu0
        %v5228 = vadd.f32 %v4997, %v5227
        %5229 = vdwg.mxu0
        %5230 = vmatprep.subr.mxu0 %v4309
        %5231 = vmatpush1.msra.mxu0 %v4308
        %5232 = vmatprep.subr.mxu0 %v4313
        %5233 = vmatpush1.msra.mxu0 %v4312
        %5234 = vmatprep.subr.mxu0 %v4317
        %5235 = vmatpush1.msra.mxu0 %v4316
        %5236 = vmatprep.subr.mxu0 %v4321
        %5237 = vmatpush1.msra.mxu0 %v4320
        %5238 = vmatprep.subr.mxu0 %v4325
        %5239 = vmatpush1.msra.mxu0 %v4324
        %5240 = vmatprep.subr.mxu0 %v4329
        %5241 = vmatpush1.msra.mxu0 %v4328
        %5242 = vmatprep.subr.mxu0 %v4333
        %5243 = vmatpush1.msra.mxu0 %v4332
        %5244 = vmatprep.subr.mxu0 %v4337
        %5245 = vmatpush1.msra.mxu0 %v4336
        %5246 = vmatprep.subr.mxu0 %v4341
        %5247 = vmatpush1.msra.mxu0 %v4340
        %5248 = vmatprep.subr.mxu0 %v4345
        %5249 = vmatpush1.msra.mxu0 %v4344
        %5250 = vmatprep.subr.mxu0 %v4349
        %5251 = vmatpush1.msra.mxu0 %v4348
        %5252 = vmatprep.subr.mxu0 %v4353
        %5253 = vmatpush1.msra.mxu0 %v4352
        %5254 = vmatprep.subr.mxu0 %v4357
        %5255 = vmatpush1.msra.mxu0 %v4356
        %5256 = vmatprep.subr.mxu0 %v4361
        %5257 = vmatpush1.msra.mxu0 %v4360
        %5258 = vmatprep.subr.mxu0 %v4365
        %5259 = vmatpush1.msra.mxu0 %v4364
        %5260 = vmatprep.subr.mxu0 %v4369
        %5261 = vmatpush1.msra.mxu0 %v4368
        %5262 = vmatprep.subr.mxu0 %v4373
        %5263 = vmatpush1.msra.mxu0 %v4372
        %5264 = vmatprep.subr.mxu0 %v4377
        %5265 = vmatpush1.msra.mxu0 %v4376
        %5266 = vmatprep.subr.mxu0 %v4381
        %5267 = vmatpush1.msra.mxu0 %v4380
        %5268 = vmatprep.subr.mxu0 %v4385
        %5269 = vmatpush1.msra.mxu0 %v4384
        %5270 = vmatprep.subr.mxu0 %v4389
        %5271 = vmatpush1.msra.mxu0 %v4388
        %5272 = vmatprep.subr.mxu0 %v4393
        %5273 = vmatpush1.msra.mxu0 %v4392
        %5274 = vmatprep.subr.mxu0 %v4397
        %5275 = vmatpush1.msra.mxu0 %v4396
        %5276 = vmatprep.subr.mxu0 %v4401
        %5277 = vmatpush1.msra.mxu0 %v4400
        %5278 = vmatprep.subr.mxu0 %v4405
        %5279 = vmatpush1.msra.mxu0 %v4404
        %5280 = vmatprep.subr.mxu0 %v4409
        %5281 = vmatpush1.msra.mxu0 %v4408
        %5282 = vmatprep.subr.mxu0 %v4413
        %5283 = vmatpush1.msra.mxu0 %v4412
        %5284 = vmatprep.subr.mxu0 %v4417
        %5285 = vmatpush1.msra.mxu0 %v4416
        %5286 = vmatprep.subr.mxu0 %v4421
        %5287 = vmatpush1.msra.mxu0 %v4420
        %5288 = vmatprep.subr.mxu0 %v4425
        %5289 = vmatpush1.msra.mxu0 %v4424
        %5290 = vmatprep.subr.mxu0 %v4429
        %5291 = vmatpush1.msra.mxu0 %v4428
        %5292 = vmatprep.subr.mxu0 %v4433
        %5293 = vmatpush1.msra.mxu0 %v4432
        %5294 = vmatprep.mubr.f32.mxu0 %v4170
        %5295 = vmatmul.mubr.f32.gmra.mrb[0].mxu0 %v4168
        %v5296 = vpop.f32.mrb[0].mxu0
        %v5297 = vadd.f32 %v5220, %v5296
        %v5298 = vpop.f32.mrb[0].mxu0
        %v5299 = vadd.f32 %v5222, %v5298
        %5300 = vmatprep.mubr.f32.mxu0 %v4176
        %5301 = vmatmul.mubr.f32.gmra.mrb[0].mxu0 %v4174
        %v5302 = vpop.f32.mrb[0].mxu0
        %v5303 = vadd.f32 %v5226, %v5302
        %v5304 = vpop.f32.mrb[0].mxu0
        %v5305 = vadd.f32 %v5228, %v5304
        %5306 = vdwg.mxu0
        %s5307 = scalar_lea.vmem [#allocation16], 48
        %v5308 = vld [vmem:[%s5307] sm:$0xff]
        %v5309 = vld [vmem:[%s5307 + $0x8] sm:$0xff]
        %v5311 = vsel %vm4017, %v5308, 0
        %v5314 = vsel %vm4017, %v5309, 0
        %5316 = vmatprep.subr.mxu0 %v2243
        %5317 = vmatpush1.msra.mxu0 %v2242
        %5318 = vmatprep.subr.mxu0 %v2245
        %5319 = vmatpush1.msra.mxu0 %v2244
        %5320 = vmatprep.subr.mxu0 0.0
        %5321 = vmatpush1.msra.mxu0 0.0
        %5322 = vmatprep.subr.mxu0 0.0
        %5323 = vmatpush1.msra.mxu0 0.0
        %5324 = vmatprep.subr.mxu0 0.0
        %5325 = vmatpush1.msra.mxu0 0.0
        %5326 = vmatprep.subr.mxu0 0.0
        %5327 = vmatpush1.msra.mxu0 0.0
        %5328 = vmatprep.subr.mxu0 0.0
        %5329 = vmatpush1.msra.mxu0 0.0
        %5330 = vmatprep.subr.mxu0 0.0
        %5331 = vmatpush1.msra.mxu0 0.0
        %5332 = vmatprep.subr.mxu0 0.0
        %5333 = vmatpush1.msra.mxu0 0.0
        %5334 = vmatprep.subr.mxu0 0.0
        %5335 = vmatpush1.msra.mxu0 0.0
        %5336 = vmatprep.subr.mxu0 0.0
        %5337 = vmatpush1.msra.mxu0 0.0
        %5338 = vmatprep.subr.mxu0 0.0
        %5339 = vmatpush1.msra.mxu0 0.0
        %5340 = vmatprep.subr.mxu0 0.0
        %5341 = vmatpush1.msra.mxu0 0.0
        %5342 = vmatprep.subr.mxu0 0.0
        %5343 = vmatpush1.msra.mxu0 0.0
        %5344 = vmatprep.subr.mxu0 0.0
        %5345 = vmatpush1.msra.mxu0 0.0
        %5346 = vmatprep.subr.mxu0 0.0
        %5347 = vmatpush1.msra.mxu0 0.0
        %5348 = vmatprep.subr.mxu0 0.0
        %5349 = vmatpush1.msra.mxu0 0.0
        %5350 = vmatprep.subr.mxu0 0.0
        %5351 = vmatpush1.msra.mxu0 0.0
        %5352 = vmatprep.subr.mxu0 0.0
        %5353 = vmatpush1.msra.mxu0 0.0
        %5354 = vmatprep.subr.mxu0 0.0
        %5355 = vmatpush1.msra.mxu0 0.0
        %5356 = vmatprep.subr.mxu0 0.0
        %5357 = vmatpush1.msra.mxu0 0.0
        %5358 = vmatprep.subr.mxu0 0.0
        %5359 = vmatpush1.msra.mxu0 0.0
        %5360 = vmatprep.subr.mxu0 0.0
        %5361 = vmatpush1.msra.mxu0 0.0
        %5362 = vmatprep.subr.mxu0 0.0
        %5363 = vmatpush1.msra.mxu0 0.0
        %5364 = vmatprep.subr.mxu0 0.0
        %5365 = vmatpush1.msra.mxu0 0.0
        %5366 = vmatprep.subr.mxu0 0.0
        %5367 = vmatpush1.msra.mxu0 0.0
        %5368 = vmatprep.subr.mxu0 0.0
        %5369 = vmatpush1.msra.mxu0 0.0
        %5370 = vmatprep.subr.mxu0 0.0
        %5371 = vmatpush1.msra.mxu0 0.0
        %5372 = vmatprep.subr.mxu0 0.0
        %5373 = vmatpush1.msra.mxu0 0.0
        %5374 = vmatprep.subr.mxu0 0.0
        %5375 = vmatpush1.msra.mxu0 0.0
        %5376 = vmatprep.subr.mxu0 0.0
        %5377 = vmatpush1.msra.mxu0 0.0
        %5378 = vmatprep.subr.mxu0 0.0
        %5379 = vmatpush1.msra.mxu0 0.0
        %5380 = vmatprep.mubr.f32.mxu0 0.0
        %5381 = vmatmul.mubr.f32.gmra.mrb[0].mxu0 %v5311
        %v5382 = vpop.f32.mrb[0].mxu0
        %v5383 = vadd.f32 0.0, %v5382
        %v5384 = vpop.f32.mrb[0].mxu0
        %v5385 = vadd.f32 0.0, %v5384
        %5386 = vmatprep.mubr.f32.mxu0 0.0
        %5387 = vmatmul.mubr.f32.gmra.mrb[0].mxu0 %v5314
        %v5388 = vpop.f32.mrb[0].mxu0
        %v5389 = vadd.f32 0.0, %v5388
        %v5390 = vpop.f32.mrb[0].mxu0
        %v5391 = vadd.f32 0.0, %v5390
        %5392 = vdwg.mxu0
        %5393 = vmatprep.subr.mxu0 %v4011
        %5394 = vmatpush1.msra.mxu0 %v4010
        %5395 = vmatprep.subr.mxu0 %v4013
        %5396 = vmatpush1.msra.mxu0 %v4012
        %5397 = vmatprep.subr.mxu0 0.0
        %5398 = vmatpush1.msra.mxu0 0.0
        %5399 = vmatprep.subr.mxu0 0.0
        %5400 = vmatpush1.msra.mxu0 0.0
        %5401 = vmatprep.subr.mxu0 0.0
        %5402 = vmatpush1.msra.mxu0 0.0
        %5403 = vmatprep.subr.mxu0 0.0
        %5404 = vmatpush1.msra.mxu0 0.0
        %5405 = vmatprep.subr.mxu0 0.0
        %5406 = vmatpush1.msra.mxu0 0.0
        %5407 = vmatprep.subr.mxu0 0.0
        %5408 = vmatpush1.msra.mxu0 0.0
        %5409 = vmatprep.subr.mxu0 0.0
        %5410 = vmatpush1.msra.mxu0 0.0
        %5411 = vmatprep.subr.mxu0 0.0
        %5412 = vmatpush1.msra.mxu0 0.0
        %5413 = vmatprep.subr.mxu0 0.0
        %5414 = vmatpush1.msra.mxu0 0.0
        %5415 = vmatprep.subr.mxu0 0.0
        %5416 = vmatpush1.msra.mxu0 0.0
        %5417 = vmatprep.subr.mxu0 0.0
        %5418 = vmatpush1.msra.mxu0 0.0
        %5419 = vmatprep.subr.mxu0 0.0
        %5420 = vmatpush1.msra.mxu0 0.0
        %5421 = vmatprep.subr.mxu0 0.0
        %5422 = vmatpush1.msra.mxu0 0.0
        %5423 = vmatprep.subr.mxu0 0.0
        %5424 = vmatpush1.msra.mxu0 0.0
        %5425 = vmatprep.subr.mxu0 0.0
        %5426 = vmatpush1.msra.mxu0 0.0
        %5427 = vmatprep.subr.mxu0 0.0
        %5428 = vmatpush1.msra.mxu0 0.0
        %5429 = vmatprep.subr.mxu0 0.0
        %5430 = vmatpush1.msra.mxu0 0.0
        %5431 = vmatprep.subr.mxu0 0.0
        %5432 = vmatpush1.msra.mxu0 0.0
        %5433 = vmatprep.subr.mxu0 0.0
        %5434 = vmatpush1.msra.mxu0 0.0
        %5435 = vmatprep.subr.mxu0 0.0
        %5436 = vmatpush1.msra.mxu0 0.0
        %5437 = vmatprep.subr.mxu0 0.0
        %5438 = vmatpush1.msra.mxu0 0.0
        %5439 = vmatprep.subr.mxu0 0.0
        %5440 = vmatpush1.msra.mxu0 0.0
        %5441 = vmatprep.subr.mxu0 0.0
        %5442 = vmatpush1.msra.mxu0 0.0
        %5443 = vmatprep.subr.mxu0 0.0
        %5444 = vmatpush1.msra.mxu0 0.0
        %5445 = vmatprep.subr.mxu0 0.0
        %5446 = vmatpush1.msra.mxu0 0.0
        %5447 = vmatprep.subr.mxu0 0.0
        %5448 = vmatpush1.msra.mxu0 0.0
        %5449 = vmatprep.subr.mxu0 0.0
        %5450 = vmatpush1.msra.mxu0 0.0
        %5451 = vmatprep.subr.mxu0 0.0
        %5452 = vmatpush1.msra.mxu0 0.0
        %5453 = vmatprep.subr.mxu0 0.0
        %5454 = vmatpush1.msra.mxu0 0.0
        %5455 = vmatprep.subr.mxu0 0.0
        %5456 = vmatpush1.msra.mxu0 0.0
        %5457 = vmatprep.mubr.f32.mxu0 0.0
        %5458 = vmatmul.mubr.f32.gmra.mrb[0].mxu0 %v5311
        %v5459 = vpop.f32.mrb[0].mxu0
        %v5460 = vadd.f32 0.0, %v5459
        %v5461 = vpop.f32.mrb[0].mxu0
        %v5462 = vadd.f32 0.0, %v5461
        %5463 = vmatprep.mubr.f32.mxu0 0.0
        %5464 = vmatmul.mubr.f32.gmra.mrb[0].mxu0 %v5314
        %v5465 = vpop.f32.mrb[0].mxu0
        %v5466 = vadd.f32 0.0, %v5465
        %v5467 = vpop.f32.mrb[0].mxu0
        %v5468 = vadd.f32 0.0, %v5467
        %5469 = vdwg.mxu0
        %s5470 = scalar_lea.vmem [#allocation17], 4096
        %v5471 = vld [vmem:[%s5470] sm:$0xff]
        %v5472 = vld [vmem:[%s5470 + $0x8] sm:$0xff]
        %v5473 = vld [vmem:[%s5470 + $0x10] sm:$0xff]
        %v5474 = vld [vmem:[%s5470 + $0x18] sm:$0xff]
        %v5475 = vld [vmem:[%s5470 + $0x20] sm:$0xff]
        %v5476 = vld [vmem:[%s5470 + $0x28] sm:$0xff]
        %v5477 = vld [vmem:[%s5470 + $0x30] sm:$0xff]
        %v5478 = vld [vmem:[%s5470 + $0x38] sm:$0xff]
        %v5479 = vld [vmem:[%s5470 + $0x40] sm:$0xff]
        %v5480 = vld [vmem:[%s5470 + $0x48] sm:$0xff]
        %v5481 = vld [vmem:[%s5470 + $0x50] sm:$0xff]
        %v5482 = vld [vmem:[%s5470 + $0x58] sm:$0xff]
        %v5483 = vld [vmem:[%s5470 + $0x60] sm:$0xff]
        %v5484 = vld [vmem:[%s5470 + $0x68] sm:$0xff]
        %v5485 = vld [vmem:[%s5470 + $0x70] sm:$0xff]
        %v5486 = vld [vmem:[%s5470 + $0x78] sm:$0xff]
        %v5487 = vld [vmem:[%s5470 + $0x80] sm:$0xff]
        %v5488 = vld [vmem:[%s5470 + $0x88] sm:$0xff]
        %v5489 = vld [vmem:[%s5470 + $0x90] sm:$0xff]
        %v5490 = vld [vmem:[%s5470 + $0x98] sm:$0xff]
        %v5491 = vld [vmem:[%s5470 + $0xa0] sm:$0xff]
        %v5492 = vld [vmem:[%s5470 + $0xa8] sm:$0xff]
        %v5493 = vld [vmem:[%s5470 + $0xb0] sm:$0xff]
        %v5494 = vld [vmem:[%s5470 + $0xb8] sm:$0xff]
        %v5495 = vld [vmem:[%s5470 + $0xc0] sm:$0xff]
        %v5496 = vld [vmem:[%s5470 + $0xc8] sm:$0xff]
        %v5497 = vld [vmem:[%s5470 + $0xd0] sm:$0xff]
        %v5498 = vld [vmem:[%s5470 + $0xd8] sm:$0xff]
        %v5499 = vld [vmem:[%s5470 + $0xe0] sm:$0xff]
        %v5500 = vld [vmem:[%s5470 + $0xe8] sm:$0xff]
        %v5501 = vld [vmem:[%s5470 + $0xf0] sm:$0xff]
        %v5502 = vld [vmem:[%s5470 + $0xf8] sm:$0xff]
        %v5503 = vld [vmem:[%s5470 + $0x100] sm:$0xff]
        %v5504 = vld [vmem:[%s5470 + $0x108] sm:$0xff]
        %v5505 = vld [vmem:[%s5470 + $0x110] sm:$0xff]
        %v5506 = vld [vmem:[%s5470 + $0x118] sm:$0xff]
        %v5507 = vld [vmem:[%s5470 + $0x120] sm:$0xff]
        %v5508 = vld [vmem:[%s5470 + $0x128] sm:$0xff]
        %v5509 = vld [vmem:[%s5470 + $0x130] sm:$0xff]
        %v5510 = vld [vmem:[%s5470 + $0x138] sm:$0xff]
        %v5511 = vld [vmem:[%s5470 + $0x140] sm:$0xff]
        %v5512 = vld [vmem:[%s5470 + $0x148] sm:$0xff]
        %v5513 = vld [vmem:[%s5470 + $0x150] sm:$0xff]
        %v5514 = vld [vmem:[%s5470 + $0x158] sm:$0xff]
        %v5515 = vld [vmem:[%s5470 + $0x160] sm:$0xff]
        %v5516 = vld [vmem:[%s5470 + $0x168] sm:$0xff]
        %v5517 = vld [vmem:[%s5470 + $0x170] sm:$0xff]
        %v5518 = vld [vmem:[%s5470 + $0x178] sm:$0xff]
        %v5519 = vld [vmem:[%s5470 + $0x180] sm:$0xff]
        %v5520 = vld [vmem:[%s5470 + $0x188] sm:$0xff]
        %v5521 = vld [vmem:[%s5470 + $0x190] sm:$0xff]
        %v5522 = vld [vmem:[%s5470 + $0x198] sm:$0xff]
        %v5523 = vld [vmem:[%s5470 + $0x1a0] sm:$0xff]
        %v5524 = vld [vmem:[%s5470 + $0x1a8] sm:$0xff]
        %v5525 = vld [vmem:[%s5470 + $0x1b0] sm:$0xff]
        %v5526 = vld [vmem:[%s5470 + $0x1b8] sm:$0xff]
        %v5527 = vld [vmem:[%s5470 + $0x1c0] sm:$0xff]
        %v5528 = vld [vmem:[%s5470 + $0x1c8] sm:$0xff]
        %v5529 = vld [vmem:[%s5470 + $0x1d0] sm:$0xff]
        %v5530 = vld [vmem:[%s5470 + $0x1d8] sm:$0xff]
        %v5531 = vld [vmem:[%s5470 + $0x1e0] sm:$0xff]
        %v5532 = vld [vmem:[%s5470 + $0x1e8] sm:$0xff]
        %v5533 = vld [vmem:[%s5470 + $0x1f0] sm:$0xff]
        %v5534 = vld [vmem:[%s5470 + $0x1f8] sm:$0xff]
        %v5535 = vld [vmem:[%s5470 + $0x200] sm:$0xff]
        %v5536 = vld [vmem:[%s5470 + $0x208] sm:$0xff]
        %v5537 = vld [vmem:[%s5470 + $0x210] sm:$0xff]
        %v5538 = vld [vmem:[%s5470 + $0x218] sm:$0xff]
        %v5539 = vld [vmem:[%s5470 + $0x220] sm:$0xff]
        %v5540 = vld [vmem:[%s5470 + $0x228] sm:$0xff]
        %v5541 = vld [vmem:[%s5470 + $0x230] sm:$0xff]
        %v5542 = vld [vmem:[%s5470 + $0x238] sm:$0xff]
        %v5543 = vld [vmem:[%s5470 + $0x240] sm:$0xff]
        %v5544 = vld [vmem:[%s5470 + $0x248] sm:$0xff]
        %v5545 = vld [vmem:[%s5470 + $0x250] sm:$0xff]
        %v5546 = vld [vmem:[%s5470 + $0x258] sm:$0xff]
        %v5547 = vld [vmem:[%s5470 + $0x260] sm:$0xff]
        %v5548 = vld [vmem:[%s5470 + $0x268] sm:$0xff]
        %v5549 = vld [vmem:[%s5470 + $0x270] sm:$0xff]
        %v5550 = vld [vmem:[%s5470 + $0x278] sm:$0xff]
        %v5551 = vld [vmem:[%s5470 + $0x280] sm:$0xff]
        %v5552 = vld [vmem:[%s5470 + $0x288] sm:$0xff]
        %v5553 = vld [vmem:[%s5470 + $0x290] sm:$0xff]
        %v5554 = vld [vmem:[%s5470 + $0x298] sm:$0xff]
        %v5555 = vld [vmem:[%s5470 + $0x2a0] sm:$0xff]
        %v5556 = vld [vmem:[%s5470 + $0x2a8] sm:$0xff]
        %v5557 = vld [vmem:[%s5470 + $0x2b0] sm:$0xff]
        %v5558 = vld [vmem:[%s5470 + $0x2b8] sm:$0xff]
        %v5559 = vld [vmem:[%s5470 + $0x2c0] sm:$0xff]
        %v5560 = vld [vmem:[%s5470 + $0x2c8] sm:$0xff]
        %v5561 = vld [vmem:[%s5470 + $0x2d0] sm:$0xff]
        %v5562 = vld [vmem:[%s5470 + $0x2d8] sm:$0xff]
        %v5563 = vld [vmem:[%s5470 + $0x2e0] sm:$0xff]
        %v5564 = vld [vmem:[%s5470 + $0x2e8] sm:$0xff]
        %v5565 = vld [vmem:[%s5470 + $0x2f0] sm:$0xff]
        %v5566 = vld [vmem:[%s5470 + $0x2f8] sm:$0xff]
        %v5567 = vld [vmem:[%s5470 + $0x300] sm:$0xff]
        %v5568 = vld [vmem:[%s5470 + $0x308] sm:$0xff]
        %v5569 = vld [vmem:[%s5470 + $0x310] sm:$0xff]
        %v5570 = vld [vmem:[%s5470 + $0x318] sm:$0xff]
        %v5571 = vld [vmem:[%s5470 + $0x320] sm:$0xff]
        %v5572 = vld [vmem:[%s5470 + $0x328] sm:$0xff]
        %v5573 = vld [vmem:[%s5470 + $0x330] sm:$0xff]
        %v5574 = vld [vmem:[%s5470 + $0x338] sm:$0xff]
        %v5575 = vld [vmem:[%s5470 + $0x340] sm:$0xff]
        %v5576 = vld [vmem:[%s5470 + $0x348] sm:$0xff]
        %v5577 = vld [vmem:[%s5470 + $0x350] sm:$0xff]
        %v5578 = vld [vmem:[%s5470 + $0x358] sm:$0xff]
        %v5579 = vld [vmem:[%s5470 + $0x360] sm:$0xff]
        %v5580 = vld [vmem:[%s5470 + $0x368] sm:$0xff]
        %v5581 = vld [vmem:[%s5470 + $0x370] sm:$0xff]
        %v5582 = vld [vmem:[%s5470 + $0x378] sm:$0xff]
        %v5583 = vld [vmem:[%s5470 + $0x380] sm:$0xff]
        %v5584 = vld [vmem:[%s5470 + $0x388] sm:$0xff]
        %v5585 = vld [vmem:[%s5470 + $0x390] sm:$0xff]
        %v5586 = vld [vmem:[%s5470 + $0x398] sm:$0xff]
        %v5587 = vld [vmem:[%s5470 + $0x3a0] sm:$0xff]
        %v5588 = vld [vmem:[%s5470 + $0x3a8] sm:$0xff]
        %v5589 = vld [vmem:[%s5470 + $0x3b0] sm:$0xff]
        %v5590 = vld [vmem:[%s5470 + $0x3b8] sm:$0xff]
        %v5591 = vld [vmem:[%s5470 + $0x3c0] sm:$0xff]
        %v5592 = vld [vmem:[%s5470 + $0x3c8] sm:$0xff]
        %v5593 = vld [vmem:[%s5470 + $0x3d0] sm:$0xff]
        %v5594 = vld [vmem:[%s5470 + $0x3d8] sm:$0xff]
        %v5595 = vld [vmem:[%s5470 + $0x3e0] sm:$0xff]
        %v5596 = vld [vmem:[%s5470 + $0x3e8] sm:$0xff]
        %v5597 = vld [vmem:[%s5470 + $0x3f0] sm:$0xff]
        %v5598 = vld [vmem:[%s5470 + $0x3f8] sm:$0xff]
        %v5599 = vld [vmem:[%s5470 + $0x400] sm:$0xff]
        %v5600 = vld [vmem:[%s5470 + $0x408] sm:$0xff]
        %v5601 = vld [vmem:[%s5470 + $0x410] sm:$0xff]
        %v5602 = vld [vmem:[%s5470 + $0x418] sm:$0xff]
        %v5603 = vld [vmem:[%s5470 + $0x420] sm:$0xff]
        %v5604 = vld [vmem:[%s5470 + $0x428] sm:$0xff]
        %v5605 = vld [vmem:[%s5470 + $0x430] sm:$0xff]
        %v5606 = vld [vmem:[%s5470 + $0x438] sm:$0xff]
        %v5607 = vld [vmem:[%s5470 + $0x440] sm:$0xff]
        %v5608 = vld [vmem:[%s5470 + $0x448] sm:$0xff]
        %v5609 = vld [vmem:[%s5470 + $0x450] sm:$0xff]
        %v5610 = vld [vmem:[%s5470 + $0x458] sm:$0xff]
        %v5611 = vld [vmem:[%s5470 + $0x460] sm:$0xff]
        %v5612 = vld [vmem:[%s5470 + $0x468] sm:$0xff]
        %v5613 = vld [vmem:[%s5470 + $0x470] sm:$0xff]
        %v5614 = vld [vmem:[%s5470 + $0x478] sm:$0xff]
        %v5615 = vld [vmem:[%s5470 + $0x480] sm:$0xff]
        %v5616 = vld [vmem:[%s5470 + $0x488] sm:$0xff]
        %v5617 = vld [vmem:[%s5470 + $0x490] sm:$0xff]
        %v5618 = vld [vmem:[%s5470 + $0x498] sm:$0xff]
        %v5619 = vld [vmem:[%s5470 + $0x4a0] sm:$0xff]
        %v5620 = vld [vmem:[%s5470 + $0x4a8] sm:$0xff]
        %v5621 = vld [vmem:[%s5470 + $0x4b0] sm:$0xff]
        %v5622 = vld [vmem:[%s5470 + $0x4b8] sm:$0xff]
        %v5623 = vld [vmem:[%s5470 + $0x4c0] sm:$0xff]
        %v5624 = vld [vmem:[%s5470 + $0x4c8] sm:$0xff]
        %v5625 = vld [vmem:[%s5470 + $0x4d0] sm:$0xff]
        %v5626 = vld [vmem:[%s5470 + $0x4d8] sm:$0xff]
        %v5627 = vld [vmem:[%s5470 + $0x4e0] sm:$0xff]
        %v5628 = vld [vmem:[%s5470 + $0x4e8] sm:$0xff]
        %v5629 = vld [vmem:[%s5470 + $0x4f0] sm:$0xff]
        %v5630 = vld [vmem:[%s5470 + $0x4f8] sm:$0xff]
        %v5631 = vld [vmem:[%s5470 + $0x500] sm:$0xff]
        %v5632 = vld [vmem:[%s5470 + $0x508] sm:$0xff]
        %v5633 = vld [vmem:[%s5470 + $0x510] sm:$0xff]
        %v5634 = vld [vmem:[%s5470 + $0x518] sm:$0xff]
        %v5635 = vld [vmem:[%s5470 + $0x520] sm:$0xff]
        %v5636 = vld [vmem:[%s5470 + $0x528] sm:$0xff]
        %v5637 = vld [vmem:[%s5470 + $0x530] sm:$0xff]
        %v5638 = vld [vmem:[%s5470 + $0x538] sm:$0xff]
        %v5639 = vld [vmem:[%s5470 + $0x540] sm:$0xff]
        %v5640 = vld [vmem:[%s5470 + $0x548] sm:$0xff]
        %v5641 = vld [vmem:[%s5470 + $0x550] sm:$0xff]
        %v5642 = vld [vmem:[%s5470 + $0x558] sm:$0xff]
        %v5643 = vld [vmem:[%s5470 + $0x560] sm:$0xff]
        %v5644 = vld [vmem:[%s5470 + $0x568] sm:$0xff]
        %v5645 = vld [vmem:[%s5470 + $0x570] sm:$0xff]
        %v5646 = vld [vmem:[%s5470 + $0x578] sm:$0xff]
        %v5647 = vld [vmem:[%s5470 + $0x580] sm:$0xff]
        %v5648 = vld [vmem:[%s5470 + $0x588] sm:$0xff]
        %v5649 = vld [vmem:[%s5470 + $0x590] sm:$0xff]
        %v5650 = vld [vmem:[%s5470 + $0x598] sm:$0xff]
        %v5651 = vld [vmem:[%s5470 + $0x5a0] sm:$0xff]
        %v5652 = vld [vmem:[%s5470 + $0x5a8] sm:$0xff]
        %v5653 = vld [vmem:[%s5470 + $0x5b0] sm:$0xff]
        %v5654 = vld [vmem:[%s5470 + $0x5b8] sm:$0xff]
        %v5655 = vld [vmem:[%s5470 + $0x5c0] sm:$0xff]
        %v5656 = vld [vmem:[%s5470 + $0x5c8] sm:$0xff]
        %v5657 = vld [vmem:[%s5470 + $0x5d0] sm:$0xff]
        %v5658 = vld [vmem:[%s5470 + $0x5d8] sm:$0xff]
        %v5659 = vld [vmem:[%s5470 + $0x5e0] sm:$0xff]
        %v5660 = vld [vmem:[%s5470 + $0x5e8] sm:$0xff]
        %v5661 = vld [vmem:[%s5470 + $0x5f0] sm:$0xff]
        %v5662 = vld [vmem:[%s5470 + $0x5f8] sm:$0xff]
        %v5663 = vld [vmem:[%s5470 + $0x600] sm:$0xff]
        %v5664 = vld [vmem:[%s5470 + $0x608] sm:$0xff]
        %v5665 = vld [vmem:[%s5470 + $0x610] sm:$0xff]
        %v5666 = vld [vmem:[%s5470 + $0x618] sm:$0xff]
        %v5667 = vld [vmem:[%s5470 + $0x620] sm:$0xff]
        %v5668 = vld [vmem:[%s5470 + $0x628] sm:$0xff]
        %v5669 = vld [vmem:[%s5470 + $0x630] sm:$0xff]
        %v5670 = vld [vmem:[%s5470 + $0x638] sm:$0xff]
        %v5671 = vld [vmem:[%s5470 + $0x640] sm:$0xff]
        %v5672 = vld [vmem:[%s5470 + $0x648] sm:$0xff]
        %v5673 = vld [vmem:[%s5470 + $0x650] sm:$0xff]
        %v5674 = vld [vmem:[%s5470 + $0x658] sm:$0xff]
        %v5675 = vld [vmem:[%s5470 + $0x660] sm:$0xff]
        %v5676 = vld [vmem:[%s5470 + $0x668] sm:$0xff]
        %v5677 = vld [vmem:[%s5470 + $0x670] sm:$0xff]
        %v5678 = vld [vmem:[%s5470 + $0x678] sm:$0xff]
        %v5679 = vld [vmem:[%s5470 + $0x680] sm:$0xff]
        %v5680 = vld [vmem:[%s5470 + $0x688] sm:$0xff]
        %v5681 = vld [vmem:[%s5470 + $0x690] sm:$0xff]
        %v5682 = vld [vmem:[%s5470 + $0x698] sm:$0xff]
        %v5683 = vld [vmem:[%s5470 + $0x6a0] sm:$0xff]
        %v5684 = vld [vmem:[%s5470 + $0x6a8] sm:$0xff]
        %v5685 = vld [vmem:[%s5470 + $0x6b0] sm:$0xff]
        %v5686 = vld [vmem:[%s5470 + $0x6b8] sm:$0xff]
        %v5687 = vld [vmem:[%s5470 + $0x6c0] sm:$0xff]
        %v5688 = vld [vmem:[%s5470 + $0x6c8] sm:$0xff]
        %v5689 = vld [vmem:[%s5470 + $0x6d0] sm:$0xff]
        %v5690 = vld [vmem:[%s5470 + $0x6d8] sm:$0xff]
        %v5691 = vld [vmem:[%s5470 + $0x6e0] sm:$0xff]
        %v5692 = vld [vmem:[%s5470 + $0x6e8] sm:$0xff]
        %v5693 = vld [vmem:[%s5470 + $0x6f0] sm:$0xff]
        %v5694 = vld [vmem:[%s5470 + $0x6f8] sm:$0xff]
        %v5695 = vld [vmem:[%s5470 + $0x700] sm:$0xff]
        %v5696 = vld [vmem:[%s5470 + $0x708] sm:$0xff]
        %v5697 = vld [vmem:[%s5470 + $0x710] sm:$0xff]
        %v5698 = vld [vmem:[%s5470 + $0x718] sm:$0xff]
        %v5699 = vld [vmem:[%s5470 + $0x720] sm:$0xff]
        %v5700 = vld [vmem:[%s5470 + $0x728] sm:$0xff]
        %v5701 = vld [vmem:[%s5470 + $0x730] sm:$0xff]
        %v5702 = vld [vmem:[%s5470 + $0x738] sm:$0xff]
        %v5703 = vld [vmem:[%s5470 + $0x740] sm:$0xff]
        %v5704 = vld [vmem:[%s5470 + $0x748] sm:$0xff]
        %v5705 = vld [vmem:[%s5470 + $0x750] sm:$0xff]
        %v5706 = vld [vmem:[%s5470 + $0x758] sm:$0xff]
        %v5707 = vld [vmem:[%s5470 + $0x760] sm:$0xff]
        %v5708 = vld [vmem:[%s5470 + $0x768] sm:$0xff]
        %v5709 = vld [vmem:[%s5470 + $0x770] sm:$0xff]
        %v5710 = vld [vmem:[%s5470 + $0x778] sm:$0xff]
        %v5711 = vld [vmem:[%s5470 + $0x780] sm:$0xff]
        %v5712 = vld [vmem:[%s5470 + $0x788] sm:$0xff]
        %v5713 = vld [vmem:[%s5470 + $0x790] sm:$0xff]
        %v5714 = vld [vmem:[%s5470 + $0x798] sm:$0xff]
        %v5715 = vld [vmem:[%s5470 + $0x7a0] sm:$0xff]
        %v5716 = vld [vmem:[%s5470 + $0x7a8] sm:$0xff]
        %v5717 = vld [vmem:[%s5470 + $0x7b0] sm:$0xff]
        %v5718 = vld [vmem:[%s5470 + $0x7b8] sm:$0xff]
        %v5719 = vld [vmem:[%s5470 + $0x7c0] sm:$0xff]
        %v5720 = vld [vmem:[%s5470 + $0x7c8] sm:$0xff]
        %v5721 = vld [vmem:[%s5470 + $0x7d0] sm:$0xff]
        %v5722 = vld [vmem:[%s5470 + $0x7d8] sm:$0xff]
        %v5723 = vld [vmem:[%s5470 + $0x7e0] sm:$0xff]
        %v5724 = vld [vmem:[%s5470 + $0x7e8] sm:$0xff]
        %v5725 = vld [vmem:[%s5470 + $0x7f0] sm:$0xff]
        %v5726 = vld [vmem:[%s5470 + $0x7f8] sm:$0xff]
        %5727 = vmatprep.subr.mxu0 %v5472
        %5728 = vmatpush1.msra.mxu0 %v5471
        %5729 = vmatprep.subr.mxu0 %v5476
        %5730 = vmatpush1.msra.mxu0 %v5475
        %5731 = vmatprep.subr.mxu0 %v5480
        %5732 = vmatpush1.msra.mxu0 %v5479
        %5733 = vmatprep.subr.mxu0 %v5484
        %5734 = vmatpush1.msra.mxu0 %v5483
        %5735 = vmatprep.subr.mxu0 %v5488
        %5736 = vmatpush1.msra.mxu0 %v5487
        %5737 = vmatprep.subr.mxu0 %v5492
        %5738 = vmatpush1.msra.mxu0 %v5491
        %5739 = vmatprep.subr.mxu0 %v5496
        %5740 = vmatpush1.msra.mxu0 %v5495
        %5741 = vmatprep.subr.mxu0 %v5500
        %5742 = vmatpush1.msra.mxu0 %v5499
        %5743 = vmatprep.subr.mxu0 %v5504
        %5744 = vmatpush1.msra.mxu0 %v5503
        %5745 = vmatprep.subr.mxu0 %v5508
        %5746 = vmatpush1.msra.mxu0 %v5507
        %5747 = vmatprep.subr.mxu0 %v5512
        %5748 = vmatpush1.msra.mxu0 %v5511
        %5749 = vmatprep.subr.mxu0 %v5516
        %5750 = vmatpush1.msra.mxu0 %v5515
        %5751 = vmatprep.subr.mxu0 %v5520
        %5752 = vmatpush1.msra.mxu0 %v5519
        %5753 = vmatprep.subr.mxu0 %v5524
        %5754 = vmatpush1.msra.mxu0 %v5523
        %5755 = vmatprep.subr.mxu0 %v5528
        %5756 = vmatpush1.msra.mxu0 %v5527
        %5757 = vmatprep.subr.mxu0 %v5532
        %5758 = vmatpush1.msra.mxu0 %v5531
        %5759 = vmatprep.subr.mxu0 %v5536
        %5760 = vmatpush1.msra.mxu0 %v5535
        %5761 = vmatprep.subr.mxu0 %v5540
        %5762 = vmatpush1.msra.mxu0 %v5539
        %5763 = vmatprep.subr.mxu0 %v5544
        %5764 = vmatpush1.msra.mxu0 %v5543
        %5765 = vmatprep.subr.mxu0 %v5548
        %5766 = vmatpush1.msra.mxu0 %v5547
        %5767 = vmatprep.subr.mxu0 %v5552
        %5768 = vmatpush1.msra.mxu0 %v5551
        %5769 = vmatprep.subr.mxu0 %v5556
        %5770 = vmatpush1.msra.mxu0 %v5555
        %5771 = vmatprep.subr.mxu0 %v5560
        %5772 = vmatpush1.msra.mxu0 %v5559
        %5773 = vmatprep.subr.mxu0 %v5564
        %5774 = vmatpush1.msra.mxu0 %v5563
        %5775 = vmatprep.subr.mxu0 %v5568
        %5776 = vmatpush1.msra.mxu0 %v5567
        %5777 = vmatprep.subr.mxu0 %v5572
        %5778 = vmatpush1.msra.mxu0 %v5571
        %5779 = vmatprep.subr.mxu0 %v5576
        %5780 = vmatpush1.msra.mxu0 %v5575
        %5781 = vmatprep.subr.mxu0 %v5580
        %5782 = vmatpush1.msra.mxu0 %v5579
        %5783 = vmatprep.subr.mxu0 %v5584
        %5784 = vmatpush1.msra.mxu0 %v5583
        %5785 = vmatprep.subr.mxu0 %v5588
        %5786 = vmatpush1.msra.mxu0 %v5587
        %5787 = vmatprep.subr.mxu0 %v5592
        %5788 = vmatpush1.msra.mxu0 %v5591
        %5789 = vmatprep.subr.mxu0 %v5596
        %5790 = vmatpush1.msra.mxu0 %v5595
        %5791 = vmatprep.mubr.f32.mxu0 %v5385
        %5792 = vmatmul.mubr.f32.gmra.mrb[0].mxu0 %v5383
        %v5793 = vpop.f32.mrb[0].mxu0
        %v5794 = vadd.f32 0.0, %v5793
        %v5795 = vpop.f32.mrb[0].mxu0
        %v5796 = vadd.f32 0.0, %v5795
        %5797 = vmatprep.mubr.f32.mxu0 %v5391
        %5798 = vmatmul.mubr.f32.gmra.mrb[0].mxu0 %v5389
        %v5799 = vpop.f32.mrb[0].mxu0
        %v5800 = vadd.f32 0.0, %v5799
        %v5801 = vpop.f32.mrb[0].mxu0
        %v5802 = vadd.f32 0.0, %v5801
        %5803 = vdwg.mxu0
        %5804 = vmatprep.subr.mxu0 %v5600
        %5805 = vmatpush1.msra.mxu0 %v5599
        %5806 = vmatprep.subr.mxu0 %v5604
        %5807 = vmatpush1.msra.mxu0 %v5603
        %5808 = vmatprep.subr.mxu0 %v5608
        %5809 = vmatpush1.msra.mxu0 %v5607
        %5810 = vmatprep.subr.mxu0 %v5612
        %5811 = vmatpush1.msra.mxu0 %v5611
        %5812 = vmatprep.subr.mxu0 %v5616
        %5813 = vmatpush1.msra.mxu0 %v5615
        %5814 = vmatprep.subr.mxu0 %v5620
        %5815 = vmatpush1.msra.mxu0 %v5619
        %5816 = vmatprep.subr.mxu0 %v5624
        %5817 = vmatpush1.msra.mxu0 %v5623
        %5818 = vmatprep.subr.mxu0 %v5628
        %5819 = vmatpush1.msra.mxu0 %v5627
        %5820 = vmatprep.subr.mxu0 %v5632
        %5821 = vmatpush1.msra.mxu0 %v5631
        %5822 = vmatprep.subr.mxu0 %v5636
        %5823 = vmatpush1.msra.mxu0 %v5635
        %5824 = vmatprep.subr.mxu0 %v5640
        %5825 = vmatpush1.msra.mxu0 %v5639
        %5826 = vmatprep.subr.mxu0 %v5644
        %5827 = vmatpush1.msra.mxu0 %v5643
        %5828 = vmatprep.subr.mxu0 %v5648
        %5829 = vmatpush1.msra.mxu0 %v5647
        %5830 = vmatprep.subr.mxu0 %v5652
        %5831 = vmatpush1.msra.mxu0 %v5651
        %5832 = vmatprep.subr.mxu0 %v5656
        %5833 = vmatpush1.msra.mxu0 %v5655
        %5834 = vmatprep.subr.mxu0 %v5660
        %5835 = vmatpush1.msra.mxu0 %v5659
        %5836 = vmatprep.subr.mxu0 %v5664
        %5837 = vmatpush1.msra.mxu0 %v5663
        %5838 = vmatprep.subr.mxu0 %v5668
        %5839 = vmatpush1.msra.mxu0 %v5667
        %5840 = vmatprep.subr.mxu0 %v5672
        %5841 = vmatpush1.msra.mxu0 %v5671
        %5842 = vmatprep.subr.mxu0 %v5676
        %5843 = vmatpush1.msra.mxu0 %v5675
        %5844 = vmatprep.subr.mxu0 %v5680
        %5845 = vmatpush1.msra.mxu0 %v5679
        %5846 = vmatprep.subr.mxu0 %v5684
        %5847 = vmatpush1.msra.mxu0 %v5683
        %5848 = vmatprep.subr.mxu0 %v5688
        %5849 = vmatpush1.msra.mxu0 %v5687
        %5850 = vmatprep.subr.mxu0 %v5692
        %5851 = vmatpush1.msra.mxu0 %v5691
        %5852 = vmatprep.subr.mxu0 %v5696
        %5853 = vmatpush1.msra.mxu0 %v5695
        %5854 = vmatprep.subr.mxu0 %v5700
        %5855 = vmatpush1.msra.mxu0 %v5699
        %5856 = vmatprep.subr.mxu0 %v5704
        %5857 = vmatpush1.msra.mxu0 %v5703
        %5858 = vmatprep.subr.mxu0 %v5708
        %5859 = vmatpush1.msra.mxu0 %v5707
        %5860 = vmatprep.subr.mxu0 %v5712
        %5861 = vmatpush1.msra.mxu0 %v5711
        %5862 = vmatprep.subr.mxu0 %v5716
        %5863 = vmatpush1.msra.mxu0 %v5715
        %5864 = vmatprep.subr.mxu0 %v5720
        %5865 = vmatpush1.msra.mxu0 %v5719
        %5866 = vmatprep.subr.mxu0 %v5724
        %5867 = vmatpush1.msra.mxu0 %v5723
        %5868 = vmatprep.mubr.f32.mxu0 %v5462
        %5869 = vmatmul.mubr.f32.gmra.mrb[0].mxu0 %v5460
        %v5870 = vpop.f32.mrb[0].mxu0
        %v5871 = vadd.f32 %v5794, %v5870
        %v5872 = vpop.f32.mrb[0].mxu0
        %v5873 = vadd.f32 %v5796, %v5872
        %5874 = vmatprep.mubr.f32.mxu0 %v5468
        %5875 = vmatmul.mubr.f32.gmra.mrb[0].mxu0 %v5466
        %v5876 = vpop.f32.mrb[0].mxu0
        %v5877 = vadd.f32 %v5800, %v5876
        %v5878 = vpop.f32.mrb[0].mxu0
        %v5879 = vadd.f32 %v5802, %v5878
        %5880 = vdwg.mxu0
        %5881 = vmatprep.subr.mxu0 %v5474
        %5882 = vmatpush1.msra.mxu0 %v5473
        %5883 = vmatprep.subr.mxu0 %v5478
        %5884 = vmatpush1.msra.mxu0 %v5477
        %5885 = vmatprep.subr.mxu0 %v5482
        %5886 = vmatpush1.msra.mxu0 %v5481
        %5887 = vmatprep.subr.mxu0 %v5486
        %5888 = vmatpush1.msra.mxu0 %v5485
        %5889 = vmatprep.subr.mxu0 %v5490
        %5890 = vmatpush1.msra.mxu0 %v5489
        %5891 = vmatprep.subr.mxu0 %v5494
        %5892 = vmatpush1.msra.mxu0 %v5493
        %5893 = vmatprep.subr.mxu0 %v5498
        %5894 = vmatpush1.msra.mxu0 %v5497
        %5895 = vmatprep.subr.mxu0 %v5502
        %5896 = vmatpush1.msra.mxu0 %v5501
        %5897 = vmatprep.subr.mxu0 %v5506
        %5898 = vmatpush1.msra.mxu0 %v5505
        %5899 = vmatprep.subr.mxu0 %v5510
        %5900 = vmatpush1.msra.mxu0 %v5509
        %5901 = vmatprep.subr.mxu0 %v5514
        %5902 = vmatpush1.msra.mxu0 %v5513
        %5903 = vmatprep.subr.mxu0 %v5518
        %5904 = vmatpush1.msra.mxu0 %v5517
        %5905 = vmatprep.subr.mxu0 %v5522
        %5906 = vmatpush1.msra.mxu0 %v5521
        %5907 = vmatprep.subr.mxu0 %v5526
        %5908 = vmatpush1.msra.mxu0 %v5525
        %5909 = vmatprep.subr.mxu0 %v5530
        %5910 = vmatpush1.msra.mxu0 %v5529
        %5911 = vmatprep.subr.mxu0 %v5534
        %5912 = vmatpush1.msra.mxu0 %v5533
        %5913 = vmatprep.subr.mxu0 %v5538
        %5914 = vmatpush1.msra.mxu0 %v5537
        %5915 = vmatprep.subr.mxu0 %v5542
        %5916 = vmatpush1.msra.mxu0 %v5541
        %5917 = vmatprep.subr.mxu0 %v5546
        %5918 = vmatpush1.msra.mxu0 %v5545
        %5919 = vmatprep.subr.mxu0 %v5550
        %5920 = vmatpush1.msra.mxu0 %v5549
        %5921 = vmatprep.subr.mxu0 %v5554
        %5922 = vmatpush1.msra.mxu0 %v5553
        %5923 = vmatprep.subr.mxu0 %v5558
        %5924 = vmatpush1.msra.mxu0 %v5557
        %5925 = vmatprep.subr.mxu0 %v5562
        %5926 = vmatpush1.msra.mxu0 %v5561
        %5927 = vmatprep.subr.mxu0 %v5566
        %5928 = vmatpush1.msra.mxu0 %v5565
        %5929 = vmatprep.subr.mxu0 %v5570
        %5930 = vmatpush1.msra.mxu0 %v5569
        %5931 = vmatprep.subr.mxu0 %v5574
        %5932 = vmatpush1.msra.mxu0 %v5573
        %5933 = vmatprep.subr.mxu0 %v5578
        %5934 = vmatpush1.msra.mxu0 %v5577
        %5935 = vmatprep.subr.mxu0 %v5582
        %5936 = vmatpush1.msra.mxu0 %v5581
        %5937 = vmatprep.subr.mxu0 %v5586
        %5938 = vmatpush1.msra.mxu0 %v5585
        %5939 = vmatprep.subr.mxu0 %v5590
        %5940 = vmatpush1.msra.mxu0 %v5589
        %5941 = vmatprep.subr.mxu0 %v5594
        %5942 = vmatpush1.msra.mxu0 %v5593
        %5943 = vmatprep.subr.mxu0 %v5598
        %5944 = vmatpush1.msra.mxu0 %v5597
        %5945 = vmatprep.mubr.f32.mxu0 %v5385
        %5946 = vmatmul.mubr.f32.gmra.mrb[0].mxu0 %v5383
        %v5947 = vpop.f32.mrb[0].mxu0
        %v5948 = vadd.f32 0.0, %v5947
        %v5949 = vpop.f32.mrb[0].mxu0
        %v5950 = vadd.f32 0.0, %v5949
        %5951 = vmatprep.mubr.f32.mxu0 %v5391
        %5952 = vmatmul.mubr.f32.gmra.mrb[0].mxu0 %v5389
        %v5953 = vpop.f32.mrb[0].mxu0
        %v5954 = vadd.f32 0.0, %v5953
        %v5955 = vpop.f32.mrb[0].mxu0
        %v5956 = vadd.f32 0.0, %v5955
        %5957 = vdwg.mxu0
        %5958 = vmatprep.subr.mxu0 %v5602
        %5959 = vmatpush1.msra.mxu0 %v5601
        %5960 = vmatprep.subr.mxu0 %v5606
        %5961 = vmatpush1.msra.mxu0 %v5605
        %5962 = vmatprep.subr.mxu0 %v5610
        %5963 = vmatpush1.msra.mxu0 %v5609
        %5964 = vmatprep.subr.mxu0 %v5614
        %5965 = vmatpush1.msra.mxu0 %v5613
        %5966 = vmatprep.subr.mxu0 %v5618
        %5967 = vmatpush1.msra.mxu0 %v5617
        %5968 = vmatprep.subr.mxu0 %v5622
        %5969 = vmatpush1.msra.mxu0 %v5621
        %5970 = vmatprep.subr.mxu0 %v5626
        %5971 = vmatpush1.msra.mxu0 %v5625
        %5972 = vmatprep.subr.mxu0 %v5630
        %5973 = vmatpush1.msra.mxu0 %v5629
        %5974 = vmatprep.subr.mxu0 %v5634
        %5975 = vmatpush1.msra.mxu0 %v5633
        %5976 = vmatprep.subr.mxu0 %v5638
        %5977 = vmatpush1.msra.mxu0 %v5637
        %5978 = vmatprep.subr.mxu0 %v5642
        %5979 = vmatpush1.msra.mxu0 %v5641
        %5980 = vmatprep.subr.mxu0 %v5646
        %5981 = vmatpush1.msra.mxu0 %v5645
        %5982 = vmatprep.subr.mxu0 %v5650
        %5983 = vmatpush1.msra.mxu0 %v5649
        %5984 = vmatprep.subr.mxu0 %v5654
        %5985 = vmatpush1.msra.mxu0 %v5653
        %5986 = vmatprep.subr.mxu0 %v5658
        %5987 = vmatpush1.msra.mxu0 %v5657
        %5988 = vmatprep.subr.mxu0 %v5662
        %5989 = vmatpush1.msra.mxu0 %v5661
        %5990 = vmatprep.subr.mxu0 %v5666
        %5991 = vmatpush1.msra.mxu0 %v5665
        %5992 = vmatprep.subr.mxu0 %v5670
        %5993 = vmatpush1.msra.mxu0 %v5669
        %5994 = vmatprep.subr.mxu0 %v5674
        %5995 = vmatpush1.msra.mxu0 %v5673
        %5996 = vmatprep.subr.mxu0 %v5678
        %5997 = vmatpush1.msra.mxu0 %v5677
        %5998 = vmatprep.subr.mxu0 %v5682
        %5999 = vmatpush1.msra.mxu0 %v5681
        %6000 = vmatprep.subr.mxu0 %v5686
        %6001 = vmatpush1.msra.mxu0 %v5685
        %6002 = vmatprep.subr.mxu0 %v5690
        %6003 = vmatpush1.msra.mxu0 %v5689
        %6004 = vmatprep.subr.mxu0 %v5694
        %6005 = vmatpush1.msra.mxu0 %v5693
        %6006 = vmatprep.subr.mxu0 %v5698
        %6007 = vmatpush1.msra.mxu0 %v5697
        %6008 = vmatprep.subr.mxu0 %v5702
        %6009 = vmatpush1.msra.mxu0 %v5701
        %6010 = vmatprep.subr.mxu0 %v5706
        %6011 = vmatpush1.msra.mxu0 %v5705
        %6012 = vmatprep.subr.mxu0 %v5710
        %6013 = vmatpush1.msra.mxu0 %v5709
        %6014 = vmatprep.subr.mxu0 %v5714
        %6015 = vmatpush1.msra.mxu0 %v5713
        %6016 = vmatprep.subr.mxu0 %v5718
        %6017 = vmatpush1.msra.mxu0 %v5717
        %6018 = vmatprep.subr.mxu0 %v5722
        %6019 = vmatpush1.msra.mxu0 %v5721
        %6020 = vmatprep.subr.mxu0 %v5726
        %6021 = vmatpush1.msra.mxu0 %v5725
        %6022 = vmatprep.mubr.f32.mxu0 %v5462
        %6023 = vmatmul.mubr.f32.gmra.mrb[0].mxu0 %v5460
        %v6024 = vpop.f32.mrb[0].mxu0
        %v6025 = vadd.f32 %v5948, %v6024
        %v6026 = vpop.f32.mrb[0].mxu0
        %v6027 = vadd.f32 %v5950, %v6026
        %6028 = vmatprep.mubr.f32.mxu0 %v5468
        %6029 = vmatmul.mubr.f32.gmra.mrb[0].mxu0 %v5466
        %v6030 = vpop.f32.mrb[0].mxu0
        %v6031 = vadd.f32 %v5954, %v6030
        %v6032 = vpop.f32.mrb[0].mxu0
        %v6033 = vadd.f32 %v5956, %v6032
        %6034 = vdwg.mxu0
        %v6035 = vadd.f32 %v5143, %v5871
        %v6036 = vadd.f32 %v5145, %v5873
        %v6037 = vadd.f32 %v5297, %v6025
        %v6038 = vadd.f32 %v5299, %v6027
        %v6039 = vadd.f32 %v5149, %v5877
        %v6040 = vadd.f32 %v5151, %v5879
        %v6041 = vadd.f32 %v5303, %v6031
        %v6042 = vadd.f32 %v5305, %v6033
        %v6043 = vadd.f32 %v6035, %v2220
        %v6044 = vadd.f32 %v6036, %v2221
        %v6045 = vadd.f32 %v6037, %v3988
        %v6046 = vadd.f32 %v6038, %v3989
        %v6047 = vadd.f32 %v6039, %v2224
        %v6048 = vadd.f32 %v6040, %v2225
        %v6049 = vadd.f32 %v6041, %v3992
        %v6050 = vadd.f32 %v6042, %v3993
        %v6051 = vld [vmem:[#allocation19] sm:$0xf]
        %v6053 = vlaneseq
        %v6054 = vshrl.u32 %v6053, 7
        %v6055 = vsub.s32 0, %v6054
        %v6056 = vrot.slane %v6051, %v6055
        %v6057 = vlaneseq
        %v6058 = vshrl.u32 %v6057, 7
        %v6059 = vsub.s32 1, %v6058
        %v6060 = vrot.slane %v6051, %v6059
        %v6061 = vlaneseq
        %v6062 = vshrl.u32 %v6061, 7
        %v6063 = vsub.s32 2, %v6062
        %v6064 = vrot.slane %v6051, %v6063
        %v6065 = vlaneseq
        %v6066 = vshrl.u32 %v6065, 7
        %v6067 = vsub.s32 3, %v6066
        %v6068 = vrot.slane %v6051, %v6067
        %v6073 = vadd.f32 %v6043, %v6056
        %v6074 = vadd.f32 %v6044, %v6060
        %v6075 = vadd.f32 %v6045, %v6064
        %v6076 = vadd.f32 %v6046, %v6068
        %v6077 = vadd.f32 %v6047, %v6056
        %v6078 = vadd.f32 %v6048, %v6060
        %v6079 = vadd.f32 %v6049, %v6064
        %v6080 = vadd.f32 %v6050, %v6068
        %v6081 = vmax.f32 %v6073, 0.0
        %v6082 = vmax.f32 %v6074, 0.0
        %v6083 = vmax.f32 %v6075, 0.0
        %v6084 = vmax.f32 %v6076, 0.0
        %v6085 = vmax.f32 %v6077, 0.0
        %v6086 = vmax.f32 %v6078, 0.0
        %v6087 = vmax.f32 %v6079, 0.0
        %v6088 = vmax.f32 %v6080, 0.0
        %v6089 = vld [vmem:[#allocation16] sm:$0xff]
        %v6090 = vld [vmem:[#allocation16 + $0x8] sm:$0xff]
        %v6092 = vsel %vm4017, %v6089, 0
        %v6095 = vsel %vm4017, %v6090, 0
        %6097 = vmatprep.subr.mxu0 %v6082
        %6098 = vmatpush1.msra.mxu0 %v6081
        %6099 = vmatprep.subr.mxu0 %v6086
        %6100 = vmatpush1.msra.mxu0 %v6085
        %6101 = vmatprep.subr.mxu0 0.0
        %6102 = vmatpush1.msra.mxu0 0.0
        %6103 = vmatprep.subr.mxu0 0.0
        %6104 = vmatpush1.msra.mxu0 0.0
        %6105 = vmatprep.subr.mxu0 0.0
        %6106 = vmatpush1.msra.mxu0 0.0
        %6107 = vmatprep.subr.mxu0 0.0
        %6108 = vmatpush1.msra.mxu0 0.0
        %6109 = vmatprep.subr.mxu0 0.0
        %6110 = vmatpush1.msra.mxu0 0.0
        %6111 = vmatprep.subr.mxu0 0.0
        %6112 = vmatpush1.msra.mxu0 0.0
        %6113 = vmatprep.subr.mxu0 0.0
        %6114 = vmatpush1.msra.mxu0 0.0
        %6115 = vmatprep.subr.mxu0 0.0
        %6116 = vmatpush1.msra.mxu0 0.0
        %6117 = vmatprep.subr.mxu0 0.0
        %6118 = vmatpush1.msra.mxu0 0.0
        %6119 = vmatprep.subr.mxu0 0.0
        %6120 = vmatpush1.msra.mxu0 0.0
        %6121 = vmatprep.subr.mxu0 0.0
        %6122 = vmatpush1.msra.mxu0 0.0
        %6123 = vmatprep.subr.mxu0 0.0
        %6124 = vmatpush1.msra.mxu0 0.0
        %6125 = vmatprep.subr.mxu0 0.0
        %6126 = vmatpush1.msra.mxu0 0.0
        %6127 = vmatprep.subr.mxu0 0.0
        %6128 = vmatpush1.msra.mxu0 0.0
        %6129 = vmatprep.subr.mxu0 0.0
        %6130 = vmatpush1.msra.mxu0 0.0
        %6131 = vmatprep.subr.mxu0 0.0
        %6132 = vmatpush1.msra.mxu0 0.0
        %6133 = vmatprep.subr.mxu0 0.0
        %6134 = vmatpush1.msra.mxu0 0.0
        %6135 = vmatprep.subr.mxu0 0.0
        %6136 = vmatpush1.msra.mxu0 0.0
        %6137 = vmatprep.subr.mxu0 0.0
        %6138 = vmatpush1.msra.mxu0 0.0
        %6139 = vmatprep.subr.mxu0 0.0
        %6140 = vmatpush1.msra.mxu0 0.0
        %6141 = vmatprep.subr.mxu0 0.0
        %6142 = vmatpush1.msra.mxu0 0.0
        %6143 = vmatprep.subr.mxu0 0.0
        %6144 = vmatpush1.msra.mxu0 0.0
        %6145 = vmatprep.subr.mxu0 0.0
        %6146 = vmatpush1.msra.mxu0 0.0
        %6147 = vmatprep.subr.mxu0 0.0
        %6148 = vmatpush1.msra.mxu0 0.0
        %6149 = vmatprep.subr.mxu0 0.0
        %6150 = vmatpush1.msra.mxu0 0.0
        %6151 = vmatprep.subr.mxu0 0.0
        %6152 = vmatpush1.msra.mxu0 0.0
        %6153 = vmatprep.subr.mxu0 0.0
        %6154 = vmatpush1.msra.mxu0 0.0
        %6155 = vmatprep.subr.mxu0 0.0
        %6156 = vmatpush1.msra.mxu0 0.0
        %6157 = vmatprep.subr.mxu0 0.0
        %6158 = vmatpush1.msra.mxu0 0.0
        %6159 = vmatprep.subr.mxu0 0.0
        %6160 = vmatpush1.msra.mxu0 0.0
        %6161 = vmatprep.mubr.f32.mxu0 0.0
        %6162 = vmatmul.mubr.f32.gmra.mrb[0].mxu0 %v6092
        %v6163 = vpop.f32.mrb[0].mxu0
        %v6164 = vadd.f32 0.0, %v6163
        %v6165 = vpop.f32.mrb[0].mxu0
        %v6166 = vadd.f32 0.0, %v6165
        %6167 = vmatprep.mubr.f32.mxu0 0.0
        %6168 = vmatmul.mubr.f32.gmra.mrb[0].mxu0 %v6095
        %v6169 = vpop.f32.mrb[0].mxu0
        %v6170 = vadd.f32 0.0, %v6169
        %v6171 = vpop.f32.mrb[0].mxu0
        %v6172 = vadd.f32 0.0, %v6171
        %6173 = vdwg.mxu0
        %6174 = vmatprep.subr.mxu0 %v6084
        %6175 = vmatpush1.msra.mxu0 %v6083
        %6176 = vmatprep.subr.mxu0 %v6088
        %6177 = vmatpush1.msra.mxu0 %v6087
        %6178 = vmatprep.subr.mxu0 0.0
        %6179 = vmatpush1.msra.mxu0 0.0
        %6180 = vmatprep.subr.mxu0 0.0
        %6181 = vmatpush1.msra.mxu0 0.0
        %6182 = vmatprep.subr.mxu0 0.0
        %6183 = vmatpush1.msra.mxu0 0.0
        %6184 = vmatprep.subr.mxu0 0.0
        %6185 = vmatpush1.msra.mxu0 0.0
        %6186 = vmatprep.subr.mxu0 0.0
        %6187 = vmatpush1.msra.mxu0 0.0
        %6188 = vmatprep.subr.mxu0 0.0
        %6189 = vmatpush1.msra.mxu0 0.0
        %6190 = vmatprep.subr.mxu0 0.0
        %6191 = vmatpush1.msra.mxu0 0.0
        %6192 = vmatprep.subr.mxu0 0.0
        %6193 = vmatpush1.msra.mxu0 0.0
        %6194 = vmatprep.subr.mxu0 0.0
        %6195 = vmatpush1.msra.mxu0 0.0
        %6196 = vmatprep.subr.mxu0 0.0
        %6197 = vmatpush1.msra.mxu0 0.0
        %6198 = vmatprep.subr.mxu0 0.0
        %6199 = vmatpush1.msra.mxu0 0.0
        %6200 = vmatprep.subr.mxu0 0.0
        %6201 = vmatpush1.msra.mxu0 0.0
        %6202 = vmatprep.subr.mxu0 0.0
        %6203 = vmatpush1.msra.mxu0 0.0
        %6204 = vmatprep.subr.mxu0 0.0
        %6205 = vmatpush1.msra.mxu0 0.0
        %6206 = vmatprep.subr.mxu0 0.0
        %6207 = vmatpush1.msra.mxu0 0.0
        %6208 = vmatprep.subr.mxu0 0.0
        %6209 = vmatpush1.msra.mxu0 0.0
        %6210 = vmatprep.subr.mxu0 0.0
        %6211 = vmatpush1.msra.mxu0 0.0
        %6212 = vmatprep.subr.mxu0 0.0
        %6213 = vmatpush1.msra.mxu0 0.0
        %6214 = vmatprep.subr.mxu0 0.0
        %6215 = vmatpush1.msra.mxu0 0.0
        %6216 = vmatprep.subr.mxu0 0.0
        %6217 = vmatpush1.msra.mxu0 0.0
        %6218 = vmatprep.subr.mxu0 0.0
        %6219 = vmatpush1.msra.mxu0 0.0
        %6220 = vmatprep.subr.mxu0 0.0
        %6221 = vmatpush1.msra.mxu0 0.0
        %6222 = vmatprep.subr.mxu0 0.0
        %6223 = vmatpush1.msra.mxu0 0.0
        %6224 = vmatprep.subr.mxu0 0.0
        %6225 = vmatpush1.msra.mxu0 0.0
        %6226 = vmatprep.subr.mxu0 0.0
        %6227 = vmatpush1.msra.mxu0 0.0
        %6228 = vmatprep.subr.mxu0 0.0
        %6229 = vmatpush1.msra.mxu0 0.0
        %6230 = vmatprep.subr.mxu0 0.0
        %6231 = vmatpush1.msra.mxu0 0.0
        %6232 = vmatprep.subr.mxu0 0.0
        %6233 = vmatpush1.msra.mxu0 0.0
        %6234 = vmatprep.subr.mxu0 0.0
        %6235 = vmatpush1.msra.mxu0 0.0
        %6236 = vmatprep.subr.mxu0 0.0
        %6237 = vmatpush1.msra.mxu0 0.0
        %6238 = vmatprep.mubr.f32.mxu0 0.0
        %6239 = vmatmul.mubr.f32.gmra.mrb[0].mxu0 %v6092
        %v6240 = vpop.f32.mrb[0].mxu0
        %v6241 = vadd.f32 0.0, %v6240
        %v6242 = vpop.f32.mrb[0].mxu0
        %v6243 = vadd.f32 0.0, %v6242
        %6244 = vmatprep.mubr.f32.mxu0 0.0
        %6245 = vmatmul.mubr.f32.gmra.mrb[0].mxu0 %v6095
        %v6246 = vpop.f32.mrb[0].mxu0
        %v6247 = vadd.f32 0.0, %v6246
        %v6248 = vpop.f32.mrb[0].mxu0
        %v6249 = vadd.f32 0.0, %v6248
        %6250 = vdwg.mxu0
        %v6251 = vld [vmem:[#allocation20] sm:$0xff]
        %v6252 = vld [vmem:[#allocation20 + $0x8] sm:$0xff]
        %v6253 = vld [vmem:[#allocation20 + $0x10] sm:$0xff]
        %v6254 = vld [vmem:[#allocation20 + $0x18] sm:$0xff]
        %v6255 = vld [vmem:[#allocation20 + $0x20] sm:$0xff]
        %v6256 = vld [vmem:[#allocation20 + $0x28] sm:$0xff]
        %v6257 = vld [vmem:[#allocation20 + $0x30] sm:$0xff]
        %v6258 = vld [vmem:[#allocation20 + $0x38] sm:$0xff]
        %v6259 = vld [vmem:[#allocation20 + $0x40] sm:$0xff]
        %v6260 = vld [vmem:[#allocation20 + $0x48] sm:$0xff]
        %v6261 = vld [vmem:[#allocation20 + $0x50] sm:$0xff]
        %v6262 = vld [vmem:[#allocation20 + $0x58] sm:$0xff]
        %v6263 = vld [vmem:[#allocation20 + $0x60] sm:$0xff]
        %v6264 = vld [vmem:[#allocation20 + $0x68] sm:$0xff]
        %v6265 = vld [vmem:[#allocation20 + $0x70] sm:$0xff]
        %v6266 = vld [vmem:[#allocation20 + $0x78] sm:$0xff]
        %v6267 = vld [vmem:[#allocation20 + $0x80] sm:$0xff]
        %v6268 = vld [vmem:[#allocation20 + $0x88] sm:$0xff]
        %v6269 = vld [vmem:[#allocation20 + $0x90] sm:$0xff]
        %v6270 = vld [vmem:[#allocation20 + $0x98] sm:$0xff]
        %v6271 = vld [vmem:[#allocation20 + $0xa0] sm:$0xff]
        %v6272 = vld [vmem:[#allocation20 + $0xa8] sm:$0xff]
        %v6273 = vld [vmem:[#allocation20 + $0xb0] sm:$0xff]
        %v6274 = vld [vmem:[#allocation20 + $0xb8] sm:$0xff]
        %v6275 = vld [vmem:[#allocation20 + $0xc0] sm:$0xff]
        %v6276 = vld [vmem:[#allocation20 + $0xc8] sm:$0xff]
        %v6277 = vld [vmem:[#allocation20 + $0xd0] sm:$0xff]
        %v6278 = vld [vmem:[#allocation20 + $0xd8] sm:$0xff]
        %v6279 = vld [vmem:[#allocation20 + $0xe0] sm:$0xff]
        %v6280 = vld [vmem:[#allocation20 + $0xe8] sm:$0xff]
        %v6281 = vld [vmem:[#allocation20 + $0xf0] sm:$0xff]
        %v6282 = vld [vmem:[#allocation20 + $0xf8] sm:$0xff]
        %v6283 = vld [vmem:[#allocation20 + $0x100] sm:$0xff]
        %v6284 = vld [vmem:[#allocation20 + $0x108] sm:$0xff]
        %v6285 = vld [vmem:[#allocation20 + $0x110] sm:$0xff]
        %v6286 = vld [vmem:[#allocation20 + $0x118] sm:$0xff]
        %v6287 = vld [vmem:[#allocation20 + $0x120] sm:$0xff]
        %v6288 = vld [vmem:[#allocation20 + $0x128] sm:$0xff]
        %v6289 = vld [vmem:[#allocation20 + $0x130] sm:$0xff]
        %v6290 = vld [vmem:[#allocation20 + $0x138] sm:$0xff]
        %v6291 = vld [vmem:[#allocation20 + $0x140] sm:$0xff]
        %v6292 = vld [vmem:[#allocation20 + $0x148] sm:$0xff]
        %v6293 = vld [vmem:[#allocation20 + $0x150] sm:$0xff]
        %v6294 = vld [vmem:[#allocation20 + $0x158] sm:$0xff]
        %v6295 = vld [vmem:[#allocation20 + $0x160] sm:$0xff]
        %v6296 = vld [vmem:[#allocation20 + $0x168] sm:$0xff]
        %v6297 = vld [vmem:[#allocation20 + $0x170] sm:$0xff]
        %v6298 = vld [vmem:[#allocation20 + $0x178] sm:$0xff]
        %v6299 = vld [vmem:[#allocation20 + $0x180] sm:$0xff]
        %v6300 = vld [vmem:[#allocation20 + $0x188] sm:$0xff]
        %v6301 = vld [vmem:[#allocation20 + $0x190] sm:$0xff]
        %v6302 = vld [vmem:[#allocation20 + $0x198] sm:$0xff]
        %v6303 = vld [vmem:[#allocation20 + $0x1a0] sm:$0xff]
        %v6304 = vld [vmem:[#allocation20 + $0x1a8] sm:$0xff]
        %v6305 = vld [vmem:[#allocation20 + $0x1b0] sm:$0xff]
        %v6306 = vld [vmem:[#allocation20 + $0x1b8] sm:$0xff]
        %v6307 = vld [vmem:[#allocation20 + $0x1c0] sm:$0xff]
        %v6308 = vld [vmem:[#allocation20 + $0x1c8] sm:$0xff]
        %v6309 = vld [vmem:[#allocation20 + $0x1d0] sm:$0xff]
        %v6310 = vld [vmem:[#allocation20 + $0x1d8] sm:$0xff]
        %v6311 = vld [vmem:[#allocation20 + $0x1e0] sm:$0xff]
        %v6312 = vld [vmem:[#allocation20 + $0x1e8] sm:$0xff]
        %v6313 = vld [vmem:[#allocation20 + $0x1f0] sm:$0xff]
        %v6314 = vld [vmem:[#allocation20 + $0x1f8] sm:$0xff]
        %v6315 = vld [vmem:[#allocation20 + $0x200] sm:$0xff]
        %v6316 = vld [vmem:[#allocation20 + $0x208] sm:$0xff]
        %v6317 = vld [vmem:[#allocation20 + $0x210] sm:$0xff]
        %v6318 = vld [vmem:[#allocation20 + $0x218] sm:$0xff]
        %v6319 = vld [vmem:[#allocation20 + $0x220] sm:$0xff]
        %v6320 = vld [vmem:[#allocation20 + $0x228] sm:$0xff]
        %v6321 = vld [vmem:[#allocation20 + $0x230] sm:$0xff]
        %v6322 = vld [vmem:[#allocation20 + $0x238] sm:$0xff]
        %v6323 = vld [vmem:[#allocation20 + $0x240] sm:$0xff]
        %v6324 = vld [vmem:[#allocation20 + $0x248] sm:$0xff]
        %v6325 = vld [vmem:[#allocation20 + $0x250] sm:$0xff]
        %v6326 = vld [vmem:[#allocation20 + $0x258] sm:$0xff]
        %v6327 = vld [vmem:[#allocation20 + $0x260] sm:$0xff]
        %v6328 = vld [vmem:[#allocation20 + $0x268] sm:$0xff]
        %v6329 = vld [vmem:[#allocation20 + $0x270] sm:$0xff]
        %v6330 = vld [vmem:[#allocation20 + $0x278] sm:$0xff]
        %v6331 = vld [vmem:[#allocation20 + $0x280] sm:$0xff]
        %v6332 = vld [vmem:[#allocation20 + $0x288] sm:$0xff]
        %v6333 = vld [vmem:[#allocation20 + $0x290] sm:$0xff]
        %v6334 = vld [vmem:[#allocation20 + $0x298] sm:$0xff]
        %v6335 = vld [vmem:[#allocation20 + $0x2a0] sm:$0xff]
        %v6336 = vld [vmem:[#allocation20 + $0x2a8] sm:$0xff]
        %v6337 = vld [vmem:[#allocation20 + $0x2b0] sm:$0xff]
        %v6338 = vld [vmem:[#allocation20 + $0x2b8] sm:$0xff]
        %v6339 = vld [vmem:[#allocation20 + $0x2c0] sm:$0xff]
        %v6340 = vld [vmem:[#allocation20 + $0x2c8] sm:$0xff]
        %v6341 = vld [vmem:[#allocation20 + $0x2d0] sm:$0xff]
        %v6342 = vld [vmem:[#allocation20 + $0x2d8] sm:$0xff]
        %v6343 = vld [vmem:[#allocation20 + $0x2e0] sm:$0xff]
        %v6344 = vld [vmem:[#allocation20 + $0x2e8] sm:$0xff]
        %v6345 = vld [vmem:[#allocation20 + $0x2f0] sm:$0xff]
        %v6346 = vld [vmem:[#allocation20 + $0x2f8] sm:$0xff]
        %v6347 = vld [vmem:[#allocation20 + $0x300] sm:$0xff]
        %v6348 = vld [vmem:[#allocation20 + $0x308] sm:$0xff]
        %v6349 = vld [vmem:[#allocation20 + $0x310] sm:$0xff]
        %v6350 = vld [vmem:[#allocation20 + $0x318] sm:$0xff]
        %v6351 = vld [vmem:[#allocation20 + $0x320] sm:$0xff]
        %v6352 = vld [vmem:[#allocation20 + $0x328] sm:$0xff]
        %v6353 = vld [vmem:[#allocation20 + $0x330] sm:$0xff]
        %v6354 = vld [vmem:[#allocation20 + $0x338] sm:$0xff]
        %v6355 = vld [vmem:[#allocation20 + $0x340] sm:$0xff]
        %v6356 = vld [vmem:[#allocation20 + $0x348] sm:$0xff]
        %v6357 = vld [vmem:[#allocation20 + $0x350] sm:$0xff]
        %v6358 = vld [vmem:[#allocation20 + $0x358] sm:$0xff]
        %v6359 = vld [vmem:[#allocation20 + $0x360] sm:$0xff]
        %v6360 = vld [vmem:[#allocation20 + $0x368] sm:$0xff]
        %v6361 = vld [vmem:[#allocation20 + $0x370] sm:$0xff]
        %v6362 = vld [vmem:[#allocation20 + $0x378] sm:$0xff]
        %v6363 = vld [vmem:[#allocation20 + $0x380] sm:$0xff]
        %v6364 = vld [vmem:[#allocation20 + $0x388] sm:$0xff]
        %v6365 = vld [vmem:[#allocation20 + $0x390] sm:$0xff]
        %v6366 = vld [vmem:[#allocation20 + $0x398] sm:$0xff]
        %v6367 = vld [vmem:[#allocation20 + $0x3a0] sm:$0xff]
        %v6368 = vld [vmem:[#allocation20 + $0x3a8] sm:$0xff]
        %v6369 = vld [vmem:[#allocation20 + $0x3b0] sm:$0xff]
        %v6370 = vld [vmem:[#allocation20 + $0x3b8] sm:$0xff]
        %v6371 = vld [vmem:[#allocation20 + $0x3c0] sm:$0xff]
        %v6372 = vld [vmem:[#allocation20 + $0x3c8] sm:$0xff]
        %v6373 = vld [vmem:[#allocation20 + $0x3d0] sm:$0xff]
        %v6374 = vld [vmem:[#allocation20 + $0x3d8] sm:$0xff]
        %v6375 = vld [vmem:[#allocation20 + $0x3e0] sm:$0xff]
        %v6376 = vld [vmem:[#allocation20 + $0x3e8] sm:$0xff]
        %v6377 = vld [vmem:[#allocation20 + $0x3f0] sm:$0xff]
        %v6378 = vld [vmem:[#allocation20 + $0x3f8] sm:$0xff]
        %v6379 = vld [vmem:[#allocation20 + $0x400] sm:$0xff]
        %v6380 = vld [vmem:[#allocation20 + $0x408] sm:$0xff]
        %v6381 = vld [vmem:[#allocation20 + $0x410] sm:$0xff]
        %v6382 = vld [vmem:[#allocation20 + $0x418] sm:$0xff]
        %v6383 = vld [vmem:[#allocation20 + $0x420] sm:$0xff]
        %v6384 = vld [vmem:[#allocation20 + $0x428] sm:$0xff]
        %v6385 = vld [vmem:[#allocation20 + $0x430] sm:$0xff]
        %v6386 = vld [vmem:[#allocation20 + $0x438] sm:$0xff]
        %v6387 = vld [vmem:[#allocation20 + $0x440] sm:$0xff]
        %v6388 = vld [vmem:[#allocation20 + $0x448] sm:$0xff]
        %v6389 = vld [vmem:[#allocation20 + $0x450] sm:$0xff]
        %v6390 = vld [vmem:[#allocation20 + $0x458] sm:$0xff]
        %v6391 = vld [vmem:[#allocation20 + $0x460] sm:$0xff]
        %v6392 = vld [vmem:[#allocation20 + $0x468] sm:$0xff]
        %v6393 = vld [vmem:[#allocation20 + $0x470] sm:$0xff]
        %v6394 = vld [vmem:[#allocation20 + $0x478] sm:$0xff]
        %v6395 = vld [vmem:[#allocation20 + $0x480] sm:$0xff]
        %v6396 = vld [vmem:[#allocation20 + $0x488] sm:$0xff]
        %v6397 = vld [vmem:[#allocation20 + $0x490] sm:$0xff]
        %v6398 = vld [vmem:[#allocation20 + $0x498] sm:$0xff]
        %v6399 = vld [vmem:[#allocation20 + $0x4a0] sm:$0xff]
        %v6400 = vld [vmem:[#allocation20 + $0x4a8] sm:$0xff]
        %v6401 = vld [vmem:[#allocation20 + $0x4b0] sm:$0xff]
        %v6402 = vld [vmem:[#allocation20 + $0x4b8] sm:$0xff]
        %v6403 = vld [vmem:[#allocation20 + $0x4c0] sm:$0xff]
        %v6404 = vld [vmem:[#allocation20 + $0x4c8] sm:$0xff]
        %v6405 = vld [vmem:[#allocation20 + $0x4d0] sm:$0xff]
        %v6406 = vld [vmem:[#allocation20 + $0x4d8] sm:$0xff]
        %v6407 = vld [vmem:[#allocation20 + $0x4e0] sm:$0xff]
        %v6408 = vld [vmem:[#allocation20 + $0x4e8] sm:$0xff]
        %v6409 = vld [vmem:[#allocation20 + $0x4f0] sm:$0xff]
        %v6410 = vld [vmem:[#allocation20 + $0x4f8] sm:$0xff]
        %v6411 = vld [vmem:[#allocation20 + $0x500] sm:$0xff]
        %v6412 = vld [vmem:[#allocation20 + $0x508] sm:$0xff]
        %v6413 = vld [vmem:[#allocation20 + $0x510] sm:$0xff]
        %v6414 = vld [vmem:[#allocation20 + $0x518] sm:$0xff]
        %v6415 = vld [vmem:[#allocation20 + $0x520] sm:$0xff]
        %v6416 = vld [vmem:[#allocation20 + $0x528] sm:$0xff]
        %v6417 = vld [vmem:[#allocation20 + $0x530] sm:$0xff]
        %v6418 = vld [vmem:[#allocation20 + $0x538] sm:$0xff]
        %v6419 = vld [vmem:[#allocation20 + $0x540] sm:$0xff]
        %v6420 = vld [vmem:[#allocation20 + $0x548] sm:$0xff]
        %v6421 = vld [vmem:[#allocation20 + $0x550] sm:$0xff]
        %v6422 = vld [vmem:[#allocation20 + $0x558] sm:$0xff]
        %v6423 = vld [vmem:[#allocation20 + $0x560] sm:$0xff]
        %v6424 = vld [vmem:[#allocation20 + $0x568] sm:$0xff]
        %v6425 = vld [vmem:[#allocation20 + $0x570] sm:$0xff]
        %v6426 = vld [vmem:[#allocation20 + $0x578] sm:$0xff]
        %v6427 = vld [vmem:[#allocation20 + $0x580] sm:$0xff]
        %v6428 = vld [vmem:[#allocation20 + $0x588] sm:$0xff]
        %v6429 = vld [vmem:[#allocation20 + $0x590] sm:$0xff]
        %v6430 = vld [vmem:[#allocation20 + $0x598] sm:$0xff]
        %v6431 = vld [vmem:[#allocation20 + $0x5a0] sm:$0xff]
        %v6432 = vld [vmem:[#allocation20 + $0x5a8] sm:$0xff]
        %v6433 = vld [vmem:[#allocation20 + $0x5b0] sm:$0xff]
        %v6434 = vld [vmem:[#allocation20 + $0x5b8] sm:$0xff]
        %v6435 = vld [vmem:[#allocation20 + $0x5c0] sm:$0xff]
        %v6436 = vld [vmem:[#allocation20 + $0x5c8] sm:$0xff]
        %v6437 = vld [vmem:[#allocation20 + $0x5d0] sm:$0xff]
        %v6438 = vld [vmem:[#allocation20 + $0x5d8] sm:$0xff]
        %v6439 = vld [vmem:[#allocation20 + $0x5e0] sm:$0xff]
        %v6440 = vld [vmem:[#allocation20 + $0x5e8] sm:$0xff]
        %v6441 = vld [vmem:[#allocation20 + $0x5f0] sm:$0xff]
        %v6442 = vld [vmem:[#allocation20 + $0x5f8] sm:$0xff]
        %v6443 = vld [vmem:[#allocation20 + $0x600] sm:$0xff]
        %v6444 = vld [vmem:[#allocation20 + $0x608] sm:$0xff]
        %v6445 = vld [vmem:[#allocation20 + $0x610] sm:$0xff]
        %v6446 = vld [vmem:[#allocation20 + $0x618] sm:$0xff]
        %v6447 = vld [vmem:[#allocation20 + $0x620] sm:$0xff]
        %v6448 = vld [vmem:[#allocation20 + $0x628] sm:$0xff]
        %v6449 = vld [vmem:[#allocation20 + $0x630] sm:$0xff]
        %v6450 = vld [vmem:[#allocation20 + $0x638] sm:$0xff]
        %v6451 = vld [vmem:[#allocation20 + $0x640] sm:$0xff]
        %v6452 = vld [vmem:[#allocation20 + $0x648] sm:$0xff]
        %v6453 = vld [vmem:[#allocation20 + $0x650] sm:$0xff]
        %v6454 = vld [vmem:[#allocation20 + $0x658] sm:$0xff]
        %v6455 = vld [vmem:[#allocation20 + $0x660] sm:$0xff]
        %v6456 = vld [vmem:[#allocation20 + $0x668] sm:$0xff]
        %v6457 = vld [vmem:[#allocation20 + $0x670] sm:$0xff]
        %v6458 = vld [vmem:[#allocation20 + $0x678] sm:$0xff]
        %v6459 = vld [vmem:[#allocation20 + $0x680] sm:$0xff]
        %v6460 = vld [vmem:[#allocation20 + $0x688] sm:$0xff]
        %v6461 = vld [vmem:[#allocation20 + $0x690] sm:$0xff]
        %v6462 = vld [vmem:[#allocation20 + $0x698] sm:$0xff]
        %v6463 = vld [vmem:[#allocation20 + $0x6a0] sm:$0xff]
        %v6464 = vld [vmem:[#allocation20 + $0x6a8] sm:$0xff]
        %v6465 = vld [vmem:[#allocation20 + $0x6b0] sm:$0xff]
        %v6466 = vld [vmem:[#allocation20 + $0x6b8] sm:$0xff]
        %v6467 = vld [vmem:[#allocation20 + $0x6c0] sm:$0xff]
        %v6468 = vld [vmem:[#allocation20 + $0x6c8] sm:$0xff]
        %v6469 = vld [vmem:[#allocation20 + $0x6d0] sm:$0xff]
        %v6470 = vld [vmem:[#allocation20 + $0x6d8] sm:$0xff]
        %v6471 = vld [vmem:[#allocation20 + $0x6e0] sm:$0xff]
        %v6472 = vld [vmem:[#allocation20 + $0x6e8] sm:$0xff]
        %v6473 = vld [vmem:[#allocation20 + $0x6f0] sm:$0xff]
        %v6474 = vld [vmem:[#allocation20 + $0x6f8] sm:$0xff]
        %v6475 = vld [vmem:[#allocation20 + $0x700] sm:$0xff]
        %v6476 = vld [vmem:[#allocation20 + $0x708] sm:$0xff]
        %v6477 = vld [vmem:[#allocation20 + $0x710] sm:$0xff]
        %v6478 = vld [vmem:[#allocation20 + $0x718] sm:$0xff]
        %v6479 = vld [vmem:[#allocation20 + $0x720] sm:$0xff]
        %v6480 = vld [vmem:[#allocation20 + $0x728] sm:$0xff]
        %v6481 = vld [vmem:[#allocation20 + $0x730] sm:$0xff]
        %v6482 = vld [vmem:[#allocation20 + $0x738] sm:$0xff]
        %v6483 = vld [vmem:[#allocation20 + $0x740] sm:$0xff]
        %v6484 = vld [vmem:[#allocation20 + $0x748] sm:$0xff]
        %v6485 = vld [vmem:[#allocation20 + $0x750] sm:$0xff]
        %v6486 = vld [vmem:[#allocation20 + $0x758] sm:$0xff]
        %v6487 = vld [vmem:[#allocation20 + $0x760] sm:$0xff]
        %v6488 = vld [vmem:[#allocation20 + $0x768] sm:$0xff]
        %v6489 = vld [vmem:[#allocation20 + $0x770] sm:$0xff]
        %v6490 = vld [vmem:[#allocation20 + $0x778] sm:$0xff]
        %v6491 = vld [vmem:[#allocation20 + $0x780] sm:$0xff]
        %v6492 = vld [vmem:[#allocation20 + $0x788] sm:$0xff]
        %v6493 = vld [vmem:[#allocation20 + $0x790] sm:$0xff]
        %v6494 = vld [vmem:[#allocation20 + $0x798] sm:$0xff]
        %v6495 = vld [vmem:[#allocation20 + $0x7a0] sm:$0xff]
        %v6496 = vld [vmem:[#allocation20 + $0x7a8] sm:$0xff]
        %v6497 = vld [vmem:[#allocation20 + $0x7b0] sm:$0xff]
        %v6498 = vld [vmem:[#allocation20 + $0x7b8] sm:$0xff]
        %v6499 = vld [vmem:[#allocation20 + $0x7c0] sm:$0xff]
        %v6500 = vld [vmem:[#allocation20 + $0x7c8] sm:$0xff]
        %v6501 = vld [vmem:[#allocation20 + $0x7d0] sm:$0xff]
        %v6502 = vld [vmem:[#allocation20 + $0x7d8] sm:$0xff]
        %v6503 = vld [vmem:[#allocation20 + $0x7e0] sm:$0xff]
        %v6504 = vld [vmem:[#allocation20 + $0x7e8] sm:$0xff]
        %v6505 = vld [vmem:[#allocation20 + $0x7f0] sm:$0xff]
        %v6506 = vld [vmem:[#allocation20 + $0x7f8] sm:$0xff]
        %6507 = vmatprep.subr.mxu0 %v6082
        %6508 = vmatpush1.msra.mxu0 %v6081
        %6509 = vmatprep.subr.mxu0 %v6086
        %6510 = vmatpush1.msra.mxu0 %v6085
        %6511 = vmatprep.subr.mxu0 0.0
        %6512 = vmatpush1.msra.mxu0 0.0
        %6513 = vmatprep.subr.mxu0 0.0
        %6514 = vmatpush1.msra.mxu0 0.0
        %6515 = vmatprep.subr.mxu0 0.0
        %6516 = vmatpush1.msra.mxu0 0.0
        %6517 = vmatprep.subr.mxu0 0.0
        %6518 = vmatpush1.msra.mxu0 0.0
        %6519 = vmatprep.subr.mxu0 0.0
        %6520 = vmatpush1.msra.mxu0 0.0
        %6521 = vmatprep.subr.mxu0 0.0
        %6522 = vmatpush1.msra.mxu0 0.0
        %6523 = vmatprep.subr.mxu0 0.0
        %6524 = vmatpush1.msra.mxu0 0.0
        %6525 = vmatprep.subr.mxu0 0.0
        %6526 = vmatpush1.msra.mxu0 0.0
        %6527 = vmatprep.subr.mxu0 0.0
        %6528 = vmatpush1.msra.mxu0 0.0
        %6529 = vmatprep.subr.mxu0 0.0
        %6530 = vmatpush1.msra.mxu0 0.0
        %6531 = vmatprep.subr.mxu0 0.0
        %6532 = vmatpush1.msra.mxu0 0.0
        %6533 = vmatprep.subr.mxu0 0.0
        %6534 = vmatpush1.msra.mxu0 0.0
        %6535 = vmatprep.subr.mxu0 0.0
        %6536 = vmatpush1.msra.mxu0 0.0
        %6537 = vmatprep.subr.mxu0 0.0
        %6538 = vmatpush1.msra.mxu0 0.0
        %6539 = vmatprep.subr.mxu0 0.0
        %6540 = vmatpush1.msra.mxu0 0.0
        %6541 = vmatprep.subr.mxu0 0.0
        %6542 = vmatpush1.msra.mxu0 0.0
        %6543 = vmatprep.subr.mxu0 0.0
        %6544 = vmatpush1.msra.mxu0 0.0
        %6545 = vmatprep.subr.mxu0 0.0
        %6546 = vmatpush1.msra.mxu0 0.0
        %6547 = vmatprep.subr.mxu0 0.0
        %6548 = vmatpush1.msra.mxu0 0.0
        %6549 = vmatprep.subr.mxu0 0.0
        %6550 = vmatpush1.msra.mxu0 0.0
        %6551 = vmatprep.subr.mxu0 0.0
        %6552 = vmatpush1.msra.mxu0 0.0
        %6553 = vmatprep.subr.mxu0 0.0
        %6554 = vmatpush1.msra.mxu0 0.0
        %6555 = vmatprep.subr.mxu0 0.0
        %6556 = vmatpush1.msra.mxu0 0.0
        %6557 = vmatprep.subr.mxu0 0.0
        %6558 = vmatpush1.msra.mxu0 0.0
        %6559 = vmatprep.subr.mxu0 0.0
        %6560 = vmatpush1.msra.mxu0 0.0
        %6561 = vmatprep.subr.mxu0 0.0
        %6562 = vmatpush1.msra.mxu0 0.0
        %6563 = vmatprep.subr.mxu0 0.0
        %6564 = vmatpush1.msra.mxu0 0.0
        %6565 = vmatprep.subr.mxu0 0.0
        %6566 = vmatpush1.msra.mxu0 0.0
        %6567 = vmatprep.subr.mxu0 0.0
        %6568 = vmatpush1.msra.mxu0 0.0
        %6569 = vmatprep.subr.mxu0 0.0
        %6570 = vmatpush1.msra.mxu0 0.0
        %6571 = vmatprep.mubr.f32.mxu0 0.0
        %6572 = vmatmul.mubr.f32.gmra.mrb[0].mxu0 %v4019
        %v6573 = vpop.f32.mrb[0].mxu0
        %v6574 = vadd.f32 0.0, %v6573
        %v6575 = vpop.f32.mrb[0].mxu0
        %v6576 = vadd.f32 0.0, %v6575
        %6577 = vmatprep.mubr.f32.mxu0 0.0
        %6578 = vmatmul.mubr.f32.gmra.mrb[0].mxu0 %v4022
        %v6579 = vpop.f32.mrb[0].mxu0
        %v6580 = vadd.f32 0.0, %v6579
        %v6581 = vpop.f32.mrb[0].mxu0
        %v6582 = vadd.f32 0.0, %v6581
        %6583 = vdwg.mxu0
        %6584 = vmatprep.subr.mxu0 %v6084
        %6585 = vmatpush1.msra.mxu0 %v6083
        %6586 = vmatprep.subr.mxu0 %v6088
        %6587 = vmatpush1.msra.mxu0 %v6087
        %6588 = vmatprep.subr.mxu0 0.0
        %6589 = vmatpush1.msra.mxu0 0.0
        %6590 = vmatprep.subr.mxu0 0.0
        %6591 = vmatpush1.msra.mxu0 0.0
        %6592 = vmatprep.subr.mxu0 0.0
        %6593 = vmatpush1.msra.mxu0 0.0
        %6594 = vmatprep.subr.mxu0 0.0
        %6595 = vmatpush1.msra.mxu0 0.0
        %6596 = vmatprep.subr.mxu0 0.0
        %6597 = vmatpush1.msra.mxu0 0.0
        %6598 = vmatprep.subr.mxu0 0.0
        %6599 = vmatpush1.msra.mxu0 0.0
        %6600 = vmatprep.subr.mxu0 0.0
        %6601 = vmatpush1.msra.mxu0 0.0
        %6602 = vmatprep.subr.mxu0 0.0
        %6603 = vmatpush1.msra.mxu0 0.0
        %6604 = vmatprep.subr.mxu0 0.0
        %6605 = vmatpush1.msra.mxu0 0.0
        %6606 = vmatprep.subr.mxu0 0.0
        %6607 = vmatpush1.msra.mxu0 0.0
        %6608 = vmatprep.subr.mxu0 0.0
        %6609 = vmatpush1.msra.mxu0 0.0
        %6610 = vmatprep.subr.mxu0 0.0
        %6611 = vmatpush1.msra.mxu0 0.0
        %6612 = vmatprep.subr.mxu0 0.0
        %6613 = vmatpush1.msra.mxu0 0.0
        %6614 = vmatprep.subr.mxu0 0.0
        %6615 = vmatpush1.msra.mxu0 0.0
        %6616 = vmatprep.subr.mxu0 0.0
        %6617 = vmatpush1.msra.mxu0 0.0
        %6618 = vmatprep.subr.mxu0 0.0
        %6619 = vmatpush1.msra.mxu0 0.0
        %6620 = vmatprep.subr.mxu0 0.0
        %6621 = vmatpush1.msra.mxu0 0.0
        %6622 = vmatprep.subr.mxu0 0.0
        %6623 = vmatpush1.msra.mxu0 0.0
        %6624 = vmatprep.subr.mxu0 0.0
        %6625 = vmatpush1.msra.mxu0 0.0
        %6626 = vmatprep.subr.mxu0 0.0
        %6627 = vmatpush1.msra.mxu0 0.0
        %6628 = vmatprep.subr.mxu0 0.0
        %6629 = vmatpush1.msra.mxu0 0.0
        %6630 = vmatprep.subr.mxu0 0.0
        %6631 = vmatpush1.msra.mxu0 0.0
        %6632 = vmatprep.subr.mxu0 0.0
        %6633 = vmatpush1.msra.mxu0 0.0
        %6634 = vmatprep.subr.mxu0 0.0
        %6635 = vmatpush1.msra.mxu0 0.0
        %6636 = vmatprep.subr.mxu0 0.0
        %6637 = vmatpush1.msra.mxu0 0.0
        %6638 = vmatprep.subr.mxu0 0.0
        %6639 = vmatpush1.msra.mxu0 0.0
        %6640 = vmatprep.subr.mxu0 0.0
        %6641 = vmatpush1.msra.mxu0 0.0
        %6642 = vmatprep.subr.mxu0 0.0
        %6643 = vmatpush1.msra.mxu0 0.0
        %6644 = vmatprep.subr.mxu0 0.0
        %6645 = vmatpush1.msra.mxu0 0.0
        %6646 = vmatprep.subr.mxu0 0.0
        %6647 = vmatpush1.msra.mxu0 0.0
        %6648 = vmatprep.mubr.f32.mxu0 0.0
        %6649 = vmatmul.mubr.f32.gmra.mrb[0].mxu0 %v4019
        %v6650 = vpop.f32.mrb[0].mxu0
        %v6651 = vadd.f32 0.0, %v6650
        %v6652 = vpop.f32.mrb[0].mxu0
        %v6653 = vadd.f32 0.0, %v6652
        %6654 = vmatprep.mubr.f32.mxu0 0.0
        %6655 = vmatmul.mubr.f32.gmra.mrb[0].mxu0 %v4022
        %v6656 = vpop.f32.mrb[0].mxu0
        %v6657 = vadd.f32 0.0, %v6656
        %v6658 = vpop.f32.mrb[0].mxu0
        %v6659 = vadd.f32 0.0, %v6658
        %6660 = vdwg.mxu0
        %s6661 = scalar_lea.vmem [#allocation20], 2048
        %v6662 = vld [vmem:[%s6661] sm:$0xff]
        %v6663 = vld [vmem:[%s6661 + $0x8] sm:$0xff]
        %v6664 = vld [vmem:[%s6661 + $0x10] sm:$0xff]
        %v6665 = vld [vmem:[%s6661 + $0x18] sm:$0xff]
        %v6666 = vld [vmem:[%s6661 + $0x20] sm:$0xff]
        %v6667 = vld [vmem:[%s6661 + $0x28] sm:$0xff]
        %v6668 = vld [vmem:[%s6661 + $0x30] sm:$0xff]
        %v6669 = vld [vmem:[%s6661 + $0x38] sm:$0xff]
        %v6670 = vld [vmem:[%s6661 + $0x40] sm:$0xff]
        %v6671 = vld [vmem:[%s6661 + $0x48] sm:$0xff]
        %v6672 = vld [vmem:[%s6661 + $0x50] sm:$0xff]
        %v6673 = vld [vmem:[%s6661 + $0x58] sm:$0xff]
        %v6674 = vld [vmem:[%s6661 + $0x60] sm:$0xff]
        %v6675 = vld [vmem:[%s6661 + $0x68] sm:$0xff]
        %v6676 = vld [vmem:[%s6661 + $0x70] sm:$0xff]
        %v6677 = vld [vmem:[%s6661 + $0x78] sm:$0xff]
        %v6678 = vld [vmem:[%s6661 + $0x80] sm:$0xff]
        %v6679 = vld [vmem:[%s6661 + $0x88] sm:$0xff]
        %v6680 = vld [vmem:[%s6661 + $0x90] sm:$0xff]
        %v6681 = vld [vmem:[%s6661 + $0x98] sm:$0xff]
        %v6682 = vld [vmem:[%s6661 + $0xa0] sm:$0xff]
        %v6683 = vld [vmem:[%s6661 + $0xa8] sm:$0xff]
        %v6684 = vld [vmem:[%s6661 + $0xb0] sm:$0xff]
        %v6685 = vld [vmem:[%s6661 + $0xb8] sm:$0xff]
        %v6686 = vld [vmem:[%s6661 + $0xc0] sm:$0xff]
        %v6687 = vld [vmem:[%s6661 + $0xc8] sm:$0xff]
        %v6688 = vld [vmem:[%s6661 + $0xd0] sm:$0xff]
        %v6689 = vld [vmem:[%s6661 + $0xd8] sm:$0xff]
        %v6690 = vld [vmem:[%s6661 + $0xe0] sm:$0xff]
        %v6691 = vld [vmem:[%s6661 + $0xe8] sm:$0xff]
        %v6692 = vld [vmem:[%s6661 + $0xf0] sm:$0xff]
        %v6693 = vld [vmem:[%s6661 + $0xf8] sm:$0xff]
        %v6694 = vld [vmem:[%s6661 + $0x100] sm:$0xff]
        %v6695 = vld [vmem:[%s6661 + $0x108] sm:$0xff]
        %v6696 = vld [vmem:[%s6661 + $0x110] sm:$0xff]
        %v6697 = vld [vmem:[%s6661 + $0x118] sm:$0xff]
        %v6698 = vld [vmem:[%s6661 + $0x120] sm:$0xff]
        %v6699 = vld [vmem:[%s6661 + $0x128] sm:$0xff]
        %v6700 = vld [vmem:[%s6661 + $0x130] sm:$0xff]
        %v6701 = vld [vmem:[%s6661 + $0x138] sm:$0xff]
        %v6702 = vld [vmem:[%s6661 + $0x140] sm:$0xff]
        %v6703 = vld [vmem:[%s6661 + $0x148] sm:$0xff]
        %v6704 = vld [vmem:[%s6661 + $0x150] sm:$0xff]
        %v6705 = vld [vmem:[%s6661 + $0x158] sm:$0xff]
        %v6706 = vld [vmem:[%s6661 + $0x160] sm:$0xff]
        %v6707 = vld [vmem:[%s6661 + $0x168] sm:$0xff]
        %v6708 = vld [vmem:[%s6661 + $0x170] sm:$0xff]
        %v6709 = vld [vmem:[%s6661 + $0x178] sm:$0xff]
        %v6710 = vld [vmem:[%s6661 + $0x180] sm:$0xff]
        %v6711 = vld [vmem:[%s6661 + $0x188] sm:$0xff]
        %v6712 = vld [vmem:[%s6661 + $0x190] sm:$0xff]
        %v6713 = vld [vmem:[%s6661 + $0x198] sm:$0xff]
        %v6714 = vld [vmem:[%s6661 + $0x1a0] sm:$0xff]
        %v6715 = vld [vmem:[%s6661 + $0x1a8] sm:$0xff]
        %v6716 = vld [vmem:[%s6661 + $0x1b0] sm:$0xff]
        %v6717 = vld [vmem:[%s6661 + $0x1b8] sm:$0xff]
        %v6718 = vld [vmem:[%s6661 + $0x1c0] sm:$0xff]
        %v6719 = vld [vmem:[%s6661 + $0x1c8] sm:$0xff]
        %v6720 = vld [vmem:[%s6661 + $0x1d0] sm:$0xff]
        %v6721 = vld [vmem:[%s6661 + $0x1d8] sm:$0xff]
        %v6722 = vld [vmem:[%s6661 + $0x1e0] sm:$0xff]
        %v6723 = vld [vmem:[%s6661 + $0x1e8] sm:$0xff]
        %v6724 = vld [vmem:[%s6661 + $0x1f0] sm:$0xff]
        %v6725 = vld [vmem:[%s6661 + $0x1f8] sm:$0xff]
        %v6726 = vld [vmem:[%s6661 + $0x200] sm:$0xff]
        %v6727 = vld [vmem:[%s6661 + $0x208] sm:$0xff]
        %v6728 = vld [vmem:[%s6661 + $0x210] sm:$0xff]
        %v6729 = vld [vmem:[%s6661 + $0x218] sm:$0xff]
        %v6730 = vld [vmem:[%s6661 + $0x220] sm:$0xff]
        %v6731 = vld [vmem:[%s6661 + $0x228] sm:$0xff]
        %v6732 = vld [vmem:[%s6661 + $0x230] sm:$0xff]
        %v6733 = vld [vmem:[%s6661 + $0x238] sm:$0xff]
        %v6734 = vld [vmem:[%s6661 + $0x240] sm:$0xff]
        %v6735 = vld [vmem:[%s6661 + $0x248] sm:$0xff]
        %v6736 = vld [vmem:[%s6661 + $0x250] sm:$0xff]
        %v6737 = vld [vmem:[%s6661 + $0x258] sm:$0xff]
        %v6738 = vld [vmem:[%s6661 + $0x260] sm:$0xff]
        %v6739 = vld [vmem:[%s6661 + $0x268] sm:$0xff]
        %v6740 = vld [vmem:[%s6661 + $0x270] sm:$0xff]
        %v6741 = vld [vmem:[%s6661 + $0x278] sm:$0xff]
        %v6742 = vld [vmem:[%s6661 + $0x280] sm:$0xff]
        %v6743 = vld [vmem:[%s6661 + $0x288] sm:$0xff]
        %v6744 = vld [vmem:[%s6661 + $0x290] sm:$0xff]
        %v6745 = vld [vmem:[%s6661 + $0x298] sm:$0xff]
        %v6746 = vld [vmem:[%s6661 + $0x2a0] sm:$0xff]
        %v6747 = vld [vmem:[%s6661 + $0x2a8] sm:$0xff]
        %v6748 = vld [vmem:[%s6661 + $0x2b0] sm:$0xff]
        %v6749 = vld [vmem:[%s6661 + $0x2b8] sm:$0xff]
        %v6750 = vld [vmem:[%s6661 + $0x2c0] sm:$0xff]
        %v6751 = vld [vmem:[%s6661 + $0x2c8] sm:$0xff]
        %v6752 = vld [vmem:[%s6661 + $0x2d0] sm:$0xff]
        %v6753 = vld [vmem:[%s6661 + $0x2d8] sm:$0xff]
        %v6754 = vld [vmem:[%s6661 + $0x2e0] sm:$0xff]
        %v6755 = vld [vmem:[%s6661 + $0x2e8] sm:$0xff]
        %v6756 = vld [vmem:[%s6661 + $0x2f0] sm:$0xff]
        %v6757 = vld [vmem:[%s6661 + $0x2f8] sm:$0xff]
        %v6758 = vld [vmem:[%s6661 + $0x300] sm:$0xff]
        %v6759 = vld [vmem:[%s6661 + $0x308] sm:$0xff]
        %v6760 = vld [vmem:[%s6661 + $0x310] sm:$0xff]
        %v6761 = vld [vmem:[%s6661 + $0x318] sm:$0xff]
        %v6762 = vld [vmem:[%s6661 + $0x320] sm:$0xff]
        %v6763 = vld [vmem:[%s6661 + $0x328] sm:$0xff]
        %v6764 = vld [vmem:[%s6661 + $0x330] sm:$0xff]
        %v6765 = vld [vmem:[%s6661 + $0x338] sm:$0xff]
        %v6766 = vld [vmem:[%s6661 + $0x340] sm:$0xff]
        %v6767 = vld [vmem:[%s6661 + $0x348] sm:$0xff]
        %v6768 = vld [vmem:[%s6661 + $0x350] sm:$0xff]
        %v6769 = vld [vmem:[%s6661 + $0x358] sm:$0xff]
        %v6770 = vld [vmem:[%s6661 + $0x360] sm:$0xff]
        %v6771 = vld [vmem:[%s6661 + $0x368] sm:$0xff]
        %v6772 = vld [vmem:[%s6661 + $0x370] sm:$0xff]
        %v6773 = vld [vmem:[%s6661 + $0x378] sm:$0xff]
        %v6774 = vld [vmem:[%s6661 + $0x380] sm:$0xff]
        %v6775 = vld [vmem:[%s6661 + $0x388] sm:$0xff]
        %v6776 = vld [vmem:[%s6661 + $0x390] sm:$0xff]
        %v6777 = vld [vmem:[%s6661 + $0x398] sm:$0xff]
        %v6778 = vld [vmem:[%s6661 + $0x3a0] sm:$0xff]
        %v6779 = vld [vmem:[%s6661 + $0x3a8] sm:$0xff]
        %v6780 = vld [vmem:[%s6661 + $0x3b0] sm:$0xff]
        %v6781 = vld [vmem:[%s6661 + $0x3b8] sm:$0xff]
        %v6782 = vld [vmem:[%s6661 + $0x3c0] sm:$0xff]
        %v6783 = vld [vmem:[%s6661 + $0x3c8] sm:$0xff]
        %v6784 = vld [vmem:[%s6661 + $0x3d0] sm:$0xff]
        %v6785 = vld [vmem:[%s6661 + $0x3d8] sm:$0xff]
        %v6786 = vld [vmem:[%s6661 + $0x3e0] sm:$0xff]
        %v6787 = vld [vmem:[%s6661 + $0x3e8] sm:$0xff]
        %v6788 = vld [vmem:[%s6661 + $0x3f0] sm:$0xff]
        %v6789 = vld [vmem:[%s6661 + $0x3f8] sm:$0xff]
        %v6790 = vld [vmem:[%s6661 + $0x400] sm:$0xff]
        %v6791 = vld [vmem:[%s6661 + $0x408] sm:$0xff]
        %v6792 = vld [vmem:[%s6661 + $0x410] sm:$0xff]
        %v6793 = vld [vmem:[%s6661 + $0x418] sm:$0xff]
        %v6794 = vld [vmem:[%s6661 + $0x420] sm:$0xff]
        %v6795 = vld [vmem:[%s6661 + $0x428] sm:$0xff]
        %v6796 = vld [vmem:[%s6661 + $0x430] sm:$0xff]
        %v6797 = vld [vmem:[%s6661 + $0x438] sm:$0xff]
        %v6798 = vld [vmem:[%s6661 + $0x440] sm:$0xff]
        %v6799 = vld [vmem:[%s6661 + $0x448] sm:$0xff]
        %v6800 = vld [vmem:[%s6661 + $0x450] sm:$0xff]
        %v6801 = vld [vmem:[%s6661 + $0x458] sm:$0xff]
        %v6802 = vld [vmem:[%s6661 + $0x460] sm:$0xff]
        %v6803 = vld [vmem:[%s6661 + $0x468] sm:$0xff]
        %v6804 = vld [vmem:[%s6661 + $0x470] sm:$0xff]
        %v6805 = vld [vmem:[%s6661 + $0x478] sm:$0xff]
        %v6806 = vld [vmem:[%s6661 + $0x480] sm:$0xff]
        %v6807 = vld [vmem:[%s6661 + $0x488] sm:$0xff]
        %v6808 = vld [vmem:[%s6661 + $0x490] sm:$0xff]
        %v6809 = vld [vmem:[%s6661 + $0x498] sm:$0xff]
        %v6810 = vld [vmem:[%s6661 + $0x4a0] sm:$0xff]
        %v6811 = vld [vmem:[%s6661 + $0x4a8] sm:$0xff]
        %v6812 = vld [vmem:[%s6661 + $0x4b0] sm:$0xff]
        %v6813 = vld [vmem:[%s6661 + $0x4b8] sm:$0xff]
        %v6814 = vld [vmem:[%s6661 + $0x4c0] sm:$0xff]
        %v6815 = vld [vmem:[%s6661 + $0x4c8] sm:$0xff]
        %v6816 = vld [vmem:[%s6661 + $0x4d0] sm:$0xff]
        %v6817 = vld [vmem:[%s6661 + $0x4d8] sm:$0xff]
        %v6818 = vld [vmem:[%s6661 + $0x4e0] sm:$0xff]
        %v6819 = vld [vmem:[%s6661 + $0x4e8] sm:$0xff]
        %v6820 = vld [vmem:[%s6661 + $0x4f0] sm:$0xff]
        %v6821 = vld [vmem:[%s6661 + $0x4f8] sm:$0xff]
        %v6822 = vld [vmem:[%s6661 + $0x500] sm:$0xff]
        %v6823 = vld [vmem:[%s6661 + $0x508] sm:$0xff]
        %v6824 = vld [vmem:[%s6661 + $0x510] sm:$0xff]
        %v6825 = vld [vmem:[%s6661 + $0x518] sm:$0xff]
        %v6826 = vld [vmem:[%s6661 + $0x520] sm:$0xff]
        %v6827 = vld [vmem:[%s6661 + $0x528] sm:$0xff]
        %v6828 = vld [vmem:[%s6661 + $0x530] sm:$0xff]
        %v6829 = vld [vmem:[%s6661 + $0x538] sm:$0xff]
        %v6830 = vld [vmem:[%s6661 + $0x540] sm:$0xff]
        %v6831 = vld [vmem:[%s6661 + $0x548] sm:$0xff]
        %v6832 = vld [vmem:[%s6661 + $0x550] sm:$0xff]
        %v6833 = vld [vmem:[%s6661 + $0x558] sm:$0xff]
        %v6834 = vld [vmem:[%s6661 + $0x560] sm:$0xff]
        %v6835 = vld [vmem:[%s6661 + $0x568] sm:$0xff]
        %v6836 = vld [vmem:[%s6661 + $0x570] sm:$0xff]
        %v6837 = vld [vmem:[%s6661 + $0x578] sm:$0xff]
        %v6838 = vld [vmem:[%s6661 + $0x580] sm:$0xff]
        %v6839 = vld [vmem:[%s6661 + $0x588] sm:$0xff]
        %v6840 = vld [vmem:[%s6661 + $0x590] sm:$0xff]
        %v6841 = vld [vmem:[%s6661 + $0x598] sm:$0xff]
        %v6842 = vld [vmem:[%s6661 + $0x5a0] sm:$0xff]
        %v6843 = vld [vmem:[%s6661 + $0x5a8] sm:$0xff]
        %v6844 = vld [vmem:[%s6661 + $0x5b0] sm:$0xff]
        %v6845 = vld [vmem:[%s6661 + $0x5b8] sm:$0xff]
        %v6846 = vld [vmem:[%s6661 + $0x5c0] sm:$0xff]
        %v6847 = vld [vmem:[%s6661 + $0x5c8] sm:$0xff]
        %v6848 = vld [vmem:[%s6661 + $0x5d0] sm:$0xff]
        %v6849 = vld [vmem:[%s6661 + $0x5d8] sm:$0xff]
        %v6850 = vld [vmem:[%s6661 + $0x5e0] sm:$0xff]
        %v6851 = vld [vmem:[%s6661 + $0x5e8] sm:$0xff]
        %v6852 = vld [vmem:[%s6661 + $0x5f0] sm:$0xff]
        %v6853 = vld [vmem:[%s6661 + $0x5f8] sm:$0xff]
        %v6854 = vld [vmem:[%s6661 + $0x600] sm:$0xff]
        %v6855 = vld [vmem:[%s6661 + $0x608] sm:$0xff]
        %v6856 = vld [vmem:[%s6661 + $0x610] sm:$0xff]
        %v6857 = vld [vmem:[%s6661 + $0x618] sm:$0xff]
        %v6858 = vld [vmem:[%s6661 + $0x620] sm:$0xff]
        %v6859 = vld [vmem:[%s6661 + $0x628] sm:$0xff]
        %v6860 = vld [vmem:[%s6661 + $0x630] sm:$0xff]
        %v6861 = vld [vmem:[%s6661 + $0x638] sm:$0xff]
        %v6862 = vld [vmem:[%s6661 + $0x640] sm:$0xff]
        %v6863 = vld [vmem:[%s6661 + $0x648] sm:$0xff]
        %v6864 = vld [vmem:[%s6661 + $0x650] sm:$0xff]
        %v6865 = vld [vmem:[%s6661 + $0x658] sm:$0xff]
        %v6866 = vld [vmem:[%s6661 + $0x660] sm:$0xff]
        %v6867 = vld [vmem:[%s6661 + $0x668] sm:$0xff]
        %v6868 = vld [vmem:[%s6661 + $0x670] sm:$0xff]
        %v6869 = vld [vmem:[%s6661 + $0x678] sm:$0xff]
        %v6870 = vld [vmem:[%s6661 + $0x680] sm:$0xff]
        %v6871 = vld [vmem:[%s6661 + $0x688] sm:$0xff]
        %v6872 = vld [vmem:[%s6661 + $0x690] sm:$0xff]
        %v6873 = vld [vmem:[%s6661 + $0x698] sm:$0xff]
        %v6874 = vld [vmem:[%s6661 + $0x6a0] sm:$0xff]
        %v6875 = vld [vmem:[%s6661 + $0x6a8] sm:$0xff]
        %v6876 = vld [vmem:[%s6661 + $0x6b0] sm:$0xff]
        %v6877 = vld [vmem:[%s6661 + $0x6b8] sm:$0xff]
        %v6878 = vld [vmem:[%s6661 + $0x6c0] sm:$0xff]
        %v6879 = vld [vmem:[%s6661 + $0x6c8] sm:$0xff]
        %v6880 = vld [vmem:[%s6661 + $0x6d0] sm:$0xff]
        %v6881 = vld [vmem:[%s6661 + $0x6d8] sm:$0xff]
        %v6882 = vld [vmem:[%s6661 + $0x6e0] sm:$0xff]
        %v6883 = vld [vmem:[%s6661 + $0x6e8] sm:$0xff]
        %v6884 = vld [vmem:[%s6661 + $0x6f0] sm:$0xff]
        %v6885 = vld [vmem:[%s6661 + $0x6f8] sm:$0xff]
        %v6886 = vld [vmem:[%s6661 + $0x700] sm:$0xff]
        %v6887 = vld [vmem:[%s6661 + $0x708] sm:$0xff]
        %v6888 = vld [vmem:[%s6661 + $0x710] sm:$0xff]
        %v6889 = vld [vmem:[%s6661 + $0x718] sm:$0xff]
        %v6890 = vld [vmem:[%s6661 + $0x720] sm:$0xff]
        %v6891 = vld [vmem:[%s6661 + $0x728] sm:$0xff]
        %v6892 = vld [vmem:[%s6661 + $0x730] sm:$0xff]
        %v6893 = vld [vmem:[%s6661 + $0x738] sm:$0xff]
        %v6894 = vld [vmem:[%s6661 + $0x740] sm:$0xff]
        %v6895 = vld [vmem:[%s6661 + $0x748] sm:$0xff]
        %v6896 = vld [vmem:[%s6661 + $0x750] sm:$0xff]
        %v6897 = vld [vmem:[%s6661 + $0x758] sm:$0xff]
        %v6898 = vld [vmem:[%s6661 + $0x760] sm:$0xff]
        %v6899 = vld [vmem:[%s6661 + $0x768] sm:$0xff]
        %v6900 = vld [vmem:[%s6661 + $0x770] sm:$0xff]
        %v6901 = vld [vmem:[%s6661 + $0x778] sm:$0xff]
        %v6902 = vld [vmem:[%s6661 + $0x780] sm:$0xff]
        %v6903 = vld [vmem:[%s6661 + $0x788] sm:$0xff]
        %v6904 = vld [vmem:[%s6661 + $0x790] sm:$0xff]
        %v6905 = vld [vmem:[%s6661 + $0x798] sm:$0xff]
        %v6906 = vld [vmem:[%s6661 + $0x7a0] sm:$0xff]
        %v6907 = vld [vmem:[%s6661 + $0x7a8] sm:$0xff]
        %v6908 = vld [vmem:[%s6661 + $0x7b0] sm:$0xff]
        %v6909 = vld [vmem:[%s6661 + $0x7b8] sm:$0xff]
        %v6910 = vld [vmem:[%s6661 + $0x7c0] sm:$0xff]
        %v6911 = vld [vmem:[%s6661 + $0x7c8] sm:$0xff]
        %v6912 = vld [vmem:[%s6661 + $0x7d0] sm:$0xff]
        %v6913 = vld [vmem:[%s6661 + $0x7d8] sm:$0xff]
        %v6914 = vld [vmem:[%s6661 + $0x7e0] sm:$0xff]
        %v6915 = vld [vmem:[%s6661 + $0x7e8] sm:$0xff]
        %v6916 = vld [vmem:[%s6661 + $0x7f0] sm:$0xff]
        %v6917 = vld [vmem:[%s6661 + $0x7f8] sm:$0xff]
        %6918 = vmatprep.subr.mxu0 %v6663
        %6919 = vmatpush1.msra.mxu0 %v6662
        %6920 = vmatprep.subr.mxu0 %v6667
        %6921 = vmatpush1.msra.mxu0 %v6666
        %6922 = vmatprep.subr.mxu0 %v6671
        %6923 = vmatpush1.msra.mxu0 %v6670
        %6924 = vmatprep.subr.mxu0 %v6675
        %6925 = vmatpush1.msra.mxu0 %v6674
        %6926 = vmatprep.subr.mxu0 %v6679
        %6927 = vmatpush1.msra.mxu0 %v6678
        %6928 = vmatprep.subr.mxu0 %v6683
        %6929 = vmatpush1.msra.mxu0 %v6682
        %6930 = vmatprep.subr.mxu0 %v6687
        %6931 = vmatpush1.msra.mxu0 %v6686
        %6932 = vmatprep.subr.mxu0 %v6691
        %6933 = vmatpush1.msra.mxu0 %v6690
        %6934 = vmatprep.subr.mxu0 %v6695
        %6935 = vmatpush1.msra.mxu0 %v6694
        %6936 = vmatprep.subr.mxu0 %v6699
        %6937 = vmatpush1.msra.mxu0 %v6698
        %6938 = vmatprep.subr.mxu0 %v6703
        %6939 = vmatpush1.msra.mxu0 %v6702
        %6940 = vmatprep.subr.mxu0 %v6707
        %6941 = vmatpush1.msra.mxu0 %v6706
        %6942 = vmatprep.subr.mxu0 %v6711
        %6943 = vmatpush1.msra.mxu0 %v6710
        %6944 = vmatprep.subr.mxu0 %v6715
        %6945 = vmatpush1.msra.mxu0 %v6714
        %6946 = vmatprep.subr.mxu0 %v6719
        %6947 = vmatpush1.msra.mxu0 %v6718
        %6948 = vmatprep.subr.mxu0 %v6723
        %6949 = vmatpush1.msra.mxu0 %v6722
        %6950 = vmatprep.subr.mxu0 %v6727
        %6951 = vmatpush1.msra.mxu0 %v6726
        %6952 = vmatprep.subr.mxu0 %v6731
        %6953 = vmatpush1.msra.mxu0 %v6730
        %6954 = vmatprep.subr.mxu0 %v6735
        %6955 = vmatpush1.msra.mxu0 %v6734
        %6956 = vmatprep.subr.mxu0 %v6739
        %6957 = vmatpush1.msra.mxu0 %v6738
        %6958 = vmatprep.subr.mxu0 %v6743
        %6959 = vmatpush1.msra.mxu0 %v6742
        %6960 = vmatprep.subr.mxu0 %v6747
        %6961 = vmatpush1.msra.mxu0 %v6746
        %6962 = vmatprep.subr.mxu0 %v6751
        %6963 = vmatpush1.msra.mxu0 %v6750
        %6964 = vmatprep.subr.mxu0 %v6755
        %6965 = vmatpush1.msra.mxu0 %v6754
        %6966 = vmatprep.subr.mxu0 %v6759
        %6967 = vmatpush1.msra.mxu0 %v6758
        %6968 = vmatprep.subr.mxu0 %v6763
        %6969 = vmatpush1.msra.mxu0 %v6762
        %6970 = vmatprep.subr.mxu0 %v6767
        %6971 = vmatpush1.msra.mxu0 %v6766
        %6972 = vmatprep.subr.mxu0 %v6771
        %6973 = vmatpush1.msra.mxu0 %v6770
        %6974 = vmatprep.subr.mxu0 %v6775
        %6975 = vmatpush1.msra.mxu0 %v6774
        %6976 = vmatprep.subr.mxu0 %v6779
        %6977 = vmatpush1.msra.mxu0 %v6778
        %6978 = vmatprep.subr.mxu0 %v6783
        %6979 = vmatpush1.msra.mxu0 %v6782
        %6980 = vmatprep.subr.mxu0 %v6787
        %6981 = vmatpush1.msra.mxu0 %v6786
        %6982 = vmatprep.mubr.f32.mxu0 %v6576
        %6983 = vmatmul.mubr.f32.gmra.mrb[0].mxu0 %v6574
        %v6984 = vpop.f32.mrb[0].mxu0
        %v6985 = vadd.f32 0.0, %v6984
        %v6986 = vpop.f32.mrb[0].mxu0
        %v6987 = vadd.f32 0.0, %v6986
        %6988 = vmatprep.mubr.f32.mxu0 %v6582
        %6989 = vmatmul.mubr.f32.gmra.mrb[0].mxu0 %v6580
        %v6990 = vpop.f32.mrb[0].mxu0
        %v6991 = vadd.f32 0.0, %v6990
        %v6992 = vpop.f32.mrb[0].mxu0
        %v6993 = vadd.f32 0.0, %v6992
        %6994 = vdwg.mxu0
        %6995 = vmatprep.subr.mxu0 %v6791
        %6996 = vmatpush1.msra.mxu0 %v6790
        %6997 = vmatprep.subr.mxu0 %v6795
        %6998 = vmatpush1.msra.mxu0 %v6794
        %6999 = vmatprep.subr.mxu0 %v6799
        %7000 = vmatpush1.msra.mxu0 %v6798
        %7001 = vmatprep.subr.mxu0 %v6803
        %7002 = vmatpush1.msra.mxu0 %v6802
        %7003 = vmatprep.subr.mxu0 %v6807
        %7004 = vmatpush1.msra.mxu0 %v6806
        %7005 = vmatprep.subr.mxu0 %v6811
        %7006 = vmatpush1.msra.mxu0 %v6810
        %7007 = vmatprep.subr.mxu0 %v6815
        %7008 = vmatpush1.msra.mxu0 %v6814
        %7009 = vmatprep.subr.mxu0 %v6819
        %7010 = vmatpush1.msra.mxu0 %v6818
        %7011 = vmatprep.subr.mxu0 %v6823
        %7012 = vmatpush1.msra.mxu0 %v6822
        %7013 = vmatprep.subr.mxu0 %v6827
        %7014 = vmatpush1.msra.mxu0 %v6826
        %7015 = vmatprep.subr.mxu0 %v6831
        %7016 = vmatpush1.msra.mxu0 %v6830
        %7017 = vmatprep.subr.mxu0 %v6835
        %7018 = vmatpush1.msra.mxu0 %v6834
        %7019 = vmatprep.subr.mxu0 %v6839
        %7020 = vmatpush1.msra.mxu0 %v6838
        %7021 = vmatprep.subr.mxu0 %v6843
        %7022 = vmatpush1.msra.mxu0 %v6842
        %7023 = vmatprep.subr.mxu0 %v6847
        %7024 = vmatpush1.msra.mxu0 %v6846
        %7025 = vmatprep.subr.mxu0 %v6851
        %7026 = vmatpush1.msra.mxu0 %v6850
        %7027 = vmatprep.subr.mxu0 %v6855
        %7028 = vmatpush1.msra.mxu0 %v6854
        %7029 = vmatprep.subr.mxu0 %v6859
        %7030 = vmatpush1.msra.mxu0 %v6858
        %7031 = vmatprep.subr.mxu0 %v6863
        %7032 = vmatpush1.msra.mxu0 %v6862
        %7033 = vmatprep.subr.mxu0 %v6867
        %7034 = vmatpush1.msra.mxu0 %v6866
        %7035 = vmatprep.subr.mxu0 %v6871
        %7036 = vmatpush1.msra.mxu0 %v6870
        %7037 = vmatprep.subr.mxu0 %v6875
        %7038 = vmatpush1.msra.mxu0 %v6874
        %7039 = vmatprep.subr.mxu0 %v6879
        %7040 = vmatpush1.msra.mxu0 %v6878
        %7041 = vmatprep.subr.mxu0 %v6883
        %7042 = vmatpush1.msra.mxu0 %v6882
        %7043 = vmatprep.subr.mxu0 %v6887
        %7044 = vmatpush1.msra.mxu0 %v6886
        %7045 = vmatprep.subr.mxu0 %v6891
        %7046 = vmatpush1.msra.mxu0 %v6890
        %7047 = vmatprep.subr.mxu0 %v6895
        %7048 = vmatpush1.msra.mxu0 %v6894
        %7049 = vmatprep.subr.mxu0 %v6899
        %7050 = vmatpush1.msra.mxu0 %v6898
        %7051 = vmatprep.subr.mxu0 %v6903
        %7052 = vmatpush1.msra.mxu0 %v6902
        %7053 = vmatprep.subr.mxu0 %v6907
        %7054 = vmatpush1.msra.mxu0 %v6906
        %7055 = vmatprep.subr.mxu0 %v6911
        %7056 = vmatpush1.msra.mxu0 %v6910
        %7057 = vmatprep.subr.mxu0 %v6915
        %7058 = vmatpush1.msra.mxu0 %v6914
        %7059 = vmatprep.mubr.f32.mxu0 %v6653
        %7060 = vmatmul.mubr.f32.gmra.mrb[0].mxu0 %v6651
        %v7061 = vpop.f32.mrb[0].mxu0
        %v7062 = vadd.f32 %v6985, %v7061
        %v7063 = vpop.f32.mrb[0].mxu0
        %v7064 = vadd.f32 %v6987, %v7063
        %7065 = vmatprep.mubr.f32.mxu0 %v6659
        %7066 = vmatmul.mubr.f32.gmra.mrb[0].mxu0 %v6657
        %v7067 = vpop.f32.mrb[0].mxu0
        %v7068 = vadd.f32 %v6991, %v7067
        %v7069 = vpop.f32.mrb[0].mxu0
        %v7070 = vadd.f32 %v6993, %v7069
        %7071 = vdwg.mxu0
        %7072 = vmatprep.subr.mxu0 %v6665
        %7073 = vmatpush1.msra.mxu0 %v6664
        %7074 = vmatprep.subr.mxu0 %v6669
        %7075 = vmatpush1.msra.mxu0 %v6668
        %7076 = vmatprep.subr.mxu0 %v6673
        %7077 = vmatpush1.msra.mxu0 %v6672
        %7078 = vmatprep.subr.mxu0 %v6677
        %7079 = vmatpush1.msra.mxu0 %v6676
        %7080 = vmatprep.subr.mxu0 %v6681
        %7081 = vmatpush1.msra.mxu0 %v6680
        %7082 = vmatprep.subr.mxu0 %v6685
        %7083 = vmatpush1.msra.mxu0 %v6684
        %7084 = vmatprep.subr.mxu0 %v6689
        %7085 = vmatpush1.msra.mxu0 %v6688
        %7086 = vmatprep.subr.mxu0 %v6693
        %7087 = vmatpush1.msra.mxu0 %v6692
        %7088 = vmatprep.subr.mxu0 %v6697
        %7089 = vmatpush1.msra.mxu0 %v6696
        %7090 = vmatprep.subr.mxu0 %v6701
        %7091 = vmatpush1.msra.mxu0 %v6700
        %7092 = vmatprep.subr.mxu0 %v6705
        %7093 = vmatpush1.msra.mxu0 %v6704
        %7094 = vmatprep.subr.mxu0 %v6709
        %7095 = vmatpush1.msra.mxu0 %v6708
        %7096 = vmatprep.subr.mxu0 %v6713
        %7097 = vmatpush1.msra.mxu0 %v6712
        %7098 = vmatprep.subr.mxu0 %v6717
        %7099 = vmatpush1.msra.mxu0 %v6716
        %7100 = vmatprep.subr.mxu0 %v6721
        %7101 = vmatpush1.msra.mxu0 %v6720
        %7102 = vmatprep.subr.mxu0 %v6725
        %7103 = vmatpush1.msra.mxu0 %v6724
        %7104 = vmatprep.subr.mxu0 %v6729
        %7105 = vmatpush1.msra.mxu0 %v6728
        %7106 = vmatprep.subr.mxu0 %v6733
        %7107 = vmatpush1.msra.mxu0 %v6732
        %7108 = vmatprep.subr.mxu0 %v6737
        %7109 = vmatpush1.msra.mxu0 %v6736
        %7110 = vmatprep.subr.mxu0 %v6741
        %7111 = vmatpush1.msra.mxu0 %v6740
        %7112 = vmatprep.subr.mxu0 %v6745
        %7113 = vmatpush1.msra.mxu0 %v6744
        %7114 = vmatprep.subr.mxu0 %v6749
        %7115 = vmatpush1.msra.mxu0 %v6748
        %7116 = vmatprep.subr.mxu0 %v6753
        %7117 = vmatpush1.msra.mxu0 %v6752
        %7118 = vmatprep.subr.mxu0 %v6757
        %7119 = vmatpush1.msra.mxu0 %v6756
        %7120 = vmatprep.subr.mxu0 %v6761
        %7121 = vmatpush1.msra.mxu0 %v6760
        %7122 = vmatprep.subr.mxu0 %v6765
        %7123 = vmatpush1.msra.mxu0 %v6764
        %7124 = vmatprep.subr.mxu0 %v6769
        %7125 = vmatpush1.msra.mxu0 %v6768
        %7126 = vmatprep.subr.mxu0 %v6773
        %7127 = vmatpush1.msra.mxu0 %v6772
        %7128 = vmatprep.subr.mxu0 %v6777
        %7129 = vmatpush1.msra.mxu0 %v6776
        %7130 = vmatprep.subr.mxu0 %v6781
        %7131 = vmatpush1.msra.mxu0 %v6780
        %7132 = vmatprep.subr.mxu0 %v6785
        %7133 = vmatpush1.msra.mxu0 %v6784
        %7134 = vmatprep.subr.mxu0 %v6789
        %7135 = vmatpush1.msra.mxu0 %v6788
        %7136 = vmatprep.mubr.f32.mxu0 %v6576
        %7137 = vmatmul.mubr.f32.gmra.mrb[0].mxu0 %v6574
        %v7138 = vpop.f32.mrb[0].mxu0
        %v7139 = vadd.f32 0.0, %v7138
        %v7140 = vpop.f32.mrb[0].mxu0
        %v7141 = vadd.f32 0.0, %v7140
        %7142 = vmatprep.mubr.f32.mxu0 %v6582
        %7143 = vmatmul.mubr.f32.gmra.mrb[0].mxu0 %v6580
        %v7144 = vpop.f32.mrb[0].mxu0
        %v7145 = vadd.f32 0.0, %v7144
        %v7146 = vpop.f32.mrb[0].mxu0
        %v7147 = vadd.f32 0.0, %v7146
        %7148 = vdwg.mxu0
        %7149 = vmatprep.subr.mxu0 %v6793
        %7150 = vmatpush1.msra.mxu0 %v6792
        %7151 = vmatprep.subr.mxu0 %v6797
        %7152 = vmatpush1.msra.mxu0 %v6796
        %7153 = vmatprep.subr.mxu0 %v6801
        %7154 = vmatpush1.msra.mxu0 %v6800
        %7155 = vmatprep.subr.mxu0 %v6805
        %7156 = vmatpush1.msra.mxu0 %v6804
        %7157 = vmatprep.subr.mxu0 %v6809
        %7158 = vmatpush1.msra.mxu0 %v6808
        %7159 = vmatprep.subr.mxu0 %v6813
        %7160 = vmatpush1.msra.mxu0 %v6812
        %7161 = vmatprep.subr.mxu0 %v6817
        %7162 = vmatpush1.msra.mxu0 %v6816
        %7163 = vmatprep.subr.mxu0 %v6821
        %7164 = vmatpush1.msra.mxu0 %v6820
        %7165 = vmatprep.subr.mxu0 %v6825
        %7166 = vmatpush1.msra.mxu0 %v6824
        %7167 = vmatprep.subr.mxu0 %v6829
        %7168 = vmatpush1.msra.mxu0 %v6828
        %7169 = vmatprep.subr.mxu0 %v6833
        %7170 = vmatpush1.msra.mxu0 %v6832
        %7171 = vmatprep.subr.mxu0 %v6837
        %7172 = vmatpush1.msra.mxu0 %v6836
        %7173 = vmatprep.subr.mxu0 %v6841
        %7174 = vmatpush1.msra.mxu0 %v6840
        %7175 = vmatprep.subr.mxu0 %v6845
        %7176 = vmatpush1.msra.mxu0 %v6844
        %7177 = vmatprep.subr.mxu0 %v6849
        %7178 = vmatpush1.msra.mxu0 %v6848
        %7179 = vmatprep.subr.mxu0 %v6853
        %7180 = vmatpush1.msra.mxu0 %v6852
        %7181 = vmatprep.subr.mxu0 %v6857
        %7182 = vmatpush1.msra.mxu0 %v6856
        %7183 = vmatprep.subr.mxu0 %v6861
        %7184 = vmatpush1.msra.mxu0 %v6860
        %7185 = vmatprep.subr.mxu0 %v6865
        %7186 = vmatpush1.msra.mxu0 %v6864
        %7187 = vmatprep.subr.mxu0 %v6869
        %7188 = vmatpush1.msra.mxu0 %v6868
        %7189 = vmatprep.subr.mxu0 %v6873
        %7190 = vmatpush1.msra.mxu0 %v6872
        %7191 = vmatprep.subr.mxu0 %v6877
        %7192 = vmatpush1.msra.mxu0 %v6876
        %7193 = vmatprep.subr.mxu0 %v6881
        %7194 = vmatpush1.msra.mxu0 %v6880
        %7195 = vmatprep.subr.mxu0 %v6885
        %7196 = vmatpush1.msra.mxu0 %v6884
        %7197 = vmatprep.subr.mxu0 %v6889
        %7198 = vmatpush1.msra.mxu0 %v6888
        %7199 = vmatprep.subr.mxu0 %v6893
        %7200 = vmatpush1.msra.mxu0 %v6892
        %7201 = vmatprep.subr.mxu0 %v6897
        %7202 = vmatpush1.msra.mxu0 %v6896
        %7203 = vmatprep.subr.mxu0 %v6901
        %7204 = vmatpush1.msra.mxu0 %v6900
        %7205 = vmatprep.subr.mxu0 %v6905
        %7206 = vmatpush1.msra.mxu0 %v6904
        %7207 = vmatprep.subr.mxu0 %v6909
        %7208 = vmatpush1.msra.mxu0 %v6908
        %7209 = vmatprep.subr.mxu0 %v6913
        %7210 = vmatpush1.msra.mxu0 %v6912
        %7211 = vmatprep.subr.mxu0 %v6917
        %7212 = vmatpush1.msra.mxu0 %v6916
        %7213 = vmatprep.mubr.f32.mxu0 %v6653
        %7214 = vmatmul.mubr.f32.gmra.mrb[0].mxu0 %v6651
        %v7215 = vpop.f32.mrb[0].mxu0
        %v7216 = vadd.f32 %v7139, %v7215
        %v7217 = vpop.f32.mrb[0].mxu0
        %v7218 = vadd.f32 %v7141, %v7217
        %7219 = vmatprep.mubr.f32.mxu0 %v6659
        %7220 = vmatmul.mubr.f32.gmra.mrb[0].mxu0 %v6657
        %v7221 = vpop.f32.mrb[0].mxu0
        %v7222 = vadd.f32 %v7145, %v7221
        %v7223 = vpop.f32.mrb[0].mxu0
        %v7224 = vadd.f32 %v7147, %v7223
        %7225 = vdwg.mxu0
        %7226 = vmatprep.subr.mxu0 %v6252
        %7227 = vmatpush1.msra.mxu0 %v6251
        %7228 = vmatprep.subr.mxu0 %v6256
        %7229 = vmatpush1.msra.mxu0 %v6255
        %7230 = vmatprep.subr.mxu0 %v6260
        %7231 = vmatpush1.msra.mxu0 %v6259
        %7232 = vmatprep.subr.mxu0 %v6264
        %7233 = vmatpush1.msra.mxu0 %v6263
        %7234 = vmatprep.subr.mxu0 %v6268
        %7235 = vmatpush1.msra.mxu0 %v6267
        %7236 = vmatprep.subr.mxu0 %v6272
        %7237 = vmatpush1.msra.mxu0 %v6271
        %7238 = vmatprep.subr.mxu0 %v6276
        %7239 = vmatpush1.msra.mxu0 %v6275
        %7240 = vmatprep.subr.mxu0 %v6280
        %7241 = vmatpush1.msra.mxu0 %v6279
        %7242 = vmatprep.subr.mxu0 %v6284
        %7243 = vmatpush1.msra.mxu0 %v6283
        %7244 = vmatprep.subr.mxu0 %v6288
        %7245 = vmatpush1.msra.mxu0 %v6287
        %7246 = vmatprep.subr.mxu0 %v6292
        %7247 = vmatpush1.msra.mxu0 %v6291
        %7248 = vmatprep.subr.mxu0 %v6296
        %7249 = vmatpush1.msra.mxu0 %v6295
        %7250 = vmatprep.subr.mxu0 %v6300
        %7251 = vmatpush1.msra.mxu0 %v6299
        %7252 = vmatprep.subr.mxu0 %v6304
        %7253 = vmatpush1.msra.mxu0 %v6303
        %7254 = vmatprep.subr.mxu0 %v6308
        %7255 = vmatpush1.msra.mxu0 %v6307
        %7256 = vmatprep.subr.mxu0 %v6312
        %7257 = vmatpush1.msra.mxu0 %v6311
        %7258 = vmatprep.subr.mxu0 %v6316
        %7259 = vmatpush1.msra.mxu0 %v6315
        %7260 = vmatprep.subr.mxu0 %v6320
        %7261 = vmatpush1.msra.mxu0 %v6319
        %7262 = vmatprep.subr.mxu0 %v6324
        %7263 = vmatpush1.msra.mxu0 %v6323
        %7264 = vmatprep.subr.mxu0 %v6328
        %7265 = vmatpush1.msra.mxu0 %v6327
        %7266 = vmatprep.subr.mxu0 %v6332
        %7267 = vmatpush1.msra.mxu0 %v6331
        %7268 = vmatprep.subr.mxu0 %v6336
        %7269 = vmatpush1.msra.mxu0 %v6335
        %7270 = vmatprep.subr.mxu0 %v6340
        %7271 = vmatpush1.msra.mxu0 %v6339
        %7272 = vmatprep.subr.mxu0 %v6344
        %7273 = vmatpush1.msra.mxu0 %v6343
        %7274 = vmatprep.subr.mxu0 %v6348
        %7275 = vmatpush1.msra.mxu0 %v6347
        %7276 = vmatprep.subr.mxu0 %v6352
        %7277 = vmatpush1.msra.mxu0 %v6351
        %7278 = vmatprep.subr.mxu0 %v6356
        %7279 = vmatpush1.msra.mxu0 %v6355
        %7280 = vmatprep.subr.mxu0 %v6360
        %7281 = vmatpush1.msra.mxu0 %v6359
        %7282 = vmatprep.subr.mxu0 %v6364
        %7283 = vmatpush1.msra.mxu0 %v6363
        %7284 = vmatprep.subr.mxu0 %v6368
        %7285 = vmatpush1.msra.mxu0 %v6367
        %7286 = vmatprep.subr.mxu0 %v6372
        %7287 = vmatpush1.msra.mxu0 %v6371
        %7288 = vmatprep.subr.mxu0 %v6376
        %7289 = vmatpush1.msra.mxu0 %v6375
        %7290 = vmatprep.mubr.f32.mxu0 %v6166
        %7291 = vmatmul.mubr.f32.gmra.mrb[0].mxu0 %v6164
        %v7292 = vpop.f32.mrb[0].mxu0
        %v7293 = vadd.f32 %v7062, %v7292
        %v7294 = vpop.f32.mrb[0].mxu0
        %v7295 = vadd.f32 %v7064, %v7294
        %7296 = vmatprep.mubr.f32.mxu0 %v6172
        %7297 = vmatmul.mubr.f32.gmra.mrb[0].mxu0 %v6170
        %v7298 = vpop.f32.mrb[0].mxu0
        %v7299 = vadd.f32 %v7068, %v7298
        %v7300 = vpop.f32.mrb[0].mxu0
        %v7301 = vadd.f32 %v7070, %v7300
        %7302 = vdwg.mxu0
        %7303 = vmatprep.subr.mxu0 %v6380
        %7304 = vmatpush1.msra.mxu0 %v6379
        %7305 = vmatprep.subr.mxu0 %v6384
        %7306 = vmatpush1.msra.mxu0 %v6383
        %7307 = vmatprep.subr.mxu0 %v6388
        %7308 = vmatpush1.msra.mxu0 %v6387
        %7309 = vmatprep.subr.mxu0 %v6392
        %7310 = vmatpush1.msra.mxu0 %v6391
        %7311 = vmatprep.subr.mxu0 %v6396
        %7312 = vmatpush1.msra.mxu0 %v6395
        %7313 = vmatprep.subr.mxu0 %v6400
        %7314 = vmatpush1.msra.mxu0 %v6399
        %7315 = vmatprep.subr.mxu0 %v6404
        %7316 = vmatpush1.msra.mxu0 %v6403
        %7317 = vmatprep.subr.mxu0 %v6408
        %7318 = vmatpush1.msra.mxu0 %v6407
        %7319 = vmatprep.subr.mxu0 %v6412
        %7320 = vmatpush1.msra.mxu0 %v6411
        %7321 = vmatprep.subr.mxu0 %v6416
        %7322 = vmatpush1.msra.mxu0 %v6415
        %7323 = vmatprep.subr.mxu0 %v6420
        %7324 = vmatpush1.msra.mxu0 %v6419
        %7325 = vmatprep.subr.mxu0 %v6424
        %7326 = vmatpush1.msra.mxu0 %v6423
        %7327 = vmatprep.subr.mxu0 %v6428
        %7328 = vmatpush1.msra.mxu0 %v6427
        %7329 = vmatprep.subr.mxu0 %v6432
        %7330 = vmatpush1.msra.mxu0 %v6431
        %7331 = vmatprep.subr.mxu0 %v6436
        %7332 = vmatpush1.msra.mxu0 %v6435
        %7333 = vmatprep.subr.mxu0 %v6440
        %7334 = vmatpush1.msra.mxu0 %v6439
        %7335 = vmatprep.subr.mxu0 %v6444
        %7336 = vmatpush1.msra.mxu0 %v6443
        %7337 = vmatprep.subr.mxu0 %v6448
        %7338 = vmatpush1.msra.mxu0 %v6447
        %7339 = vmatprep.subr.mxu0 %v6452
        %7340 = vmatpush1.msra.mxu0 %v6451
        %7341 = vmatprep.subr.mxu0 %v6456
        %7342 = vmatpush1.msra.mxu0 %v6455
        %7343 = vmatprep.subr.mxu0 %v6460
        %7344 = vmatpush1.msra.mxu0 %v6459
        %7345 = vmatprep.subr.mxu0 %v6464
        %7346 = vmatpush1.msra.mxu0 %v6463
        %7347 = vmatprep.subr.mxu0 %v6468
        %7348 = vmatpush1.msra.mxu0 %v6467
        %7349 = vmatprep.subr.mxu0 %v6472
        %7350 = vmatpush1.msra.mxu0 %v6471
        %7351 = vmatprep.subr.mxu0 %v6476
        %7352 = vmatpush1.msra.mxu0 %v6475
        %7353 = vmatprep.subr.mxu0 %v6480
        %7354 = vmatpush1.msra.mxu0 %v6479
        %7355 = vmatprep.subr.mxu0 %v6484
        %7356 = vmatpush1.msra.mxu0 %v6483
        %7357 = vmatprep.subr.mxu0 %v6488
        %7358 = vmatpush1.msra.mxu0 %v6487
        %7359 = vmatprep.subr.mxu0 %v6492
        %7360 = vmatpush1.msra.mxu0 %v6491
        %7361 = vmatprep.subr.mxu0 %v6496
        %7362 = vmatpush1.msra.mxu0 %v6495
        %7363 = vmatprep.subr.mxu0 %v6500
        %7364 = vmatpush1.msra.mxu0 %v6499
        %7365 = vmatprep.subr.mxu0 %v6504
        %7366 = vmatpush1.msra.mxu0 %v6503
        %7367 = vmatprep.mubr.f32.mxu0 %v6243
        %7368 = vmatmul.mubr.f32.gmra.mrb[0].mxu0 %v6241
        %v7369 = vpop.f32.mrb[0].mxu0
        %v7370 = vadd.f32 %v7293, %v7369
        %v7371 = vpop.f32.mrb[0].mxu0
        %v7372 = vadd.f32 %v7295, %v7371
        %7373 = vmatprep.mubr.f32.mxu0 %v6249
        %7374 = vmatmul.mubr.f32.gmra.mrb[0].mxu0 %v6247
        %v7375 = vpop.f32.mrb[0].mxu0
        %v7376 = vadd.f32 %v7299, %v7375
        %v7377 = vpop.f32.mrb[0].mxu0
        %v7378 = vadd.f32 %v7301, %v7377
        %7379 = vdwg.mxu0
        %7380 = vmatprep.subr.mxu0 %v6254
        %7381 = vmatpush1.msra.mxu0 %v6253
        %7382 = vmatprep.subr.mxu0 %v6258
        %7383 = vmatpush1.msra.mxu0 %v6257
        %7384 = vmatprep.subr.mxu0 %v6262
        %7385 = vmatpush1.msra.mxu0 %v6261
        %7386 = vmatprep.subr.mxu0 %v6266
        %7387 = vmatpush1.msra.mxu0 %v6265
        %7388 = vmatprep.subr.mxu0 %v6270
        %7389 = vmatpush1.msra.mxu0 %v6269
        %7390 = vmatprep.subr.mxu0 %v6274
        %7391 = vmatpush1.msra.mxu0 %v6273
        %7392 = vmatprep.subr.mxu0 %v6278
        %7393 = vmatpush1.msra.mxu0 %v6277
        %7394 = vmatprep.subr.mxu0 %v6282
        %7395 = vmatpush1.msra.mxu0 %v6281
        %7396 = vmatprep.subr.mxu0 %v6286
        %7397 = vmatpush1.msra.mxu0 %v6285
        %7398 = vmatprep.subr.mxu0 %v6290
        %7399 = vmatpush1.msra.mxu0 %v6289
        %7400 = vmatprep.subr.mxu0 %v6294
        %7401 = vmatpush1.msra.mxu0 %v6293
        %7402 = vmatprep.subr.mxu0 %v6298
        %7403 = vmatpush1.msra.mxu0 %v6297
        %7404 = vmatprep.subr.mxu0 %v6302
        %7405 = vmatpush1.msra.mxu0 %v6301
        %7406 = vmatprep.subr.mxu0 %v6306
        %7407 = vmatpush1.msra.mxu0 %v6305
        %7408 = vmatprep.subr.mxu0 %v6310
        %7409 = vmatpush1.msra.mxu0 %v6309
        %7410 = vmatprep.subr.mxu0 %v6314
        %7411 = vmatpush1.msra.mxu0 %v6313
        %7412 = vmatprep.subr.mxu0 %v6318
        %7413 = vmatpush1.msra.mxu0 %v6317
        %7414 = vmatprep.subr.mxu0 %v6322
        %7415 = vmatpush1.msra.mxu0 %v6321
        %7416 = vmatprep.subr.mxu0 %v6326
        %7417 = vmatpush1.msra.mxu0 %v6325
        %7418 = vmatprep.subr.mxu0 %v6330
        %7419 = vmatpush1.msra.mxu0 %v6329
        %7420 = vmatprep.subr.mxu0 %v6334
        %7421 = vmatpush1.msra.mxu0 %v6333
        %7422 = vmatprep.subr.mxu0 %v6338
        %7423 = vmatpush1.msra.mxu0 %v6337
        %7424 = vmatprep.subr.mxu0 %v6342
        %7425 = vmatpush1.msra.mxu0 %v6341
        %7426 = vmatprep.subr.mxu0 %v6346
        %7427 = vmatpush1.msra.mxu0 %v6345
        %7428 = vmatprep.subr.mxu0 %v6350
        %7429 = vmatpush1.msra.mxu0 %v6349
        %7430 = vmatprep.subr.mxu0 %v6354
        %7431 = vmatpush1.msra.mxu0 %v6353
        %7432 = vmatprep.subr.mxu0 %v6358
        %7433 = vmatpush1.msra.mxu0 %v6357
        %7434 = vmatprep.subr.mxu0 %v6362
        %7435 = vmatpush1.msra.mxu0 %v6361
        %7436 = vmatprep.subr.mxu0 %v6366
        %7437 = vmatpush1.msra.mxu0 %v6365
        %7438 = vmatprep.subr.mxu0 %v6370
        %7439 = vmatpush1.msra.mxu0 %v6369
        %7440 = vmatprep.subr.mxu0 %v6374
        %7441 = vmatpush1.msra.mxu0 %v6373
        %7442 = vmatprep.subr.mxu0 %v6378
        %7443 = vmatpush1.msra.mxu0 %v6377
        %7444 = vmatprep.mubr.f32.mxu0 %v6166
        %7445 = vmatmul.mubr.f32.gmra.mrb[0].mxu0 %v6164
        %v7446 = vpop.f32.mrb[0].mxu0
        %v7447 = vadd.f32 %v7216, %v7446
        %v7448 = vpop.f32.mrb[0].mxu0
        %v7449 = vadd.f32 %v7218, %v7448
        %7450 = vmatprep.mubr.f32.mxu0 %v6172
        %7451 = vmatmul.mubr.f32.gmra.mrb[0].mxu0 %v6170
        %v7452 = vpop.f32.mrb[0].mxu0
        %v7453 = vadd.f32 %v7222, %v7452
        %v7454 = vpop.f32.mrb[0].mxu0
        %v7455 = vadd.f32 %v7224, %v7454
        %7456 = vdwg.mxu0
        %7457 = vmatprep.subr.mxu0 %v6382
        %7458 = vmatpush1.msra.mxu0 %v6381
        %7459 = vmatprep.subr.mxu0 %v6386
        %7460 = vmatpush1.msra.mxu0 %v6385
        %7461 = vmatprep.subr.mxu0 %v6390
        %7462 = vmatpush1.msra.mxu0 %v6389
        %7463 = vmatprep.subr.mxu0 %v6394
        %7464 = vmatpush1.msra.mxu0 %v6393
        %7465 = vmatprep.subr.mxu0 %v6398
        %7466 = vmatpush1.msra.mxu0 %v6397
        %7467 = vmatprep.subr.mxu0 %v6402
        %7468 = vmatpush1.msra.mxu0 %v6401
        %7469 = vmatprep.subr.mxu0 %v6406
        %7470 = vmatpush1.msra.mxu0 %v6405
        %7471 = vmatprep.subr.mxu0 %v6410
        %7472 = vmatpush1.msra.mxu0 %v6409
        %7473 = vmatprep.subr.mxu0 %v6414
        %7474 = vmatpush1.msra.mxu0 %v6413
        %7475 = vmatprep.subr.mxu0 %v6418
        %7476 = vmatpush1.msra.mxu0 %v6417
        %7477 = vmatprep.subr.mxu0 %v6422
        %7478 = vmatpush1.msra.mxu0 %v6421
        %7479 = vmatprep.subr.mxu0 %v6426
        %7480 = vmatpush1.msra.mxu0 %v6425
        %7481 = vmatprep.subr.mxu0 %v6430
        %7482 = vmatpush1.msra.mxu0 %v6429
        %7483 = vmatprep.subr.mxu0 %v6434
        %7484 = vmatpush1.msra.mxu0 %v6433
        %7485 = vmatprep.subr.mxu0 %v6438
        %7486 = vmatpush1.msra.mxu0 %v6437
        %7487 = vmatprep.subr.mxu0 %v6442
        %7488 = vmatpush1.msra.mxu0 %v6441
        %7489 = vmatprep.subr.mxu0 %v6446
        %7490 = vmatpush1.msra.mxu0 %v6445
        %7491 = vmatprep.subr.mxu0 %v6450
        %7492 = vmatpush1.msra.mxu0 %v6449
        %7493 = vmatprep.subr.mxu0 %v6454
        %7494 = vmatpush1.msra.mxu0 %v6453
        %7495 = vmatprep.subr.mxu0 %v6458
        %7496 = vmatpush1.msra.mxu0 %v6457
        %7497 = vmatprep.subr.mxu0 %v6462
        %7498 = vmatpush1.msra.mxu0 %v6461
        %7499 = vmatprep.subr.mxu0 %v6466
        %7500 = vmatpush1.msra.mxu0 %v6465
        %7501 = vmatprep.subr.mxu0 %v6470
        %7502 = vmatpush1.msra.mxu0 %v6469
        %7503 = vmatprep.subr.mxu0 %v6474
        %7504 = vmatpush1.msra.mxu0 %v6473
        %7505 = vmatprep.subr.mxu0 %v6478
        %7506 = vmatpush1.msra.mxu0 %v6477
        %7507 = vmatprep.subr.mxu0 %v6482
        %7508 = vmatpush1.msra.mxu0 %v6481
        %7509 = vmatprep.subr.mxu0 %v6486
        %7510 = vmatpush1.msra.mxu0 %v6485
        %7511 = vmatprep.subr.mxu0 %v6490
        %7512 = vmatpush1.msra.mxu0 %v6489
        %7513 = vmatprep.subr.mxu0 %v6494
        %7514 = vmatpush1.msra.mxu0 %v6493
        %7515 = vmatprep.subr.mxu0 %v6498
        %7516 = vmatpush1.msra.mxu0 %v6497
        %7517 = vmatprep.subr.mxu0 %v6502
        %7518 = vmatpush1.msra.mxu0 %v6501
        %7519 = vmatprep.subr.mxu0 %v6506
        %7520 = vmatpush1.msra.mxu0 %v6505
        %7521 = vmatprep.mubr.f32.mxu0 %v6243
        %7522 = vmatmul.mubr.f32.gmra.mrb[0].mxu0 %v6241
        %v7523 = vpop.f32.mrb[0].mxu0
        %v7524 = vadd.f32 %v7447, %v7523
        %v7525 = vpop.f32.mrb[0].mxu0
        %v7526 = vadd.f32 %v7449, %v7525
        %7527 = vmatprep.mubr.f32.mxu0 %v6249
        %7528 = vmatmul.mubr.f32.gmra.mrb[0].mxu0 %v6247
        %v7529 = vpop.f32.mrb[0].mxu0
        %v7530 = vadd.f32 %v7453, %v7529
        %v7531 = vpop.f32.mrb[0].mxu0
        %v7532 = vadd.f32 %v7455, %v7531
        %7533 = vdwg.mxu0
        %s7534 = scalar_lea.vmem [#allocation20], 4096
        %v7535 = vld [vmem:[%s7534] sm:$0xff]
        %v7536 = vld [vmem:[%s7534 + $0x8] sm:$0xff]
        %v7537 = vld [vmem:[%s7534 + $0x10] sm:$0xff]
        %v7538 = vld [vmem:[%s7534 + $0x18] sm:$0xff]
        %v7539 = vld [vmem:[%s7534 + $0x20] sm:$0xff]
        %v7540 = vld [vmem:[%s7534 + $0x28] sm:$0xff]
        %v7541 = vld [vmem:[%s7534 + $0x30] sm:$0xff]
        %v7542 = vld [vmem:[%s7534 + $0x38] sm:$0xff]
        %v7543 = vld [vmem:[%s7534 + $0x40] sm:$0xff]
        %v7544 = vld [vmem:[%s7534 + $0x48] sm:$0xff]
        %v7545 = vld [vmem:[%s7534 + $0x50] sm:$0xff]
        %v7546 = vld [vmem:[%s7534 + $0x58] sm:$0xff]
        %v7547 = vld [vmem:[%s7534 + $0x60] sm:$0xff]
        %v7548 = vld [vmem:[%s7534 + $0x68] sm:$0xff]
        %v7549 = vld [vmem:[%s7534 + $0x70] sm:$0xff]
        %v7550 = vld [vmem:[%s7534 + $0x78] sm:$0xff]
        %v7551 = vld [vmem:[%s7534 + $0x80] sm:$0xff]
        %v7552 = vld [vmem:[%s7534 + $0x88] sm:$0xff]
        %v7553 = vld [vmem:[%s7534 + $0x90] sm:$0xff]
        %v7554 = vld [vmem:[%s7534 + $0x98] sm:$0xff]
        %v7555 = vld [vmem:[%s7534 + $0xa0] sm:$0xff]
        %v7556 = vld [vmem:[%s7534 + $0xa8] sm:$0xff]
        %v7557 = vld [vmem:[%s7534 + $0xb0] sm:$0xff]
        %v7558 = vld [vmem:[%s7534 + $0xb8] sm:$0xff]
        %v7559 = vld [vmem:[%s7534 + $0xc0] sm:$0xff]
        %v7560 = vld [vmem:[%s7534 + $0xc8] sm:$0xff]
        %v7561 = vld [vmem:[%s7534 + $0xd0] sm:$0xff]
        %v7562 = vld [vmem:[%s7534 + $0xd8] sm:$0xff]
        %v7563 = vld [vmem:[%s7534 + $0xe0] sm:$0xff]
        %v7564 = vld [vmem:[%s7534 + $0xe8] sm:$0xff]
        %v7565 = vld [vmem:[%s7534 + $0xf0] sm:$0xff]
        %v7566 = vld [vmem:[%s7534 + $0xf8] sm:$0xff]
        %v7567 = vld [vmem:[%s7534 + $0x100] sm:$0xff]
        %v7568 = vld [vmem:[%s7534 + $0x108] sm:$0xff]
        %v7569 = vld [vmem:[%s7534 + $0x110] sm:$0xff]
        %v7570 = vld [vmem:[%s7534 + $0x118] sm:$0xff]
        %v7571 = vld [vmem:[%s7534 + $0x120] sm:$0xff]
        %v7572 = vld [vmem:[%s7534 + $0x128] sm:$0xff]
        %v7573 = vld [vmem:[%s7534 + $0x130] sm:$0xff]
        %v7574 = vld [vmem:[%s7534 + $0x138] sm:$0xff]
        %v7575 = vld [vmem:[%s7534 + $0x140] sm:$0xff]
        %v7576 = vld [vmem:[%s7534 + $0x148] sm:$0xff]
        %v7577 = vld [vmem:[%s7534 + $0x150] sm:$0xff]
        %v7578 = vld [vmem:[%s7534 + $0x158] sm:$0xff]
        %v7579 = vld [vmem:[%s7534 + $0x160] sm:$0xff]
        %v7580 = vld [vmem:[%s7534 + $0x168] sm:$0xff]
        %v7581 = vld [vmem:[%s7534 + $0x170] sm:$0xff]
        %v7582 = vld [vmem:[%s7534 + $0x178] sm:$0xff]
        %v7583 = vld [vmem:[%s7534 + $0x180] sm:$0xff]
        %v7584 = vld [vmem:[%s7534 + $0x188] sm:$0xff]
        %v7585 = vld [vmem:[%s7534 + $0x190] sm:$0xff]
        %v7586 = vld [vmem:[%s7534 + $0x198] sm:$0xff]
        %v7587 = vld [vmem:[%s7534 + $0x1a0] sm:$0xff]
        %v7588 = vld [vmem:[%s7534 + $0x1a8] sm:$0xff]
        %v7589 = vld [vmem:[%s7534 + $0x1b0] sm:$0xff]
        %v7590 = vld [vmem:[%s7534 + $0x1b8] sm:$0xff]
        %v7591 = vld [vmem:[%s7534 + $0x1c0] sm:$0xff]
        %v7592 = vld [vmem:[%s7534 + $0x1c8] sm:$0xff]
        %v7593 = vld [vmem:[%s7534 + $0x1d0] sm:$0xff]
        %v7594 = vld [vmem:[%s7534 + $0x1d8] sm:$0xff]
        %v7595 = vld [vmem:[%s7534 + $0x1e0] sm:$0xff]
        %v7596 = vld [vmem:[%s7534 + $0x1e8] sm:$0xff]
        %v7597 = vld [vmem:[%s7534 + $0x1f0] sm:$0xff]
        %v7598 = vld [vmem:[%s7534 + $0x1f8] sm:$0xff]
        %v7599 = vld [vmem:[%s7534 + $0x200] sm:$0xff]
        %v7600 = vld [vmem:[%s7534 + $0x208] sm:$0xff]
        %v7601 = vld [vmem:[%s7534 + $0x210] sm:$0xff]
        %v7602 = vld [vmem:[%s7534 + $0x218] sm:$0xff]
        %v7603 = vld [vmem:[%s7534 + $0x220] sm:$0xff]
        %v7604 = vld [vmem:[%s7534 + $0x228] sm:$0xff]
        %v7605 = vld [vmem:[%s7534 + $0x230] sm:$0xff]
        %v7606 = vld [vmem:[%s7534 + $0x238] sm:$0xff]
        %v7607 = vld [vmem:[%s7534 + $0x240] sm:$0xff]
        %v7608 = vld [vmem:[%s7534 + $0x248] sm:$0xff]
        %v7609 = vld [vmem:[%s7534 + $0x250] sm:$0xff]
        %v7610 = vld [vmem:[%s7534 + $0x258] sm:$0xff]
        %v7611 = vld [vmem:[%s7534 + $0x260] sm:$0xff]
        %v7612 = vld [vmem:[%s7534 + $0x268] sm:$0xff]
        %v7613 = vld [vmem:[%s7534 + $0x270] sm:$0xff]
        %v7614 = vld [vmem:[%s7534 + $0x278] sm:$0xff]
        %v7615 = vld [vmem:[%s7534 + $0x280] sm:$0xff]
        %v7616 = vld [vmem:[%s7534 + $0x288] sm:$0xff]
        %v7617 = vld [vmem:[%s7534 + $0x290] sm:$0xff]
        %v7618 = vld [vmem:[%s7534 + $0x298] sm:$0xff]
        %v7619 = vld [vmem:[%s7534 + $0x2a0] sm:$0xff]
        %v7620 = vld [vmem:[%s7534 + $0x2a8] sm:$0xff]
        %v7621 = vld [vmem:[%s7534 + $0x2b0] sm:$0xff]
        %v7622 = vld [vmem:[%s7534 + $0x2b8] sm:$0xff]
        %v7623 = vld [vmem:[%s7534 + $0x2c0] sm:$0xff]
        %v7624 = vld [vmem:[%s7534 + $0x2c8] sm:$0xff]
        %v7625 = vld [vmem:[%s7534 + $0x2d0] sm:$0xff]
        %v7626 = vld [vmem:[%s7534 + $0x2d8] sm:$0xff]
        %v7627 = vld [vmem:[%s7534 + $0x2e0] sm:$0xff]
        %v7628 = vld [vmem:[%s7534 + $0x2e8] sm:$0xff]
        %v7629 = vld [vmem:[%s7534 + $0x2f0] sm:$0xff]
        %v7630 = vld [vmem:[%s7534 + $0x2f8] sm:$0xff]
        %v7631 = vld [vmem:[%s7534 + $0x300] sm:$0xff]
        %v7632 = vld [vmem:[%s7534 + $0x308] sm:$0xff]
        %v7633 = vld [vmem:[%s7534 + $0x310] sm:$0xff]
        %v7634 = vld [vmem:[%s7534 + $0x318] sm:$0xff]
        %v7635 = vld [vmem:[%s7534 + $0x320] sm:$0xff]
        %v7636 = vld [vmem:[%s7534 + $0x328] sm:$0xff]
        %v7637 = vld [vmem:[%s7534 + $0x330] sm:$0xff]
        %v7638 = vld [vmem:[%s7534 + $0x338] sm:$0xff]
        %v7639 = vld [vmem:[%s7534 + $0x340] sm:$0xff]
        %v7640 = vld [vmem:[%s7534 + $0x348] sm:$0xff]
        %v7641 = vld [vmem:[%s7534 + $0x350] sm:$0xff]
        %v7642 = vld [vmem:[%s7534 + $0x358] sm:$0xff]
        %v7643 = vld [vmem:[%s7534 + $0x360] sm:$0xff]
        %v7644 = vld [vmem:[%s7534 + $0x368] sm:$0xff]
        %v7645 = vld [vmem:[%s7534 + $0x370] sm:$0xff]
        %v7646 = vld [vmem:[%s7534 + $0x378] sm:$0xff]
        %v7647 = vld [vmem:[%s7534 + $0x380] sm:$0xff]
        %v7648 = vld [vmem:[%s7534 + $0x388] sm:$0xff]
        %v7649 = vld [vmem:[%s7534 + $0x390] sm:$0xff]
        %v7650 = vld [vmem:[%s7534 + $0x398] sm:$0xff]
        %v7651 = vld [vmem:[%s7534 + $0x3a0] sm:$0xff]
        %v7652 = vld [vmem:[%s7534 + $0x3a8] sm:$0xff]
        %v7653 = vld [vmem:[%s7534 + $0x3b0] sm:$0xff]
        %v7654 = vld [vmem:[%s7534 + $0x3b8] sm:$0xff]
        %v7655 = vld [vmem:[%s7534 + $0x3c0] sm:$0xff]
        %v7656 = vld [vmem:[%s7534 + $0x3c8] sm:$0xff]
        %v7657 = vld [vmem:[%s7534 + $0x3d0] sm:$0xff]
        %v7658 = vld [vmem:[%s7534 + $0x3d8] sm:$0xff]
        %v7659 = vld [vmem:[%s7534 + $0x3e0] sm:$0xff]
        %v7660 = vld [vmem:[%s7534 + $0x3e8] sm:$0xff]
        %v7661 = vld [vmem:[%s7534 + $0x3f0] sm:$0xff]
        %v7662 = vld [vmem:[%s7534 + $0x3f8] sm:$0xff]
        %v7663 = vld [vmem:[%s7534 + $0x400] sm:$0xff]
        %v7664 = vld [vmem:[%s7534 + $0x408] sm:$0xff]
        %v7665 = vld [vmem:[%s7534 + $0x410] sm:$0xff]
        %v7666 = vld [vmem:[%s7534 + $0x418] sm:$0xff]
        %v7667 = vld [vmem:[%s7534 + $0x420] sm:$0xff]
        %v7668 = vld [vmem:[%s7534 + $0x428] sm:$0xff]
        %v7669 = vld [vmem:[%s7534 + $0x430] sm:$0xff]
        %v7670 = vld [vmem:[%s7534 + $0x438] sm:$0xff]
        %v7671 = vld [vmem:[%s7534 + $0x440] sm:$0xff]
        %v7672 = vld [vmem:[%s7534 + $0x448] sm:$0xff]
        %v7673 = vld [vmem:[%s7534 + $0x450] sm:$0xff]
        %v7674 = vld [vmem:[%s7534 + $0x458] sm:$0xff]
        %v7675 = vld [vmem:[%s7534 + $0x460] sm:$0xff]
        %v7676 = vld [vmem:[%s7534 + $0x468] sm:$0xff]
        %v7677 = vld [vmem:[%s7534 + $0x470] sm:$0xff]
        %v7678 = vld [vmem:[%s7534 + $0x478] sm:$0xff]
        %v7679 = vld [vmem:[%s7534 + $0x480] sm:$0xff]
        %v7680 = vld [vmem:[%s7534 + $0x488] sm:$0xff]
        %v7681 = vld [vmem:[%s7534 + $0x490] sm:$0xff]
        %v7682 = vld [vmem:[%s7534 + $0x498] sm:$0xff]
        %v7683 = vld [vmem:[%s7534 + $0x4a0] sm:$0xff]
        %v7684 = vld [vmem:[%s7534 + $0x4a8] sm:$0xff]
        %v7685 = vld [vmem:[%s7534 + $0x4b0] sm:$0xff]
        %v7686 = vld [vmem:[%s7534 + $0x4b8] sm:$0xff]
        %v7687 = vld [vmem:[%s7534 + $0x4c0] sm:$0xff]
        %v7688 = vld [vmem:[%s7534 + $0x4c8] sm:$0xff]
        %v7689 = vld [vmem:[%s7534 + $0x4d0] sm:$0xff]
        %v7690 = vld [vmem:[%s7534 + $0x4d8] sm:$0xff]
        %v7691 = vld [vmem:[%s7534 + $0x4e0] sm:$0xff]
        %v7692 = vld [vmem:[%s7534 + $0x4e8] sm:$0xff]
        %v7693 = vld [vmem:[%s7534 + $0x4f0] sm:$0xff]
        %v7694 = vld [vmem:[%s7534 + $0x4f8] sm:$0xff]
        %v7695 = vld [vmem:[%s7534 + $0x500] sm:$0xff]
        %v7696 = vld [vmem:[%s7534 + $0x508] sm:$0xff]
        %v7697 = vld [vmem:[%s7534 + $0x510] sm:$0xff]
        %v7698 = vld [vmem:[%s7534 + $0x518] sm:$0xff]
        %v7699 = vld [vmem:[%s7534 + $0x520] sm:$0xff]
        %v7700 = vld [vmem:[%s7534 + $0x528] sm:$0xff]
        %v7701 = vld [vmem:[%s7534 + $0x530] sm:$0xff]
        %v7702 = vld [vmem:[%s7534 + $0x538] sm:$0xff]
        %v7703 = vld [vmem:[%s7534 + $0x540] sm:$0xff]
        %v7704 = vld [vmem:[%s7534 + $0x548] sm:$0xff]
        %v7705 = vld [vmem:[%s7534 + $0x550] sm:$0xff]
        %v7706 = vld [vmem:[%s7534 + $0x558] sm:$0xff]
        %v7707 = vld [vmem:[%s7534 + $0x560] sm:$0xff]
        %v7708 = vld [vmem:[%s7534 + $0x568] sm:$0xff]
        %v7709 = vld [vmem:[%s7534 + $0x570] sm:$0xff]
        %v7710 = vld [vmem:[%s7534 + $0x578] sm:$0xff]
        %v7711 = vld [vmem:[%s7534 + $0x580] sm:$0xff]
        %v7712 = vld [vmem:[%s7534 + $0x588] sm:$0xff]
        %v7713 = vld [vmem:[%s7534 + $0x590] sm:$0xff]
        %v7714 = vld [vmem:[%s7534 + $0x598] sm:$0xff]
        %v7715 = vld [vmem:[%s7534 + $0x5a0] sm:$0xff]
        %v7716 = vld [vmem:[%s7534 + $0x5a8] sm:$0xff]
        %v7717 = vld [vmem:[%s7534 + $0x5b0] sm:$0xff]
        %v7718 = vld [vmem:[%s7534 + $0x5b8] sm:$0xff]
        %v7719 = vld [vmem:[%s7534 + $0x5c0] sm:$0xff]
        %v7720 = vld [vmem:[%s7534 + $0x5c8] sm:$0xff]
        %v7721 = vld [vmem:[%s7534 + $0x5d0] sm:$0xff]
        %v7722 = vld [vmem:[%s7534 + $0x5d8] sm:$0xff]
        %v7723 = vld [vmem:[%s7534 + $0x5e0] sm:$0xff]
        %v7724 = vld [vmem:[%s7534 + $0x5e8] sm:$0xff]
        %v7725 = vld [vmem:[%s7534 + $0x5f0] sm:$0xff]
        %v7726 = vld [vmem:[%s7534 + $0x5f8] sm:$0xff]
        %v7727 = vld [vmem:[%s7534 + $0x600] sm:$0xff]
        %v7728 = vld [vmem:[%s7534 + $0x608] sm:$0xff]
        %v7729 = vld [vmem:[%s7534 + $0x610] sm:$0xff]
        %v7730 = vld [vmem:[%s7534 + $0x618] sm:$0xff]
        %v7731 = vld [vmem:[%s7534 + $0x620] sm:$0xff]
        %v7732 = vld [vmem:[%s7534 + $0x628] sm:$0xff]
        %v7733 = vld [vmem:[%s7534 + $0x630] sm:$0xff]
        %v7734 = vld [vmem:[%s7534 + $0x638] sm:$0xff]
        %v7735 = vld [vmem:[%s7534 + $0x640] sm:$0xff]
        %v7736 = vld [vmem:[%s7534 + $0x648] sm:$0xff]
        %v7737 = vld [vmem:[%s7534 + $0x650] sm:$0xff]
        %v7738 = vld [vmem:[%s7534 + $0x658] sm:$0xff]
        %v7739 = vld [vmem:[%s7534 + $0x660] sm:$0xff]
        %v7740 = vld [vmem:[%s7534 + $0x668] sm:$0xff]
        %v7741 = vld [vmem:[%s7534 + $0x670] sm:$0xff]
        %v7742 = vld [vmem:[%s7534 + $0x678] sm:$0xff]
        %v7743 = vld [vmem:[%s7534 + $0x680] sm:$0xff]
        %v7744 = vld [vmem:[%s7534 + $0x688] sm:$0xff]
        %v7745 = vld [vmem:[%s7534 + $0x690] sm:$0xff]
        %v7746 = vld [vmem:[%s7534 + $0x698] sm:$0xff]
        %v7747 = vld [vmem:[%s7534 + $0x6a0] sm:$0xff]
        %v7748 = vld [vmem:[%s7534 + $0x6a8] sm:$0xff]
        %v7749 = vld [vmem:[%s7534 + $0x6b0] sm:$0xff]
        %v7750 = vld [vmem:[%s7534 + $0x6b8] sm:$0xff]
        %v7751 = vld [vmem:[%s7534 + $0x6c0] sm:$0xff]
        %v7752 = vld [vmem:[%s7534 + $0x6c8] sm:$0xff]
        %v7753 = vld [vmem:[%s7534 + $0x6d0] sm:$0xff]
        %v7754 = vld [vmem:[%s7534 + $0x6d8] sm:$0xff]
        %v7755 = vld [vmem:[%s7534 + $0x6e0] sm:$0xff]
        %v7756 = vld [vmem:[%s7534 + $0x6e8] sm:$0xff]
        %v7757 = vld [vmem:[%s7534 + $0x6f0] sm:$0xff]
        %v7758 = vld [vmem:[%s7534 + $0x6f8] sm:$0xff]
        %v7759 = vld [vmem:[%s7534 + $0x700] sm:$0xff]
        %v7760 = vld [vmem:[%s7534 + $0x708] sm:$0xff]
        %v7761 = vld [vmem:[%s7534 + $0x710] sm:$0xff]
        %v7762 = vld [vmem:[%s7534 + $0x718] sm:$0xff]
        %v7763 = vld [vmem:[%s7534 + $0x720] sm:$0xff]
        %v7764 = vld [vmem:[%s7534 + $0x728] sm:$0xff]
        %v7765 = vld [vmem:[%s7534 + $0x730] sm:$0xff]
        %v7766 = vld [vmem:[%s7534 + $0x738] sm:$0xff]
        %v7767 = vld [vmem:[%s7534 + $0x740] sm:$0xff]
        %v7768 = vld [vmem:[%s7534 + $0x748] sm:$0xff]
        %v7769 = vld [vmem:[%s7534 + $0x750] sm:$0xff]
        %v7770 = vld [vmem:[%s7534 + $0x758] sm:$0xff]
        %v7771 = vld [vmem:[%s7534 + $0x760] sm:$0xff]
        %v7772 = vld [vmem:[%s7534 + $0x768] sm:$0xff]
        %v7773 = vld [vmem:[%s7534 + $0x770] sm:$0xff]
        %v7774 = vld [vmem:[%s7534 + $0x778] sm:$0xff]
        %v7775 = vld [vmem:[%s7534 + $0x780] sm:$0xff]
        %v7776 = vld [vmem:[%s7534 + $0x788] sm:$0xff]
        %v7777 = vld [vmem:[%s7534 + $0x790] sm:$0xff]
        %v7778 = vld [vmem:[%s7534 + $0x798] sm:$0xff]
        %v7779 = vld [vmem:[%s7534 + $0x7a0] sm:$0xff]
        %v7780 = vld [vmem:[%s7534 + $0x7a8] sm:$0xff]
        %v7781 = vld [vmem:[%s7534 + $0x7b0] sm:$0xff]
        %v7782 = vld [vmem:[%s7534 + $0x7b8] sm:$0xff]
        %v7783 = vld [vmem:[%s7534 + $0x7c0] sm:$0xff]
        %v7784 = vld [vmem:[%s7534 + $0x7c8] sm:$0xff]
        %v7785 = vld [vmem:[%s7534 + $0x7d0] sm:$0xff]
        %v7786 = vld [vmem:[%s7534 + $0x7d8] sm:$0xff]
        %v7787 = vld [vmem:[%s7534 + $0x7e0] sm:$0xff]
        %v7788 = vld [vmem:[%s7534 + $0x7e8] sm:$0xff]
        %v7789 = vld [vmem:[%s7534 + $0x7f0] sm:$0xff]
        %v7790 = vld [vmem:[%s7534 + $0x7f8] sm:$0xff]
        %7791 = vmatprep.subr.mxu0 %v7536
        %7792 = vmatpush1.msra.mxu0 %v7535
        %7793 = vmatprep.subr.mxu0 %v7540
        %7794 = vmatpush1.msra.mxu0 %v7539
        %7795 = vmatprep.subr.mxu0 %v7544
        %7796 = vmatpush1.msra.mxu0 %v7543
        %7797 = vmatprep.subr.mxu0 %v7548
        %7798 = vmatpush1.msra.mxu0 %v7547
        %7799 = vmatprep.subr.mxu0 %v7552
        %7800 = vmatpush1.msra.mxu0 %v7551
        %7801 = vmatprep.subr.mxu0 %v7556
        %7802 = vmatpush1.msra.mxu0 %v7555
        %7803 = vmatprep.subr.mxu0 %v7560
        %7804 = vmatpush1.msra.mxu0 %v7559
        %7805 = vmatprep.subr.mxu0 %v7564
        %7806 = vmatpush1.msra.mxu0 %v7563
        %7807 = vmatprep.subr.mxu0 %v7568
        %7808 = vmatpush1.msra.mxu0 %v7567
        %7809 = vmatprep.subr.mxu0 %v7572
        %7810 = vmatpush1.msra.mxu0 %v7571
        %7811 = vmatprep.subr.mxu0 %v7576
        %7812 = vmatpush1.msra.mxu0 %v7575
        %7813 = vmatprep.subr.mxu0 %v7580
        %7814 = vmatpush1.msra.mxu0 %v7579
        %7815 = vmatprep.subr.mxu0 %v7584
        %7816 = vmatpush1.msra.mxu0 %v7583
        %7817 = vmatprep.subr.mxu0 %v7588
        %7818 = vmatpush1.msra.mxu0 %v7587
        %7819 = vmatprep.subr.mxu0 %v7592
        %7820 = vmatpush1.msra.mxu0 %v7591
        %7821 = vmatprep.subr.mxu0 %v7596
        %7822 = vmatpush1.msra.mxu0 %v7595
        %7823 = vmatprep.subr.mxu0 %v7600
        %7824 = vmatpush1.msra.mxu0 %v7599
        %7825 = vmatprep.subr.mxu0 %v7604
        %7826 = vmatpush1.msra.mxu0 %v7603
        %7827 = vmatprep.subr.mxu0 %v7608
        %7828 = vmatpush1.msra.mxu0 %v7607
        %7829 = vmatprep.subr.mxu0 %v7612
        %7830 = vmatpush1.msra.mxu0 %v7611
        %7831 = vmatprep.subr.mxu0 %v7616
        %7832 = vmatpush1.msra.mxu0 %v7615
        %7833 = vmatprep.subr.mxu0 %v7620
        %7834 = vmatpush1.msra.mxu0 %v7619
        %7835 = vmatprep.subr.mxu0 %v7624
        %7836 = vmatpush1.msra.mxu0 %v7623
        %7837 = vmatprep.subr.mxu0 %v7628
        %7838 = vmatpush1.msra.mxu0 %v7627
        %7839 = vmatprep.subr.mxu0 %v7632
        %7840 = vmatpush1.msra.mxu0 %v7631
        %7841 = vmatprep.subr.mxu0 %v7636
        %7842 = vmatpush1.msra.mxu0 %v7635
        %7843 = vmatprep.subr.mxu0 %v7640
        %7844 = vmatpush1.msra.mxu0 %v7639
        %7845 = vmatprep.subr.mxu0 %v7644
        %7846 = vmatpush1.msra.mxu0 %v7643
        %7847 = vmatprep.subr.mxu0 %v7648
        %7848 = vmatpush1.msra.mxu0 %v7647
        %7849 = vmatprep.subr.mxu0 %v7652
        %7850 = vmatpush1.msra.mxu0 %v7651
        %7851 = vmatprep.subr.mxu0 %v7656
        %7852 = vmatpush1.msra.mxu0 %v7655
        %7853 = vmatprep.subr.mxu0 %v7660
        %7854 = vmatpush1.msra.mxu0 %v7659
        %7855 = vmatprep.mubr.f32.mxu0 %v6082
        %7856 = vmatmul.mubr.f32.gmra.mrb[0].mxu0 %v6081
        %v7857 = vpop.f32.mrb[0].mxu0
        %v7858 = vadd.f32 0.0, %v7857
        %v7859 = vpop.f32.mrb[0].mxu0
        %v7860 = vadd.f32 0.0, %v7859
        %7861 = vmatprep.mubr.f32.mxu0 %v6086
        %7862 = vmatmul.mubr.f32.gmra.mrb[0].mxu0 %v6085
        %v7863 = vpop.f32.mrb[0].mxu0
        %v7864 = vadd.f32 0.0, %v7863
        %v7865 = vpop.f32.mrb[0].mxu0
        %v7866 = vadd.f32 0.0, %v7865
        %7867 = vdwg.mxu0
        %7868 = vmatprep.subr.mxu0 %v7664
        %7869 = vmatpush1.msra.mxu0 %v7663
        %7870 = vmatprep.subr.mxu0 %v7668
        %7871 = vmatpush1.msra.mxu0 %v7667
        %7872 = vmatprep.subr.mxu0 %v7672
        %7873 = vmatpush1.msra.mxu0 %v7671
        %7874 = vmatprep.subr.mxu0 %v7676
        %7875 = vmatpush1.msra.mxu0 %v7675
        %7876 = vmatprep.subr.mxu0 %v7680
        %7877 = vmatpush1.msra.mxu0 %v7679
        %7878 = vmatprep.subr.mxu0 %v7684
        %7879 = vmatpush1.msra.mxu0 %v7683
        %7880 = vmatprep.subr.mxu0 %v7688
        %7881 = vmatpush1.msra.mxu0 %v7687
        %7882 = vmatprep.subr.mxu0 %v7692
        %7883 = vmatpush1.msra.mxu0 %v7691
        %7884 = vmatprep.subr.mxu0 %v7696
        %7885 = vmatpush1.msra.mxu0 %v7695
        %7886 = vmatprep.subr.mxu0 %v7700
        %7887 = vmatpush1.msra.mxu0 %v7699
        %7888 = vmatprep.subr.mxu0 %v7704
        %7889 = vmatpush1.msra.mxu0 %v7703
        %7890 = vmatprep.subr.mxu0 %v7708
        %7891 = vmatpush1.msra.mxu0 %v7707
        %7892 = vmatprep.subr.mxu0 %v7712
        %7893 = vmatpush1.msra.mxu0 %v7711
        %7894 = vmatprep.subr.mxu0 %v7716
        %7895 = vmatpush1.msra.mxu0 %v7715
        %7896 = vmatprep.subr.mxu0 %v7720
        %7897 = vmatpush1.msra.mxu0 %v7719
        %7898 = vmatprep.subr.mxu0 %v7724
        %7899 = vmatpush1.msra.mxu0 %v7723
        %7900 = vmatprep.subr.mxu0 %v7728
        %7901 = vmatpush1.msra.mxu0 %v7727
        %7902 = vmatprep.subr.mxu0 %v7732
        %7903 = vmatpush1.msra.mxu0 %v7731
        %7904 = vmatprep.subr.mxu0 %v7736
        %7905 = vmatpush1.msra.mxu0 %v7735
        %7906 = vmatprep.subr.mxu0 %v7740
        %7907 = vmatpush1.msra.mxu0 %v7739
        %7908 = vmatprep.subr.mxu0 %v7744
        %7909 = vmatpush1.msra.mxu0 %v7743
        %7910 = vmatprep.subr.mxu0 %v7748
        %7911 = vmatpush1.msra.mxu0 %v7747
        %7912 = vmatprep.subr.mxu0 %v7752
        %7913 = vmatpush1.msra.mxu0 %v7751
        %7914 = vmatprep.subr.mxu0 %v7756
        %7915 = vmatpush1.msra.mxu0 %v7755
        %7916 = vmatprep.subr.mxu0 %v7760
        %7917 = vmatpush1.msra.mxu0 %v7759
        %7918 = vmatprep.subr.mxu0 %v7764
        %7919 = vmatpush1.msra.mxu0 %v7763
        %7920 = vmatprep.subr.mxu0 %v7768
        %7921 = vmatpush1.msra.mxu0 %v7767
        %7922 = vmatprep.subr.mxu0 %v7772
        %7923 = vmatpush1.msra.mxu0 %v7771
        %7924 = vmatprep.subr.mxu0 %v7776
        %7925 = vmatpush1.msra.mxu0 %v7775
        %7926 = vmatprep.subr.mxu0 %v7780
        %7927 = vmatpush1.msra.mxu0 %v7779
        %7928 = vmatprep.subr.mxu0 %v7784
        %7929 = vmatpush1.msra.mxu0 %v7783
        %7930 = vmatprep.subr.mxu0 %v7788
        %7931 = vmatpush1.msra.mxu0 %v7787
        %7932 = vmatprep.mubr.f32.mxu0 %v6084
        %7933 = vmatmul.mubr.f32.gmra.mrb[0].mxu0 %v6083
        %v7934 = vpop.f32.mrb[0].mxu0
        %v7935 = vadd.f32 %v7858, %v7934
        %v7936 = vpop.f32.mrb[0].mxu0
        %v7937 = vadd.f32 %v7860, %v7936
        %7938 = vmatprep.mubr.f32.mxu0 %v6088
        %7939 = vmatmul.mubr.f32.gmra.mrb[0].mxu0 %v6087
        %v7940 = vpop.f32.mrb[0].mxu0
        %v7941 = vadd.f32 %v7864, %v7940
        %v7942 = vpop.f32.mrb[0].mxu0
        %v7943 = vadd.f32 %v7866, %v7942
        %7944 = vdwg.mxu0
        %7945 = vmatprep.subr.mxu0 %v7538
        %7946 = vmatpush1.msra.mxu0 %v7537
        %7947 = vmatprep.subr.mxu0 %v7542
        %7948 = vmatpush1.msra.mxu0 %v7541
        %7949 = vmatprep.subr.mxu0 %v7546
        %7950 = vmatpush1.msra.mxu0 %v7545
        %7951 = vmatprep.subr.mxu0 %v7550
        %7952 = vmatpush1.msra.mxu0 %v7549
        %7953 = vmatprep.subr.mxu0 %v7554
        %7954 = vmatpush1.msra.mxu0 %v7553
        %7955 = vmatprep.subr.mxu0 %v7558
        %7956 = vmatpush1.msra.mxu0 %v7557
        %7957 = vmatprep.subr.mxu0 %v7562
        %7958 = vmatpush1.msra.mxu0 %v7561
        %7959 = vmatprep.subr.mxu0 %v7566
        %7960 = vmatpush1.msra.mxu0 %v7565
        %7961 = vmatprep.subr.mxu0 %v7570
        %7962 = vmatpush1.msra.mxu0 %v7569
        %7963 = vmatprep.subr.mxu0 %v7574
        %7964 = vmatpush1.msra.mxu0 %v7573
        %7965 = vmatprep.subr.mxu0 %v7578
        %7966 = vmatpush1.msra.mxu0 %v7577
        %7967 = vmatprep.subr.mxu0 %v7582
        %7968 = vmatpush1.msra.mxu0 %v7581
        %7969 = vmatprep.subr.mxu0 %v7586
        %7970 = vmatpush1.msra.mxu0 %v7585
        %7971 = vmatprep.subr.mxu0 %v7590
        %7972 = vmatpush1.msra.mxu0 %v7589
        %7973 = vmatprep.subr.mxu0 %v7594
        %7974 = vmatpush1.msra.mxu0 %v7593
        %7975 = vmatprep.subr.mxu0 %v7598
        %7976 = vmatpush1.msra.mxu0 %v7597
        %7977 = vmatprep.subr.mxu0 %v7602
        %7978 = vmatpush1.msra.mxu0 %v7601
        %7979 = vmatprep.subr.mxu0 %v7606
        %7980 = vmatpush1.msra.mxu0 %v7605
        %7981 = vmatprep.subr.mxu0 %v7610
        %7982 = vmatpush1.msra.mxu0 %v7609
        %7983 = vmatprep.subr.mxu0 %v7614
        %7984 = vmatpush1.msra.mxu0 %v7613
        %7985 = vmatprep.subr.mxu0 %v7618
        %7986 = vmatpush1.msra.mxu0 %v7617
        %7987 = vmatprep.subr.mxu0 %v7622
        %7988 = vmatpush1.msra.mxu0 %v7621
        %7989 = vmatprep.subr.mxu0 %v7626
        %7990 = vmatpush1.msra.mxu0 %v7625
        %7991 = vmatprep.subr.mxu0 %v7630
        %7992 = vmatpush1.msra.mxu0 %v7629
        %7993 = vmatprep.subr.mxu0 %v7634
        %7994 = vmatpush1.msra.mxu0 %v7633
        %7995 = vmatprep.subr.mxu0 %v7638
        %7996 = vmatpush1.msra.mxu0 %v7637
        %7997 = vmatprep.subr.mxu0 %v7642
        %7998 = vmatpush1.msra.mxu0 %v7641
        %7999 = vmatprep.subr.mxu0 %v7646
        %8000 = vmatpush1.msra.mxu0 %v7645
        %8001 = vmatprep.subr.mxu0 %v7650
        %8002 = vmatpush1.msra.mxu0 %v7649
        %8003 = vmatprep.subr.mxu0 %v7654
        %8004 = vmatpush1.msra.mxu0 %v7653
        %8005 = vmatprep.subr.mxu0 %v7658
        %8006 = vmatpush1.msra.mxu0 %v7657
        %8007 = vmatprep.subr.mxu0 %v7662
        %8008 = vmatpush1.msra.mxu0 %v7661
        %8009 = vmatprep.mubr.f32.mxu0 %v6082
        %8010 = vmatmul.mubr.f32.gmra.mrb[0].mxu0 %v6081
        %v8011 = vpop.f32.mrb[0].mxu0
        %v8012 = vadd.f32 0.0, %v8011
        %v8013 = vpop.f32.mrb[0].mxu0
        %v8014 = vadd.f32 0.0, %v8013
        %8015 = vmatprep.mubr.f32.mxu0 %v6086
        %8016 = vmatmul.mubr.f32.gmra.mrb[0].mxu0 %v6085
        %v8017 = vpop.f32.mrb[0].mxu0
        %v8018 = vadd.f32 0.0, %v8017
        %v8019 = vpop.f32.mrb[0].mxu0
        %v8020 = vadd.f32 0.0, %v8019
        %8021 = vdwg.mxu0
        %8022 = vmatprep.subr.mxu0 %v7666
        %8023 = vmatpush1.msra.mxu0 %v7665
        %8024 = vmatprep.subr.mxu0 %v7670
        %8025 = vmatpush1.msra.mxu0 %v7669
        %8026 = vmatprep.subr.mxu0 %v7674
        %8027 = vmatpush1.msra.mxu0 %v7673
        %8028 = vmatprep.subr.mxu0 %v7678
        %8029 = vmatpush1.msra.mxu0 %v7677
        %8030 = vmatprep.subr.mxu0 %v7682
        %8031 = vmatpush1.msra.mxu0 %v7681
        %8032 = vmatprep.subr.mxu0 %v7686
        %8033 = vmatpush1.msra.mxu0 %v7685
        %8034 = vmatprep.subr.mxu0 %v7690
        %8035 = vmatpush1.msra.mxu0 %v7689
        %8036 = vmatprep.subr.mxu0 %v7694
        %8037 = vmatpush1.msra.mxu0 %v7693
        %8038 = vmatprep.subr.mxu0 %v7698
        %8039 = vmatpush1.msra.mxu0 %v7697
        %8040 = vmatprep.subr.mxu0 %v7702
        %8041 = vmatpush1.msra.mxu0 %v7701
        %8042 = vmatprep.subr.mxu0 %v7706
        %8043 = vmatpush1.msra.mxu0 %v7705
        %8044 = vmatprep.subr.mxu0 %v7710
        %8045 = vmatpush1.msra.mxu0 %v7709
        %8046 = vmatprep.subr.mxu0 %v7714
        %8047 = vmatpush1.msra.mxu0 %v7713
        %8048 = vmatprep.subr.mxu0 %v7718
        %8049 = vmatpush1.msra.mxu0 %v7717
        %8050 = vmatprep.subr.mxu0 %v7722
        %8051 = vmatpush1.msra.mxu0 %v7721
        %8052 = vmatprep.subr.mxu0 %v7726
        %8053 = vmatpush1.msra.mxu0 %v7725
        %8054 = vmatprep.subr.mxu0 %v7730
        %8055 = vmatpush1.msra.mxu0 %v7729
        %8056 = vmatprep.subr.mxu0 %v7734
        %8057 = vmatpush1.msra.mxu0 %v7733
        %8058 = vmatprep.subr.mxu0 %v7738
        %8059 = vmatpush1.msra.mxu0 %v7737
        %8060 = vmatprep.subr.mxu0 %v7742
        %8061 = vmatpush1.msra.mxu0 %v7741
        %8062 = vmatprep.subr.mxu0 %v7746
        %8063 = vmatpush1.msra.mxu0 %v7745
        %8064 = vmatprep.subr.mxu0 %v7750
        %8065 = vmatpush1.msra.mxu0 %v7749
        %8066 = vmatprep.subr.mxu0 %v7754
        %8067 = vmatpush1.msra.mxu0 %v7753
        %8068 = vmatprep.subr.mxu0 %v7758
        %8069 = vmatpush1.msra.mxu0 %v7757
        %8070 = vmatprep.subr.mxu0 %v7762
        %8071 = vmatpush1.msra.mxu0 %v7761
        %8072 = vmatprep.subr.mxu0 %v7766
        %8073 = vmatpush1.msra.mxu0 %v7765
        %8074 = vmatprep.subr.mxu0 %v7770
        %8075 = vmatpush1.msra.mxu0 %v7769
        %8076 = vmatprep.subr.mxu0 %v7774
        %8077 = vmatpush1.msra.mxu0 %v7773
        %8078 = vmatprep.subr.mxu0 %v7778
        %8079 = vmatpush1.msra.mxu0 %v7777
        %8080 = vmatprep.subr.mxu0 %v7782
        %8081 = vmatpush1.msra.mxu0 %v7781
        %8082 = vmatprep.subr.mxu0 %v7786
        %8083 = vmatpush1.msra.mxu0 %v7785
        %8084 = vmatprep.subr.mxu0 %v7790
        %8085 = vmatpush1.msra.mxu0 %v7789
        %8086 = vmatprep.mubr.f32.mxu0 %v6084
        %8087 = vmatmul.mubr.f32.gmra.mrb[0].mxu0 %v6083
        %v8088 = vpop.f32.mrb[0].mxu0
        %v8089 = vadd.f32 %v8012, %v8088
        %v8090 = vpop.f32.mrb[0].mxu0
        %v8091 = vadd.f32 %v8014, %v8090
        %8092 = vmatprep.mubr.f32.mxu0 %v6088
        %8093 = vmatmul.mubr.f32.gmra.mrb[0].mxu0 %v6087
        %v8094 = vpop.f32.mrb[0].mxu0
        %v8095 = vadd.f32 %v8018, %v8094
        %v8096 = vpop.f32.mrb[0].mxu0
        %v8097 = vadd.f32 %v8020, %v8096
        %8098 = vdwg.mxu0
        %v8099 = vadd.f32 %v7370, %v7935
        %v8100 = vadd.f32 %v7372, %v7937
        %v8101 = vadd.f32 %v7524, %v8089
        %v8102 = vadd.f32 %v7526, %v8091
        %v8103 = vadd.f32 %v7376, %v7941
        %v8104 = vadd.f32 %v7378, %v7943
        %v8105 = vadd.f32 %v7530, %v8095
        %v8106 = vadd.f32 %v7532, %v8097
        %8107 = vmatprep.subr.mxu0 %v6082
        %8108 = vmatpush1.msra.mxu0 %v6081
        %8109 = vmatprep.subr.mxu0 %v6086
        %8110 = vmatpush1.msra.mxu0 %v6085
        %8111 = vmatprep.subr.mxu0 0.0
        %8112 = vmatpush1.msra.mxu0 0.0
        %8113 = vmatprep.subr.mxu0 0.0
        %8114 = vmatpush1.msra.mxu0 0.0
        %8115 = vmatprep.subr.mxu0 0.0
        %8116 = vmatpush1.msra.mxu0 0.0
        %8117 = vmatprep.subr.mxu0 0.0
        %8118 = vmatpush1.msra.mxu0 0.0
        %8119 = vmatprep.subr.mxu0 0.0
        %8120 = vmatpush1.msra.mxu0 0.0
        %8121 = vmatprep.subr.mxu0 0.0
        %8122 = vmatpush1.msra.mxu0 0.0
        %8123 = vmatprep.subr.mxu0 0.0
        %8124 = vmatpush1.msra.mxu0 0.0
        %8125 = vmatprep.subr.mxu0 0.0
        %8126 = vmatpush1.msra.mxu0 0.0
        %8127 = vmatprep.subr.mxu0 0.0
        %8128 = vmatpush1.msra.mxu0 0.0
        %8129 = vmatprep.subr.mxu0 0.0
        %8130 = vmatpush1.msra.mxu0 0.0
        %8131 = vmatprep.subr.mxu0 0.0
        %8132 = vmatpush1.msra.mxu0 0.0
        %8133 = vmatprep.subr.mxu0 0.0
        %8134 = vmatpush1.msra.mxu0 0.0
        %8135 = vmatprep.subr.mxu0 0.0
        %8136 = vmatpush1.msra.mxu0 0.0
        %8137 = vmatprep.subr.mxu0 0.0
        %8138 = vmatpush1.msra.mxu0 0.0
        %8139 = vmatprep.subr.mxu0 0.0
        %8140 = vmatpush1.msra.mxu0 0.0
        %8141 = vmatprep.subr.mxu0 0.0
        %8142 = vmatpush1.msra.mxu0 0.0
        %8143 = vmatprep.subr.mxu0 0.0
        %8144 = vmatpush1.msra.mxu0 0.0
        %8145 = vmatprep.subr.mxu0 0.0
        %8146 = vmatpush1.msra.mxu0 0.0
        %8147 = vmatprep.subr.mxu0 0.0
        %8148 = vmatpush1.msra.mxu0 0.0
        %8149 = vmatprep.subr.mxu0 0.0
        %8150 = vmatpush1.msra.mxu0 0.0
        %8151 = vmatprep.subr.mxu0 0.0
        %8152 = vmatpush1.msra.mxu0 0.0
        %8153 = vmatprep.subr.mxu0 0.0
        %8154 = vmatpush1.msra.mxu0 0.0
        %8155 = vmatprep.subr.mxu0 0.0
        %8156 = vmatpush1.msra.mxu0 0.0
        %8157 = vmatprep.subr.mxu0 0.0
        %8158 = vmatpush1.msra.mxu0 0.0
        %8159 = vmatprep.subr.mxu0 0.0
        %8160 = vmatpush1.msra.mxu0 0.0
        %8161 = vmatprep.subr.mxu0 0.0
        %8162 = vmatpush1.msra.mxu0 0.0
        %8163 = vmatprep.subr.mxu0 0.0
        %8164 = vmatpush1.msra.mxu0 0.0
        %8165 = vmatprep.subr.mxu0 0.0
        %8166 = vmatpush1.msra.mxu0 0.0
        %8167 = vmatprep.subr.mxu0 0.0
        %8168 = vmatpush1.msra.mxu0 0.0
        %8169 = vmatprep.subr.mxu0 0.0
        %8170 = vmatpush1.msra.mxu0 0.0
        %8171 = vmatprep.mubr.f32.mxu0 0.0
        %8172 = vmatmul.mubr.f32.gmra.mrb[0].mxu0 %v5311
        %v8173 = vpop.f32.mrb[0].mxu0
        %v8174 = vadd.f32 0.0, %v8173
        %v8175 = vpop.f32.mrb[0].mxu0
        %v8176 = vadd.f32 0.0, %v8175
        %8177 = vmatprep.mubr.f32.mxu0 0.0
        %8178 = vmatmul.mubr.f32.gmra.mrb[0].mxu0 %v5314
        %v8179 = vpop.f32.mrb[0].mxu0
        %v8180 = vadd.f32 0.0, %v8179
        %v8181 = vpop.f32.mrb[0].mxu0
        %v8182 = vadd.f32 0.0, %v8181
        %8183 = vdwg.mxu0
        %8184 = vmatprep.subr.mxu0 %v6084
        %8185 = vmatpush1.msra.mxu0 %v6083
        %8186 = vmatprep.subr.mxu0 %v6088
        %8187 = vmatpush1.msra.mxu0 %v6087
        %8188 = vmatprep.subr.mxu0 0.0
        %8189 = vmatpush1.msra.mxu0 0.0
        %8190 = vmatprep.subr.mxu0 0.0
        %8191 = vmatpush1.msra.mxu0 0.0
        %8192 = vmatprep.subr.mxu0 0.0
        %8193 = vmatpush1.msra.mxu0 0.0
        %8194 = vmatprep.subr.mxu0 0.0
        %8195 = vmatpush1.msra.mxu0 0.0
        %8196 = vmatprep.subr.mxu0 0.0
        %8197 = vmatpush1.msra.mxu0 0.0
        %8198 = vmatprep.subr.mxu0 0.0
        %8199 = vmatpush1.msra.mxu0 0.0
        %8200 = vmatprep.subr.mxu0 0.0
        %8201 = vmatpush1.msra.mxu0 0.0
        %8202 = vmatprep.subr.mxu0 0.0
        %8203 = vmatpush1.msra.mxu0 0.0
        %8204 = vmatprep.subr.mxu0 0.0
        %8205 = vmatpush1.msra.mxu0 0.0
        %8206 = vmatprep.subr.mxu0 0.0
        %8207 = vmatpush1.msra.mxu0 0.0
        %8208 = vmatprep.subr.mxu0 0.0
        %8209 = vmatpush1.msra.mxu0 0.0
        %8210 = vmatprep.subr.mxu0 0.0
        %8211 = vmatpush1.msra.mxu0 0.0
        %8212 = vmatprep.subr.mxu0 0.0
        %8213 = vmatpush1.msra.mxu0 0.0
        %8214 = vmatprep.subr.mxu0 0.0
        %8215 = vmatpush1.msra.mxu0 0.0
        %8216 = vmatprep.subr.mxu0 0.0
        %8217 = vmatpush1.msra.mxu0 0.0
        %8218 = vmatprep.subr.mxu0 0.0
        %8219 = vmatpush1.msra.mxu0 0.0
        %8220 = vmatprep.subr.mxu0 0.0
        %8221 = vmatpush1.msra.mxu0 0.0
        %8222 = vmatprep.subr.mxu0 0.0
        %8223 = vmatpush1.msra.mxu0 0.0
        %8224 = vmatprep.subr.mxu0 0.0
        %8225 = vmatpush1.msra.mxu0 0.0
        %8226 = vmatprep.subr.mxu0 0.0
        %8227 = vmatpush1.msra.mxu0 0.0
        %8228 = vmatprep.subr.mxu0 0.0
        %8229 = vmatpush1.msra.mxu0 0.0
        %8230 = vmatprep.subr.mxu0 0.0
        %8231 = vmatpush1.msra.mxu0 0.0
        %8232 = vmatprep.subr.mxu0 0.0
        %8233 = vmatpush1.msra.mxu0 0.0
        %8234 = vmatprep.subr.mxu0 0.0
        %8235 = vmatpush1.msra.mxu0 0.0
        %8236 = vmatprep.subr.mxu0 0.0
        %8237 = vmatpush1.msra.mxu0 0.0
        %8238 = vmatprep.subr.mxu0 0.0
        %8239 = vmatpush1.msra.mxu0 0.0
        %8240 = vmatprep.subr.mxu0 0.0
        %8241 = vmatpush1.msra.mxu0 0.0
        %8242 = vmatprep.subr.mxu0 0.0
        %8243 = vmatpush1.msra.mxu0 0.0
        %8244 = vmatprep.subr.mxu0 0.0
        %8245 = vmatpush1.msra.mxu0 0.0
        %8246 = vmatprep.subr.mxu0 0.0
        %8247 = vmatpush1.msra.mxu0 0.0
        %8248 = vmatprep.mubr.f32.mxu0 0.0
        %8249 = vmatmul.mubr.f32.gmra.mrb[0].mxu0 %v5311
        %v8250 = vpop.f32.mrb[0].mxu0
        %v8251 = vadd.f32 0.0, %v8250
        %v8252 = vpop.f32.mrb[0].mxu0
        %v8253 = vadd.f32 0.0, %v8252
        %8254 = vmatprep.mubr.f32.mxu0 0.0
        %8255 = vmatmul.mubr.f32.gmra.mrb[0].mxu0 %v5314
        %v8256 = vpop.f32.mrb[0].mxu0
        %v8257 = vadd.f32 0.0, %v8256
        %v8258 = vpop.f32.mrb[0].mxu0
        %v8259 = vadd.f32 0.0, %v8258
        %8260 = vdwg.mxu0
        %s8261 = scalar_lea.vmem [#allocation20], 6144
        %v8262 = vld [vmem:[%s8261] sm:$0xff]
        %v8263 = vld [vmem:[%s8261 + $0x8] sm:$0xff]
        %v8264 = vld [vmem:[%s8261 + $0x10] sm:$0xff]
        %v8265 = vld [vmem:[%s8261 + $0x18] sm:$0xff]
        %v8266 = vld [vmem:[%s8261 + $0x20] sm:$0xff]
        %v8267 = vld [vmem:[%s8261 + $0x28] sm:$0xff]
        %v8268 = vld [vmem:[%s8261 + $0x30] sm:$0xff]
        %v8269 = vld [vmem:[%s8261 + $0x38] sm:$0xff]
        %v8270 = vld [vmem:[%s8261 + $0x40] sm:$0xff]
        %v8271 = vld [vmem:[%s8261 + $0x48] sm:$0xff]
        %v8272 = vld [vmem:[%s8261 + $0x50] sm:$0xff]
        %v8273 = vld [vmem:[%s8261 + $0x58] sm:$0xff]
        %v8274 = vld [vmem:[%s8261 + $0x60] sm:$0xff]
        %v8275 = vld [vmem:[%s8261 + $0x68] sm:$0xff]
        %v8276 = vld [vmem:[%s8261 + $0x70] sm:$0xff]
        %v8277 = vld [vmem:[%s8261 + $0x78] sm:$0xff]
        %v8278 = vld [vmem:[%s8261 + $0x80] sm:$0xff]
        %v8279 = vld [vmem:[%s8261 + $0x88] sm:$0xff]
        %v8280 = vld [vmem:[%s8261 + $0x90] sm:$0xff]
        %v8281 = vld [vmem:[%s8261 + $0x98] sm:$0xff]
        %v8282 = vld [vmem:[%s8261 + $0xa0] sm:$0xff]
        %v8283 = vld [vmem:[%s8261 + $0xa8] sm:$0xff]
        %v8284 = vld [vmem:[%s8261 + $0xb0] sm:$0xff]
        %v8285 = vld [vmem:[%s8261 + $0xb8] sm:$0xff]
        %v8286 = vld [vmem:[%s8261 + $0xc0] sm:$0xff]
        %v8287 = vld [vmem:[%s8261 + $0xc8] sm:$0xff]
        %v8288 = vld [vmem:[%s8261 + $0xd0] sm:$0xff]
        %v8289 = vld [vmem:[%s8261 + $0xd8] sm:$0xff]
        %v8290 = vld [vmem:[%s8261 + $0xe0] sm:$0xff]
        %v8291 = vld [vmem:[%s8261 + $0xe8] sm:$0xff]
        %v8292 = vld [vmem:[%s8261 + $0xf0] sm:$0xff]
        %v8293 = vld [vmem:[%s8261 + $0xf8] sm:$0xff]
        %v8294 = vld [vmem:[%s8261 + $0x100] sm:$0xff]
        %v8295 = vld [vmem:[%s8261 + $0x108] sm:$0xff]
        %v8296 = vld [vmem:[%s8261 + $0x110] sm:$0xff]
        %v8297 = vld [vmem:[%s8261 + $0x118] sm:$0xff]
        %v8298 = vld [vmem:[%s8261 + $0x120] sm:$0xff]
        %v8299 = vld [vmem:[%s8261 + $0x128] sm:$0xff]
        %v8300 = vld [vmem:[%s8261 + $0x130] sm:$0xff]
        %v8301 = vld [vmem:[%s8261 + $0x138] sm:$0xff]
        %v8302 = vld [vmem:[%s8261 + $0x140] sm:$0xff]
        %v8303 = vld [vmem:[%s8261 + $0x148] sm:$0xff]
        %v8304 = vld [vmem:[%s8261 + $0x150] sm:$0xff]
        %v8305 = vld [vmem:[%s8261 + $0x158] sm:$0xff]
        %v8306 = vld [vmem:[%s8261 + $0x160] sm:$0xff]
        %v8307 = vld [vmem:[%s8261 + $0x168] sm:$0xff]
        %v8308 = vld [vmem:[%s8261 + $0x170] sm:$0xff]
        %v8309 = vld [vmem:[%s8261 + $0x178] sm:$0xff]
        %v8310 = vld [vmem:[%s8261 + $0x180] sm:$0xff]
        %v8311 = vld [vmem:[%s8261 + $0x188] sm:$0xff]
        %v8312 = vld [vmem:[%s8261 + $0x190] sm:$0xff]
        %v8313 = vld [vmem:[%s8261 + $0x198] sm:$0xff]
        %v8314 = vld [vmem:[%s8261 + $0x1a0] sm:$0xff]
        %v8315 = vld [vmem:[%s8261 + $0x1a8] sm:$0xff]
        %v8316 = vld [vmem:[%s8261 + $0x1b0] sm:$0xff]
        %v8317 = vld [vmem:[%s8261 + $0x1b8] sm:$0xff]
        %v8318 = vld [vmem:[%s8261 + $0x1c0] sm:$0xff]
        %v8319 = vld [vmem:[%s8261 + $0x1c8] sm:$0xff]
        %v8320 = vld [vmem:[%s8261 + $0x1d0] sm:$0xff]
        %v8321 = vld [vmem:[%s8261 + $0x1d8] sm:$0xff]
        %v8322 = vld [vmem:[%s8261 + $0x1e0] sm:$0xff]
        %v8323 = vld [vmem:[%s8261 + $0x1e8] sm:$0xff]
        %v8324 = vld [vmem:[%s8261 + $0x1f0] sm:$0xff]
        %v8325 = vld [vmem:[%s8261 + $0x1f8] sm:$0xff]
        %v8326 = vld [vmem:[%s8261 + $0x200] sm:$0xff]
        %v8327 = vld [vmem:[%s8261 + $0x208] sm:$0xff]
        %v8328 = vld [vmem:[%s8261 + $0x210] sm:$0xff]
        %v8329 = vld [vmem:[%s8261 + $0x218] sm:$0xff]
        %v8330 = vld [vmem:[%s8261 + $0x220] sm:$0xff]
        %v8331 = vld [vmem:[%s8261 + $0x228] sm:$0xff]
        %v8332 = vld [vmem:[%s8261 + $0x230] sm:$0xff]
        %v8333 = vld [vmem:[%s8261 + $0x238] sm:$0xff]
        %v8334 = vld [vmem:[%s8261 + $0x240] sm:$0xff]
        %v8335 = vld [vmem:[%s8261 + $0x248] sm:$0xff]
        %v8336 = vld [vmem:[%s8261 + $0x250] sm:$0xff]
        %v8337 = vld [vmem:[%s8261 + $0x258] sm:$0xff]
        %v8338 = vld [vmem:[%s8261 + $0x260] sm:$0xff]
        %v8339 = vld [vmem:[%s8261 + $0x268] sm:$0xff]
        %v8340 = vld [vmem:[%s8261 + $0x270] sm:$0xff]
        %v8341 = vld [vmem:[%s8261 + $0x278] sm:$0xff]
        %v8342 = vld [vmem:[%s8261 + $0x280] sm:$0xff]
        %v8343 = vld [vmem:[%s8261 + $0x288] sm:$0xff]
        %v8344 = vld [vmem:[%s8261 + $0x290] sm:$0xff]
        %v8345 = vld [vmem:[%s8261 + $0x298] sm:$0xff]
        %v8346 = vld [vmem:[%s8261 + $0x2a0] sm:$0xff]
        %v8347 = vld [vmem:[%s8261 + $0x2a8] sm:$0xff]
        %v8348 = vld [vmem:[%s8261 + $0x2b0] sm:$0xff]
        %v8349 = vld [vmem:[%s8261 + $0x2b8] sm:$0xff]
        %v8350 = vld [vmem:[%s8261 + $0x2c0] sm:$0xff]
        %v8351 = vld [vmem:[%s8261 + $0x2c8] sm:$0xff]
        %v8352 = vld [vmem:[%s8261 + $0x2d0] sm:$0xff]
        %v8353 = vld [vmem:[%s8261 + $0x2d8] sm:$0xff]
        %v8354 = vld [vmem:[%s8261 + $0x2e0] sm:$0xff]
        %v8355 = vld [vmem:[%s8261 + $0x2e8] sm:$0xff]
        %v8356 = vld [vmem:[%s8261 + $0x2f0] sm:$0xff]
        %v8357 = vld [vmem:[%s8261 + $0x2f8] sm:$0xff]
        %v8358 = vld [vmem:[%s8261 + $0x300] sm:$0xff]
        %v8359 = vld [vmem:[%s8261 + $0x308] sm:$0xff]
        %v8360 = vld [vmem:[%s8261 + $0x310] sm:$0xff]
        %v8361 = vld [vmem:[%s8261 + $0x318] sm:$0xff]
        %v8362 = vld [vmem:[%s8261 + $0x320] sm:$0xff]
        %v8363 = vld [vmem:[%s8261 + $0x328] sm:$0xff]
        %v8364 = vld [vmem:[%s8261 + $0x330] sm:$0xff]
        %v8365 = vld [vmem:[%s8261 + $0x338] sm:$0xff]
        %v8366 = vld [vmem:[%s8261 + $0x340] sm:$0xff]
        %v8367 = vld [vmem:[%s8261 + $0x348] sm:$0xff]
        %v8368 = vld [vmem:[%s8261 + $0x350] sm:$0xff]
        %v8369 = vld [vmem:[%s8261 + $0x358] sm:$0xff]
        %v8370 = vld [vmem:[%s8261 + $0x360] sm:$0xff]
        %v8371 = vld [vmem:[%s8261 + $0x368] sm:$0xff]
        %v8372 = vld [vmem:[%s8261 + $0x370] sm:$0xff]
        %v8373 = vld [vmem:[%s8261 + $0x378] sm:$0xff]
        %v8374 = vld [vmem:[%s8261 + $0x380] sm:$0xff]
        %v8375 = vld [vmem:[%s8261 + $0x388] sm:$0xff]
        %v8376 = vld [vmem:[%s8261 + $0x390] sm:$0xff]
        %v8377 = vld [vmem:[%s8261 + $0x398] sm:$0xff]
        %v8378 = vld [vmem:[%s8261 + $0x3a0] sm:$0xff]
        %v8379 = vld [vmem:[%s8261 + $0x3a8] sm:$0xff]
        %v8380 = vld [vmem:[%s8261 + $0x3b0] sm:$0xff]
        %v8381 = vld [vmem:[%s8261 + $0x3b8] sm:$0xff]
        %v8382 = vld [vmem:[%s8261 + $0x3c0] sm:$0xff]
        %v8383 = vld [vmem:[%s8261 + $0x3c8] sm:$0xff]
        %v8384 = vld [vmem:[%s8261 + $0x3d0] sm:$0xff]
        %v8385 = vld [vmem:[%s8261 + $0x3d8] sm:$0xff]
        %v8386 = vld [vmem:[%s8261 + $0x3e0] sm:$0xff]
        %v8387 = vld [vmem:[%s8261 + $0x3e8] sm:$0xff]
        %v8388 = vld [vmem:[%s8261 + $0x3f0] sm:$0xff]
        %v8389 = vld [vmem:[%s8261 + $0x3f8] sm:$0xff]
        %v8390 = vld [vmem:[%s8261 + $0x400] sm:$0xff]
        %v8391 = vld [vmem:[%s8261 + $0x408] sm:$0xff]
        %v8392 = vld [vmem:[%s8261 + $0x410] sm:$0xff]
        %v8393 = vld [vmem:[%s8261 + $0x418] sm:$0xff]
        %v8394 = vld [vmem:[%s8261 + $0x420] sm:$0xff]
        %v8395 = vld [vmem:[%s8261 + $0x428] sm:$0xff]
        %v8396 = vld [vmem:[%s8261 + $0x430] sm:$0xff]
        %v8397 = vld [vmem:[%s8261 + $0x438] sm:$0xff]
        %v8398 = vld [vmem:[%s8261 + $0x440] sm:$0xff]
        %v8399 = vld [vmem:[%s8261 + $0x448] sm:$0xff]
        %v8400 = vld [vmem:[%s8261 + $0x450] sm:$0xff]
        %v8401 = vld [vmem:[%s8261 + $0x458] sm:$0xff]
        %v8402 = vld [vmem:[%s8261 + $0x460] sm:$0xff]
        %v8403 = vld [vmem:[%s8261 + $0x468] sm:$0xff]
        %v8404 = vld [vmem:[%s8261 + $0x470] sm:$0xff]
        %v8405 = vld [vmem:[%s8261 + $0x478] sm:$0xff]
        %v8406 = vld [vmem:[%s8261 + $0x480] sm:$0xff]
        %v8407 = vld [vmem:[%s8261 + $0x488] sm:$0xff]
        %v8408 = vld [vmem:[%s8261 + $0x490] sm:$0xff]
        %v8409 = vld [vmem:[%s8261 + $0x498] sm:$0xff]
        %v8410 = vld [vmem:[%s8261 + $0x4a0] sm:$0xff]
        %v8411 = vld [vmem:[%s8261 + $0x4a8] sm:$0xff]
        %v8412 = vld [vmem:[%s8261 + $0x4b0] sm:$0xff]
        %v8413 = vld [vmem:[%s8261 + $0x4b8] sm:$0xff]
        %v8414 = vld [vmem:[%s8261 + $0x4c0] sm:$0xff]
        %v8415 = vld [vmem:[%s8261 + $0x4c8] sm:$0xff]
        %v8416 = vld [vmem:[%s8261 + $0x4d0] sm:$0xff]
        %v8417 = vld [vmem:[%s8261 + $0x4d8] sm:$0xff]
        %v8418 = vld [vmem:[%s8261 + $0x4e0] sm:$0xff]
        %v8419 = vld [vmem:[%s8261 + $0x4e8] sm:$0xff]
        %v8420 = vld [vmem:[%s8261 + $0x4f0] sm:$0xff]
        %v8421 = vld [vmem:[%s8261 + $0x4f8] sm:$0xff]
        %v8422 = vld [vmem:[%s8261 + $0x500] sm:$0xff]
        %v8423 = vld [vmem:[%s8261 + $0x508] sm:$0xff]
        %v8424 = vld [vmem:[%s8261 + $0x510] sm:$0xff]
        %v8425 = vld [vmem:[%s8261 + $0x518] sm:$0xff]
        %v8426 = vld [vmem:[%s8261 + $0x520] sm:$0xff]
        %v8427 = vld [vmem:[%s8261 + $0x528] sm:$0xff]
        %v8428 = vld [vmem:[%s8261 + $0x530] sm:$0xff]
        %v8429 = vld [vmem:[%s8261 + $0x538] sm:$0xff]
        %v8430 = vld [vmem:[%s8261 + $0x540] sm:$0xff]
        %v8431 = vld [vmem:[%s8261 + $0x548] sm:$0xff]
        %v8432 = vld [vmem:[%s8261 + $0x550] sm:$0xff]
        %v8433 = vld [vmem:[%s8261 + $0x558] sm:$0xff]
        %v8434 = vld [vmem:[%s8261 + $0x560] sm:$0xff]
        %v8435 = vld [vmem:[%s8261 + $0x568] sm:$0xff]
        %v8436 = vld [vmem:[%s8261 + $0x570] sm:$0xff]
        %v8437 = vld [vmem:[%s8261 + $0x578] sm:$0xff]
        %v8438 = vld [vmem:[%s8261 + $0x580] sm:$0xff]
        %v8439 = vld [vmem:[%s8261 + $0x588] sm:$0xff]
        %v8440 = vld [vmem:[%s8261 + $0x590] sm:$0xff]
        %v8441 = vld [vmem:[%s8261 + $0x598] sm:$0xff]
        %v8442 = vld [vmem:[%s8261 + $0x5a0] sm:$0xff]
        %v8443 = vld [vmem:[%s8261 + $0x5a8] sm:$0xff]
        %v8444 = vld [vmem:[%s8261 + $0x5b0] sm:$0xff]
        %v8445 = vld [vmem:[%s8261 + $0x5b8] sm:$0xff]
        %v8446 = vld [vmem:[%s8261 + $0x5c0] sm:$0xff]
        %v8447 = vld [vmem:[%s8261 + $0x5c8] sm:$0xff]
        %v8448 = vld [vmem:[%s8261 + $0x5d0] sm:$0xff]
        %v8449 = vld [vmem:[%s8261 + $0x5d8] sm:$0xff]
        %v8450 = vld [vmem:[%s8261 + $0x5e0] sm:$0xff]
        %v8451 = vld [vmem:[%s8261 + $0x5e8] sm:$0xff]
        %v8452 = vld [vmem:[%s8261 + $0x5f0] sm:$0xff]
        %v8453 = vld [vmem:[%s8261 + $0x5f8] sm:$0xff]
        %v8454 = vld [vmem:[%s8261 + $0x600] sm:$0xff]
        %v8455 = vld [vmem:[%s8261 + $0x608] sm:$0xff]
        %v8456 = vld [vmem:[%s8261 + $0x610] sm:$0xff]
        %v8457 = vld [vmem:[%s8261 + $0x618] sm:$0xff]
        %v8458 = vld [vmem:[%s8261 + $0x620] sm:$0xff]
        %v8459 = vld [vmem:[%s8261 + $0x628] sm:$0xff]
        %v8460 = vld [vmem:[%s8261 + $0x630] sm:$0xff]
        %v8461 = vld [vmem:[%s8261 + $0x638] sm:$0xff]
        %v8462 = vld [vmem:[%s8261 + $0x640] sm:$0xff]
        %v8463 = vld [vmem:[%s8261 + $0x648] sm:$0xff]
        %v8464 = vld [vmem:[%s8261 + $0x650] sm:$0xff]
        %v8465 = vld [vmem:[%s8261 + $0x658] sm:$0xff]
        %v8466 = vld [vmem:[%s8261 + $0x660] sm:$0xff]
        %v8467 = vld [vmem:[%s8261 + $0x668] sm:$0xff]
        %v8468 = vld [vmem:[%s8261 + $0x670] sm:$0xff]
        %v8469 = vld [vmem:[%s8261 + $0x678] sm:$0xff]
        %v8470 = vld [vmem:[%s8261 + $0x680] sm:$0xff]
        %v8471 = vld [vmem:[%s8261 + $0x688] sm:$0xff]
        %v8472 = vld [vmem:[%s8261 + $0x690] sm:$0xff]
        %v8473 = vld [vmem:[%s8261 + $0x698] sm:$0xff]
        %v8474 = vld [vmem:[%s8261 + $0x6a0] sm:$0xff]
        %v8475 = vld [vmem:[%s8261 + $0x6a8] sm:$0xff]
        %v8476 = vld [vmem:[%s8261 + $0x6b0] sm:$0xff]
        %v8477 = vld [vmem:[%s8261 + $0x6b8] sm:$0xff]
        %v8478 = vld [vmem:[%s8261 + $0x6c0] sm:$0xff]
        %v8479 = vld [vmem:[%s8261 + $0x6c8] sm:$0xff]
        %v8480 = vld [vmem:[%s8261 + $0x6d0] sm:$0xff]
        %v8481 = vld [vmem:[%s8261 + $0x6d8] sm:$0xff]
        %v8482 = vld [vmem:[%s8261 + $0x6e0] sm:$0xff]
        %v8483 = vld [vmem:[%s8261 + $0x6e8] sm:$0xff]
        %v8484 = vld [vmem:[%s8261 + $0x6f0] sm:$0xff]
        %v8485 = vld [vmem:[%s8261 + $0x6f8] sm:$0xff]
        %v8486 = vld [vmem:[%s8261 + $0x700] sm:$0xff]
        %v8487 = vld [vmem:[%s8261 + $0x708] sm:$0xff]
        %v8488 = vld [vmem:[%s8261 + $0x710] sm:$0xff]
        %v8489 = vld [vmem:[%s8261 + $0x718] sm:$0xff]
        %v8490 = vld [vmem:[%s8261 + $0x720] sm:$0xff]
        %v8491 = vld [vmem:[%s8261 + $0x728] sm:$0xff]
        %v8492 = vld [vmem:[%s8261 + $0x730] sm:$0xff]
        %v8493 = vld [vmem:[%s8261 + $0x738] sm:$0xff]
        %v8494 = vld [vmem:[%s8261 + $0x740] sm:$0xff]
        %v8495 = vld [vmem:[%s8261 + $0x748] sm:$0xff]
        %v8496 = vld [vmem:[%s8261 + $0x750] sm:$0xff]
        %v8497 = vld [vmem:[%s8261 + $0x758] sm:$0xff]
        %v8498 = vld [vmem:[%s8261 + $0x760] sm:$0xff]
        %v8499 = vld [vmem:[%s8261 + $0x768] sm:$0xff]
        %v8500 = vld [vmem:[%s8261 + $0x770] sm:$0xff]
        %v8501 = vld [vmem:[%s8261 + $0x778] sm:$0xff]
        %v8502 = vld [vmem:[%s8261 + $0x780] sm:$0xff]
        %v8503 = vld [vmem:[%s8261 + $0x788] sm:$0xff]
        %v8504 = vld [vmem:[%s8261 + $0x790] sm:$0xff]
        %v8505 = vld [vmem:[%s8261 + $0x798] sm:$0xff]
        %v8506 = vld [vmem:[%s8261 + $0x7a0] sm:$0xff]
        %v8507 = vld [vmem:[%s8261 + $0x7a8] sm:$0xff]
        %v8508 = vld [vmem:[%s8261 + $0x7b0] sm:$0xff]
        %v8509 = vld [vmem:[%s8261 + $0x7b8] sm:$0xff]
        %v8510 = vld [vmem:[%s8261 + $0x7c0] sm:$0xff]
        %v8511 = vld [vmem:[%s8261 + $0x7c8] sm:$0xff]
        %v8512 = vld [vmem:[%s8261 + $0x7d0] sm:$0xff]
        %v8513 = vld [vmem:[%s8261 + $0x7d8] sm:$0xff]
        %v8514 = vld [vmem:[%s8261 + $0x7e0] sm:$0xff]
        %v8515 = vld [vmem:[%s8261 + $0x7e8] sm:$0xff]
        %v8516 = vld [vmem:[%s8261 + $0x7f0] sm:$0xff]
        %v8517 = vld [vmem:[%s8261 + $0x7f8] sm:$0xff]
        %8518 = vmatprep.subr.mxu0 %v8263
        %8519 = vmatpush1.msra.mxu0 %v8262
        %8520 = vmatprep.subr.mxu0 %v8267
        %8521 = vmatpush1.msra.mxu0 %v8266
        %8522 = vmatprep.subr.mxu0 %v8271
        %8523 = vmatpush1.msra.mxu0 %v8270
        %8524 = vmatprep.subr.mxu0 %v8275
        %8525 = vmatpush1.msra.mxu0 %v8274
        %8526 = vmatprep.subr.mxu0 %v8279
        %8527 = vmatpush1.msra.mxu0 %v8278
        %8528 = vmatprep.subr.mxu0 %v8283
        %8529 = vmatpush1.msra.mxu0 %v8282
        %8530 = vmatprep.subr.mxu0 %v8287
        %8531 = vmatpush1.msra.mxu0 %v8286
        %8532 = vmatprep.subr.mxu0 %v8291
        %8533 = vmatpush1.msra.mxu0 %v8290
        %8534 = vmatprep.subr.mxu0 %v8295
        %8535 = vmatpush1.msra.mxu0 %v8294
        %8536 = vmatprep.subr.mxu0 %v8299
        %8537 = vmatpush1.msra.mxu0 %v8298
        %8538 = vmatprep.subr.mxu0 %v8303
        %8539 = vmatpush1.msra.mxu0 %v8302
        %8540 = vmatprep.subr.mxu0 %v8307
        %8541 = vmatpush1.msra.mxu0 %v8306
        %8542 = vmatprep.subr.mxu0 %v8311
        %8543 = vmatpush1.msra.mxu0 %v8310
        %8544 = vmatprep.subr.mxu0 %v8315
        %8545 = vmatpush1.msra.mxu0 %v8314
        %8546 = vmatprep.subr.mxu0 %v8319
        %8547 = vmatpush1.msra.mxu0 %v8318
        %8548 = vmatprep.subr.mxu0 %v8323
        %8549 = vmatpush1.msra.mxu0 %v8322
        %8550 = vmatprep.subr.mxu0 %v8327
        %8551 = vmatpush1.msra.mxu0 %v8326
        %8552 = vmatprep.subr.mxu0 %v8331
        %8553 = vmatpush1.msra.mxu0 %v8330
        %8554 = vmatprep.subr.mxu0 %v8335
        %8555 = vmatpush1.msra.mxu0 %v8334
        %8556 = vmatprep.subr.mxu0 %v8339
        %8557 = vmatpush1.msra.mxu0 %v8338
        %8558 = vmatprep.subr.mxu0 %v8343
        %8559 = vmatpush1.msra.mxu0 %v8342
        %8560 = vmatprep.subr.mxu0 %v8347
        %8561 = vmatpush1.msra.mxu0 %v8346
        %8562 = vmatprep.subr.mxu0 %v8351
        %8563 = vmatpush1.msra.mxu0 %v8350
        %8564 = vmatprep.subr.mxu0 %v8355
        %8565 = vmatpush1.msra.mxu0 %v8354
        %8566 = vmatprep.subr.mxu0 %v8359
        %8567 = vmatpush1.msra.mxu0 %v8358
        %8568 = vmatprep.subr.mxu0 %v8363
        %8569 = vmatpush1.msra.mxu0 %v8362
        %8570 = vmatprep.subr.mxu0 %v8367
        %8571 = vmatpush1.msra.mxu0 %v8366
        %8572 = vmatprep.subr.mxu0 %v8371
        %8573 = vmatpush1.msra.mxu0 %v8370
        %8574 = vmatprep.subr.mxu0 %v8375
        %8575 = vmatpush1.msra.mxu0 %v8374
        %8576 = vmatprep.subr.mxu0 %v8379
        %8577 = vmatpush1.msra.mxu0 %v8378
        %8578 = vmatprep.subr.mxu0 %v8383
        %8579 = vmatpush1.msra.mxu0 %v8382
        %8580 = vmatprep.subr.mxu0 %v8387
        %8581 = vmatpush1.msra.mxu0 %v8386
        %8582 = vmatprep.mubr.f32.mxu0 %v8176
        %8583 = vmatmul.mubr.f32.gmra.mrb[0].mxu0 %v8174
        %v8584 = vpop.f32.mrb[0].mxu0
        %v8585 = vadd.f32 0.0, %v8584
        %v8586 = vpop.f32.mrb[0].mxu0
        %v8587 = vadd.f32 0.0, %v8586
        %8588 = vmatprep.mubr.f32.mxu0 %v8182
        %8589 = vmatmul.mubr.f32.gmra.mrb[0].mxu0 %v8180
        %v8590 = vpop.f32.mrb[0].mxu0
        %v8591 = vadd.f32 0.0, %v8590
        %v8592 = vpop.f32.mrb[0].mxu0
        %v8593 = vadd.f32 0.0, %v8592
        %8594 = vdwg.mxu0
        %8595 = vmatprep.subr.mxu0 %v8391
        %8596 = vmatpush1.msra.mxu0 %v8390
        %8597 = vmatprep.subr.mxu0 %v8395
        %8598 = vmatpush1.msra.mxu0 %v8394
        %8599 = vmatprep.subr.mxu0 %v8399
        %8600 = vmatpush1.msra.mxu0 %v8398
        %8601 = vmatprep.subr.mxu0 %v8403
        %8602 = vmatpush1.msra.mxu0 %v8402
        %8603 = vmatprep.subr.mxu0 %v8407
        %8604 = vmatpush1.msra.mxu0 %v8406
        %8605 = vmatprep.subr.mxu0 %v8411
        %8606 = vmatpush1.msra.mxu0 %v8410
        %8607 = vmatprep.subr.mxu0 %v8415
        %8608 = vmatpush1.msra.mxu0 %v8414
        %8609 = vmatprep.subr.mxu0 %v8419
        %8610 = vmatpush1.msra.mxu0 %v8418
        %8611 = vmatprep.subr.mxu0 %v8423
        %8612 = vmatpush1.msra.mxu0 %v8422
        %8613 = vmatprep.subr.mxu0 %v8427
        %8614 = vmatpush1.msra.mxu0 %v8426
        %8615 = vmatprep.subr.mxu0 %v8431
        %8616 = vmatpush1.msra.mxu0 %v8430
        %8617 = vmatprep.subr.mxu0 %v8435
        %8618 = vmatpush1.msra.mxu0 %v8434
        %8619 = vmatprep.subr.mxu0 %v8439
        %8620 = vmatpush1.msra.mxu0 %v8438
        %8621 = vmatprep.subr.mxu0 %v8443
        %8622 = vmatpush1.msra.mxu0 %v8442
        %8623 = vmatprep.subr.mxu0 %v8447
        %8624 = vmatpush1.msra.mxu0 %v8446
        %8625 = vmatprep.subr.mxu0 %v8451
        %8626 = vmatpush1.msra.mxu0 %v8450
        %8627 = vmatprep.subr.mxu0 %v8455
        %8628 = vmatpush1.msra.mxu0 %v8454
        %8629 = vmatprep.subr.mxu0 %v8459
        %8630 = vmatpush1.msra.mxu0 %v8458
        %8631 = vmatprep.subr.mxu0 %v8463
        %8632 = vmatpush1.msra.mxu0 %v8462
        %8633 = vmatprep.subr.mxu0 %v8467
        %8634 = vmatpush1.msra.mxu0 %v8466
        %8635 = vmatprep.subr.mxu0 %v8471
        %8636 = vmatpush1.msra.mxu0 %v8470
        %8637 = vmatprep.subr.mxu0 %v8475
        %8638 = vmatpush1.msra.mxu0 %v8474
        %8639 = vmatprep.subr.mxu0 %v8479
        %8640 = vmatpush1.msra.mxu0 %v8478
        %8641 = vmatprep.subr.mxu0 %v8483
        %8642 = vmatpush1.msra.mxu0 %v8482
        %8643 = vmatprep.subr.mxu0 %v8487
        %8644 = vmatpush1.msra.mxu0 %v8486
        %8645 = vmatprep.subr.mxu0 %v8491
        %8646 = vmatpush1.msra.mxu0 %v8490
        %8647 = vmatprep.subr.mxu0 %v8495
        %8648 = vmatpush1.msra.mxu0 %v8494
        %8649 = vmatprep.subr.mxu0 %v8499
        %8650 = vmatpush1.msra.mxu0 %v8498
        %8651 = vmatprep.subr.mxu0 %v8503
        %8652 = vmatpush1.msra.mxu0 %v8502
        %8653 = vmatprep.subr.mxu0 %v8507
        %8654 = vmatpush1.msra.mxu0 %v8506
        %8655 = vmatprep.subr.mxu0 %v8511
        %8656 = vmatpush1.msra.mxu0 %v8510
        %8657 = vmatprep.subr.mxu0 %v8515
        %8658 = vmatpush1.msra.mxu0 %v8514
        %8659 = vmatprep.mubr.f32.mxu0 %v8253
        %8660 = vmatmul.mubr.f32.gmra.mrb[0].mxu0 %v8251
        %v8661 = vpop.f32.mrb[0].mxu0
        %v8662 = vadd.f32 %v8585, %v8661
        %v8663 = vpop.f32.mrb[0].mxu0
        %v8664 = vadd.f32 %v8587, %v8663
        %8665 = vmatprep.mubr.f32.mxu0 %v8259
        %8666 = vmatmul.mubr.f32.gmra.mrb[0].mxu0 %v8257
        %v8667 = vpop.f32.mrb[0].mxu0
        %v8668 = vadd.f32 %v8591, %v8667
        %v8669 = vpop.f32.mrb[0].mxu0
        %v8670 = vadd.f32 %v8593, %v8669
        %8671 = vdwg.mxu0
        %8672 = vmatprep.subr.mxu0 %v8265
        %8673 = vmatpush1.msra.mxu0 %v8264
        %8674 = vmatprep.subr.mxu0 %v8269
        %8675 = vmatpush1.msra.mxu0 %v8268
        %8676 = vmatprep.subr.mxu0 %v8273
        %8677 = vmatpush1.msra.mxu0 %v8272
        %8678 = vmatprep.subr.mxu0 %v8277
        %8679 = vmatpush1.msra.mxu0 %v8276
        %8680 = vmatprep.subr.mxu0 %v8281
        %8681 = vmatpush1.msra.mxu0 %v8280
        %8682 = vmatprep.subr.mxu0 %v8285
        %8683 = vmatpush1.msra.mxu0 %v8284
        %8684 = vmatprep.subr.mxu0 %v8289
        %8685 = vmatpush1.msra.mxu0 %v8288
        %8686 = vmatprep.subr.mxu0 %v8293
        %8687 = vmatpush1.msra.mxu0 %v8292
        %8688 = vmatprep.subr.mxu0 %v8297
        %8689 = vmatpush1.msra.mxu0 %v8296
        %8690 = vmatprep.subr.mxu0 %v8301
        %8691 = vmatpush1.msra.mxu0 %v8300
        %8692 = vmatprep.subr.mxu0 %v8305
        %8693 = vmatpush1.msra.mxu0 %v8304
        %8694 = vmatprep.subr.mxu0 %v8309
        %8695 = vmatpush1.msra.mxu0 %v8308
        %8696 = vmatprep.subr.mxu0 %v8313
        %8697 = vmatpush1.msra.mxu0 %v8312
        %8698 = vmatprep.subr.mxu0 %v8317
        %8699 = vmatpush1.msra.mxu0 %v8316
        %8700 = vmatprep.subr.mxu0 %v8321
        %8701 = vmatpush1.msra.mxu0 %v8320
        %8702 = vmatprep.subr.mxu0 %v8325
        %8703 = vmatpush1.msra.mxu0 %v8324
        %8704 = vmatprep.subr.mxu0 %v8329
        %8705 = vmatpush1.msra.mxu0 %v8328
        %8706 = vmatprep.subr.mxu0 %v8333
        %8707 = vmatpush1.msra.mxu0 %v8332
        %8708 = vmatprep.subr.mxu0 %v8337
        %8709 = vmatpush1.msra.mxu0 %v8336
        %8710 = vmatprep.subr.mxu0 %v8341
        %8711 = vmatpush1.msra.mxu0 %v8340
        %8712 = vmatprep.subr.mxu0 %v8345
        %8713 = vmatpush1.msra.mxu0 %v8344
        %8714 = vmatprep.subr.mxu0 %v8349
        %8715 = vmatpush1.msra.mxu0 %v8348
        %8716 = vmatprep.subr.mxu0 %v8353
        %8717 = vmatpush1.msra.mxu0 %v8352
        %8718 = vmatprep.subr.mxu0 %v8357
        %8719 = vmatpush1.msra.mxu0 %v8356
        %8720 = vmatprep.subr.mxu0 %v8361
        %8721 = vmatpush1.msra.mxu0 %v8360
        %8722 = vmatprep.subr.mxu0 %v8365
        %8723 = vmatpush1.msra.mxu0 %v8364
        %8724 = vmatprep.subr.mxu0 %v8369
        %8725 = vmatpush1.msra.mxu0 %v8368
        %8726 = vmatprep.subr.mxu0 %v8373
        %8727 = vmatpush1.msra.mxu0 %v8372
        %8728 = vmatprep.subr.mxu0 %v8377
        %8729 = vmatpush1.msra.mxu0 %v8376
        %8730 = vmatprep.subr.mxu0 %v8381
        %8731 = vmatpush1.msra.mxu0 %v8380
        %8732 = vmatprep.subr.mxu0 %v8385
        %8733 = vmatpush1.msra.mxu0 %v8384
        %8734 = vmatprep.subr.mxu0 %v8389
        %8735 = vmatpush1.msra.mxu0 %v8388
        %8736 = vmatprep.mubr.f32.mxu0 %v8176
        %8737 = vmatmul.mubr.f32.gmra.mrb[0].mxu0 %v8174
        %v8738 = vpop.f32.mrb[0].mxu0
        %v8739 = vadd.f32 0.0, %v8738
        %v8740 = vpop.f32.mrb[0].mxu0
        %v8741 = vadd.f32 0.0, %v8740
        %8742 = vmatprep.mubr.f32.mxu0 %v8182
        %8743 = vmatmul.mubr.f32.gmra.mrb[0].mxu0 %v8180
        %v8744 = vpop.f32.mrb[0].mxu0
        %v8745 = vadd.f32 0.0, %v8744
        %v8746 = vpop.f32.mrb[0].mxu0
        %v8747 = vadd.f32 0.0, %v8746
        %8748 = vdwg.mxu0
        %8749 = vmatprep.subr.mxu0 %v8393
        %8750 = vmatpush1.msra.mxu0 %v8392
        %8751 = vmatprep.subr.mxu0 %v8397
        %8752 = vmatpush1.msra.mxu0 %v8396
        %8753 = vmatprep.subr.mxu0 %v8401
        %8754 = vmatpush1.msra.mxu0 %v8400
        %8755 = vmatprep.subr.mxu0 %v8405
        %8756 = vmatpush1.msra.mxu0 %v8404
        %8757 = vmatprep.subr.mxu0 %v8409
        %8758 = vmatpush1.msra.mxu0 %v8408
        %8759 = vmatprep.subr.mxu0 %v8413
        %8760 = vmatpush1.msra.mxu0 %v8412
        %8761 = vmatprep.subr.mxu0 %v8417
        %8762 = vmatpush1.msra.mxu0 %v8416
        %8763 = vmatprep.subr.mxu0 %v8421
        %8764 = vmatpush1.msra.mxu0 %v8420
        %8765 = vmatprep.subr.mxu0 %v8425
        %8766 = vmatpush1.msra.mxu0 %v8424
        %8767 = vmatprep.subr.mxu0 %v8429
        %8768 = vmatpush1.msra.mxu0 %v8428
        %8769 = vmatprep.subr.mxu0 %v8433
        %8770 = vmatpush1.msra.mxu0 %v8432
        %8771 = vmatprep.subr.mxu0 %v8437
        %8772 = vmatpush1.msra.mxu0 %v8436
        %8773 = vmatprep.subr.mxu0 %v8441
        %8774 = vmatpush1.msra.mxu0 %v8440
        %8775 = vmatprep.subr.mxu0 %v8445
        %8776 = vmatpush1.msra.mxu0 %v8444
        %8777 = vmatprep.subr.mxu0 %v8449
        %8778 = vmatpush1.msra.mxu0 %v8448
        %8779 = vmatprep.subr.mxu0 %v8453
        %8780 = vmatpush1.msra.mxu0 %v8452
        %8781 = vmatprep.subr.mxu0 %v8457
        %8782 = vmatpush1.msra.mxu0 %v8456
        %8783 = vmatprep.subr.mxu0 %v8461
        %8784 = vmatpush1.msra.mxu0 %v8460
        %8785 = vmatprep.subr.mxu0 %v8465
        %8786 = vmatpush1.msra.mxu0 %v8464
        %8787 = vmatprep.subr.mxu0 %v8469
        %8788 = vmatpush1.msra.mxu0 %v8468
        %8789 = vmatprep.subr.mxu0 %v8473
        %8790 = vmatpush1.msra.mxu0 %v8472
        %8791 = vmatprep.subr.mxu0 %v8477
        %8792 = vmatpush1.msra.mxu0 %v8476
        %8793 = vmatprep.subr.mxu0 %v8481
        %8794 = vmatpush1.msra.mxu0 %v8480
        %8795 = vmatprep.subr.mxu0 %v8485
        %8796 = vmatpush1.msra.mxu0 %v8484
        %8797 = vmatprep.subr.mxu0 %v8489
        %8798 = vmatpush1.msra.mxu0 %v8488
        %8799 = vmatprep.subr.mxu0 %v8493
        %8800 = vmatpush1.msra.mxu0 %v8492
        %8801 = vmatprep.subr.mxu0 %v8497
        %8802 = vmatpush1.msra.mxu0 %v8496
        %8803 = vmatprep.subr.mxu0 %v8501
        %8804 = vmatpush1.msra.mxu0 %v8500
        %8805 = vmatprep.subr.mxu0 %v8505
        %8806 = vmatpush1.msra.mxu0 %v8504
        %8807 = vmatprep.subr.mxu0 %v8509
        %8808 = vmatpush1.msra.mxu0 %v8508
        %8809 = vmatprep.subr.mxu0 %v8513
        %8810 = vmatpush1.msra.mxu0 %v8512
        %8811 = vmatprep.subr.mxu0 %v8517
        %8812 = vmatpush1.msra.mxu0 %v8516
        %8813 = vmatprep.mubr.f32.mxu0 %v8253
        %8814 = vmatmul.mubr.f32.gmra.mrb[0].mxu0 %v8251
        %v8815 = vpop.f32.mrb[0].mxu0
        %v8816 = vadd.f32 %v8739, %v8815
        %v8817 = vpop.f32.mrb[0].mxu0
        %v8818 = vadd.f32 %v8741, %v8817
        %8819 = vmatprep.mubr.f32.mxu0 %v8259
        %8820 = vmatmul.mubr.f32.gmra.mrb[0].mxu0 %v8257
        %v8821 = vpop.f32.mrb[0].mxu0
        %v8822 = vadd.f32 %v8745, %v8821
        %v8823 = vpop.f32.mrb[0].mxu0
        %v8824 = vadd.f32 %v8747, %v8823
        %8825 = vdwg.mxu0
        %v8826 = vadd.f32 %v8099, %v8662
        %v8827 = vadd.f32 %v8100, %v8664
        %v8828 = vadd.f32 %v8101, %v8816
        %v8829 = vadd.f32 %v8102, %v8818
        %v8830 = vadd.f32 %v8103, %v8668
        %v8831 = vadd.f32 %v8104, %v8670
        %v8832 = vadd.f32 %v8105, %v8822
        %v8833 = vadd.f32 %v8106, %v8824
        %s8834 = scalar_lea.vmem [#allocation16], 64
        %v8835 = vld [vmem:[%s8834] sm:$0xff]
        %v8836 = vld [vmem:[%s8834 + $0x8] sm:$0xff]
        %v8838 = vsel %vm4017, %v8835, 0
        %v8841 = vsel %vm4017, %v8836, 0
        %8843 = vmatprep.subr.mxu0 %v6082
        %8844 = vmatpush1.msra.mxu0 %v6081
        %8845 = vmatprep.subr.mxu0 %v6086
        %8846 = vmatpush1.msra.mxu0 %v6085
        %8847 = vmatprep.subr.mxu0 0.0
        %8848 = vmatpush1.msra.mxu0 0.0
        %8849 = vmatprep.subr.mxu0 0.0
        %8850 = vmatpush1.msra.mxu0 0.0
        %8851 = vmatprep.subr.mxu0 0.0
        %8852 = vmatpush1.msra.mxu0 0.0
        %8853 = vmatprep.subr.mxu0 0.0
        %8854 = vmatpush1.msra.mxu0 0.0
        %8855 = vmatprep.subr.mxu0 0.0
        %8856 = vmatpush1.msra.mxu0 0.0
        %8857 = vmatprep.subr.mxu0 0.0
        %8858 = vmatpush1.msra.mxu0 0.0
        %8859 = vmatprep.subr.mxu0 0.0
        %8860 = vmatpush1.msra.mxu0 0.0
        %8861 = vmatprep.subr.mxu0 0.0
        %8862 = vmatpush1.msra.mxu0 0.0
        %8863 = vmatprep.subr.mxu0 0.0
        %8864 = vmatpush1.msra.mxu0 0.0
        %8865 = vmatprep.subr.mxu0 0.0
        %8866 = vmatpush1.msra.mxu0 0.0
        %8867 = vmatprep.subr.mxu0 0.0
        %8868 = vmatpush1.msra.mxu0 0.0
        %8869 = vmatprep.subr.mxu0 0.0
        %8870 = vmatpush1.msra.mxu0 0.0
        %8871 = vmatprep.subr.mxu0 0.0
        %8872 = vmatpush1.msra.mxu0 0.0
        %8873 = vmatprep.subr.mxu0 0.0
        %8874 = vmatpush1.msra.mxu0 0.0
        %8875 = vmatprep.subr.mxu0 0.0
        %8876 = vmatpush1.msra.mxu0 0.0
        %8877 = vmatprep.subr.mxu0 0.0
        %8878 = vmatpush1.msra.mxu0 0.0
        %8879 = vmatprep.subr.mxu0 0.0
        %8880 = vmatpush1.msra.mxu0 0.0
        %8881 = vmatprep.subr.mxu0 0.0
        %8882 = vmatpush1.msra.mxu0 0.0
        %8883 = vmatprep.subr.mxu0 0.0
        %8884 = vmatpush1.msra.mxu0 0.0
        %8885 = vmatprep.subr.mxu0 0.0
        %8886 = vmatpush1.msra.mxu0 0.0
        %8887 = vmatprep.subr.mxu0 0.0
        %8888 = vmatpush1.msra.mxu0 0.0
        %8889 = vmatprep.subr.mxu0 0.0
        %8890 = vmatpush1.msra.mxu0 0.0
        %8891 = vmatprep.subr.mxu0 0.0
        %8892 = vmatpush1.msra.mxu0 0.0
        %8893 = vmatprep.subr.mxu0 0.0
        %8894 = vmatpush1.msra.mxu0 0.0
        %8895 = vmatprep.subr.mxu0 0.0
        %8896 = vmatpush1.msra.mxu0 0.0
        %8897 = vmatprep.subr.mxu0 0.0
        %8898 = vmatpush1.msra.mxu0 0.0
        %8899 = vmatprep.subr.mxu0 0.0
        %8900 = vmatpush1.msra.mxu0 0.0
        %8901 = vmatprep.subr.mxu0 0.0
        %8902 = vmatpush1.msra.mxu0 0.0
        %8903 = vmatprep.subr.mxu0 0.0
        %8904 = vmatpush1.msra.mxu0 0.0
        %8905 = vmatprep.subr.mxu0 0.0
        %8906 = vmatpush1.msra.mxu0 0.0
        %8907 = vmatprep.mubr.f32.mxu0 0.0
        %8908 = vmatmul.mubr.f32.gmra.mrb[0].mxu0 %v8838
        %v8909 = vpop.f32.mrb[0].mxu0
        %v8910 = vadd.f32 0.0, %v8909
        %v8911 = vpop.f32.mrb[0].mxu0
        %v8912 = vadd.f32 0.0, %v8911
        %8913 = vmatprep.mubr.f32.mxu0 0.0
        %8914 = vmatmul.mubr.f32.gmra.mrb[0].mxu0 %v8841
        %v8915 = vpop.f32.mrb[0].mxu0
        %v8916 = vadd.f32 0.0, %v8915
        %v8917 = vpop.f32.mrb[0].mxu0
        %v8918 = vadd.f32 0.0, %v8917
        %8919 = vdwg.mxu0
        %8920 = vmatprep.subr.mxu0 %v6084
        %8921 = vmatpush1.msra.mxu0 %v6083
        %8922 = vmatprep.subr.mxu0 %v6088
        %8923 = vmatpush1.msra.mxu0 %v6087
        %8924 = vmatprep.subr.mxu0 0.0
        %8925 = vmatpush1.msra.mxu0 0.0
        %8926 = vmatprep.subr.mxu0 0.0
        %8927 = vmatpush1.msra.mxu0 0.0
        %8928 = vmatprep.subr.mxu0 0.0
        %8929 = vmatpush1.msra.mxu0 0.0
        %8930 = vmatprep.subr.mxu0 0.0
        %8931 = vmatpush1.msra.mxu0 0.0
        %8932 = vmatprep.subr.mxu0 0.0
        %8933 = vmatpush1.msra.mxu0 0.0
        %8934 = vmatprep.subr.mxu0 0.0
        %8935 = vmatpush1.msra.mxu0 0.0
        %8936 = vmatprep.subr.mxu0 0.0
        %8937 = vmatpush1.msra.mxu0 0.0
        %8938 = vmatprep.subr.mxu0 0.0
        %8939 = vmatpush1.msra.mxu0 0.0
        %8940 = vmatprep.subr.mxu0 0.0
        %8941 = vmatpush1.msra.mxu0 0.0
        %8942 = vmatprep.subr.mxu0 0.0
        %8943 = vmatpush1.msra.mxu0 0.0
        %8944 = vmatprep.subr.mxu0 0.0
        %8945 = vmatpush1.msra.mxu0 0.0
        %8946 = vmatprep.subr.mxu0 0.0
        %8947 = vmatpush1.msra.mxu0 0.0
        %8948 = vmatprep.subr.mxu0 0.0
        %8949 = vmatpush1.msra.mxu0 0.0
        %8950 = vmatprep.subr.mxu0 0.0
        %8951 = vmatpush1.msra.mxu0 0.0
        %8952 = vmatprep.subr.mxu0 0.0
        %8953 = vmatpush1.msra.mxu0 0.0
        %8954 = vmatprep.subr.mxu0 0.0
        %8955 = vmatpush1.msra.mxu0 0.0
        %8956 = vmatprep.subr.mxu0 0.0
        %8957 = vmatpush1.msra.mxu0 0.0
        %8958 = vmatprep.subr.mxu0 0.0
        %8959 = vmatpush1.msra.mxu0 0.0
        %8960 = vmatprep.subr.mxu0 0.0
        %8961 = vmatpush1.msra.mxu0 0.0
        %8962 = vmatprep.subr.mxu0 0.0
        %8963 = vmatpush1.msra.mxu0 0.0
        %8964 = vmatprep.subr.mxu0 0.0
        %8965 = vmatpush1.msra.mxu0 0.0
        %8966 = vmatprep.subr.mxu0 0.0
        %8967 = vmatpush1.msra.mxu0 0.0
        %8968 = vmatprep.subr.mxu0 0.0
        %8969 = vmatpush1.msra.mxu0 0.0
        %8970 = vmatprep.subr.mxu0 0.0
        %8971 = vmatpush1.msra.mxu0 0.0
        %8972 = vmatprep.subr.mxu0 0.0
        %8973 = vmatpush1.msra.mxu0 0.0
        %8974 = vmatprep.subr.mxu0 0.0
        %8975 = vmatpush1.msra.mxu0 0.0
        %8976 = vmatprep.subr.mxu0 0.0
        %8977 = vmatpush1.msra.mxu0 0.0
        %8978 = vmatprep.subr.mxu0 0.0
        %8979 = vmatpush1.msra.mxu0 0.0
        %8980 = vmatprep.subr.mxu0 0.0
        %8981 = vmatpush1.msra.mxu0 0.0
        %8982 = vmatprep.subr.mxu0 0.0
        %8983 = vmatpush1.msra.mxu0 0.0
        %8984 = vmatprep.mubr.f32.mxu0 0.0
        %8985 = vmatmul.mubr.f32.gmra.mrb[0].mxu0 %v8838
        %v8986 = vpop.f32.mrb[0].mxu0
        %v8987 = vadd.f32 0.0, %v8986
        %v8988 = vpop.f32.mrb[0].mxu0
        %v8989 = vadd.f32 0.0, %v8988
        %8990 = vmatprep.mubr.f32.mxu0 0.0
        %8991 = vmatmul.mubr.f32.gmra.mrb[0].mxu0 %v8841
        %v8992 = vpop.f32.mrb[0].mxu0
        %v8993 = vadd.f32 0.0, %v8992
        %v8994 = vpop.f32.mrb[0].mxu0
        %v8995 = vadd.f32 0.0, %v8994
        %8996 = vdwg.mxu0
        %s8997 = scalar_lea.vmem [#allocation20], 8192
        %v8998 = vld [vmem:[%s8997] sm:$0xff]
        %v8999 = vld [vmem:[%s8997 + $0x8] sm:$0xff]
        %v9000 = vld [vmem:[%s8997 + $0x10] sm:$0xff]
        %v9001 = vld [vmem:[%s8997 + $0x18] sm:$0xff]
        %v9002 = vld [vmem:[%s8997 + $0x20] sm:$0xff]
        %v9003 = vld [vmem:[%s8997 + $0x28] sm:$0xff]
        %v9004 = vld [vmem:[%s8997 + $0x30] sm:$0xff]
        %v9005 = vld [vmem:[%s8997 + $0x38] sm:$0xff]
        %v9006 = vld [vmem:[%s8997 + $0x40] sm:$0xff]
        %v9007 = vld [vmem:[%s8997 + $0x48] sm:$0xff]
        %v9008 = vld [vmem:[%s8997 + $0x50] sm:$0xff]
        %v9009 = vld [vmem:[%s8997 + $0x58] sm:$0xff]
        %v9010 = vld [vmem:[%s8997 + $0x60] sm:$0xff]
        %v9011 = vld [vmem:[%s8997 + $0x68] sm:$0xff]
        %v9012 = vld [vmem:[%s8997 + $0x70] sm:$0xff]
        %v9013 = vld [vmem:[%s8997 + $0x78] sm:$0xff]
        %v9014 = vld [vmem:[%s8997 + $0x80] sm:$0xff]
        %v9015 = vld [vmem:[%s8997 + $0x88] sm:$0xff]
        %v9016 = vld [vmem:[%s8997 + $0x90] sm:$0xff]
        %v9017 = vld [vmem:[%s8997 + $0x98] sm:$0xff]
        %v9018 = vld [vmem:[%s8997 + $0xa0] sm:$0xff]
        %v9019 = vld [vmem:[%s8997 + $0xa8] sm:$0xff]
        %v9020 = vld [vmem:[%s8997 + $0xb0] sm:$0xff]
        %v9021 = vld [vmem:[%s8997 + $0xb8] sm:$0xff]
        %v9022 = vld [vmem:[%s8997 + $0xc0] sm:$0xff]
        %v9023 = vld [vmem:[%s8997 + $0xc8] sm:$0xff]
        %v9024 = vld [vmem:[%s8997 + $0xd0] sm:$0xff]
        %v9025 = vld [vmem:[%s8997 + $0xd8] sm:$0xff]
        %v9026 = vld [vmem:[%s8997 + $0xe0] sm:$0xff]
        %v9027 = vld [vmem:[%s8997 + $0xe8] sm:$0xff]
        %v9028 = vld [vmem:[%s8997 + $0xf0] sm:$0xff]
        %v9029 = vld [vmem:[%s8997 + $0xf8] sm:$0xff]
        %v9030 = vld [vmem:[%s8997 + $0x100] sm:$0xff]
        %v9031 = vld [vmem:[%s8997 + $0x108] sm:$0xff]
        %v9032 = vld [vmem:[%s8997 + $0x110] sm:$0xff]
        %v9033 = vld [vmem:[%s8997 + $0x118] sm:$0xff]
        %v9034 = vld [vmem:[%s8997 + $0x120] sm:$0xff]
        %v9035 = vld [vmem:[%s8997 + $0x128] sm:$0xff]
        %v9036 = vld [vmem:[%s8997 + $0x130] sm:$0xff]
        %v9037 = vld [vmem:[%s8997 + $0x138] sm:$0xff]
        %v9038 = vld [vmem:[%s8997 + $0x140] sm:$0xff]
        %v9039 = vld [vmem:[%s8997 + $0x148] sm:$0xff]
        %v9040 = vld [vmem:[%s8997 + $0x150] sm:$0xff]
        %v9041 = vld [vmem:[%s8997 + $0x158] sm:$0xff]
        %v9042 = vld [vmem:[%s8997 + $0x160] sm:$0xff]
        %v9043 = vld [vmem:[%s8997 + $0x168] sm:$0xff]
        %v9044 = vld [vmem:[%s8997 + $0x170] sm:$0xff]
        %v9045 = vld [vmem:[%s8997 + $0x178] sm:$0xff]
        %v9046 = vld [vmem:[%s8997 + $0x180] sm:$0xff]
        %v9047 = vld [vmem:[%s8997 + $0x188] sm:$0xff]
        %v9048 = vld [vmem:[%s8997 + $0x190] sm:$0xff]
        %v9049 = vld [vmem:[%s8997 + $0x198] sm:$0xff]
        %v9050 = vld [vmem:[%s8997 + $0x1a0] sm:$0xff]
        %v9051 = vld [vmem:[%s8997 + $0x1a8] sm:$0xff]
        %v9052 = vld [vmem:[%s8997 + $0x1b0] sm:$0xff]
        %v9053 = vld [vmem:[%s8997 + $0x1b8] sm:$0xff]
        %v9054 = vld [vmem:[%s8997 + $0x1c0] sm:$0xff]
        %v9055 = vld [vmem:[%s8997 + $0x1c8] sm:$0xff]
        %v9056 = vld [vmem:[%s8997 + $0x1d0] sm:$0xff]
        %v9057 = vld [vmem:[%s8997 + $0x1d8] sm:$0xff]
        %v9058 = vld [vmem:[%s8997 + $0x1e0] sm:$0xff]
        %v9059 = vld [vmem:[%s8997 + $0x1e8] sm:$0xff]
        %v9060 = vld [vmem:[%s8997 + $0x1f0] sm:$0xff]
        %v9061 = vld [vmem:[%s8997 + $0x1f8] sm:$0xff]
        %v9062 = vld [vmem:[%s8997 + $0x200] sm:$0xff]
        %v9063 = vld [vmem:[%s8997 + $0x208] sm:$0xff]
        %v9064 = vld [vmem:[%s8997 + $0x210] sm:$0xff]
        %v9065 = vld [vmem:[%s8997 + $0x218] sm:$0xff]
        %v9066 = vld [vmem:[%s8997 + $0x220] sm:$0xff]
        %v9067 = vld [vmem:[%s8997 + $0x228] sm:$0xff]
        %v9068 = vld [vmem:[%s8997 + $0x230] sm:$0xff]
        %v9069 = vld [vmem:[%s8997 + $0x238] sm:$0xff]
        %v9070 = vld [vmem:[%s8997 + $0x240] sm:$0xff]
        %v9071 = vld [vmem:[%s8997 + $0x248] sm:$0xff]
        %v9072 = vld [vmem:[%s8997 + $0x250] sm:$0xff]
        %v9073 = vld [vmem:[%s8997 + $0x258] sm:$0xff]
        %v9074 = vld [vmem:[%s8997 + $0x260] sm:$0xff]
        %v9075 = vld [vmem:[%s8997 + $0x268] sm:$0xff]
        %v9076 = vld [vmem:[%s8997 + $0x270] sm:$0xff]
        %v9077 = vld [vmem:[%s8997 + $0x278] sm:$0xff]
        %v9078 = vld [vmem:[%s8997 + $0x280] sm:$0xff]
        %v9079 = vld [vmem:[%s8997 + $0x288] sm:$0xff]
        %v9080 = vld [vmem:[%s8997 + $0x290] sm:$0xff]
        %v9081 = vld [vmem:[%s8997 + $0x298] sm:$0xff]
        %v9082 = vld [vmem:[%s8997 + $0x2a0] sm:$0xff]
        %v9083 = vld [vmem:[%s8997 + $0x2a8] sm:$0xff]
        %v9084 = vld [vmem:[%s8997 + $0x2b0] sm:$0xff]
        %v9085 = vld [vmem:[%s8997 + $0x2b8] sm:$0xff]
        %v9086 = vld [vmem:[%s8997 + $0x2c0] sm:$0xff]
        %v9087 = vld [vmem:[%s8997 + $0x2c8] sm:$0xff]
        %v9088 = vld [vmem:[%s8997 + $0x2d0] sm:$0xff]
        %v9089 = vld [vmem:[%s8997 + $0x2d8] sm:$0xff]
        %v9090 = vld [vmem:[%s8997 + $0x2e0] sm:$0xff]
        %v9091 = vld [vmem:[%s8997 + $0x2e8] sm:$0xff]
        %v9092 = vld [vmem:[%s8997 + $0x2f0] sm:$0xff]
        %v9093 = vld [vmem:[%s8997 + $0x2f8] sm:$0xff]
        %v9094 = vld [vmem:[%s8997 + $0x300] sm:$0xff]
        %v9095 = vld [vmem:[%s8997 + $0x308] sm:$0xff]
        %v9096 = vld [vmem:[%s8997 + $0x310] sm:$0xff]
        %v9097 = vld [vmem:[%s8997 + $0x318] sm:$0xff]
        %v9098 = vld [vmem:[%s8997 + $0x320] sm:$0xff]
        %v9099 = vld [vmem:[%s8997 + $0x328] sm:$0xff]
        %v9100 = vld [vmem:[%s8997 + $0x330] sm:$0xff]
        %v9101 = vld [vmem:[%s8997 + $0x338] sm:$0xff]
        %v9102 = vld [vmem:[%s8997 + $0x340] sm:$0xff]
        %v9103 = vld [vmem:[%s8997 + $0x348] sm:$0xff]
        %v9104 = vld [vmem:[%s8997 + $0x350] sm:$0xff]
        %v9105 = vld [vmem:[%s8997 + $0x358] sm:$0xff]
        %v9106 = vld [vmem:[%s8997 + $0x360] sm:$0xff]
        %v9107 = vld [vmem:[%s8997 + $0x368] sm:$0xff]
        %v9108 = vld [vmem:[%s8997 + $0x370] sm:$0xff]
        %v9109 = vld [vmem:[%s8997 + $0x378] sm:$0xff]
        %v9110 = vld [vmem:[%s8997 + $0x380] sm:$0xff]
        %v9111 = vld [vmem:[%s8997 + $0x388] sm:$0xff]
        %v9112 = vld [vmem:[%s8997 + $0x390] sm:$0xff]
        %v9113 = vld [vmem:[%s8997 + $0x398] sm:$0xff]
        %v9114 = vld [vmem:[%s8997 + $0x3a0] sm:$0xff]
        %v9115 = vld [vmem:[%s8997 + $0x3a8] sm:$0xff]
        %v9116 = vld [vmem:[%s8997 + $0x3b0] sm:$0xff]
        %v9117 = vld [vmem:[%s8997 + $0x3b8] sm:$0xff]
        %v9118 = vld [vmem:[%s8997 + $0x3c0] sm:$0xff]
        %v9119 = vld [vmem:[%s8997 + $0x3c8] sm:$0xff]
        %v9120 = vld [vmem:[%s8997 + $0x3d0] sm:$0xff]
        %v9121 = vld [vmem:[%s8997 + $0x3d8] sm:$0xff]
        %v9122 = vld [vmem:[%s8997 + $0x3e0] sm:$0xff]
        %v9123 = vld [vmem:[%s8997 + $0x3e8] sm:$0xff]
        %v9124 = vld [vmem:[%s8997 + $0x3f0] sm:$0xff]
        %v9125 = vld [vmem:[%s8997 + $0x3f8] sm:$0xff]
        %v9126 = vld [vmem:[%s8997 + $0x400] sm:$0xff]
        %v9127 = vld [vmem:[%s8997 + $0x408] sm:$0xff]
        %v9128 = vld [vmem:[%s8997 + $0x410] sm:$0xff]
        %v9129 = vld [vmem:[%s8997 + $0x418] sm:$0xff]
        %v9130 = vld [vmem:[%s8997 + $0x420] sm:$0xff]
        %v9131 = vld [vmem:[%s8997 + $0x428] sm:$0xff]
        %v9132 = vld [vmem:[%s8997 + $0x430] sm:$0xff]
        %v9133 = vld [vmem:[%s8997 + $0x438] sm:$0xff]
        %v9134 = vld [vmem:[%s8997 + $0x440] sm:$0xff]
        %v9135 = vld [vmem:[%s8997 + $0x448] sm:$0xff]
        %v9136 = vld [vmem:[%s8997 + $0x450] sm:$0xff]
        %v9137 = vld [vmem:[%s8997 + $0x458] sm:$0xff]
        %v9138 = vld [vmem:[%s8997 + $0x460] sm:$0xff]
        %v9139 = vld [vmem:[%s8997 + $0x468] sm:$0xff]
        %v9140 = vld [vmem:[%s8997 + $0x470] sm:$0xff]
        %v9141 = vld [vmem:[%s8997 + $0x478] sm:$0xff]
        %v9142 = vld [vmem:[%s8997 + $0x480] sm:$0xff]
        %v9143 = vld [vmem:[%s8997 + $0x488] sm:$0xff]
        %v9144 = vld [vmem:[%s8997 + $0x490] sm:$0xff]
        %v9145 = vld [vmem:[%s8997 + $0x498] sm:$0xff]
        %v9146 = vld [vmem:[%s8997 + $0x4a0] sm:$0xff]
        %v9147 = vld [vmem:[%s8997 + $0x4a8] sm:$0xff]
        %v9148 = vld [vmem:[%s8997 + $0x4b0] sm:$0xff]
        %v9149 = vld [vmem:[%s8997 + $0x4b8] sm:$0xff]
        %v9150 = vld [vmem:[%s8997 + $0x4c0] sm:$0xff]
        %v9151 = vld [vmem:[%s8997 + $0x4c8] sm:$0xff]
        %v9152 = vld [vmem:[%s8997 + $0x4d0] sm:$0xff]
        %v9153 = vld [vmem:[%s8997 + $0x4d8] sm:$0xff]
        %v9154 = vld [vmem:[%s8997 + $0x4e0] sm:$0xff]
        %v9155 = vld [vmem:[%s8997 + $0x4e8] sm:$0xff]
        %v9156 = vld [vmem:[%s8997 + $0x4f0] sm:$0xff]
        %v9157 = vld [vmem:[%s8997 + $0x4f8] sm:$0xff]
        %v9158 = vld [vmem:[%s8997 + $0x500] sm:$0xff]
        %v9159 = vld [vmem:[%s8997 + $0x508] sm:$0xff]
        %v9160 = vld [vmem:[%s8997 + $0x510] sm:$0xff]
        %v9161 = vld [vmem:[%s8997 + $0x518] sm:$0xff]
        %v9162 = vld [vmem:[%s8997 + $0x520] sm:$0xff]
        %v9163 = vld [vmem:[%s8997 + $0x528] sm:$0xff]
        %v9164 = vld [vmem:[%s8997 + $0x530] sm:$0xff]
        %v9165 = vld [vmem:[%s8997 + $0x538] sm:$0xff]
        %v9166 = vld [vmem:[%s8997 + $0x540] sm:$0xff]
        %v9167 = vld [vmem:[%s8997 + $0x548] sm:$0xff]
        %v9168 = vld [vmem:[%s8997 + $0x550] sm:$0xff]
        %v9169 = vld [vmem:[%s8997 + $0x558] sm:$0xff]
        %v9170 = vld [vmem:[%s8997 + $0x560] sm:$0xff]
        %v9171 = vld [vmem:[%s8997 + $0x568] sm:$0xff]
        %v9172 = vld [vmem:[%s8997 + $0x570] sm:$0xff]
        %v9173 = vld [vmem:[%s8997 + $0x578] sm:$0xff]
        %v9174 = vld [vmem:[%s8997 + $0x580] sm:$0xff]
        %v9175 = vld [vmem:[%s8997 + $0x588] sm:$0xff]
        %v9176 = vld [vmem:[%s8997 + $0x590] sm:$0xff]
        %v9177 = vld [vmem:[%s8997 + $0x598] sm:$0xff]
        %v9178 = vld [vmem:[%s8997 + $0x5a0] sm:$0xff]
        %v9179 = vld [vmem:[%s8997 + $0x5a8] sm:$0xff]
        %v9180 = vld [vmem:[%s8997 + $0x5b0] sm:$0xff]
        %v9181 = vld [vmem:[%s8997 + $0x5b8] sm:$0xff]
        %v9182 = vld [vmem:[%s8997 + $0x5c0] sm:$0xff]
        %v9183 = vld [vmem:[%s8997 + $0x5c8] sm:$0xff]
        %v9184 = vld [vmem:[%s8997 + $0x5d0] sm:$0xff]
        %v9185 = vld [vmem:[%s8997 + $0x5d8] sm:$0xff]
        %v9186 = vld [vmem:[%s8997 + $0x5e0] sm:$0xff]
        %v9187 = vld [vmem:[%s8997 + $0x5e8] sm:$0xff]
        %v9188 = vld [vmem:[%s8997 + $0x5f0] sm:$0xff]
        %v9189 = vld [vmem:[%s8997 + $0x5f8] sm:$0xff]
        %v9190 = vld [vmem:[%s8997 + $0x600] sm:$0xff]
        %v9191 = vld [vmem:[%s8997 + $0x608] sm:$0xff]
        %v9192 = vld [vmem:[%s8997 + $0x610] sm:$0xff]
        %v9193 = vld [vmem:[%s8997 + $0x618] sm:$0xff]
        %v9194 = vld [vmem:[%s8997 + $0x620] sm:$0xff]
        %v9195 = vld [vmem:[%s8997 + $0x628] sm:$0xff]
        %v9196 = vld [vmem:[%s8997 + $0x630] sm:$0xff]
        %v9197 = vld [vmem:[%s8997 + $0x638] sm:$0xff]
        %v9198 = vld [vmem:[%s8997 + $0x640] sm:$0xff]
        %v9199 = vld [vmem:[%s8997 + $0x648] sm:$0xff]
        %v9200 = vld [vmem:[%s8997 + $0x650] sm:$0xff]
        %v9201 = vld [vmem:[%s8997 + $0x658] sm:$0xff]
        %v9202 = vld [vmem:[%s8997 + $0x660] sm:$0xff]
        %v9203 = vld [vmem:[%s8997 + $0x668] sm:$0xff]
        %v9204 = vld [vmem:[%s8997 + $0x670] sm:$0xff]
        %v9205 = vld [vmem:[%s8997 + $0x678] sm:$0xff]
        %v9206 = vld [vmem:[%s8997 + $0x680] sm:$0xff]
        %v9207 = vld [vmem:[%s8997 + $0x688] sm:$0xff]
        %v9208 = vld [vmem:[%s8997 + $0x690] sm:$0xff]
        %v9209 = vld [vmem:[%s8997 + $0x698] sm:$0xff]
        %v9210 = vld [vmem:[%s8997 + $0x6a0] sm:$0xff]
        %v9211 = vld [vmem:[%s8997 + $0x6a8] sm:$0xff]
        %v9212 = vld [vmem:[%s8997 + $0x6b0] sm:$0xff]
        %v9213 = vld [vmem:[%s8997 + $0x6b8] sm:$0xff]
        %v9214 = vld [vmem:[%s8997 + $0x6c0] sm:$0xff]
        %v9215 = vld [vmem:[%s8997 + $0x6c8] sm:$0xff]
        %v9216 = vld [vmem:[%s8997 + $0x6d0] sm:$0xff]
        %v9217 = vld [vmem:[%s8997 + $0x6d8] sm:$0xff]
        %v9218 = vld [vmem:[%s8997 + $0x6e0] sm:$0xff]
        %v9219 = vld [vmem:[%s8997 + $0x6e8] sm:$0xff]
        %v9220 = vld [vmem:[%s8997 + $0x6f0] sm:$0xff]
        %v9221 = vld [vmem:[%s8997 + $0x6f8] sm:$0xff]
        %v9222 = vld [vmem:[%s8997 + $0x700] sm:$0xff]
        %v9223 = vld [vmem:[%s8997 + $0x708] sm:$0xff]
        %v9224 = vld [vmem:[%s8997 + $0x710] sm:$0xff]
        %v9225 = vld [vmem:[%s8997 + $0x718] sm:$0xff]
        %v9226 = vld [vmem:[%s8997 + $0x720] sm:$0xff]
        %v9227 = vld [vmem:[%s8997 + $0x728] sm:$0xff]
        %v9228 = vld [vmem:[%s8997 + $0x730] sm:$0xff]
        %v9229 = vld [vmem:[%s8997 + $0x738] sm:$0xff]
        %v9230 = vld [vmem:[%s8997 + $0x740] sm:$0xff]
        %v9231 = vld [vmem:[%s8997 + $0x748] sm:$0xff]
        %v9232 = vld [vmem:[%s8997 + $0x750] sm:$0xff]
        %v9233 = vld [vmem:[%s8997 + $0x758] sm:$0xff]
        %v9234 = vld [vmem:[%s8997 + $0x760] sm:$0xff]
        %v9235 = vld [vmem:[%s8997 + $0x768] sm:$0xff]
        %v9236 = vld [vmem:[%s8997 + $0x770] sm:$0xff]
        %v9237 = vld [vmem:[%s8997 + $0x778] sm:$0xff]
        %v9238 = vld [vmem:[%s8997 + $0x780] sm:$0xff]
        %v9239 = vld [vmem:[%s8997 + $0x788] sm:$0xff]
        %v9240 = vld [vmem:[%s8997 + $0x790] sm:$0xff]
        %v9241 = vld [vmem:[%s8997 + $0x798] sm:$0xff]
        %v9242 = vld [vmem:[%s8997 + $0x7a0] sm:$0xff]
        %v9243 = vld [vmem:[%s8997 + $0x7a8] sm:$0xff]
        %v9244 = vld [vmem:[%s8997 + $0x7b0] sm:$0xff]
        %v9245 = vld [vmem:[%s8997 + $0x7b8] sm:$0xff]
        %v9246 = vld [vmem:[%s8997 + $0x7c0] sm:$0xff]
        %v9247 = vld [vmem:[%s8997 + $0x7c8] sm:$0xff]
        %v9248 = vld [vmem:[%s8997 + $0x7d0] sm:$0xff]
        %v9249 = vld [vmem:[%s8997 + $0x7d8] sm:$0xff]
        %v9250 = vld [vmem:[%s8997 + $0x7e0] sm:$0xff]
        %v9251 = vld [vmem:[%s8997 + $0x7e8] sm:$0xff]
        %v9252 = vld [vmem:[%s8997 + $0x7f0] sm:$0xff]
        %v9253 = vld [vmem:[%s8997 + $0x7f8] sm:$0xff]
        %9254 = vmatprep.subr.mxu0 %v8999
        %9255 = vmatpush1.msra.mxu0 %v8998
        %9256 = vmatprep.subr.mxu0 %v9003
        %9257 = vmatpush1.msra.mxu0 %v9002
        %9258 = vmatprep.subr.mxu0 %v9007
        %9259 = vmatpush1.msra.mxu0 %v9006
        %9260 = vmatprep.subr.mxu0 %v9011
        %9261 = vmatpush1.msra.mxu0 %v9010
        %9262 = vmatprep.subr.mxu0 %v9015
        %9263 = vmatpush1.msra.mxu0 %v9014
        %9264 = vmatprep.subr.mxu0 %v9019
        %9265 = vmatpush1.msra.mxu0 %v9018
        %9266 = vmatprep.subr.mxu0 %v9023
        %9267 = vmatpush1.msra.mxu0 %v9022
        %9268 = vmatprep.subr.mxu0 %v9027
        %9269 = vmatpush1.msra.mxu0 %v9026
        %9270 = vmatprep.subr.mxu0 %v9031
        %9271 = vmatpush1.msra.mxu0 %v9030
        %9272 = vmatprep.subr.mxu0 %v9035
        %9273 = vmatpush1.msra.mxu0 %v9034
        %9274 = vmatprep.subr.mxu0 %v9039
        %9275 = vmatpush1.msra.mxu0 %v9038
        %9276 = vmatprep.subr.mxu0 %v9043
        %9277 = vmatpush1.msra.mxu0 %v9042
        %9278 = vmatprep.subr.mxu0 %v9047
        %9279 = vmatpush1.msra.mxu0 %v9046
        %9280 = vmatprep.subr.mxu0 %v9051
        %9281 = vmatpush1.msra.mxu0 %v9050
        %9282 = vmatprep.subr.mxu0 %v9055
        %9283 = vmatpush1.msra.mxu0 %v9054
        %9284 = vmatprep.subr.mxu0 %v9059
        %9285 = vmatpush1.msra.mxu0 %v9058
        %9286 = vmatprep.subr.mxu0 %v9063
        %9287 = vmatpush1.msra.mxu0 %v9062
        %9288 = vmatprep.subr.mxu0 %v9067
        %9289 = vmatpush1.msra.mxu0 %v9066
        %9290 = vmatprep.subr.mxu0 %v9071
        %9291 = vmatpush1.msra.mxu0 %v9070
        %9292 = vmatprep.subr.mxu0 %v9075
        %9293 = vmatpush1.msra.mxu0 %v9074
        %9294 = vmatprep.subr.mxu0 %v9079
        %9295 = vmatpush1.msra.mxu0 %v9078
        %9296 = vmatprep.subr.mxu0 %v9083
        %9297 = vmatpush1.msra.mxu0 %v9082
        %9298 = vmatprep.subr.mxu0 %v9087
        %9299 = vmatpush1.msra.mxu0 %v9086
        %9300 = vmatprep.subr.mxu0 %v9091
        %9301 = vmatpush1.msra.mxu0 %v9090
        %9302 = vmatprep.subr.mxu0 %v9095
        %9303 = vmatpush1.msra.mxu0 %v9094
        %9304 = vmatprep.subr.mxu0 %v9099
        %9305 = vmatpush1.msra.mxu0 %v9098
        %9306 = vmatprep.subr.mxu0 %v9103
        %9307 = vmatpush1.msra.mxu0 %v9102
        %9308 = vmatprep.subr.mxu0 %v9107
        %9309 = vmatpush1.msra.mxu0 %v9106
        %9310 = vmatprep.subr.mxu0 %v9111
        %9311 = vmatpush1.msra.mxu0 %v9110
        %9312 = vmatprep.subr.mxu0 %v9115
        %9313 = vmatpush1.msra.mxu0 %v9114
        %9314 = vmatprep.subr.mxu0 %v9119
        %9315 = vmatpush1.msra.mxu0 %v9118
        %9316 = vmatprep.subr.mxu0 %v9123
        %9317 = vmatpush1.msra.mxu0 %v9122
        %9318 = vmatprep.mubr.f32.mxu0 %v8912
        %9319 = vmatmul.mubr.f32.gmra.mrb[0].mxu0 %v8910
        %v9320 = vpop.f32.mrb[0].mxu0
        %v9321 = vadd.f32 0.0, %v9320
        %v9322 = vpop.f32.mrb[0].mxu0
        %v9323 = vadd.f32 0.0, %v9322
        %9324 = vmatprep.mubr.f32.mxu0 %v8918
        %9325 = vmatmul.mubr.f32.gmra.mrb[0].mxu0 %v8916
        %v9326 = vpop.f32.mrb[0].mxu0
        %v9327 = vadd.f32 0.0, %v9326
        %v9328 = vpop.f32.mrb[0].mxu0
        %v9329 = vadd.f32 0.0, %v9328
        %9330 = vdwg.mxu0
        %9331 = vmatprep.subr.mxu0 %v9127
        %9332 = vmatpush1.msra.mxu0 %v9126
        %9333 = vmatprep.subr.mxu0 %v9131
        %9334 = vmatpush1.msra.mxu0 %v9130
        %9335 = vmatprep.subr.mxu0 %v9135
        %9336 = vmatpush1.msra.mxu0 %v9134
        %9337 = vmatprep.subr.mxu0 %v9139
        %9338 = vmatpush1.msra.mxu0 %v9138
        %9339 = vmatprep.subr.mxu0 %v9143
        %9340 = vmatpush1.msra.mxu0 %v9142
        %9341 = vmatprep.subr.mxu0 %v9147
        %9342 = vmatpush1.msra.mxu0 %v9146
        %9343 = vmatprep.subr.mxu0 %v9151
        %9344 = vmatpush1.msra.mxu0 %v9150
        %9345 = vmatprep.subr.mxu0 %v9155
        %9346 = vmatpush1.msra.mxu0 %v9154
        %9347 = vmatprep.subr.mxu0 %v9159
        %9348 = vmatpush1.msra.mxu0 %v9158
        %9349 = vmatprep.subr.mxu0 %v9163
        %9350 = vmatpush1.msra.mxu0 %v9162
        %9351 = vmatprep.subr.mxu0 %v9167
        %9352 = vmatpush1.msra.mxu0 %v9166
        %9353 = vmatprep.subr.mxu0 %v9171
        %9354 = vmatpush1.msra.mxu0 %v9170
        %9355 = vmatprep.subr.mxu0 %v9175
        %9356 = vmatpush1.msra.mxu0 %v9174
        %9357 = vmatprep.subr.mxu0 %v9179
        %9358 = vmatpush1.msra.mxu0 %v9178
        %9359 = vmatprep.subr.mxu0 %v9183
        %9360 = vmatpush1.msra.mxu0 %v9182
        %9361 = vmatprep.subr.mxu0 %v9187
        %9362 = vmatpush1.msra.mxu0 %v9186
        %9363 = vmatprep.subr.mxu0 %v9191
        %9364 = vmatpush1.msra.mxu0 %v9190
        %9365 = vmatprep.subr.mxu0 %v9195
        %9366 = vmatpush1.msra.mxu0 %v9194
        %9367 = vmatprep.subr.mxu0 %v9199
        %9368 = vmatpush1.msra.mxu0 %v9198
        %9369 = vmatprep.subr.mxu0 %v9203
        %9370 = vmatpush1.msra.mxu0 %v9202
        %9371 = vmatprep.subr.mxu0 %v9207
        %9372 = vmatpush1.msra.mxu0 %v9206
        %9373 = vmatprep.subr.mxu0 %v9211
        %9374 = vmatpush1.msra.mxu0 %v9210
        %9375 = vmatprep.subr.mxu0 %v9215
        %9376 = vmatpush1.msra.mxu0 %v9214
        %9377 = vmatprep.subr.mxu0 %v9219
        %9378 = vmatpush1.msra.mxu0 %v9218
        %9379 = vmatprep.subr.mxu0 %v9223
        %9380 = vmatpush1.msra.mxu0 %v9222
        %9381 = vmatprep.subr.mxu0 %v9227
        %9382 = vmatpush1.msra.mxu0 %v9226
        %9383 = vmatprep.subr.mxu0 %v9231
        %9384 = vmatpush1.msra.mxu0 %v9230
        %9385 = vmatprep.subr.mxu0 %v9235
        %9386 = vmatpush1.msra.mxu0 %v9234
        %9387 = vmatprep.subr.mxu0 %v9239
        %9388 = vmatpush1.msra.mxu0 %v9238
        %9389 = vmatprep.subr.mxu0 %v9243
        %9390 = vmatpush1.msra.mxu0 %v9242
        %9391 = vmatprep.subr.mxu0 %v9247
        %9392 = vmatpush1.msra.mxu0 %v9246
        %9393 = vmatprep.subr.mxu0 %v9251
        %9394 = vmatpush1.msra.mxu0 %v9250
        %9395 = vmatprep.mubr.f32.mxu0 %v8989
        %9396 = vmatmul.mubr.f32.gmra.mrb[0].mxu0 %v8987
        %v9397 = vpop.f32.mrb[0].mxu0
        %v9398 = vadd.f32 %v9321, %v9397
        %v9399 = vpop.f32.mrb[0].mxu0
        %v9400 = vadd.f32 %v9323, %v9399
        %9401 = vmatprep.mubr.f32.mxu0 %v8995
        %9402 = vmatmul.mubr.f32.gmra.mrb[0].mxu0 %v8993
        %v9403 = vpop.f32.mrb[0].mxu0
        %v9404 = vadd.f32 %v9327, %v9403
        %v9405 = vpop.f32.mrb[0].mxu0
        %v9406 = vadd.f32 %v9329, %v9405
        %9407 = vdwg.mxu0
        %9408 = vmatprep.subr.mxu0 %v9001
        %9409 = vmatpush1.msra.mxu0 %v9000
        %9410 = vmatprep.subr.mxu0 %v9005
        %9411 = vmatpush1.msra.mxu0 %v9004
        %9412 = vmatprep.subr.mxu0 %v9009
        %9413 = vmatpush1.msra.mxu0 %v9008
        %9414 = vmatprep.subr.mxu0 %v9013
        %9415 = vmatpush1.msra.mxu0 %v9012
        %9416 = vmatprep.subr.mxu0 %v9017
        %9417 = vmatpush1.msra.mxu0 %v9016
        %9418 = vmatprep.subr.mxu0 %v9021
        %9419 = vmatpush1.msra.mxu0 %v9020
        %9420 = vmatprep.subr.mxu0 %v9025
        %9421 = vmatpush1.msra.mxu0 %v9024
        %9422 = vmatprep.subr.mxu0 %v9029
        %9423 = vmatpush1.msra.mxu0 %v9028
        %9424 = vmatprep.subr.mxu0 %v9033
        %9425 = vmatpush1.msra.mxu0 %v9032
        %9426 = vmatprep.subr.mxu0 %v9037
        %9427 = vmatpush1.msra.mxu0 %v9036
        %9428 = vmatprep.subr.mxu0 %v9041
        %9429 = vmatpush1.msra.mxu0 %v9040
        %9430 = vmatprep.subr.mxu0 %v9045
        %9431 = vmatpush1.msra.mxu0 %v9044
        %9432 = vmatprep.subr.mxu0 %v9049
        %9433 = vmatpush1.msra.mxu0 %v9048
        %9434 = vmatprep.subr.mxu0 %v9053
        %9435 = vmatpush1.msra.mxu0 %v9052
        %9436 = vmatprep.subr.mxu0 %v9057
        %9437 = vmatpush1.msra.mxu0 %v9056
        %9438 = vmatprep.subr.mxu0 %v9061
        %9439 = vmatpush1.msra.mxu0 %v9060
        %9440 = vmatprep.subr.mxu0 %v9065
        %9441 = vmatpush1.msra.mxu0 %v9064
        %9442 = vmatprep.subr.mxu0 %v9069
        %9443 = vmatpush1.msra.mxu0 %v9068
        %9444 = vmatprep.subr.mxu0 %v9073
        %9445 = vmatpush1.msra.mxu0 %v9072
        %9446 = vmatprep.subr.mxu0 %v9077
        %9447 = vmatpush1.msra.mxu0 %v9076
        %9448 = vmatprep.subr.mxu0 %v9081
        %9449 = vmatpush1.msra.mxu0 %v9080
        %9450 = vmatprep.subr.mxu0 %v9085
        %9451 = vmatpush1.msra.mxu0 %v9084
        %9452 = vmatprep.subr.mxu0 %v9089
        %9453 = vmatpush1.msra.mxu0 %v9088
        %9454 = vmatprep.subr.mxu0 %v9093
        %9455 = vmatpush1.msra.mxu0 %v9092
        %9456 = vmatprep.subr.mxu0 %v9097
        %9457 = vmatpush1.msra.mxu0 %v9096
        %9458 = vmatprep.subr.mxu0 %v9101
        %9459 = vmatpush1.msra.mxu0 %v9100
        %9460 = vmatprep.subr.mxu0 %v9105
        %9461 = vmatpush1.msra.mxu0 %v9104
        %9462 = vmatprep.subr.mxu0 %v9109
        %9463 = vmatpush1.msra.mxu0 %v9108
        %9464 = vmatprep.subr.mxu0 %v9113
        %9465 = vmatpush1.msra.mxu0 %v9112
        %9466 = vmatprep.subr.mxu0 %v9117
        %9467 = vmatpush1.msra.mxu0 %v9116
        %9468 = vmatprep.subr.mxu0 %v9121
        %9469 = vmatpush1.msra.mxu0 %v9120
        %9470 = vmatprep.subr.mxu0 %v9125
        %9471 = vmatpush1.msra.mxu0 %v9124
        %9472 = vmatprep.mubr.f32.mxu0 %v8912
        %9473 = vmatmul.mubr.f32.gmra.mrb[0].mxu0 %v8910
        %v9474 = vpop.f32.mrb[0].mxu0
        %v9475 = vadd.f32 0.0, %v9474
        %v9476 = vpop.f32.mrb[0].mxu0
        %v9477 = vadd.f32 0.0, %v9476
        %9478 = vmatprep.mubr.f32.mxu0 %v8918
        %9479 = vmatmul.mubr.f32.gmra.mrb[0].mxu0 %v8916
        %v9480 = vpop.f32.mrb[0].mxu0
        %v9481 = vadd.f32 0.0, %v9480
        %v9482 = vpop.f32.mrb[0].mxu0
        %v9483 = vadd.f32 0.0, %v9482
        %9484 = vdwg.mxu0
        %9485 = vmatprep.subr.mxu0 %v9129
        %9486 = vmatpush1.msra.mxu0 %v9128
        %9487 = vmatprep.subr.mxu0 %v9133
        %9488 = vmatpush1.msra.mxu0 %v9132
        %9489 = vmatprep.subr.mxu0 %v9137
        %9490 = vmatpush1.msra.mxu0 %v9136
        %9491 = vmatprep.subr.mxu0 %v9141
        %9492 = vmatpush1.msra.mxu0 %v9140
        %9493 = vmatprep.subr.mxu0 %v9145
        %9494 = vmatpush1.msra.mxu0 %v9144
        %9495 = vmatprep.subr.mxu0 %v9149
        %9496 = vmatpush1.msra.mxu0 %v9148
        %9497 = vmatprep.subr.mxu0 %v9153
        %9498 = vmatpush1.msra.mxu0 %v9152
        %9499 = vmatprep.subr.mxu0 %v9157
        %9500 = vmatpush1.msra.mxu0 %v9156
        %9501 = vmatprep.subr.mxu0 %v9161
        %9502 = vmatpush1.msra.mxu0 %v9160
        %9503 = vmatprep.subr.mxu0 %v9165
        %9504 = vmatpush1.msra.mxu0 %v9164
        %9505 = vmatprep.subr.mxu0 %v9169
        %9506 = vmatpush1.msra.mxu0 %v9168
        %9507 = vmatprep.subr.mxu0 %v9173
        %9508 = vmatpush1.msra.mxu0 %v9172
        %9509 = vmatprep.subr.mxu0 %v9177
        %9510 = vmatpush1.msra.mxu0 %v9176
        %9511 = vmatprep.subr.mxu0 %v9181
        %9512 = vmatpush1.msra.mxu0 %v9180
        %9513 = vmatprep.subr.mxu0 %v9185
        %9514 = vmatpush1.msra.mxu0 %v9184
        %9515 = vmatprep.subr.mxu0 %v9189
        %9516 = vmatpush1.msra.mxu0 %v9188
        %9517 = vmatprep.subr.mxu0 %v9193
        %9518 = vmatpush1.msra.mxu0 %v9192
        %9519 = vmatprep.subr.mxu0 %v9197
        %9520 = vmatpush1.msra.mxu0 %v9196
        %9521 = vmatprep.subr.mxu0 %v9201
        %9522 = vmatpush1.msra.mxu0 %v9200
        %9523 = vmatprep.subr.mxu0 %v9205
        %9524 = vmatpush1.msra.mxu0 %v9204
        %9525 = vmatprep.subr.mxu0 %v9209
        %9526 = vmatpush1.msra.mxu0 %v9208
        %9527 = vmatprep.subr.mxu0 %v9213
        %9528 = vmatpush1.msra.mxu0 %v9212
        %9529 = vmatprep.subr.mxu0 %v9217
        %9530 = vmatpush1.msra.mxu0 %v9216
        %9531 = vmatprep.subr.mxu0 %v9221
        %9532 = vmatpush1.msra.mxu0 %v9220
        %9533 = vmatprep.subr.mxu0 %v9225
        %9534 = vmatpush1.msra.mxu0 %v9224
        %9535 = vmatprep.subr.mxu0 %v9229
        %9536 = vmatpush1.msra.mxu0 %v9228
        %9537 = vmatprep.subr.mxu0 %v9233
        %9538 = vmatpush1.msra.mxu0 %v9232
        %9539 = vmatprep.subr.mxu0 %v9237
        %9540 = vmatpush1.msra.mxu0 %v9236
        %9541 = vmatprep.subr.mxu0 %v9241
        %9542 = vmatpush1.msra.mxu0 %v9240
        %9543 = vmatprep.subr.mxu0 %v9245
        %9544 = vmatpush1.msra.mxu0 %v9244
        %9545 = vmatprep.subr.mxu0 %v9249
        %9546 = vmatpush1.msra.mxu0 %v9248
        %9547 = vmatprep.subr.mxu0 %v9253
        %9548 = vmatpush1.msra.mxu0 %v9252
        %9549 = vmatprep.mubr.f32.mxu0 %v8989
        %9550 = vmatmul.mubr.f32.gmra.mrb[0].mxu0 %v8987
        %v9551 = vpop.f32.mrb[0].mxu0
        %v9552 = vadd.f32 %v9475, %v9551
        %v9553 = vpop.f32.mrb[0].mxu0
        %v9554 = vadd.f32 %v9477, %v9553
        %9555 = vmatprep.mubr.f32.mxu0 %v8995
        %9556 = vmatmul.mubr.f32.gmra.mrb[0].mxu0 %v8993
        %v9557 = vpop.f32.mrb[0].mxu0
        %v9558 = vadd.f32 %v9481, %v9557
        %v9559 = vpop.f32.mrb[0].mxu0
        %v9560 = vadd.f32 %v9483, %v9559
        %9561 = vdwg.mxu0
        %v9562 = vadd.f32 %v8826, %v9398
        %v9563 = vadd.f32 %v8827, %v9400
        %v9564 = vadd.f32 %v8828, %v9552
        %v9565 = vadd.f32 %v8829, %v9554
        %v9566 = vadd.f32 %v8830, %v9404
        %v9567 = vadd.f32 %v8831, %v9406
        %v9568 = vadd.f32 %v8832, %v9558
        %v9569 = vadd.f32 %v8833, %v9560
        %v9570 = vld [vmem:[#allocation22] sm:$0xf]
        %v9572 = vlaneseq
        %v9573 = vshrl.u32 %v9572, 7
        %v9574 = vsub.s32 0, %v9573
        %v9575 = vrot.slane %v9570, %v9574
        %v9576 = vlaneseq
        %v9577 = vshrl.u32 %v9576, 7
        %v9578 = vsub.s32 1, %v9577
        %v9579 = vrot.slane %v9570, %v9578
        %v9580 = vlaneseq
        %v9581 = vshrl.u32 %v9580, 7
        %v9582 = vsub.s32 2, %v9581
        %v9583 = vrot.slane %v9570, %v9582
        %v9584 = vlaneseq
        %v9585 = vshrl.u32 %v9584, 7
        %v9586 = vsub.s32 3, %v9585
        %v9587 = vrot.slane %v9570, %v9586
        %v9592 = vadd.f32 %v9562, %v9575
        %v9593 = vadd.f32 %v9563, %v9579
        %v9594 = vadd.f32 %v9564, %v9583
        %v9595 = vadd.f32 %v9565, %v9587
        %v9596 = vadd.f32 %v9566, %v9575
        %v9597 = vadd.f32 %v9567, %v9579
        %v9598 = vadd.f32 %v9568, %v9583
        %v9599 = vadd.f32 %v9569, %v9587
        %v9600 = vmax.f32 %v9592, 0.0
        %v9601 = vmax.f32 %v9593, 0.0
        %v9602 = vmax.f32 %v9594, 0.0
        %v9603 = vmax.f32 %v9595, 0.0
        %v9604 = vmax.f32 %v9596, 0.0
        %v9605 = vmax.f32 %v9597, 0.0
        %v9606 = vmax.f32 %v9598, 0.0
        %v9607 = vmax.f32 %v9599, 0.0
        %9608 = vst [vmem:[%s697] sm:$0xff] %v9600
        %9609 = vst [vmem:[%s697 + $0x8] sm:$0xff] %v9601
        %9610 = vst [vmem:[%s697 + $0x10] sm:$0xff] %v9602
        %9611 = vst [vmem:[%s697 + $0x18] sm:$0xff] %v9603
        %9612 = vst [vmem:[%s697 + $0x20] sm:$0xff] %v9604
        %9613 = vst [vmem:[%s697 + $0x28] sm:$0xff] %v9605
        %9614 = vst [vmem:[%s697 + $0x30] sm:$0xff] %v9606
        %9615 = vst [vmem:[%s697 + $0x38] sm:$0xff] %v9607
        %s9616 = sand.u32 %s373, 1
        %s9617 = scalar_lea.sflag [#allocation4], %s9616
        %s9618 = sand.u32 %s373, 1
        %s9619 = smul.addr %s9618, 64
        %s9620 = scalar_lea.vmem [#allocation23], %s9619
        // Predicated region
        $region133: #{tpu_custom_call.1} parent=79 // pred_check
          %p9621 = pneg %p383
        $region134: #{tpu_custom_call.1} parent=79 // pred_check_branch
          %9623 = sbr.rel (%p9621) target = $region136
        $region135: #{tpu_custom_call.1} parent=79 // pred_region
          %s9625 = ssub.s32 1024, 1024
          %9626 = vsyncadd %s9617, %s9625
          %s9627 = smul.addr %s40, 8
          %s9628 = smul.addr %s9627, 128
          %s9629 = scalar_lea.hbm %s15, %s9628
          %s9630 = sshll.u32 %s9620, 4
          %s9631 = int_to_ptr.vmem [resolvable:$true] %s9630
          %9636 = dma.vmem_to_hbm [thread:$0]  %s9631, 1024, %s9629, %s9617, 512, 512, 32
        $region136: #{tpu_custom_call.1} parent=79 // pred_fallthru
          _
      $region80: #{tpu_custom_call.1} parent=5 // pred_fallthru
        _
      %p9637 = scmp.le.s32.totalorder 2, %s35
      // Predicated region
      $region137: #{tpu_custom_call.1} parent=5 // pred_check
        %p9638 = pneg %p9637
      $region138: #{tpu_custom_call.1} parent=5 // pred_check_branch
        %9640 = sbr.rel (%p9638) target = $region140
      $region139: #{tpu_custom_call.1} parent=5 // pred_region
        %s9641 = ssub.s32 %s35, 2
        // Predicated region
        $region141: #{tpu_custom_call.1} parent=139 // pred_check
          %p9642 = pneg %p389
        $region142: #{tpu_custom_call.1} parent=139 // pred_check_branch
          %9644 = sbr.rel (%p9642) target = $region144
        $region143: #{tpu_custom_call.1} parent=139 // pred_region
          %s9645 = sand.u32 %s374, 1
          %s9646 = scalar_lea.sflag [#allocation4], %s9645
          %s9647 = sand.u32 %s374, 1
          %s9648 = smul.addr %s9647, 64
          %s9649 = scalar_lea.vmem [#allocation23], %s9648
          %9650 = dma.done %s9646, 1024
        $region144: #{tpu_custom_call.1} parent=139 // pred_fallthru
          _
      $region140: #{tpu_custom_call.1} parent=5 // pred_fallthru
        _
    $region6: #{tpu_custom_call.1} parent=1 // loop_footer
      %s39 = sadd.s32 1, %s35
    $region7: #{tpu_custom_call.1} parent=1 // loop_footer_branch
      %34 = sbr.rel target = $region3
    $region8: #{tpu_custom_call.1} parent=1 // loop_exit
      _
    %9651 = vsyncpa [#allocation3], 1
    %s9652 = scalar_lea.sflag [#allocation3], 1
    %9653 = vsyncpa %s9652, 1
    %9654 = vsyncpa [#allocation6], 1
    %s9655 = scalar_lea.sflag [#allocation6], 1
    %9656 = vsyncpa %s9655, 1
    %9657 = vsyncpa [#allocation9], 1
    %9658 = vsyncpa [#allocation12], 1
    %9659 = vsyncpa [#allocation15], 1
    %9660 = vsyncpa [#allocation18], 1
    %9661 = vsyncpa [#allocation21], 1
    %9662 = vsyncpa [#allocation4], 1
    %s9663 = scalar_lea.sflag [#allocation4], 1
    %9664 = vsyncpa %s9663, 1

</llo_original>
